<compile_context>
chip_gen: v5e
topology: v5e:2x2
jax: 0.10.0
libtpu: 0.0.40
codegen_flags: <defaults>
</compile_context>

<pallas_src>
from functools import partial

import numpy as np
import jax
import jax.numpy as jnp
from jax.experimental import pallas as pl
from jax.experimental.pallas import tpu as pltpu


# --------------------------------------------------------------------------- kernel
def _head_kernel(xp_ref, w3_ref, b3_ref, w1_ref, b1_ref, out_ref, *, n_cls, n_k):
    nb, hp, wp, cin = xp_ref.shape
    th, w = hp - 2, wp - 2
    m = nb * th * w
    c_hid_pad = w3_ref.shape[1]

    # Fused 3x3 conv for all heads: 9 accumulated bf16 MXU dots with f32 accumulation.
    hid = jnp.zeros((m, c_hid_pad), jnp.float32)
    for ky in range(3):
        for kx in range(3):
            k = ky * 3 + kx
            patch = xp_ref[:, ky:ky + th, kx:kx + w, :].reshape(m, cin)     # bf16
            hid = hid + jnp.dot(patch, w3_ref[k * cin:(k + 1) * cin, :],
                                preferred_element_type=jnp.float32)
    hid = jnp.maximum(hid + b3_ref[...], 0.0)                               # (m, c_hid_pad) f32

    # Fused block-diagonal 1x1 conv -> lane-dense 128-wide output slab.
    # (hid is cast to bf16 for the tiny second matmul; keep f32 here if tighter
    #  accuracy is ever required — it is <5% of the FLOPs.)
    out = jnp.dot(hid.astype(jnp.bfloat16), w1_ref[...],
                  preferred_element_type=jnp.float32) + b1_ref[...]         # (m, out_pad) f32

    # Per-head activation selected by output lane: [sigmoid | relu | identity | pad].
    lane = jax.lax.broadcasted_iota(jnp.int32, out.shape, 1)
    out = jnp.where(lane < n_cls, jax.nn.sigmoid(out),
                    jnp.where(lane < n_cls + n_k, jnp.maximum(out, 0.0), out))

    out_ref[...] = out.reshape(out_ref.shape).astype(out_ref.dtype)


# --------------------------------------------------------------------------- helpers
def _vmem_limit_bytes():
    """Generation-aware scoped-VMEM limit (~48 MiB on v7x, up to 96 MiB on v5e/v6e)."""
    try:
        cap = pltpu.get_tpu_info().vmem_capacity_bytes
        return int(min(cap * 3 // 4, 96 << 20))
    except Exception:
        return 48 << 20


def _pick_tiles(N, H, W, Cin, c_hid_pad, out_pad, target_m, budget):
    """Pick (nb, th): batch block and H tile so per-step M ~ target_m and VMEM fits."""

    def est(nb, th):
        m = nb * th * W
        inp = 2 * nb * (th + 2) * (W + 2) * Cin * 2               # bf16 input, 2 bufs
        outb = 2 * m * out_pad * 4                                # f32 output, 2 bufs
        wts = 2 * (9 * Cin * c_hid_pad + c_hid_pad * out_pad) * 2  # bf16 weights, 2 bufs
        hid = m * c_hid_pad * 4                                   # f32 accumulator
        tmp = m * out_pad * 4 + 2 * m * Cin * 2                   # activation temporaries
        return inp + outb + wts + hid + tmp

    divs = [d for d in range(H, 0, -1) if H % d == 0]

    nb = max(1, min(N, pl.cdiv(target_m, H * W)))
    while N % nb:                      # NOTE: prime N degenerates to nb=1 (perf-only)
        nb -= 1
    while True:
        for th in divs:
            if est(nb, th) <= budget:
                return nb, th
        if nb == 1:
            return 1, divs[-1]
        nb = max(1, nb // 2)
        while N % nb:
            nb -= 1


def fuse_params(params):
    """Fuse the three heads' weights once (inference-time constants)."""
    (cls_w3, cls_b3, cls_w1, cls_b1,
     k_w3, k_b3, k_w1, k_b1,
     reg_w3, reg_b3, reg_w1, reg_b1) = params

    Cin = cls_w3.shape[2]
    c_cls, c_k, c_reg = cls_w3.shape[3], k_w3.shape[3], reg_w3.shape[3]
    n_cls, n_k, n_reg = cls_w1.shape[1], k_w1.shape[1], reg_w1.shape[1]
    c_hid = c_cls + c_k + c_reg
    c_hid_pad = ((c_hid + 127) // 128) * 128          # 576 -> 640 (lane-dense hidden)
    n_out = n_cls + n_k + n_reg
    out_pad = max(128, ((n_out + 127) // 128) * 128)  # lane-dense output width

    # 3x3: (3,3,Cin, c_hid) -> (9*Cin, c_hid_pad) bf16, row order matches the im2col loop.
    w3_f = jnp.concatenate([cls_w3, k_w3, reg_w3], axis=3).reshape(9 * Cin, c_hid)
    w3_f = jnp.pad(w3_f, ((0, 0), (0, c_hid_pad - c_hid))).astype(jnp.bfloat16)
    b3_f = jnp.pad(jnp.concatenate([cls_b3, k_b3, reg_b3], axis=1),
                   ((0, 0), (0, c_hid_pad - c_hid)))                     # (1, c_hid_pad) f32

    # 1x1: block-diagonal (c_hid_pad, out_pad) so a single matmul produces all heads.
    w1_f = jnp.zeros((c_hid_pad, out_pad), jnp.float32)
    w1_f = w1_f.at[:c_cls, :n_cls].set(cls_w1)
    w1_f = w1_f.at[c_cls:c_cls + c_k, n_cls:n_cls + n_k].set(k_w1)
    w1_f = w1_f.at[c_cls + c_k:c_hid, n_cls + n_k:n_out].set(reg_w1)
    w1_f = w1_f.astype(jnp.bfloat16)
    b1_f = jnp.zeros((1, out_pad), jnp.float32)
    b1_f = b1_f.at[:, :n_cls].set(cls_b1)
    b1_f = b1_f.at[:, n_cls:n_cls + n_k].set(k_b1)
    b1_f = b1_f.at[:, n_cls + n_k:n_out].set(reg_b1)

    fused = tuple(jax.block_until_ready(a) for a in (w3_f, b3_f, w1_f, b1_f))
    dims = dict(cin=Cin, n_cls=n_cls, n_k=n_k, n_reg=n_reg, n_out=n_out,
                c_hid_pad=c_hid_pad, out_pad=out_pad)
    return fused, dims


# --------------------------------------------------------------------------- wrapper
def head_joint_points(x_nchw, fused, dims, *, target_m=512):
    """x_nchw: (N, 256, H, W) f32.  Returns (hm, k1, offset) in NCHW (module semantics)."""
    w3_f, b3_f, w1_f, b1_f = fused
    N, Cin, H, W = x_nchw.shape
    assert Cin == dims["cin"]
    n_cls, n_k = dims["n_cls"], dims["n_k"]
    n_out, out_pad, c_hid_pad = dims["n_out"], dims["out_pad"], dims["c_hid_pad"]

    vmem_limit = _vmem_limit_bytes()
    nb, th = _pick_tiles(N, H, W, Cin, c_hid_pad, out_pad, target_m,
                         budget=int(vmem_limit * 0.6))

    # Give v7x's 2 TensorCores >= 2 grid steps only when the halved M stays MXU-full.
    if (N // nb) * (H // th) == 1 and nb * th * W >= 512:
        if nb % 2 == 0:
            nb //= 2
        else:
            for d in range(th - 1, 0, -1):
                if H % d == 0 and nb * d * W >= 256:
                    th = d
                    break
    n_h = H // th
    grid = (N // nb, n_h)

    # NHWC, pad=1, cast to bf16 once (halves the input DMA).
    x = jnp.transpose(x_nchw, (0, 2, 3, 1))
    xp = jnp.pad(x, ((0, 0), (1, 1), (1, 1), (0, 0))).astype(jnp.bfloat16)
    # Overlapping H tiles with a 2-row halo (only the halo rows are duplicated in HBM).
    xp_t = jnp.stack([xp[:, t * th: t * th + th + 2] for t in range(n_h)], axis=1)
    # -> (N, n_h, th+2, W+2, Cin) bf16

    def const_spec(a):
        nd = a.ndim
        return pl.BlockSpec(a.shape, lambda n, t, _nd=nd: (0,) * _nd)

    kernel = partial(_head_kernel, n_cls=n_cls, n_k=n_k)

    out = pl.pallas_call(
        kernel,
        out_shape=jax.ShapeDtypeStruct((N, H, W, out_pad), jnp.float32),
        grid_spec=pltpu.PrefetchScalarGridSpec(
            num_scalar_prefetch=0,
            grid=grid,
            in_specs=[pl.BlockSpec((nb, None, th + 2, W + 2, Cin),
                                   lambda n, t: (n, t, 0, 0, 0)),
                      const_spec(w3_f), const_spec(b3_f),
                      const_spec(w1_f), const_spec(b1_f)],
            out_specs=pl.BlockSpec((nb, th, W, out_pad),
                                   lambda n, t: (n, t, 0, 0)),
        ),
        compiler_params=pltpu.CompilerParams(
            dimension_semantics=("parallel", "parallel"),
            vmem_limit_bytes=vmem_limit,
        ),
    )(xp_t, w3_f, b3_f, w1_f, b1_f)

    # Split the fused lane-dense slab; return NCHW to match the PyTorch module.
    to_nchw = lambda t_: jnp.transpose(t_, (0, 3, 1, 2))
    hm = to_nchw(out[..., :n_cls])
    k1 = to_nchw(out[..., n_cls:n_cls + n_k])
    off = to_nchw(out[..., n_cls + n_k:n_out])
    return hm, k1, off


# --------------------------------------------------------------------------- params / reference
def make_params(key, num_classes=80, channel=64, in_channel=256):
    """Deterministic synthetic weights. Conv weights HWIO (kh,kw,Cin,Cout), biases (1,Cout)."""
    ks = jax.random.split(key, 12)

    def u(k, shape, fan_in):
        bound = 1.0 / np.sqrt(fan_in)
        return jax.random.uniform(k, shape, jnp.float32, -bound, bound)

    cls_w3 = u(ks[0], (3, 3, in_channel, channel), 9 * in_channel)
    cls_b3 = u(ks[1], (1, channel), 9 * in_channel)
    cls_w1 = u(ks[2], (channel, num_classes), channel)
    cls_b1 = u(ks[3], (1, num_classes), channel)
    k_w3 = u(ks[4], (3, 3, in_channel, in_channel), 9 * in_channel)
    k_b3 = u(ks[5], (1, in_channel), 9 * in_channel)
    k_w1 = u(ks[6], (in_channel, 8), in_channel)
    k_b1 = u(ks[7], (1, 8), in_channel)
    reg_w3 = u(ks[8], (3, 3, in_channel, in_channel), 9 * in_channel)
    reg_b3 = u(ks[9], (1, in_channel), 9 * in_channel)
    reg_w1 = u(ks[10], (in_channel, 2), in_channel)
    reg_b1 = u(ks[11], (1, 2), in_channel)

    return (cls_w3, cls_b3, cls_w1, cls_b1,
            k_w3, k_b3, k_w1, k_b1,
            reg_w3, reg_b3, reg_w1, reg_b1)


def _reference(x_nchw, params):
    """Pure-JAX f32 reference (lax.conv) for correctness checking."""
    (cls_w3, cls_b3, cls_w1, cls_b1,
     k_w3, k_b3, k_w1, k_b1,
     reg_w3, reg_b3, reg_w1, reg_b1) = params
    x = jnp.transpose(x_nchw, (0, 2, 3, 1))  # NHWC

    def conv(x, w, b, pad):
        y = jax.lax.conv_general_dilated(
            x, w, window_strides=(1, 1), padding=pad,
            dimension_numbers=('NHWC', 'HWIO', 'NHWC'))
        return y + b[0]

    def crc(x, w3, b3, w1, b1):
        h = jax.nn.relu(conv(x, w3, b3, 'SAME'))
        return conv(h, w1[None, None], b1, 'VALID')

    hm = jax.nn.sigmoid(crc(x, cls_w3, cls_b3, cls_w1, cls_b1))
    k1 = jax.nn.relu(crc(x, k_w3, k_b3, k_w1, k_b1))
    off = crc(x, reg_w3, reg_b3, reg_w1, reg_b1)
    to_nchw = lambda t: jnp.transpose(t, (0, 3, 1, 2))
    return to_nchw(hm), to_nchw(k1), to_nchw(off)


if __name__ == "__main__":
    key = jax.random.PRNGKey(0)
    kx, kp = jax.random.split(key)

    N, Cin, H, W = 2, 256, 8, 8            # in_channel=256 is fixed by the module
    num_classes, channel = 80, 64

    x = jax.random.normal(kx, (N, Cin, H, W), jnp.float32)
    params = make_params(kp, num_classes=num_classes, channel=channel, in_channel=Cin)

    fused, dims = fuse_params(params)                    # weight fusion precomputed once
    apply_fn = jax.jit(lambda xx: head_joint_points(xx, fused, dims))

    hm, k1, off = apply_fn(x)
    jax.block_until_ready((hm, k1, off))

    # Sanity check against the f32 reference (bf16 MXU operands => relaxed tolerance).
    hm_r, k1_r, off_r = _reference(x, params)
    np.testing.assert_allclose(np.asarray(hm), np.asarray(hm_r), atol=2e-2, rtol=2e-2)
    np.testing.assert_allclose(np.asarray(k1), np.asarray(k1_r), atol=2e-2, rtol=2e-2)
    np.testing.assert_allclose(np.asarray(off), np.asarray(off_r), atol=2e-2, rtol=2e-2)

    assert hm.shape == (N, num_classes, H, W)
    assert k1.shape == (N, 8, H, W)
    assert off.shape == (N, 2, H, W)

    print("KERNEL_OK")
</pallas_src>

<mosaic_0001>
module attributes {stable_mosaic.version = 11 : i64} {
  func.func @_head_kernel(%arg0: i32, %arg1: i32, %arg2: memref<2x1x10x10x256xbf16, #tpu.memory_space<vmem>>, %arg3: memref<2304x640xbf16, #tpu.memory_space<vmem>>, %arg4: memref<1x640xf32, #tpu.memory_space<vmem>>, %arg5: memref<640x128xbf16, #tpu.memory_space<vmem>>, %arg6: memref<1x128xf32, #tpu.memory_space<vmem>>, %arg7: memref<2x8x8x128xf32, #tpu.memory_space<vmem>>) attributes {dimension_semantics = [#tpu.dimension_semantics<parallel>, #tpu.dimension_semantics<parallel>], iteration_bounds = array<i64: 1, 1>, scalar_prefetch = 0 : i64, scratch_operands = 0 : i64, tpu.core_type = #tpu.core_type<tc>, window_params = [{transform_indices = @transform_0, window_bounds = array<i64: 2, 1, 10, 10, 256>}, {pipeline_mode = #tpu.pipeline_mode<synchronous>, transform_indices = @transform_1, window_bounds = array<i64: 2304, 640>}, {pipeline_mode = #tpu.pipeline_mode<synchronous>, transform_indices = @transform_2, window_bounds = array<i64: 1, 640>}, {pipeline_mode = #tpu.pipeline_mode<synchronous>, transform_indices = @transform_3, window_bounds = array<i64: 640, 128>}, {pipeline_mode = #tpu.pipeline_mode<synchronous>, transform_indices = @transform_4, window_bounds = array<i64: 1, 128>}, {transform_indices = @transform_5, window_bounds = array<i64: 2, 8, 8, 128>}]} {
    %cst = arith.constant 0.000000e+00 : f32
    %0 = vector.broadcast %cst : f32 to vector<128x640xf32>
    %c0 = arith.constant 0 : index
    %c0_0 = arith.constant 0 : index
    %c0_1 = arith.constant 0 : index
    %c0_2 = arith.constant 0 : index
    %c0_3 = arith.constant 0 : index
    %1 = vector.load %arg2[%c0, %c0_0, %c0_1, %c0_2, %c0_3] : memref<2x1x10x10x256xbf16, #tpu.memory_space<vmem>>, vector<2x1x8x8x256xbf16>
    %2 = vector.shape_cast %1 : vector<2x1x8x8x256xbf16> to vector<2x8x8x256xbf16>
    %3 = vector.shape_cast %2 : vector<2x8x8x256xbf16> to vector<128x256xbf16>
    %c0_4 = arith.constant 0 : index
    %c0_5 = arith.constant 0 : index
    %4 = vector.load %arg3[%c0_4, %c0_5] : memref<2304x640xbf16, #tpu.memory_space<vmem>>, vector<256x640xbf16>
    %cst_6 = arith.constant dense<0.000000e+00> : vector<128x640xf32>
    %5 = tpu.matmul %3, %4, %cst_6 {dimension_numbers = #tpu.dot_dimension_numbers<[1], [0], [0], [1], [0, 0, 1, 1], [], []>} : vector<128x256xbf16>, vector<256x640xbf16>, vector<128x640xf32> -> vector<128x640xf32>
    %6 = arith.addf %0, %5 : vector<128x640xf32>
    %c0_7 = arith.constant 0 : index
    %c0_8 = arith.constant 0 : index
    %c0_9 = arith.constant 0 : index
    %c1 = arith.constant 1 : index
    %c0_10 = arith.constant 0 : index
    %7 = vector.load %arg2[%c0_7, %c0_8, %c0_9, %c1, %c0_10] : memref<2x1x10x10x256xbf16, #tpu.memory_space<vmem>>, vector<2x1x8x8x256xbf16>
    %8 = vector.shape_cast %7 : vector<2x1x8x8x256xbf16> to vector<2x8x8x256xbf16>
    %9 = vector.shape_cast %8 : vector<2x8x8x256xbf16> to vector<128x256xbf16>
    %c256 = arith.constant 256 : index
    %c0_11 = arith.constant 0 : index
    %10 = vector.load %arg3[%c256, %c0_11] : memref<2304x640xbf16, #tpu.memory_space<vmem>>, vector<256x640xbf16>
    %cst_12 = arith.constant dense<0.000000e+00> : vector<128x640xf32>
    %11 = tpu.matmul %9, %10, %cst_12 {dimension_numbers = #tpu.dot_dimension_numbers<[1], [0], [0], [1], [0, 0, 1, 1], [], []>} : vector<128x256xbf16>, vector<256x640xbf16>, vector<128x640xf32> -> vector<128x640xf32>
    %12 = arith.addf %6, %11 : vector<128x640xf32>
    %c0_13 = arith.constant 0 : index
    %c0_14 = arith.constant 0 : index
    %c0_15 = arith.constant 0 : index
    %c2 = arith.constant 2 : index
    %c0_16 = arith.constant 0 : index
    %13 = vector.load %arg2[%c0_13, %c0_14, %c0_15, %c2, %c0_16] : memref<2x1x10x10x256xbf16, #tpu.memory_space<vmem>>, vector<2x1x8x8x256xbf16>
    %14 = vector.shape_cast %13 : vector<2x1x8x8x256xbf16> to vector<2x8x8x256xbf16>
    %15 = vector.shape_cast %14 : vector<2x8x8x256xbf16> to vector<128x256xbf16>
    %c512 = arith.constant 512 : index
    %c0_17 = arith.constant 0 : index
    %16 = vector.load %arg3[%c512, %c0_17] : memref<2304x640xbf16, #tpu.memory_space<vmem>>, vector<256x640xbf16>
    %cst_18 = arith.constant dense<0.000000e+00> : vector<128x640xf32>
    %17 = tpu.matmul %15, %16, %cst_18 {dimension_numbers = #tpu.dot_dimension_numbers<[1], [0], [0], [1], [0, 0, 1, 1], [], []>} : vector<128x256xbf16>, vector<256x640xbf16>, vector<128x640xf32> -> vector<128x640xf32>
    %18 = arith.addf %12, %17 : vector<128x640xf32>
    %c0_19 = arith.constant 0 : index
    %c0_20 = arith.constant 0 : index
    %c1_21 = arith.constant 1 : index
    %c0_22 = arith.constant 0 : index
    %c0_23 = arith.constant 0 : index
    %19 = vector.load %arg2[%c0_19, %c0_20, %c1_21, %c0_22, %c0_23] : memref<2x1x10x10x256xbf16, #tpu.memory_space<vmem>>, vector<2x1x8x8x256xbf16>
    %20 = vector.shape_cast %19 : vector<2x1x8x8x256xbf16> to vector<2x8x8x256xbf16>
    %21 = vector.shape_cast %20 : vector<2x8x8x256xbf16> to vector<128x256xbf16>
    %c768 = arith.constant 768 : index
    %c0_24 = arith.constant 0 : index
    %22 = vector.load %arg3[%c768, %c0_24] : memref<2304x640xbf16, #tpu.memory_space<vmem>>, vector<256x640xbf16>
    %cst_25 = arith.constant dense<0.000000e+00> : vector<128x640xf32>
    %23 = tpu.matmul %21, %22, %cst_25 {dimension_numbers = #tpu.dot_dimension_numbers<[1], [0], [0], [1], [0, 0, 1, 1], [], []>} : vector<128x256xbf16>, vector<256x640xbf16>, vector<128x640xf32> -> vector<128x640xf32>
    %24 = arith.addf %18, %23 : vector<128x640xf32>
    %c0_26 = arith.constant 0 : index
    %c0_27 = arith.constant 0 : index
    %c1_28 = arith.constant 1 : index
    %c1_29 = arith.constant 1 : index
    %c0_30 = arith.constant 0 : index
    %25 = vector.load %arg2[%c0_26, %c0_27, %c1_28, %c1_29, %c0_30] : memref<2x1x10x10x256xbf16, #tpu.memory_space<vmem>>, vector<2x1x8x8x256xbf16>
    %26 = vector.shape_cast %25 : vector<2x1x8x8x256xbf16> to vector<2x8x8x256xbf16>
    %27 = vector.shape_cast %26 : vector<2x8x8x256xbf16> to vector<128x256xbf16>
    %c1024 = arith.constant 1024 : index
    %c0_31 = arith.constant 0 : index
    %28 = vector.load %arg3[%c1024, %c0_31] : memref<2304x640xbf16, #tpu.memory_space<vmem>>, vector<256x640xbf16>
    %cst_32 = arith.constant dense<0.000000e+00> : vector<128x640xf32>
    %29 = tpu.matmul %27, %28, %cst_32 {dimension_numbers = #tpu.dot_dimension_numbers<[1], [0], [0], [1], [0, 0, 1, 1], [], []>} : vector<128x256xbf16>, vector<256x640xbf16>, vector<128x640xf32> -> vector<128x640xf32>
    %30 = arith.addf %24, %29 : vector<128x640xf32>
    %c0_33 = arith.constant 0 : index
    %c0_34 = arith.constant 0 : index
    %c1_35 = arith.constant 1 : index
    %c2_36 = arith.constant 2 : index
    %c0_37 = arith.constant 0 : index
    %31 = vector.load %arg2[%c0_33, %c0_34, %c1_35, %c2_36, %c0_37] : memref<2x1x10x10x256xbf16, #tpu.memory_space<vmem>>, vector<2x1x8x8x256xbf16>
    %32 = vector.shape_cast %31 : vector<2x1x8x8x256xbf16> to vector<2x8x8x256xbf16>
    %33 = vector.shape_cast %32 : vector<2x8x8x256xbf16> to vector<128x256xbf16>
    %c1280 = arith.constant 1280 : index
    %c0_38 = arith.constant 0 : index
    %34 = vector.load %arg3[%c1280, %c0_38] : memref<2304x640xbf16, #tpu.memory_space<vmem>>, vector<256x640xbf16>
    %cst_39 = arith.constant dense<0.000000e+00> : vector<128x640xf32>
    %35 = tpu.matmul %33, %34, %cst_39 {dimension_numbers = #tpu.dot_dimension_numbers<[1], [0], [0], [1], [0, 0, 1, 1], [], []>} : vector<128x256xbf16>, vector<256x640xbf16>, vector<128x640xf32> -> vector<128x640xf32>
    %36 = arith.addf %30, %35 : vector<128x640xf32>
    %c0_40 = arith.constant 0 : index
    %c0_41 = arith.constant 0 : index
    %c2_42 = arith.constant 2 : index
    %c0_43 = arith.constant 0 : index
    %c0_44 = arith.constant 0 : index
    %37 = vector.load %arg2[%c0_40, %c0_41, %c2_42, %c0_43, %c0_44] : memref<2x1x10x10x256xbf16, #tpu.memory_space<vmem>>, vector<2x1x8x8x256xbf16>
    %38 = vector.shape_cast %37 : vector<2x1x8x8x256xbf16> to vector<2x8x8x256xbf16>
    %39 = vector.shape_cast %38 : vector<2x8x8x256xbf16> to vector<128x256xbf16>
    %c1536 = arith.constant 1536 : index
    %c0_45 = arith.constant 0 : index
    %40 = vector.load %arg3[%c1536, %c0_45] : memref<2304x640xbf16, #tpu.memory_space<vmem>>, vector<256x640xbf16>
    %cst_46 = arith.constant dense<0.000000e+00> : vector<128x640xf32>
    %41 = tpu.matmul %39, %40, %cst_46 {dimension_numbers = #tpu.dot_dimension_numbers<[1], [0], [0], [1], [0, 0, 1, 1], [], []>} : vector<128x256xbf16>, vector<256x640xbf16>, vector<128x640xf32> -> vector<128x640xf32>
    %42 = arith.addf %36, %41 : vector<128x640xf32>
    %c0_47 = arith.constant 0 : index
    %c0_48 = arith.constant 0 : index
    %c2_49 = arith.constant 2 : index
    %c1_50 = arith.constant 1 : index
    %c0_51 = arith.constant 0 : index
    %43 = vector.load %arg2[%c0_47, %c0_48, %c2_49, %c1_50, %c0_51] : memref<2x1x10x10x256xbf16, #tpu.memory_space<vmem>>, vector<2x1x8x8x256xbf16>
    %44 = vector.shape_cast %43 : vector<2x1x8x8x256xbf16> to vector<2x8x8x256xbf16>
    %45 = vector.shape_cast %44 : vector<2x8x8x256xbf16> to vector<128x256xbf16>
    %c1792 = arith.constant 1792 : index
    %c0_52 = arith.constant 0 : index
    %46 = vector.load %arg3[%c1792, %c0_52] : memref<2304x640xbf16, #tpu.memory_space<vmem>>, vector<256x640xbf16>
    %cst_53 = arith.constant dense<0.000000e+00> : vector<128x640xf32>
    %47 = tpu.matmul %45, %46, %cst_53 {dimension_numbers = #tpu.dot_dimension_numbers<[1], [0], [0], [1], [0, 0, 1, 1], [], []>} : vector<128x256xbf16>, vector<256x640xbf16>, vector<128x640xf32> -> vector<128x640xf32>
    %48 = arith.addf %42, %47 : vector<128x640xf32>
    %c0_54 = arith.constant 0 : index
    %c0_55 = arith.constant 0 : index
    %c2_56 = arith.constant 2 : index
    %c2_57 = arith.constant 2 : index
    %c0_58 = arith.constant 0 : index
    %49 = vector.load %arg2[%c0_54, %c0_55, %c2_56, %c2_57, %c0_58] : memref<2x1x10x10x256xbf16, #tpu.memory_space<vmem>>, vector<2x1x8x8x256xbf16>
    %50 = vector.shape_cast %49 : vector<2x1x8x8x256xbf16> to vector<2x8x8x256xbf16>
    %51 = vector.shape_cast %50 : vector<2x8x8x256xbf16> to vector<128x256xbf16>
    %c2048 = arith.constant 2048 : index
    %c0_59 = arith.constant 0 : index
    %52 = vector.load %arg3[%c2048, %c0_59] : memref<2304x640xbf16, #tpu.memory_space<vmem>>, vector<256x640xbf16>
    %cst_60 = arith.constant dense<0.000000e+00> : vector<128x640xf32>
    %53 = tpu.matmul %51, %52, %cst_60 {dimension_numbers = #tpu.dot_dimension_numbers<[1], [0], [0], [1], [0, 0, 1, 1], [], []>} : vector<128x256xbf16>, vector<256x640xbf16>, vector<128x640xf32> -> vector<128x640xf32>
    %54 = arith.addf %48, %53 : vector<128x640xf32>
    %c0_61 = arith.constant 0 : index
    %c0_62 = arith.constant 0 : index
    %55 = vector.load %arg4[%c0_61, %c0_62] : memref<1x640xf32, #tpu.memory_space<vmem>>, vector<1x640xf32>
    %56 = vector.broadcast %55 : vector<1x640xf32> to vector<128x640xf32>
    %57 = arith.addf %54, %56 : vector<128x640xf32>
    %cst_63 = arith.constant 0.000000e+00 : f32
    %58 = vector.broadcast %cst_63 : f32 to vector<128x640xf32>
    %59 = arith.maximumf %57, %58 : vector<128x640xf32>
    %60 = arith.truncf %59 : vector<128x640xf32> to vector<128x640xbf16>
    %c0_64 = arith.constant 0 : index
    %c0_65 = arith.constant 0 : index
    %61 = vector.load %arg5[%c0_64, %c0_65] : memref<640x128xbf16, #tpu.memory_space<vmem>>, vector<640x128xbf16>
    %cst_66 = arith.constant dense<0.000000e+00> : vector<128x128xf32>
    %62 = tpu.matmul %60, %61, %cst_66 {dimension_numbers = #tpu.dot_dimension_numbers<[1], [0], [0], [1], [0, 0, 1, 1], [], []>} : vector<128x640xbf16>, vector<640x128xbf16>, vector<128x128xf32> -> vector<128x128xf32>
    %c0_67 = arith.constant 0 : index
    %c0_68 = arith.constant 0 : index
    %63 = vector.load %arg6[%c0_67, %c0_68] : memref<1x128xf32, #tpu.memory_space<vmem>>, vector<1x128xf32>
    %64 = vector.broadcast %63 : vector<1x128xf32> to vector<128x128xf32>
    %65 = arith.addf %62, %64 : vector<128x128xf32>
    %66 = tpu.iota {dimensions = array<i32: 1>} : vector<128x128xi32>
    %c80_i32 = arith.constant 80 : i32
    %67 = vector.broadcast %c80_i32 : i32 to vector<128x128xi32>
    %68 = arith.cmpi slt, %66, %67 : vector<128x128xi32>
    %69 = arith.negf %65 : vector<128x128xf32>
    %70 = math.exp %69 : vector<128x128xf32>
    %cst_69 = arith.constant 1.000000e+00 : f32
    %71 = vector.broadcast %cst_69 : f32 to vector<128x128xf32>
    %72 = arith.addf %71, %70 : vector<128x128xf32>
    %73 = arith.divf %71, %72 : vector<128x128xf32>
    %c88_i32 = arith.constant 88 : i32
    %74 = vector.broadcast %c88_i32 : i32 to vector<128x128xi32>
    %75 = arith.cmpi slt, %66, %74 : vector<128x128xi32>
    %cst_70 = arith.constant 0.000000e+00 : f32
    %76 = vector.broadcast %cst_70 : f32 to vector<128x128xf32>
    %77 = arith.maximumf %65, %76 : vector<128x128xf32>
    %78 = arith.select %75, %77, %65 : vector<128x128xi1>, vector<128x128xf32>
    %79 = arith.select %68, %73, %78 : vector<128x128xi1>, vector<128x128xf32>
    %80 = vector.shape_cast %79 : vector<128x128xf32> to vector<2x8x8x128xf32>
    %c0_71 = arith.constant 0 : index
    %c0_72 = arith.constant 0 : index
    %c0_73 = arith.constant 0 : index
    %c0_74 = arith.constant 0 : index
    %81 = vector.load %arg7[%c0_71, %c0_72, %c0_73, %c0_74] : memref<2x8x8x128xf32, #tpu.memory_space<vmem>>, vector<2x8x8x128xf32>
    tpu.vector_store %arg7[%c0_71, %c0_72, %c0_73, %c0_74], %80 {strides = array<i32>} : memref<2x8x8x128xf32, #tpu.memory_space<vmem>>, vector<2x8x8x128xf32>,
    return
  }
  func.func @transform_0(%arg0: i32, %arg1: i32) -> (i32, i32, i32, i32, i32) {
    %c0_i32 = arith.constant 0 : i32
    %c0_i32_0 = arith.constant 0 : i32
    %c0_i32_1 = arith.constant 0 : i32
    %c0_i32_2 = arith.constant 0 : i32
    return %arg0, %arg1, %c0_i32, %c0_i32_0, %c0_i32_1 : i32, i32, i32, i32, i32
  }
  func.func @transform_1(%arg0: i32, %arg1: i32) -> (i32, i32) {
    %c0_i32 = arith.constant 0 : i32
    %c0_i32_0 = arith.constant 0 : i32
    %c0_i32_1 = arith.constant 0 : i32
    return %c0_i32, %c0_i32_0 : i32, i32
  }
  func.func @transform_2(%arg0: i32, %arg1: i32) -> (i32, i32) {
    %c0_i32 = arith.constant 0 : i32
    %c0_i32_0 = arith.constant 0 : i32
    %c0_i32_1 = arith.constant 0 : i32
    return %c0_i32, %c0_i32_0 : i32, i32
  }
  func.func @transform_3(%arg0: i32, %arg1: i32) -> (i32, i32) {
    %c0_i32 = arith.constant 0 : i32
    %c0_i32_0 = arith.constant 0 : i32
    %c0_i32_1 = arith.constant 0 : i32
    return %c0_i32, %c0_i32_0 : i32, i32
  }
  func.func @transform_4(%arg0: i32, %arg1: i32) -> (i32, i32) {
    %c0_i32 = arith.constant 0 : i32
    %c0_i32_0 = arith.constant 0 : i32
    %c0_i32_1 = arith.constant 0 : i32
    return %c0_i32, %c0_i32_0 : i32, i32
  }
  func.func @transform_5(%arg0: i32, %arg1: i32) -> (i32, i32, i32, i32) {
    %c0_i32 = arith.constant 0 : i32
    %c0_i32_0 = arith.constant 0 : i32
    %c0_i32_1 = arith.constant 0 : i32
    return %arg0, %arg1, %c0_i32, %c0_i32_0 : i32, i32, i32, i32
  }
}

</mosaic_0001>

<llo_original>
// kernel: _lambda_.1
$region0: #{_lambda_.1}
  #allocation0 [shape = 'u32[]', space=smem, size = 0x4, offset = 0x4, fixed_abs, tag = 'smem constant byte address 0x4 - core index']
  #allocation1 [shape = 'u32[72,128]{1,0:T(1,128)}', space=vmem, size = 0x9000, scoped, tag = 'internal scratch']
  %s0 = inlined_call_operand.vmem [shape: bf16[2,1,10,10,256], index: 0, kind: input, shape index: {}]
  %s1 = inlined_call_operand.hbm [shape: bf16[2304,640], index: 1, kind: input, shape index: {}]
  %s2 = inlined_call_operand.hbm [shape: f32[1,640], index: 2, kind: input, shape index: {}]
  %s3 = inlined_call_operand.hbm [shape: bf16[640,128], index: 3, kind: input, shape index: {}]
  %s4 = inlined_call_operand.hbm [shape: f32[1,128], index: 4, kind: input, shape index: {}]
  %s5 = inlined_call_operand.vmem [shape: f32[2,8,8,128], index: 5, kind: output, shape index: {}]
  %s6 = sld [smem:[#allocation0]]
  $region46: #{_lambda_.1} parent=0
    _
  %s8 = ssub.s32 1, %s6
  %s9 = scalar_select 0, %s8, %s6
  $region1: #{_lambda_.1} parent=0
    #allocation2 [shape = 'u8[2949120]{0}', space=vmem, size = 0x2d0000, scoped, tag = 'input window, operand 1, single buffered']
    #allocation3 [shape = 's32[1]{0}', space=sflag, size = 0x4, scoped, tag = 'scoped memory for _lambda_.1']
    #allocation4 [shape = 'u8[2560]{0}', space=vmem, size = 0xc00, scoped, tag = 'input window, operand 2, single buffered']
    #allocation5 [shape = 's32[1]{0}', space=sflag, size = 0x4, scoped, tag = 'scoped memory for _lambda_.1']
    #allocation6 [shape = 'u8[163840]{0}', space=vmem, size = 0x28000, scoped, tag = 'input window, operand 3, single buffered']
    #allocation7 [shape = 'u8[512]{0}', space=vmem, size = 0x400, scoped, tag = 'input window, operand 4, single buffered']
    #allocation8 [shape = 's32[1]{0}', space=sflag, size = 0x4, scoped, tag = 'scoped memory for _lambda_.1']
    %10 = vsyncpa [#allocation3], 0
    %11 = vsyncpa [#allocation5], 0
    %12 = vsyncpa [#allocation8], 0
    // Predicated region
    $region2: #{_lambda_.1} parent=1 // pred_check
      _
    $region3: #{_lambda_.1} parent=1 // pred_check_branch
      %14 = sbr.rel (0) target = $region5
    $region4: #{_lambda_.1} parent=1 // pred_region
      _
    $region5: #{_lambda_.1} parent=1 // pred_fallthru
      _
    // Predicated region
    $region6: #{_lambda_.1} parent=1 // pred_check
      _
    $region7: #{_lambda_.1} parent=1 // pred_check_branch
      %16 = sbr.rel (0) target = $region9
    $region8: #{_lambda_.1} parent=1 // pred_region
      %18 = vsyncadd [#allocation3], 0
      %s19 = sshll.u32 %s1, 4
      %s20 = int_to_ptr.hbm [resolvable:$true] %s19
      %s21 = sshll.u32 [#allocation2], 4
      %s22 = int_to_ptr.vmem [resolvable:$true] %s21
      %27 = dma.hbm_to_vmem [thread:$0]  %s20, 92160, %s22, [#allocation3], 320, 320, 20
    $region9: #{_lambda_.1} parent=1 // pred_fallthru
      _
    // Predicated region
    $region10: #{_lambda_.1} parent=1 // pred_check
      _
    $region11: #{_lambda_.1} parent=1 // pred_check_branch
      %29 = sbr.rel (0) target = $region13
    $region12: #{_lambda_.1} parent=1 // pred_region
      %31 = vsyncadd [#allocation5], 0
      %s33 = sshll.u32 %s2, 4
      %s34 = int_to_ptr.hbm [resolvable:$true] %s33
      %s35 = sshll.u32 [#allocation4], 4
      %s36 = int_to_ptr.vmem [resolvable:$true] %s35
      %38 = dma.hbm_to_vmem [thread:$0]  %s34, 80, %s36, [#allocation5]
    $region13: #{_lambda_.1} parent=1 // pred_fallthru
      _
    // Predicated region
    $region14: #{_lambda_.1} parent=1 // pred_check
      _
    $region15: #{_lambda_.1} parent=1 // pred_check_branch
      %40 = sbr.rel (0) target = $region17
    $region16: #{_lambda_.1} parent=1 // pred_region
      %42 = vsyncadd [#allocation5], 0
      %s43 = sshll.u32 %s3, 4
      %s44 = int_to_ptr.hbm [resolvable:$true] %s43
      %s45 = sshll.u32 [#allocation6], 4
      %s46 = int_to_ptr.vmem [resolvable:$true] %s45
      %51 = dma.hbm_to_vmem [thread:$0]  %s44, 5120, %s46, [#allocation5], 64, 64, 4
    $region17: #{_lambda_.1} parent=1 // pred_fallthru
      _
    // Predicated region
    $region18: #{_lambda_.1} parent=1 // pred_check
      _
    $region19: #{_lambda_.1} parent=1 // pred_check_branch
      %53 = sbr.rel (0) target = $region21
    $region20: #{_lambda_.1} parent=1 // pred_region
      %55 = vsyncadd [#allocation8], 0
      %s57 = sshll.u32 %s4, 4
      %s58 = int_to_ptr.hbm [resolvable:$true] %s57
      %s59 = sshll.u32 [#allocation7], 4
      %s60 = int_to_ptr.vmem [resolvable:$true] %s59
      %62 = dma.hbm_to_vmem [thread:$0]  %s58, 16, %s60, [#allocation8]
    $region21: #{_lambda_.1} parent=1 // pred_fallthru
      _
    // Predicated region
    $region22: #{_lambda_.1} parent=1 // pred_check
      _
    $region23: #{_lambda_.1} parent=1 // pred_check_branch
      %64 = sbr.rel (0) target = $region25
    $region24: #{_lambda_.1} parent=1 // pred_region
      %66 = dma.done [#allocation3], 92160
    $region25: #{_lambda_.1} parent=1 // pred_fallthru
      _
    // Predicated region
    $region26: #{_lambda_.1} parent=1 // pred_check
      _
    $region27: #{_lambda_.1} parent=1 // pred_check_branch
      %68 = sbr.rel (0) target = $region29
    $region28: #{_lambda_.1} parent=1 // pred_region
      %70 = dma.done [#allocation5], 80
    $region29: #{_lambda_.1} parent=1 // pred_fallthru
      _
    // Predicated region
    $region30: #{_lambda_.1} parent=1 // pred_check
      _
    $region31: #{_lambda_.1} parent=1 // pred_check_branch
      %72 = sbr.rel (0) target = $region33
    $region32: #{_lambda_.1} parent=1 // pred_region
      %74 = dma.done [#allocation5], 5120
    $region33: #{_lambda_.1} parent=1 // pred_fallthru
      _
    // Predicated region
    $region34: #{_lambda_.1} parent=1 // pred_check
      _
    $region35: #{_lambda_.1} parent=1 // pred_check_branch
      %76 = sbr.rel (0) target = $region37
    $region36: #{_lambda_.1} parent=1 // pred_region
      %78 = dma.done [#allocation8], 16
    $region37: #{_lambda_.1} parent=1 // pred_fallthru
      _
    %v79 = vld [vmem:[%s0] sm:$0xff]
    %v80 = vld [vmem:[%s0 + $0x10] sm:$0xff]
    %v81 = vld [vmem:[%s0 + $0x20] sm:$0xff]
    %v82 = vld [vmem:[%s0 + $0x30] sm:$0xff]
    %v83 = vld [vmem:[%s0 + $0x40] sm:$0xff]
    %v84 = vld [vmem:[%s0 + $0x50] sm:$0xff]
    %v85 = vld [vmem:[%s0 + $0x60] sm:$0xff]
    %v86 = vld [vmem:[%s0 + $0x70] sm:$0xff]
    %v87 = vld [vmem:[%s0 + $0xa0] sm:$0xff]
    %v88 = vld [vmem:[%s0 + $0xb0] sm:$0xff]
    %v89 = vld [vmem:[%s0 + $0xc0] sm:$0xff]
    %v90 = vld [vmem:[%s0 + $0xd0] sm:$0xff]
    %v91 = vld [vmem:[%s0 + $0xe0] sm:$0xff]
    %v92 = vld [vmem:[%s0 + $0xf0] sm:$0xff]
    %v93 = vld [vmem:[%s0 + $0x100] sm:$0xff]
    %v94 = vld [vmem:[%s0 + $0x110] sm:$0xff]
    %v95 = vld [vmem:[#allocation2] sm:$0xff]
    %v96 = vld [vmem:[#allocation2 + $0x8] sm:$0xff]
    %v97 = vld [vmem:[#allocation2 + $0x10] sm:$0xf]
    %v98 = vld [vmem:[#allocation2 + $0x14] sm:$0xff]
    %v99 = vld [vmem:[#allocation2 + $0x1c] sm:$0xff]
    %v100 = vld [vmem:[#allocation2 + $0x24] sm:$0xf]
    %v101 = vld [vmem:[#allocation2 + $0x28] sm:$0xff]
    %v102 = vld [vmem:[#allocation2 + $0x30] sm:$0xff]
    %v103 = vld [vmem:[#allocation2 + $0x38] sm:$0xf]
    %v104 = vld [vmem:[#allocation2 + $0x3c] sm:$0xff]
    %v105 = vld [vmem:[#allocation2 + $0x44] sm:$0xff]
    %v106 = vld [vmem:[#allocation2 + $0x4c] sm:$0xf]
    %v107 = vld [vmem:[#allocation2 + $0x50] sm:$0xff]
    %v108 = vld [vmem:[#allocation2 + $0x58] sm:$0xff]
    %v109 = vld [vmem:[#allocation2 + $0x60] sm:$0xf]
    %v110 = vld [vmem:[#allocation2 + $0x64] sm:$0xff]
    %v111 = vld [vmem:[#allocation2 + $0x6c] sm:$0xff]
    %v112 = vld [vmem:[#allocation2 + $0x74] sm:$0xf]
    %v113 = vld [vmem:[#allocation2 + $0x78] sm:$0xff]
    %v114 = vld [vmem:[#allocation2 + $0x80] sm:$0xff]
    %v115 = vld [vmem:[#allocation2 + $0x88] sm:$0xf]
    %v116 = vld [vmem:[#allocation2 + $0x8c] sm:$0xff]
    %v117 = vld [vmem:[#allocation2 + $0x94] sm:$0xff]
    %v118 = vld [vmem:[#allocation2 + $0x9c] sm:$0xf]
    %v119 = vld [vmem:[#allocation2 + $0xa0] sm:$0xff]
    %v120 = vld [vmem:[#allocation2 + $0xa8] sm:$0xff]
    %v121 = vld [vmem:[#allocation2 + $0xb0] sm:$0xf]
    %v122 = vld [vmem:[#allocation2 + $0xb4] sm:$0xff]
    %v123 = vld [vmem:[#allocation2 + $0xbc] sm:$0xff]
    %v124 = vld [vmem:[#allocation2 + $0xc4] sm:$0xf]
    %v125 = vld [vmem:[#allocation2 + $0xc8] sm:$0xff]
    %v126 = vld [vmem:[#allocation2 + $0xd0] sm:$0xff]
    %v127 = vld [vmem:[#allocation2 + $0xd8] sm:$0xf]
    %v128 = vld [vmem:[#allocation2 + $0xdc] sm:$0xff]
    %v129 = vld [vmem:[#allocation2 + $0xe4] sm:$0xff]
    %v130 = vld [vmem:[#allocation2 + $0xec] sm:$0xf]
    %v131 = vld [vmem:[#allocation2 + $0xf0] sm:$0xff]
    %v132 = vld [vmem:[#allocation2 + $0xf8] sm:$0xff]
    %v133 = vld [vmem:[#allocation2 + $0x100] sm:$0xf]
    %v134 = vld [vmem:[#allocation2 + $0x104] sm:$0xff]
    %v135 = vld [vmem:[#allocation2 + $0x10c] sm:$0xff]
    %v136 = vld [vmem:[#allocation2 + $0x114] sm:$0xf]
    %v137 = vld [vmem:[#allocation2 + $0x118] sm:$0xff]
    %v138 = vld [vmem:[#allocation2 + $0x120] sm:$0xff]
    %v139 = vld [vmem:[#allocation2 + $0x128] sm:$0xf]
    %v140 = vld [vmem:[#allocation2 + $0x12c] sm:$0xff]
    %v141 = vld [vmem:[#allocation2 + $0x134] sm:$0xff]
    %v142 = vld [vmem:[#allocation2 + $0x13c] sm:$0xf]
    %v143 = vld [vmem:[#allocation2 + $0x140] sm:$0xff]
    %v144 = vld [vmem:[#allocation2 + $0x148] sm:$0xff]
    %v145 = vld [vmem:[#allocation2 + $0x150] sm:$0xf]
    %v146 = vld [vmem:[#allocation2 + $0x154] sm:$0xff]
    %v147 = vld [vmem:[#allocation2 + $0x15c] sm:$0xff]
    %v148 = vld [vmem:[#allocation2 + $0x164] sm:$0xf]
    %v149 = vld [vmem:[#allocation2 + $0x168] sm:$0xff]
    %v150 = vld [vmem:[#allocation2 + $0x170] sm:$0xff]
    %v151 = vld [vmem:[#allocation2 + $0x178] sm:$0xf]
    %v152 = vld [vmem:[#allocation2 + $0x17c] sm:$0xff]
    %v153 = vld [vmem:[#allocation2 + $0x184] sm:$0xff]
    %v154 = vld [vmem:[#allocation2 + $0x18c] sm:$0xf]
    %v155 = vld [vmem:[#allocation2 + $0x190] sm:$0xff]
    %v156 = vld [vmem:[#allocation2 + $0x198] sm:$0xff]
    %v157 = vld [vmem:[#allocation2 + $0x1a0] sm:$0xf]
    %v158 = vld [vmem:[#allocation2 + $0x1a4] sm:$0xff]
    %v159 = vld [vmem:[#allocation2 + $0x1ac] sm:$0xff]
    %v160 = vld [vmem:[#allocation2 + $0x1b4] sm:$0xf]
    %v161 = vld [vmem:[#allocation2 + $0x1b8] sm:$0xff]
    %v162 = vld [vmem:[#allocation2 + $0x1c0] sm:$0xff]
    %v163 = vld [vmem:[#allocation2 + $0x1c8] sm:$0xf]
    %v164 = vld [vmem:[#allocation2 + $0x1cc] sm:$0xff]
    %v165 = vld [vmem:[#allocation2 + $0x1d4] sm:$0xff]
    %v166 = vld [vmem:[#allocation2 + $0x1dc] sm:$0xf]
    %v167 = vld [vmem:[#allocation2 + $0x1e0] sm:$0xff]
    %v168 = vld [vmem:[#allocation2 + $0x1e8] sm:$0xff]
    %v169 = vld [vmem:[#allocation2 + $0x1f0] sm:$0xf]
    %v170 = vld [vmem:[#allocation2 + $0x1f4] sm:$0xff]
    %v171 = vld [vmem:[#allocation2 + $0x1fc] sm:$0xff]
    %v172 = vld [vmem:[#allocation2 + $0x204] sm:$0xf]
    %v173 = vld [vmem:[#allocation2 + $0x208] sm:$0xff]
    %v174 = vld [vmem:[#allocation2 + $0x210] sm:$0xff]
    %v175 = vld [vmem:[#allocation2 + $0x218] sm:$0xf]
    %v176 = vld [vmem:[#allocation2 + $0x21c] sm:$0xff]
    %v177 = vld [vmem:[#allocation2 + $0x224] sm:$0xff]
    %v178 = vld [vmem:[#allocation2 + $0x22c] sm:$0xf]
    %v179 = vld [vmem:[#allocation2 + $0x230] sm:$0xff]
    %v180 = vld [vmem:[#allocation2 + $0x238] sm:$0xff]
    %v181 = vld [vmem:[#allocation2 + $0x240] sm:$0xf]
    %v182 = vld [vmem:[#allocation2 + $0x244] sm:$0xff]
    %v183 = vld [vmem:[#allocation2 + $0x24c] sm:$0xff]
    %v184 = vld [vmem:[#allocation2 + $0x254] sm:$0xf]
    %v185 = vld [vmem:[#allocation2 + $0x258] sm:$0xff]
    %v186 = vld [vmem:[#allocation2 + $0x260] sm:$0xff]
    %v187 = vld [vmem:[#allocation2 + $0x268] sm:$0xf]
    %v188 = vld [vmem:[#allocation2 + $0x26c] sm:$0xff]
    %v189 = vld [vmem:[#allocation2 + $0x274] sm:$0xff]
    %v190 = vld [vmem:[#allocation2 + $0x27c] sm:$0xf]
    %v191 = vld [vmem:[%s0 + $0x8] sm:$0x11]
    %v192 = vld [vmem:[%s0 + $0x18] sm:$0x11]
    %v193 = vld [vmem:[%s0 + $0x28] sm:$0x11]
    %v194 = vld [vmem:[%s0 + $0x38] sm:$0x11]
    %v195 = vld [vmem:[%s0 + $0x48] sm:$0x11]
    %v196 = vld [vmem:[%s0 + $0x58] sm:$0x11]
    %v197 = vld [vmem:[%s0 + $0x68] sm:$0x11]
    %v198 = vld [vmem:[%s0 + $0x78] sm:$0x11]
    %v199 = vld [vmem:[%s0 + $0xa8] sm:$0x11]
    %v200 = vld [vmem:[%s0 + $0xb8] sm:$0x11]
    %v201 = vld [vmem:[%s0 + $0xc8] sm:$0x11]
    %v202 = vld [vmem:[%s0 + $0xd8] sm:$0x11]
    %v203 = vld [vmem:[%s0 + $0xe8] sm:$0x11]
    %v204 = vld [vmem:[%s0 + $0xf8] sm:$0x11]
    %v205 = vld [vmem:[%s0 + $0x108] sm:$0x11]
    %v206 = vld [vmem:[%s0 + $0x118] sm:$0x11]
    %vm207 = vsmask.f32 3328
    %vm208 = vsmask.f32 7440
    %vm209 = vmor %vm207, %vm208
    %v211 = vshrl.u32 %v79, 16
    %v213 = vrot.slane %v211, 4
    %v214 = vshll.u32 %v79, 16
    %v216 = vrot.slane %v214, 5
    %v217 = vor.u32 %v213, %v216
    %v218 = vrot.slane %v217, 4
    %v220 = vshll.u32 %v191, 16
    %v222 = vrot.slane %v220, 5
    %v223 = vsel %vm209, %v218, %v222
    %v225 = vshrl.u32 %v80, 16
    %v227 = vrot.slane %v225, 4
    %v228 = vshll.u32 %v80, 16
    %v230 = vrot.slane %v228, 5
    %v231 = vor.u32 %v227, %v230
    %v232 = vrot.slane %v231, 4
    %v234 = vshll.u32 %v192, 16
    %v236 = vrot.slane %v234, 5
    %v237 = vsel %vm209, %v232, %v236
    %v239 = vshrl.u32 %v81, 16
    %v241 = vrot.slane %v239, 4
    %v242 = vshll.u32 %v81, 16
    %v244 = vrot.slane %v242, 5
    %v245 = vor.u32 %v241, %v244
    %v246 = vrot.slane %v245, 4
    %v248 = vshll.u32 %v193, 16
    %v250 = vrot.slane %v248, 5
    %v251 = vsel %vm209, %v246, %v250
    %v253 = vshrl.u32 %v82, 16
    %v255 = vrot.slane %v253, 4
    %v256 = vshll.u32 %v82, 16
    %v258 = vrot.slane %v256, 5
    %v259 = vor.u32 %v255, %v258
    %v260 = vrot.slane %v259, 4
    %v262 = vshll.u32 %v194, 16
    %v264 = vrot.slane %v262, 5
    %v265 = vsel %vm209, %v260, %v264
    %v267 = vshrl.u32 %v83, 16
    %v269 = vrot.slane %v267, 4
    %v270 = vshll.u32 %v83, 16
    %v272 = vrot.slane %v270, 5
    %v273 = vor.u32 %v269, %v272
    %v274 = vrot.slane %v273, 4
    %v276 = vshll.u32 %v195, 16
    %v278 = vrot.slane %v276, 5
    %v279 = vsel %vm209, %v274, %v278
    %v281 = vshrl.u32 %v84, 16
    %v283 = vrot.slane %v281, 4
    %v284 = vshll.u32 %v84, 16
    %v286 = vrot.slane %v284, 5
    %v287 = vor.u32 %v283, %v286
    %v288 = vrot.slane %v287, 4
    %v290 = vshll.u32 %v196, 16
    %v292 = vrot.slane %v290, 5
    %v293 = vsel %vm209, %v288, %v292
    %v295 = vshrl.u32 %v85, 16
    %v297 = vrot.slane %v295, 4
    %v298 = vshll.u32 %v85, 16
    %v300 = vrot.slane %v298, 5
    %v301 = vor.u32 %v297, %v300
    %v302 = vrot.slane %v301, 4
    %v304 = vshll.u32 %v197, 16
    %v306 = vrot.slane %v304, 5
    %v307 = vsel %vm209, %v302, %v306
    %v309 = vshrl.u32 %v86, 16
    %v311 = vrot.slane %v309, 4
    %v312 = vshll.u32 %v86, 16
    %v314 = vrot.slane %v312, 5
    %v315 = vor.u32 %v311, %v314
    %v316 = vrot.slane %v315, 4
    %v318 = vshll.u32 %v198, 16
    %v320 = vrot.slane %v318, 5
    %v321 = vsel %vm209, %v316, %v320
    %v323 = vshrl.u32 %v87, 16
    %v325 = vrot.slane %v323, 4
    %v326 = vshll.u32 %v87, 16
    %v328 = vrot.slane %v326, 5
    %v329 = vor.u32 %v325, %v328
    %v330 = vrot.slane %v329, 4
    %v332 = vshll.u32 %v199, 16
    %v334 = vrot.slane %v332, 5
    %v335 = vsel %vm209, %v330, %v334
    %v337 = vshrl.u32 %v88, 16
    %v339 = vrot.slane %v337, 4
    %v340 = vshll.u32 %v88, 16
    %v342 = vrot.slane %v340, 5
    %v343 = vor.u32 %v339, %v342
    %v344 = vrot.slane %v343, 4
    %v346 = vshll.u32 %v200, 16
    %v348 = vrot.slane %v346, 5
    %v349 = vsel %vm209, %v344, %v348
    %v351 = vshrl.u32 %v89, 16
    %v353 = vrot.slane %v351, 4
    %v354 = vshll.u32 %v89, 16
    %v356 = vrot.slane %v354, 5
    %v357 = vor.u32 %v353, %v356
    %v358 = vrot.slane %v357, 4
    %v360 = vshll.u32 %v201, 16
    %v362 = vrot.slane %v360, 5
    %v363 = vsel %vm209, %v358, %v362
    %v365 = vshrl.u32 %v90, 16
    %v367 = vrot.slane %v365, 4
    %v368 = vshll.u32 %v90, 16
    %v370 = vrot.slane %v368, 5
    %v371 = vor.u32 %v367, %v370
    %v372 = vrot.slane %v371, 4
    %v374 = vshll.u32 %v202, 16
    %v376 = vrot.slane %v374, 5
    %v377 = vsel %vm209, %v372, %v376
    %v379 = vshrl.u32 %v91, 16
    %v381 = vrot.slane %v379, 4
    %v382 = vshll.u32 %v91, 16
    %v384 = vrot.slane %v382, 5
    %v385 = vor.u32 %v381, %v384
    %v386 = vrot.slane %v385, 4
    %v388 = vshll.u32 %v203, 16
    %v390 = vrot.slane %v388, 5
    %v391 = vsel %vm209, %v386, %v390
    %v393 = vshrl.u32 %v92, 16
    %v395 = vrot.slane %v393, 4
    %v396 = vshll.u32 %v92, 16
    %v398 = vrot.slane %v396, 5
    %v399 = vor.u32 %v395, %v398
    %v400 = vrot.slane %v399, 4
    %v402 = vshll.u32 %v204, 16
    %v404 = vrot.slane %v402, 5
    %v405 = vsel %vm209, %v400, %v404
    %v407 = vshrl.u32 %v93, 16
    %v409 = vrot.slane %v407, 4
    %v410 = vshll.u32 %v93, 16
    %v412 = vrot.slane %v410, 5
    %v413 = vor.u32 %v409, %v412
    %v414 = vrot.slane %v413, 4
    %v416 = vshll.u32 %v205, 16
    %v418 = vrot.slane %v416, 5
    %v419 = vsel %vm209, %v414, %v418
    %v421 = vshrl.u32 %v94, 16
    %v423 = vrot.slane %v421, 4
    %v424 = vshll.u32 %v94, 16
    %v426 = vrot.slane %v424, 5
    %v427 = vor.u32 %v423, %v426
    %v428 = vrot.slane %v427, 4
    %v430 = vshll.u32 %v206, 16
    %v432 = vrot.slane %v430, 5
    %v433 = vsel %vm209, %v428, %v432
    %v434 = vld [vmem:[#allocation2 + $0x280] sm:$0xff]
    %v435 = vld [vmem:[#allocation2 + $0x288] sm:$0xff]
    %v436 = vld [vmem:[#allocation2 + $0x290] sm:$0xf]
    %v437 = vld [vmem:[#allocation2 + $0x294] sm:$0xff]
    %v438 = vld [vmem:[#allocation2 + $0x29c] sm:$0xff]
    %v439 = vld [vmem:[#allocation2 + $0x2a4] sm:$0xf]
    %v440 = vld [vmem:[#allocation2 + $0x2a8] sm:$0xff]
    %v441 = vld [vmem:[#allocation2 + $0x2b0] sm:$0xff]
    %v442 = vld [vmem:[#allocation2 + $0x2b8] sm:$0xf]
    %v443 = vld [vmem:[#allocation2 + $0x2bc] sm:$0xff]
    %v444 = vld [vmem:[#allocation2 + $0x2c4] sm:$0xff]
    %v445 = vld [vmem:[#allocation2 + $0x2cc] sm:$0xf]
    %v446 = vld [vmem:[#allocation2 + $0x2d0] sm:$0xff]
    %v447 = vld [vmem:[#allocation2 + $0x2d8] sm:$0xff]
    %v448 = vld [vmem:[#allocation2 + $0x2e0] sm:$0xf]
    %v449 = vld [vmem:[#allocation2 + $0x2e4] sm:$0xff]
    %v450 = vld [vmem:[#allocation2 + $0x2ec] sm:$0xff]
    %v451 = vld [vmem:[#allocation2 + $0x2f4] sm:$0xf]
    %v452 = vld [vmem:[#allocation2 + $0x2f8] sm:$0xff]
    %v453 = vld [vmem:[#allocation2 + $0x300] sm:$0xff]
    %v454 = vld [vmem:[#allocation2 + $0x308] sm:$0xf]
    %v455 = vld [vmem:[#allocation2 + $0x30c] sm:$0xff]
    %v456 = vld [vmem:[#allocation2 + $0x314] sm:$0xff]
    %v457 = vld [vmem:[#allocation2 + $0x31c] sm:$0xf]
    %v458 = vld [vmem:[#allocation2 + $0x320] sm:$0xff]
    %v459 = vld [vmem:[#allocation2 + $0x328] sm:$0xff]
    %v460 = vld [vmem:[#allocation2 + $0x330] sm:$0xf]
    %v461 = vld [vmem:[#allocation2 + $0x334] sm:$0xff]
    %v462 = vld [vmem:[#allocation2 + $0x33c] sm:$0xff]
    %v463 = vld [vmem:[#allocation2 + $0x344] sm:$0xf]
    %v464 = vld [vmem:[#allocation2 + $0x348] sm:$0xff]
    %v465 = vld [vmem:[#allocation2 + $0x350] sm:$0xff]
    %v466 = vld [vmem:[#allocation2 + $0x358] sm:$0xf]
    %v467 = vld [vmem:[#allocation2 + $0x35c] sm:$0xff]
    %v468 = vld [vmem:[#allocation2 + $0x364] sm:$0xff]
    %v469 = vld [vmem:[#allocation2 + $0x36c] sm:$0xf]
    %v470 = vld [vmem:[#allocation2 + $0x370] sm:$0xff]
    %v471 = vld [vmem:[#allocation2 + $0x378] sm:$0xff]
    %v472 = vld [vmem:[#allocation2 + $0x380] sm:$0xf]
    %v473 = vld [vmem:[#allocation2 + $0x384] sm:$0xff]
    %v474 = vld [vmem:[#allocation2 + $0x38c] sm:$0xff]
    %v475 = vld [vmem:[#allocation2 + $0x394] sm:$0xf]
    %v476 = vld [vmem:[#allocation2 + $0x398] sm:$0xff]
    %v477 = vld [vmem:[#allocation2 + $0x3a0] sm:$0xff]
    %v478 = vld [vmem:[#allocation2 + $0x3a8] sm:$0xf]
    %v479 = vld [vmem:[#allocation2 + $0x3ac] sm:$0xff]
    %v480 = vld [vmem:[#allocation2 + $0x3b4] sm:$0xff]
    %v481 = vld [vmem:[#allocation2 + $0x3bc] sm:$0xf]
    %v482 = vld [vmem:[#allocation2 + $0x3c0] sm:$0xff]
    %v483 = vld [vmem:[#allocation2 + $0x3c8] sm:$0xff]
    %v484 = vld [vmem:[#allocation2 + $0x3d0] sm:$0xf]
    %v485 = vld [vmem:[#allocation2 + $0x3d4] sm:$0xff]
    %v486 = vld [vmem:[#allocation2 + $0x3dc] sm:$0xff]
    %v487 = vld [vmem:[#allocation2 + $0x3e4] sm:$0xf]
    %v488 = vld [vmem:[#allocation2 + $0x3e8] sm:$0xff]
    %v489 = vld [vmem:[#allocation2 + $0x3f0] sm:$0xff]
    %v490 = vld [vmem:[#allocation2 + $0x3f8] sm:$0xf]
    %v491 = vld [vmem:[#allocation2 + $0x3fc] sm:$0xff]
    %v492 = vld [vmem:[#allocation2 + $0x404] sm:$0xff]
    %v493 = vld [vmem:[#allocation2 + $0x40c] sm:$0xf]
    %v494 = vld [vmem:[#allocation2 + $0x410] sm:$0xff]
    %v495 = vld [vmem:[#allocation2 + $0x418] sm:$0xff]
    %v496 = vld [vmem:[#allocation2 + $0x420] sm:$0xf]
    %v497 = vld [vmem:[#allocation2 + $0x424] sm:$0xff]
    %v498 = vld [vmem:[#allocation2 + $0x42c] sm:$0xff]
    %v499 = vld [vmem:[#allocation2 + $0x434] sm:$0xf]
    %v500 = vld [vmem:[#allocation2 + $0x438] sm:$0xff]
    %v501 = vld [vmem:[#allocation2 + $0x440] sm:$0xff]
    %v502 = vld [vmem:[#allocation2 + $0x448] sm:$0xf]
    %v503 = vld [vmem:[#allocation2 + $0x44c] sm:$0xff]
    %v504 = vld [vmem:[#allocation2 + $0x454] sm:$0xff]
    %v505 = vld [vmem:[#allocation2 + $0x45c] sm:$0xf]
    %v506 = vld [vmem:[#allocation2 + $0x460] sm:$0xff]
    %v507 = vld [vmem:[#allocation2 + $0x468] sm:$0xff]
    %v508 = vld [vmem:[#allocation2 + $0x470] sm:$0xf]
    %v509 = vld [vmem:[#allocation2 + $0x474] sm:$0xff]
    %v510 = vld [vmem:[#allocation2 + $0x47c] sm:$0xff]
    %v511 = vld [vmem:[#allocation2 + $0x484] sm:$0xf]
    %v512 = vld [vmem:[#allocation2 + $0x488] sm:$0xff]
    %v513 = vld [vmem:[#allocation2 + $0x490] sm:$0xff]
    %v514 = vld [vmem:[#allocation2 + $0x498] sm:$0xf]
    %v515 = vld [vmem:[#allocation2 + $0x49c] sm:$0xff]
    %v516 = vld [vmem:[#allocation2 + $0x4a4] sm:$0xff]
    %v517 = vld [vmem:[#allocation2 + $0x4ac] sm:$0xf]
    %v518 = vld [vmem:[#allocation2 + $0x4b0] sm:$0xff]
    %v519 = vld [vmem:[#allocation2 + $0x4b8] sm:$0xff]
    %v520 = vld [vmem:[#allocation2 + $0x4c0] sm:$0xf]
    %v521 = vld [vmem:[#allocation2 + $0x4c4] sm:$0xff]
    %v522 = vld [vmem:[#allocation2 + $0x4cc] sm:$0xff]
    %v523 = vld [vmem:[#allocation2 + $0x4d4] sm:$0xf]
    %v524 = vld [vmem:[#allocation2 + $0x4d8] sm:$0xff]
    %v525 = vld [vmem:[#allocation2 + $0x4e0] sm:$0xff]
    %v526 = vld [vmem:[#allocation2 + $0x4e8] sm:$0xf]
    %v527 = vld [vmem:[#allocation2 + $0x4ec] sm:$0xff]
    %v528 = vld [vmem:[#allocation2 + $0x4f4] sm:$0xff]
    %v529 = vld [vmem:[#allocation2 + $0x4fc] sm:$0xf]
    %v530 = vunpack.c.l.b16 %v223
    %v531 = vunpack.c.h.b16 %v223
    %v532 = vunpack.c.l.b16 %v237
    %v533 = vunpack.c.h.b16 %v237
    %v534 = vunpack.c.l.b16 %v251
    %v535 = vunpack.c.h.b16 %v251
    %v536 = vunpack.c.l.b16 %v265
    %v537 = vunpack.c.h.b16 %v265
    %v538 = vunpack.c.l.b16 %v279
    %v539 = vunpack.c.h.b16 %v279
    %v540 = vunpack.c.l.b16 %v293
    %v541 = vunpack.c.h.b16 %v293
    %v542 = vunpack.c.l.b16 %v307
    %v543 = vunpack.c.h.b16 %v307
    %v544 = vunpack.c.l.b16 %v321
    %v545 = vunpack.c.h.b16 %v321
    %v546 = vunpack.c.l.b16 %v335
    %v547 = vunpack.c.h.b16 %v335
    %v548 = vunpack.c.l.b16 %v349
    %v549 = vunpack.c.h.b16 %v349
    %v550 = vunpack.c.l.b16 %v363
    %v551 = vunpack.c.h.b16 %v363
    %v552 = vunpack.c.l.b16 %v377
    %v553 = vunpack.c.h.b16 %v377
    %v554 = vunpack.c.l.b16 %v391
    %v555 = vunpack.c.h.b16 %v391
    %v556 = vunpack.c.l.b16 %v405
    %v557 = vunpack.c.h.b16 %v405
    %v558 = vunpack.c.l.b16 %v419
    %v559 = vunpack.c.h.b16 %v419
    %v560 = vunpack.c.l.b16 %v433
    %v561 = vunpack.c.h.b16 %v433
    %v562 = vpack.c.b16 %v532, %v530
    %v563 = vpack.c.b16 %v533, %v531
    %v564 = vpack.c.b16 %v536, %v534
    %v565 = vpack.c.b16 %v537, %v535
    %v566 = vpack.c.b16 %v540, %v538
    %v567 = vpack.c.b16 %v541, %v539
    %v568 = vpack.c.b16 %v544, %v542
    %v569 = vpack.c.b16 %v545, %v543
    %v570 = vpack.c.b16 %v548, %v546
    %v571 = vpack.c.b16 %v549, %v547
    %v572 = vpack.c.b16 %v552, %v550
    %v573 = vpack.c.b16 %v553, %v551
    %v574 = vpack.c.b16 %v556, %v554
    %v575 = vpack.c.b16 %v557, %v555
    %v576 = vpack.c.b16 %v560, %v558
    %v577 = vpack.c.b16 %v561, %v559
    %v690 = vunpack.c.l.b16 %v434
    %v691 = vunpack.c.h.b16 %v434
    %v692 = vunpack.c.l.b16 %v435
    %v693 = vunpack.c.h.b16 %v435
    %v694 = vunpack.c.l.b16 %v436
    %v695 = vunpack.c.l.b16 %v437
    %v696 = vunpack.c.h.b16 %v437
    %v697 = vunpack.c.l.b16 %v438
    %v698 = vunpack.c.h.b16 %v438
    %v699 = vunpack.c.l.b16 %v439
    %v700 = vunpack.c.l.b16 %v440
    %v701 = vunpack.c.h.b16 %v440
    %v702 = vunpack.c.l.b16 %v441
    %v703 = vunpack.c.h.b16 %v441
    %v704 = vunpack.c.l.b16 %v442
    %v705 = vunpack.c.l.b16 %v443
    %v706 = vunpack.c.h.b16 %v443
    %v707 = vunpack.c.l.b16 %v444
    %v708 = vunpack.c.h.b16 %v444
    %v709 = vunpack.c.l.b16 %v445
    %v710 = vunpack.c.l.b16 %v446
    %v711 = vunpack.c.h.b16 %v446
    %v712 = vunpack.c.l.b16 %v447
    %v713 = vunpack.c.h.b16 %v447
    %v714 = vunpack.c.l.b16 %v448
    %v715 = vunpack.c.l.b16 %v449
    %v716 = vunpack.c.h.b16 %v449
    %v717 = vunpack.c.l.b16 %v450
    %v718 = vunpack.c.h.b16 %v450
    %v719 = vunpack.c.l.b16 %v451
    %v720 = vunpack.c.l.b16 %v452
    %v721 = vunpack.c.h.b16 %v452
    %v722 = vunpack.c.l.b16 %v453
    %v723 = vunpack.c.h.b16 %v453
    %v724 = vunpack.c.l.b16 %v454
    %v725 = vunpack.c.l.b16 %v455
    %v726 = vunpack.c.h.b16 %v455
    %v727 = vunpack.c.l.b16 %v456
    %v728 = vunpack.c.h.b16 %v456
    %v729 = vunpack.c.l.b16 %v457
    %v730 = vunpack.c.l.b16 %v458
    %v731 = vunpack.c.h.b16 %v458
    %v732 = vunpack.c.l.b16 %v459
    %v733 = vunpack.c.h.b16 %v459
    %v734 = vunpack.c.l.b16 %v460
    %v735 = vunpack.c.l.b16 %v461
    %v736 = vunpack.c.h.b16 %v461
    %v737 = vunpack.c.l.b16 %v462
    %v738 = vunpack.c.h.b16 %v462
    %v739 = vunpack.c.l.b16 %v463
    %v740 = vunpack.c.l.b16 %v464
    %v741 = vunpack.c.h.b16 %v464
    %v742 = vunpack.c.l.b16 %v465
    %v743 = vunpack.c.h.b16 %v465
    %v744 = vunpack.c.l.b16 %v466
    %v745 = vunpack.c.l.b16 %v467
    %v746 = vunpack.c.h.b16 %v467
    %v747 = vunpack.c.l.b16 %v468
    %v748 = vunpack.c.h.b16 %v468
    %v749 = vunpack.c.l.b16 %v469
    %v750 = vunpack.c.l.b16 %v470
    %v751 = vunpack.c.h.b16 %v470
    %v752 = vunpack.c.l.b16 %v471
    %v753 = vunpack.c.h.b16 %v471
    %v754 = vunpack.c.l.b16 %v472
    %v755 = vunpack.c.l.b16 %v473
    %v756 = vunpack.c.h.b16 %v473
    %v757 = vunpack.c.l.b16 %v474
    %v758 = vunpack.c.h.b16 %v474
    %v759 = vunpack.c.l.b16 %v475
    %v760 = vunpack.c.l.b16 %v476
    %v761 = vunpack.c.h.b16 %v476
    %v762 = vunpack.c.l.b16 %v477
    %v763 = vunpack.c.h.b16 %v477
    %v764 = vunpack.c.l.b16 %v478
    %v765 = vunpack.c.l.b16 %v479
    %v766 = vunpack.c.h.b16 %v479
    %v767 = vunpack.c.l.b16 %v480
    %v768 = vunpack.c.h.b16 %v480
    %v769 = vunpack.c.l.b16 %v481
    %v770 = vunpack.c.l.b16 %v482
    %v771 = vunpack.c.h.b16 %v482
    %v772 = vunpack.c.l.b16 %v483
    %v773 = vunpack.c.h.b16 %v483
    %v774 = vunpack.c.l.b16 %v484
    %v775 = vunpack.c.l.b16 %v485
    %v776 = vunpack.c.h.b16 %v485
    %v777 = vunpack.c.l.b16 %v486
    %v778 = vunpack.c.h.b16 %v486
    %v779 = vunpack.c.l.b16 %v487
    %v780 = vunpack.c.l.b16 %v488
    %v781 = vunpack.c.h.b16 %v488
    %v782 = vunpack.c.l.b16 %v489
    %v783 = vunpack.c.h.b16 %v489
    %v784 = vunpack.c.l.b16 %v490
    %v785 = vunpack.c.l.b16 %v491
    %v786 = vunpack.c.h.b16 %v491
    %v787 = vunpack.c.l.b16 %v492
    %v788 = vunpack.c.h.b16 %v492
    %v789 = vunpack.c.l.b16 %v493
    %v790 = vunpack.c.l.b16 %v494
    %v791 = vunpack.c.h.b16 %v494
    %v792 = vunpack.c.l.b16 %v495
    %v793 = vunpack.c.h.b16 %v495
    %v794 = vunpack.c.l.b16 %v496
    %v795 = vunpack.c.l.b16 %v497
    %v796 = vunpack.c.h.b16 %v497
    %v797 = vunpack.c.l.b16 %v498
    %v798 = vunpack.c.h.b16 %v498
    %v799 = vunpack.c.l.b16 %v499
    %v800 = vunpack.c.l.b16 %v500
    %v801 = vunpack.c.h.b16 %v500
    %v802 = vunpack.c.l.b16 %v501
    %v803 = vunpack.c.h.b16 %v501
    %v804 = vunpack.c.l.b16 %v502
    %v805 = vunpack.c.l.b16 %v503
    %v806 = vunpack.c.h.b16 %v503
    %v807 = vunpack.c.l.b16 %v504
    %v808 = vunpack.c.h.b16 %v504
    %v809 = vunpack.c.l.b16 %v505
    %v810 = vunpack.c.l.b16 %v506
    %v811 = vunpack.c.h.b16 %v506
    %v812 = vunpack.c.l.b16 %v507
    %v813 = vunpack.c.h.b16 %v507
    %v814 = vunpack.c.l.b16 %v508
    %v815 = vunpack.c.l.b16 %v509
    %v816 = vunpack.c.h.b16 %v509
    %v817 = vunpack.c.l.b16 %v510
    %v818 = vunpack.c.h.b16 %v510
    %v819 = vunpack.c.l.b16 %v511
    %v820 = vunpack.c.l.b16 %v512
    %v821 = vunpack.c.h.b16 %v512
    %v822 = vunpack.c.l.b16 %v513
    %v823 = vunpack.c.h.b16 %v513
    %v824 = vunpack.c.l.b16 %v514
    %v825 = vunpack.c.l.b16 %v515
    %v826 = vunpack.c.h.b16 %v515
    %v827 = vunpack.c.l.b16 %v516
    %v828 = vunpack.c.h.b16 %v516
    %v829 = vunpack.c.l.b16 %v517
    %v830 = vunpack.c.l.b16 %v518
    %v831 = vunpack.c.h.b16 %v518
    %v832 = vunpack.c.l.b16 %v519
    %v833 = vunpack.c.h.b16 %v519
    %v834 = vunpack.c.l.b16 %v520
    %v835 = vunpack.c.l.b16 %v521
    %v836 = vunpack.c.h.b16 %v521
    %v837 = vunpack.c.l.b16 %v522
    %v838 = vunpack.c.h.b16 %v522
    %v839 = vunpack.c.l.b16 %v523
    %v840 = vunpack.c.l.b16 %v524
    %v841 = vunpack.c.h.b16 %v524
    %v842 = vunpack.c.l.b16 %v525
    %v843 = vunpack.c.h.b16 %v525
    %v844 = vunpack.c.l.b16 %v526
    %v845 = vunpack.c.l.b16 %v527
    %v846 = vunpack.c.h.b16 %v527
    %v847 = vunpack.c.l.b16 %v528
    %v848 = vunpack.c.h.b16 %v528
    %v849 = vunpack.c.l.b16 %v529
    %v850 = vpack.c.b16 %v695, %v690
    %v851 = vpack.c.b16 %v696, %v691
    %v852 = vpack.c.b16 %v697, %v692
    %v853 = vpack.c.b16 %v698, %v693
    %v854 = vpack.c.b16 %v699, %v694
    %v855 = vpack.c.b16 %v705, %v700
    %v856 = vpack.c.b16 %v706, %v701
    %v857 = vpack.c.b16 %v707, %v702
    %v858 = vpack.c.b16 %v708, %v703
    %v859 = vpack.c.b16 %v709, %v704
    %v860 = vpack.c.b16 %v715, %v710
    %v861 = vpack.c.b16 %v716, %v711
    %v862 = vpack.c.b16 %v717, %v712
    %v863 = vpack.c.b16 %v718, %v713
    %v864 = vpack.c.b16 %v719, %v714
    %v865 = vpack.c.b16 %v725, %v720
    %v866 = vpack.c.b16 %v726, %v721
    %v867 = vpack.c.b16 %v727, %v722
    %v868 = vpack.c.b16 %v728, %v723
    %v869 = vpack.c.b16 %v729, %v724
    %v870 = vpack.c.b16 %v735, %v730
    %v871 = vpack.c.b16 %v736, %v731
    %v872 = vpack.c.b16 %v737, %v732
    %v873 = vpack.c.b16 %v738, %v733
    %v874 = vpack.c.b16 %v739, %v734
    %v875 = vpack.c.b16 %v745, %v740
    %v876 = vpack.c.b16 %v746, %v741
    %v877 = vpack.c.b16 %v747, %v742
    %v878 = vpack.c.b16 %v748, %v743
    %v879 = vpack.c.b16 %v749, %v744
    %v880 = vpack.c.b16 %v755, %v750
    %v881 = vpack.c.b16 %v756, %v751
    %v882 = vpack.c.b16 %v757, %v752
    %v883 = vpack.c.b16 %v758, %v753
    %v884 = vpack.c.b16 %v759, %v754
    %v885 = vpack.c.b16 %v765, %v760
    %v886 = vpack.c.b16 %v766, %v761
    %v887 = vpack.c.b16 %v767, %v762
    %v888 = vpack.c.b16 %v768, %v763
    %v889 = vpack.c.b16 %v769, %v764
    %v890 = vpack.c.b16 %v775, %v770
    %v891 = vpack.c.b16 %v776, %v771
    %v892 = vpack.c.b16 %v777, %v772
    %v893 = vpack.c.b16 %v778, %v773
    %v894 = vpack.c.b16 %v779, %v774
    %v895 = vpack.c.b16 %v785, %v780
    %v896 = vpack.c.b16 %v786, %v781
    %v897 = vpack.c.b16 %v787, %v782
    %v898 = vpack.c.b16 %v788, %v783
    %v899 = vpack.c.b16 %v789, %v784
    %v900 = vpack.c.b16 %v795, %v790
    %v901 = vpack.c.b16 %v796, %v791
    %v902 = vpack.c.b16 %v797, %v792
    %v903 = vpack.c.b16 %v798, %v793
    %v904 = vpack.c.b16 %v799, %v794
    %v905 = vpack.c.b16 %v805, %v800
    %v906 = vpack.c.b16 %v806, %v801
    %v907 = vpack.c.b16 %v807, %v802
    %v908 = vpack.c.b16 %v808, %v803
    %v909 = vpack.c.b16 %v809, %v804
    %v910 = vpack.c.b16 %v815, %v810
    %v911 = vpack.c.b16 %v816, %v811
    %v912 = vpack.c.b16 %v817, %v812
    %v913 = vpack.c.b16 %v818, %v813
    %v914 = vpack.c.b16 %v819, %v814
    %v915 = vpack.c.b16 %v825, %v820
    %v916 = vpack.c.b16 %v826, %v821
    %v917 = vpack.c.b16 %v827, %v822
    %v918 = vpack.c.b16 %v828, %v823
    %v919 = vpack.c.b16 %v829, %v824
    %v920 = vpack.c.b16 %v835, %v830
    %v921 = vpack.c.b16 %v836, %v831
    %v922 = vpack.c.b16 %v837, %v832
    %v923 = vpack.c.b16 %v838, %v833
    %v924 = vpack.c.b16 %v839, %v834
    %v925 = vpack.c.b16 %v845, %v840
    %v926 = vpack.c.b16 %v846, %v841
    %v927 = vpack.c.b16 %v847, %v842
    %v928 = vpack.c.b16 %v848, %v843
    %v929 = vpack.c.b16 %v849, %v844
    %1010 = vmatpush.bf16.msra.mxu0 %v885
    %1011 = vmatpush.bf16.msra.mxu0 %v880
    %1012 = vmatpush.bf16.msra.mxu0 %v875
    %1013 = vmatpush.bf16.msra.mxu0 %v870
    %1014 = vmatpush.bf16.msra.mxu0 %v865
    %1015 = vmatpush.bf16.msra.mxu0 %v860
    %1016 = vmatpush.bf16.msra.mxu0 %v855
    %1017 = vmatpush.bf16.msra.mxu0 %v850
    %1018 = vmatmul.bf16.gmra.mxu0 %v562
    %v1019 = vpop.f32.mrf.mxu0
    %v1020 = vadd.f32 0.0, %v1019
    %v1021 = vpop.f32.mrf.mxu0
    %v1022 = vadd.f32 0.0, %v1021
    %1023 = vmatmul.bf16.gmra.mxu0 %v564
    %v1024 = vpop.f32.mrf.mxu0
    %v1025 = vadd.f32 0.0, %v1024
    %v1026 = vpop.f32.mrf.mxu0
    %v1027 = vadd.f32 0.0, %v1026
    %1028 = vmatmul.bf16.gmra.mxu0 %v566
    %v1029 = vpop.f32.mrf.mxu0
    %v1030 = vadd.f32 0.0, %v1029
    %v1031 = vpop.f32.mrf.mxu0
    %v1032 = vadd.f32 0.0, %v1031
    %1033 = vmatmul.bf16.gmra.mxu0 %v568
    %v1034 = vpop.f32.mrf.mxu0
    %v1035 = vadd.f32 0.0, %v1034
    %v1036 = vpop.f32.mrf.mxu0
    %v1037 = vadd.f32 0.0, %v1036
    %1038 = vmatmul.bf16.gmra.mxu0 %v570
    %v1039 = vpop.f32.mrf.mxu0
    %v1040 = vadd.f32 0.0, %v1039
    %v1041 = vpop.f32.mrf.mxu0
    %v1042 = vadd.f32 0.0, %v1041
    %1043 = vmatmul.bf16.gmra.mxu0 %v572
    %v1044 = vpop.f32.mrf.mxu0
    %v1045 = vadd.f32 0.0, %v1044
    %v1046 = vpop.f32.mrf.mxu0
    %v1047 = vadd.f32 0.0, %v1046
    %1048 = vmatmul.bf16.gmra.mxu0 %v574
    %v1049 = vpop.f32.mrf.mxu0
    %v1050 = vadd.f32 0.0, %v1049
    %v1051 = vpop.f32.mrf.mxu0
    %v1052 = vadd.f32 0.0, %v1051
    %1053 = vmatmul.bf16.gmra.mxu0 %v576
    %v1054 = vpop.f32.mrf.mxu0
    %v1055 = vadd.f32 0.0, %v1054
    %v1056 = vpop.f32.mrf.mxu0
    %v1057 = vadd.f32 0.0, %v1056
    %1058 = vdwg.mxu0
    %1059 = vmatpush.bf16.msra.mxu0 %v925
    %1060 = vmatpush.bf16.msra.mxu0 %v920
    %1061 = vmatpush.bf16.msra.mxu0 %v915
    %1062 = vmatpush.bf16.msra.mxu0 %v910
    %1063 = vmatpush.bf16.msra.mxu0 %v905
    %1064 = vmatpush.bf16.msra.mxu0 %v900
    %1065 = vmatpush.bf16.msra.mxu0 %v895
    %1066 = vmatpush.bf16.msra.mxu0 %v890
    %1067 = vmatmul.bf16.gmra.mxu0 %v563
    %v1068 = vpop.f32.mrf.mxu0
    %v1069 = vadd.f32 %v1020, %v1068
    %v1070 = vpop.f32.mrf.mxu0
    %v1071 = vadd.f32 %v1022, %v1070
    %1072 = vmatmul.bf16.gmra.mxu0 %v565
    %v1073 = vpop.f32.mrf.mxu0
    %v1074 = vadd.f32 %v1025, %v1073
    %v1075 = vpop.f32.mrf.mxu0
    %v1076 = vadd.f32 %v1027, %v1075
    %1077 = vmatmul.bf16.gmra.mxu0 %v567
    %v1078 = vpop.f32.mrf.mxu0
    %v1079 = vadd.f32 %v1030, %v1078
    %v1080 = vpop.f32.mrf.mxu0
    %v1081 = vadd.f32 %v1032, %v1080
    %1082 = vmatmul.bf16.gmra.mxu0 %v569
    %v1083 = vpop.f32.mrf.mxu0
    %v1084 = vadd.f32 %v1035, %v1083
    %v1085 = vpop.f32.mrf.mxu0
    %v1086 = vadd.f32 %v1037, %v1085
    %1087 = vmatmul.bf16.gmra.mxu0 %v571
    %v1088 = vpop.f32.mrf.mxu0
    %v1089 = vadd.f32 %v1040, %v1088
    %v1090 = vpop.f32.mrf.mxu0
    %v1091 = vadd.f32 %v1042, %v1090
    %1092 = vmatmul.bf16.gmra.mxu0 %v573
    %v1093 = vpop.f32.mrf.mxu0
    %v1094 = vadd.f32 %v1045, %v1093
    %v1095 = vpop.f32.mrf.mxu0
    %v1096 = vadd.f32 %v1047, %v1095
    %1097 = vmatmul.bf16.gmra.mxu0 %v575
    %v1098 = vpop.f32.mrf.mxu0
    %v1099 = vadd.f32 %v1050, %v1098
    %v1100 = vpop.f32.mrf.mxu0
    %v1101 = vadd.f32 %v1052, %v1100
    %1102 = vmatmul.bf16.gmra.mxu0 %v577
    %v1103 = vpop.f32.mrf.mxu0
    %v1104 = vadd.f32 %v1055, %v1103
    %v1105 = vpop.f32.mrf.mxu0
    %v1106 = vadd.f32 %v1057, %v1105
    %1107 = vdwg.mxu0
    %1108 = vmatpush.bf16.msra.mxu0 %v886
    %1109 = vmatpush.bf16.msra.mxu0 %v881
    %1110 = vmatpush.bf16.msra.mxu0 %v876
    %1111 = vmatpush.bf16.msra.mxu0 %v871
    %1112 = vmatpush.bf16.msra.mxu0 %v866
    %1113 = vmatpush.bf16.msra.mxu0 %v861
    %1114 = vmatpush.bf16.msra.mxu0 %v856
    %1115 = vmatpush.bf16.msra.mxu0 %v851
    %1116 = vmatmul.bf16.gmra.mxu0 %v562
    %v1117 = vpop.f32.mrf.mxu0
    %v1118 = vadd.f32 0.0, %v1117
    %v1119 = vpop.f32.mrf.mxu0
    %v1120 = vadd.f32 0.0, %v1119
    %1121 = vmatmul.bf16.gmra.mxu0 %v564
    %v1122 = vpop.f32.mrf.mxu0
    %v1123 = vadd.f32 0.0, %v1122
    %v1124 = vpop.f32.mrf.mxu0
    %v1125 = vadd.f32 0.0, %v1124
    %1126 = vmatmul.bf16.gmra.mxu0 %v566
    %v1127 = vpop.f32.mrf.mxu0
    %v1128 = vadd.f32 0.0, %v1127
    %v1129 = vpop.f32.mrf.mxu0
    %v1130 = vadd.f32 0.0, %v1129
    %1131 = vmatmul.bf16.gmra.mxu0 %v568
    %v1132 = vpop.f32.mrf.mxu0
    %v1133 = vadd.f32 0.0, %v1132
    %v1134 = vpop.f32.mrf.mxu0
    %v1135 = vadd.f32 0.0, %v1134
    %1136 = vmatmul.bf16.gmra.mxu0 %v570
    %v1137 = vpop.f32.mrf.mxu0
    %v1138 = vadd.f32 0.0, %v1137
    %v1139 = vpop.f32.mrf.mxu0
    %v1140 = vadd.f32 0.0, %v1139
    %1141 = vmatmul.bf16.gmra.mxu0 %v572
    %v1142 = vpop.f32.mrf.mxu0
    %v1143 = vadd.f32 0.0, %v1142
    %v1144 = vpop.f32.mrf.mxu0
    %v1145 = vadd.f32 0.0, %v1144
    %1146 = vmatmul.bf16.gmra.mxu0 %v574
    %v1147 = vpop.f32.mrf.mxu0
    %v1148 = vadd.f32 0.0, %v1147
    %v1149 = vpop.f32.mrf.mxu0
    %v1150 = vadd.f32 0.0, %v1149
    %1151 = vmatmul.bf16.gmra.mxu0 %v576
    %v1152 = vpop.f32.mrf.mxu0
    %v1153 = vadd.f32 0.0, %v1152
    %v1154 = vpop.f32.mrf.mxu0
    %v1155 = vadd.f32 0.0, %v1154
    %1156 = vdwg.mxu0
    %1157 = vmatpush.bf16.msra.mxu0 %v926
    %1158 = vmatpush.bf16.msra.mxu0 %v921
    %1159 = vmatpush.bf16.msra.mxu0 %v916
    %1160 = vmatpush.bf16.msra.mxu0 %v911
    %1161 = vmatpush.bf16.msra.mxu0 %v906
    %1162 = vmatpush.bf16.msra.mxu0 %v901
    %1163 = vmatpush.bf16.msra.mxu0 %v896
    %1164 = vmatpush.bf16.msra.mxu0 %v891
    %1165 = vmatmul.bf16.gmra.mxu0 %v563
    %v1166 = vpop.f32.mrf.mxu0
    %v1167 = vadd.f32 %v1118, %v1166
    %v1168 = vpop.f32.mrf.mxu0
    %v1169 = vadd.f32 %v1120, %v1168
    %1170 = vmatmul.bf16.gmra.mxu0 %v565
    %v1171 = vpop.f32.mrf.mxu0
    %v1172 = vadd.f32 %v1123, %v1171
    %v1173 = vpop.f32.mrf.mxu0
    %v1174 = vadd.f32 %v1125, %v1173
    %1175 = vmatmul.bf16.gmra.mxu0 %v567
    %v1176 = vpop.f32.mrf.mxu0
    %v1177 = vadd.f32 %v1128, %v1176
    %v1178 = vpop.f32.mrf.mxu0
    %v1179 = vadd.f32 %v1130, %v1178
    %1180 = vmatmul.bf16.gmra.mxu0 %v569
    %v1181 = vpop.f32.mrf.mxu0
    %v1182 = vadd.f32 %v1133, %v1181
    %v1183 = vpop.f32.mrf.mxu0
    %v1184 = vadd.f32 %v1135, %v1183
    %1185 = vmatmul.bf16.gmra.mxu0 %v571
    %v1186 = vpop.f32.mrf.mxu0
    %v1187 = vadd.f32 %v1138, %v1186
    %v1188 = vpop.f32.mrf.mxu0
    %v1189 = vadd.f32 %v1140, %v1188
    %1190 = vmatmul.bf16.gmra.mxu0 %v573
    %v1191 = vpop.f32.mrf.mxu0
    %v1192 = vadd.f32 %v1143, %v1191
    %v1193 = vpop.f32.mrf.mxu0
    %v1194 = vadd.f32 %v1145, %v1193
    %1195 = vmatmul.bf16.gmra.mxu0 %v575
    %v1196 = vpop.f32.mrf.mxu0
    %v1197 = vadd.f32 %v1148, %v1196
    %v1198 = vpop.f32.mrf.mxu0
    %v1199 = vadd.f32 %v1150, %v1198
    %1200 = vmatmul.bf16.gmra.mxu0 %v577
    %v1201 = vpop.f32.mrf.mxu0
    %v1202 = vadd.f32 %v1153, %v1201
    %v1203 = vpop.f32.mrf.mxu0
    %v1204 = vadd.f32 %v1155, %v1203
    %1205 = vdwg.mxu0
    %1206 = vmatpush.bf16.msra.mxu0 %v887
    %1207 = vmatpush.bf16.msra.mxu0 %v882
    %1208 = vmatpush.bf16.msra.mxu0 %v877
    %1209 = vmatpush.bf16.msra.mxu0 %v872
    %1210 = vmatpush.bf16.msra.mxu0 %v867
    %1211 = vmatpush.bf16.msra.mxu0 %v862
    %1212 = vmatpush.bf16.msra.mxu0 %v857
    %1213 = vmatpush.bf16.msra.mxu0 %v852
    %1214 = vmatmul.bf16.gmra.mxu0 %v562
    %v1215 = vpop.f32.mrf.mxu0
    %v1216 = vadd.f32 0.0, %v1215
    %v1217 = vpop.f32.mrf.mxu0
    %v1218 = vadd.f32 0.0, %v1217
    %1219 = vmatmul.bf16.gmra.mxu0 %v564
    %v1220 = vpop.f32.mrf.mxu0
    %v1221 = vadd.f32 0.0, %v1220
    %v1222 = vpop.f32.mrf.mxu0
    %v1223 = vadd.f32 0.0, %v1222
    %1224 = vmatmul.bf16.gmra.mxu0 %v566
    %v1225 = vpop.f32.mrf.mxu0
    %v1226 = vadd.f32 0.0, %v1225
    %v1227 = vpop.f32.mrf.mxu0
    %v1228 = vadd.f32 0.0, %v1227
    %1229 = vmatmul.bf16.gmra.mxu0 %v568
    %v1230 = vpop.f32.mrf.mxu0
    %v1231 = vadd.f32 0.0, %v1230
    %v1232 = vpop.f32.mrf.mxu0
    %v1233 = vadd.f32 0.0, %v1232
    %1234 = vmatmul.bf16.gmra.mxu0 %v570
    %v1235 = vpop.f32.mrf.mxu0
    %v1236 = vadd.f32 0.0, %v1235
    %v1237 = vpop.f32.mrf.mxu0
    %v1238 = vadd.f32 0.0, %v1237
    %1239 = vmatmul.bf16.gmra.mxu0 %v572
    %v1240 = vpop.f32.mrf.mxu0
    %v1241 = vadd.f32 0.0, %v1240
    %v1242 = vpop.f32.mrf.mxu0
    %v1243 = vadd.f32 0.0, %v1242
    %1244 = vmatmul.bf16.gmra.mxu0 %v574
    %v1245 = vpop.f32.mrf.mxu0
    %v1246 = vadd.f32 0.0, %v1245
    %v1247 = vpop.f32.mrf.mxu0
    %v1248 = vadd.f32 0.0, %v1247
    %1249 = vmatmul.bf16.gmra.mxu0 %v576
    %v1250 = vpop.f32.mrf.mxu0
    %v1251 = vadd.f32 0.0, %v1250
    %v1252 = vpop.f32.mrf.mxu0
    %v1253 = vadd.f32 0.0, %v1252
    %1254 = vdwg.mxu0
    %1255 = vmatpush.bf16.msra.mxu0 %v927
    %1256 = vmatpush.bf16.msra.mxu0 %v922
    %1257 = vmatpush.bf16.msra.mxu0 %v917
    %1258 = vmatpush.bf16.msra.mxu0 %v912
    %1259 = vmatpush.bf16.msra.mxu0 %v907
    %1260 = vmatpush.bf16.msra.mxu0 %v902
    %1261 = vmatpush.bf16.msra.mxu0 %v897
    %1262 = vmatpush.bf16.msra.mxu0 %v892
    %1263 = vmatmul.bf16.gmra.mxu0 %v563
    %v1264 = vpop.f32.mrf.mxu0
    %v1265 = vadd.f32 %v1216, %v1264
    %v1266 = vpop.f32.mrf.mxu0
    %v1267 = vadd.f32 %v1218, %v1266
    %1268 = vmatmul.bf16.gmra.mxu0 %v565
    %v1269 = vpop.f32.mrf.mxu0
    %v1270 = vadd.f32 %v1221, %v1269
    %v1271 = vpop.f32.mrf.mxu0
    %v1272 = vadd.f32 %v1223, %v1271
    %1273 = vmatmul.bf16.gmra.mxu0 %v567
    %v1274 = vpop.f32.mrf.mxu0
    %v1275 = vadd.f32 %v1226, %v1274
    %v1276 = vpop.f32.mrf.mxu0
    %v1277 = vadd.f32 %v1228, %v1276
    %1278 = vmatmul.bf16.gmra.mxu0 %v569
    %v1279 = vpop.f32.mrf.mxu0
    %v1280 = vadd.f32 %v1231, %v1279
    %v1281 = vpop.f32.mrf.mxu0
    %v1282 = vadd.f32 %v1233, %v1281
    %1283 = vmatmul.bf16.gmra.mxu0 %v571
    %v1284 = vpop.f32.mrf.mxu0
    %v1285 = vadd.f32 %v1236, %v1284
    %v1286 = vpop.f32.mrf.mxu0
    %v1287 = vadd.f32 %v1238, %v1286
    %1288 = vmatmul.bf16.gmra.mxu0 %v573
    %v1289 = vpop.f32.mrf.mxu0
    %v1290 = vadd.f32 %v1241, %v1289
    %v1291 = vpop.f32.mrf.mxu0
    %v1292 = vadd.f32 %v1243, %v1291
    %1293 = vmatmul.bf16.gmra.mxu0 %v575
    %v1294 = vpop.f32.mrf.mxu0
    %v1295 = vadd.f32 %v1246, %v1294
    %v1296 = vpop.f32.mrf.mxu0
    %v1297 = vadd.f32 %v1248, %v1296
    %1298 = vmatmul.bf16.gmra.mxu0 %v577
    %v1299 = vpop.f32.mrf.mxu0
    %v1300 = vadd.f32 %v1251, %v1299
    %v1301 = vpop.f32.mrf.mxu0
    %v1302 = vadd.f32 %v1253, %v1301
    %1303 = vdwg.mxu0
    %1304 = vmatpush.bf16.msra.mxu0 %v888
    %1305 = vmatpush.bf16.msra.mxu0 %v883
    %1306 = vmatpush.bf16.msra.mxu0 %v878
    %1307 = vmatpush.bf16.msra.mxu0 %v873
    %1308 = vmatpush.bf16.msra.mxu0 %v868
    %1309 = vmatpush.bf16.msra.mxu0 %v863
    %1310 = vmatpush.bf16.msra.mxu0 %v858
    %1311 = vmatpush.bf16.msra.mxu0 %v853
    %1312 = vmatmul.bf16.gmra.mxu0 %v562
    %v1313 = vpop.f32.mrf.mxu0
    %v1314 = vadd.f32 0.0, %v1313
    %v1315 = vpop.f32.mrf.mxu0
    %v1316 = vadd.f32 0.0, %v1315
    %1317 = vmatmul.bf16.gmra.mxu0 %v564
    %v1318 = vpop.f32.mrf.mxu0
    %v1319 = vadd.f32 0.0, %v1318
    %v1320 = vpop.f32.mrf.mxu0
    %v1321 = vadd.f32 0.0, %v1320
    %1322 = vmatmul.bf16.gmra.mxu0 %v566
    %v1323 = vpop.f32.mrf.mxu0
    %v1324 = vadd.f32 0.0, %v1323
    %v1325 = vpop.f32.mrf.mxu0
    %v1326 = vadd.f32 0.0, %v1325
    %1327 = vmatmul.bf16.gmra.mxu0 %v568
    %v1328 = vpop.f32.mrf.mxu0
    %v1329 = vadd.f32 0.0, %v1328
    %v1330 = vpop.f32.mrf.mxu0
    %v1331 = vadd.f32 0.0, %v1330
    %1332 = vmatmul.bf16.gmra.mxu0 %v570
    %v1333 = vpop.f32.mrf.mxu0
    %v1334 = vadd.f32 0.0, %v1333
    %v1335 = vpop.f32.mrf.mxu0
    %v1336 = vadd.f32 0.0, %v1335
    %1337 = vmatmul.bf16.gmra.mxu0 %v572
    %v1338 = vpop.f32.mrf.mxu0
    %v1339 = vadd.f32 0.0, %v1338
    %v1340 = vpop.f32.mrf.mxu0
    %v1341 = vadd.f32 0.0, %v1340
    %1342 = vmatmul.bf16.gmra.mxu0 %v574
    %v1343 = vpop.f32.mrf.mxu0
    %v1344 = vadd.f32 0.0, %v1343
    %v1345 = vpop.f32.mrf.mxu0
    %v1346 = vadd.f32 0.0, %v1345
    %1347 = vmatmul.bf16.gmra.mxu0 %v576
    %v1348 = vpop.f32.mrf.mxu0
    %v1349 = vadd.f32 0.0, %v1348
    %v1350 = vpop.f32.mrf.mxu0
    %v1351 = vadd.f32 0.0, %v1350
    %1352 = vdwg.mxu0
    %1353 = vmatpush.bf16.msra.mxu0 %v928
    %1354 = vmatpush.bf16.msra.mxu0 %v923
    %1355 = vmatpush.bf16.msra.mxu0 %v918
    %1356 = vmatpush.bf16.msra.mxu0 %v913
    %1357 = vmatpush.bf16.msra.mxu0 %v908
    %1358 = vmatpush.bf16.msra.mxu0 %v903
    %1359 = vmatpush.bf16.msra.mxu0 %v898
    %1360 = vmatpush.bf16.msra.mxu0 %v893
    %1361 = vmatmul.bf16.gmra.mxu0 %v563
    %v1362 = vpop.f32.mrf.mxu0
    %v1363 = vadd.f32 %v1314, %v1362
    %v1364 = vpop.f32.mrf.mxu0
    %v1365 = vadd.f32 %v1316, %v1364
    %1366 = vmatmul.bf16.gmra.mxu0 %v565
    %v1367 = vpop.f32.mrf.mxu0
    %v1368 = vadd.f32 %v1319, %v1367
    %v1369 = vpop.f32.mrf.mxu0
    %v1370 = vadd.f32 %v1321, %v1369
    %1371 = vmatmul.bf16.gmra.mxu0 %v567
    %v1372 = vpop.f32.mrf.mxu0
    %v1373 = vadd.f32 %v1324, %v1372
    %v1374 = vpop.f32.mrf.mxu0
    %v1375 = vadd.f32 %v1326, %v1374
    %1376 = vmatmul.bf16.gmra.mxu0 %v569
    %v1377 = vpop.f32.mrf.mxu0
    %v1378 = vadd.f32 %v1329, %v1377
    %v1379 = vpop.f32.mrf.mxu0
    %v1380 = vadd.f32 %v1331, %v1379
    %1381 = vmatmul.bf16.gmra.mxu0 %v571
    %v1382 = vpop.f32.mrf.mxu0
    %v1383 = vadd.f32 %v1334, %v1382
    %v1384 = vpop.f32.mrf.mxu0
    %v1385 = vadd.f32 %v1336, %v1384
    %1386 = vmatmul.bf16.gmra.mxu0 %v573
    %v1387 = vpop.f32.mrf.mxu0
    %v1388 = vadd.f32 %v1339, %v1387
    %v1389 = vpop.f32.mrf.mxu0
    %v1390 = vadd.f32 %v1341, %v1389
    %1391 = vmatmul.bf16.gmra.mxu0 %v575
    %v1392 = vpop.f32.mrf.mxu0
    %v1393 = vadd.f32 %v1344, %v1392
    %v1394 = vpop.f32.mrf.mxu0
    %v1395 = vadd.f32 %v1346, %v1394
    %1396 = vmatmul.bf16.gmra.mxu0 %v577
    %v1397 = vpop.f32.mrf.mxu0
    %v1398 = vadd.f32 %v1349, %v1397
    %v1399 = vpop.f32.mrf.mxu0
    %v1400 = vadd.f32 %v1351, %v1399
    %1401 = vdwg.mxu0
    %1402 = vmatpush.bf16.msra.mxu0 %v889
    %1403 = vmatpush.bf16.msra.mxu0 %v884
    %1404 = vmatpush.bf16.msra.mxu0 %v879
    %1405 = vmatpush.bf16.msra.mxu0 %v874
    %1406 = vmatpush.bf16.msra.mxu0 %v869
    %1407 = vmatpush.bf16.msra.mxu0 %v864
    %1408 = vmatpush.bf16.msra.mxu0 %v859
    %1409 = vmatpush.bf16.msra.mxu0 %v854
    %1410 = vmatmul.bf16.gmra.mxu0 %v562
    %v1411 = vpop.f32.mrf.mxu0
    %v1412 = vadd.f32 0.0, %v1411
    %v1413 = vpop.f32.mrf.mxu0
    %v1414 = vadd.f32 0.0, %v1413
    %1415 = vmatmul.bf16.gmra.mxu0 %v564
    %v1416 = vpop.f32.mrf.mxu0
    %v1417 = vadd.f32 0.0, %v1416
    %v1418 = vpop.f32.mrf.mxu0
    %v1419 = vadd.f32 0.0, %v1418
    %1420 = vmatmul.bf16.gmra.mxu0 %v566
    %v1421 = vpop.f32.mrf.mxu0
    %v1422 = vadd.f32 0.0, %v1421
    %v1423 = vpop.f32.mrf.mxu0
    %v1424 = vadd.f32 0.0, %v1423
    %1425 = vmatmul.bf16.gmra.mxu0 %v568
    %v1426 = vpop.f32.mrf.mxu0
    %v1427 = vadd.f32 0.0, %v1426
    %v1428 = vpop.f32.mrf.mxu0
    %v1429 = vadd.f32 0.0, %v1428
    %1430 = vmatmul.bf16.gmra.mxu0 %v570
    %v1431 = vpop.f32.mrf.mxu0
    %v1432 = vadd.f32 0.0, %v1431
    %v1433 = vpop.f32.mrf.mxu0
    %v1434 = vadd.f32 0.0, %v1433
    %1435 = vmatmul.bf16.gmra.mxu0 %v572
    %v1436 = vpop.f32.mrf.mxu0
    %v1437 = vadd.f32 0.0, %v1436
    %v1438 = vpop.f32.mrf.mxu0
    %v1439 = vadd.f32 0.0, %v1438
    %1440 = vmatmul.bf16.gmra.mxu0 %v574
    %v1441 = vpop.f32.mrf.mxu0
    %v1442 = vadd.f32 0.0, %v1441
    %v1443 = vpop.f32.mrf.mxu0
    %v1444 = vadd.f32 0.0, %v1443
    %1445 = vmatmul.bf16.gmra.mxu0 %v576
    %v1446 = vpop.f32.mrf.mxu0
    %v1447 = vadd.f32 0.0, %v1446
    %v1448 = vpop.f32.mrf.mxu0
    %v1449 = vadd.f32 0.0, %v1448
    %1450 = vdwg.mxu0
    %1451 = vmatpush.bf16.msra.mxu0 %v929
    %1452 = vmatpush.bf16.msra.mxu0 %v924
    %1453 = vmatpush.bf16.msra.mxu0 %v919
    %1454 = vmatpush.bf16.msra.mxu0 %v914
    %1455 = vmatpush.bf16.msra.mxu0 %v909
    %1456 = vmatpush.bf16.msra.mxu0 %v904
    %1457 = vmatpush.bf16.msra.mxu0 %v899
    %1458 = vmatpush.bf16.msra.mxu0 %v894
    %1459 = vmatmul.bf16.gmra.mxu0 %v563
    %v1460 = vpop.f32.mrf.mxu0
    %v1461 = vadd.f32 %v1412, %v1460
    %v1462 = vpop.f32.mrf.mxu0
    %v1463 = vadd.f32 %v1414, %v1462
    %1464 = vmatmul.bf16.gmra.mxu0 %v565
    %v1465 = vpop.f32.mrf.mxu0
    %v1466 = vadd.f32 %v1417, %v1465
    %v1467 = vpop.f32.mrf.mxu0
    %v1468 = vadd.f32 %v1419, %v1467
    %1469 = vmatmul.bf16.gmra.mxu0 %v567
    %v1470 = vpop.f32.mrf.mxu0
    %v1471 = vadd.f32 %v1422, %v1470
    %v1472 = vpop.f32.mrf.mxu0
    %v1473 = vadd.f32 %v1424, %v1472
    %1474 = vmatmul.bf16.gmra.mxu0 %v569
    %v1475 = vpop.f32.mrf.mxu0
    %v1476 = vadd.f32 %v1427, %v1475
    %v1477 = vpop.f32.mrf.mxu0
    %v1478 = vadd.f32 %v1429, %v1477
    %1479 = vmatmul.bf16.gmra.mxu0 %v571
    %v1480 = vpop.f32.mrf.mxu0
    %v1481 = vadd.f32 %v1432, %v1480
    %v1482 = vpop.f32.mrf.mxu0
    %v1483 = vadd.f32 %v1434, %v1482
    %1484 = vmatmul.bf16.gmra.mxu0 %v573
    %v1485 = vpop.f32.mrf.mxu0
    %v1486 = vadd.f32 %v1437, %v1485
    %v1487 = vpop.f32.mrf.mxu0
    %v1488 = vadd.f32 %v1439, %v1487
    %1489 = vmatmul.bf16.gmra.mxu0 %v575
    %v1490 = vpop.f32.mrf.mxu0
    %v1491 = vadd.f32 %v1442, %v1490
    %v1492 = vpop.f32.mrf.mxu0
    %v1493 = vadd.f32 %v1444, %v1492
    %1494 = vmatmul.bf16.gmra.mxu0 %v577
    %v1495 = vpop.f32.mrf.mxu0
    %v1496 = vadd.f32 %v1447, %v1495
    %v1497 = vpop.f32.mrf.mxu0
    %v1498 = vadd.f32 %v1449, %v1497
    %1499 = vdwg.mxu0
    %v1516 = vunpack.c.l.b16 %v79
    %v1517 = vunpack.c.h.b16 %v79
    %v1518 = vunpack.c.l.b16 %v80
    %v1519 = vunpack.c.h.b16 %v80
    %v1520 = vunpack.c.l.b16 %v81
    %v1521 = vunpack.c.h.b16 %v81
    %v1522 = vunpack.c.l.b16 %v82
    %v1523 = vunpack.c.h.b16 %v82
    %v1524 = vunpack.c.l.b16 %v83
    %v1525 = vunpack.c.h.b16 %v83
    %v1526 = vunpack.c.l.b16 %v84
    %v1527 = vunpack.c.h.b16 %v84
    %v1528 = vunpack.c.l.b16 %v85
    %v1529 = vunpack.c.h.b16 %v85
    %v1530 = vunpack.c.l.b16 %v86
    %v1531 = vunpack.c.h.b16 %v86
    %v1532 = vunpack.c.l.b16 %v87
    %v1533 = vunpack.c.h.b16 %v87
    %v1534 = vunpack.c.l.b16 %v88
    %v1535 = vunpack.c.h.b16 %v88
    %v1536 = vunpack.c.l.b16 %v89
    %v1537 = vunpack.c.h.b16 %v89
    %v1538 = vunpack.c.l.b16 %v90
    %v1539 = vunpack.c.h.b16 %v90
    %v1540 = vunpack.c.l.b16 %v91
    %v1541 = vunpack.c.h.b16 %v91
    %v1542 = vunpack.c.l.b16 %v92
    %v1543 = vunpack.c.h.b16 %v92
    %v1544 = vunpack.c.l.b16 %v93
    %v1545 = vunpack.c.h.b16 %v93
    %v1546 = vunpack.c.l.b16 %v94
    %v1547 = vunpack.c.h.b16 %v94
    %v1548 = vpack.c.b16 %v1518, %v1516
    %v1549 = vpack.c.b16 %v1519, %v1517
    %v1550 = vpack.c.b16 %v1522, %v1520
    %v1551 = vpack.c.b16 %v1523, %v1521
    %v1552 = vpack.c.b16 %v1526, %v1524
    %v1553 = vpack.c.b16 %v1527, %v1525
    %v1554 = vpack.c.b16 %v1530, %v1528
    %v1555 = vpack.c.b16 %v1531, %v1529
    %v1556 = vpack.c.b16 %v1534, %v1532
    %v1557 = vpack.c.b16 %v1535, %v1533
    %v1558 = vpack.c.b16 %v1538, %v1536
    %v1559 = vpack.c.b16 %v1539, %v1537
    %v1560 = vpack.c.b16 %v1542, %v1540
    %v1561 = vpack.c.b16 %v1543, %v1541
    %v1562 = vpack.c.b16 %v1546, %v1544
    %v1563 = vpack.c.b16 %v1547, %v1545
    %v1676 = vunpack.c.l.b16 %v95
    %v1677 = vunpack.c.h.b16 %v95
    %v1678 = vunpack.c.l.b16 %v96
    %v1679 = vunpack.c.h.b16 %v96
    %v1680 = vunpack.c.l.b16 %v97
    %v1681 = vunpack.c.l.b16 %v98
    %v1682 = vunpack.c.h.b16 %v98
    %v1683 = vunpack.c.l.b16 %v99
    %v1684 = vunpack.c.h.b16 %v99
    %v1685 = vunpack.c.l.b16 %v100
    %v1686 = vunpack.c.l.b16 %v101
    %v1687 = vunpack.c.h.b16 %v101
    %v1688 = vunpack.c.l.b16 %v102
    %v1689 = vunpack.c.h.b16 %v102
    %v1690 = vunpack.c.l.b16 %v103
    %v1691 = vunpack.c.l.b16 %v104
    %v1692 = vunpack.c.h.b16 %v104
    %v1693 = vunpack.c.l.b16 %v105
    %v1694 = vunpack.c.h.b16 %v105
    %v1695 = vunpack.c.l.b16 %v106
    %v1696 = vunpack.c.l.b16 %v107
    %v1697 = vunpack.c.h.b16 %v107
    %v1698 = vunpack.c.l.b16 %v108
    %v1699 = vunpack.c.h.b16 %v108
    %v1700 = vunpack.c.l.b16 %v109
    %v1701 = vunpack.c.l.b16 %v110
    %v1702 = vunpack.c.h.b16 %v110
    %v1703 = vunpack.c.l.b16 %v111
    %v1704 = vunpack.c.h.b16 %v111
    %v1705 = vunpack.c.l.b16 %v112
    %v1706 = vunpack.c.l.b16 %v113
    %v1707 = vunpack.c.h.b16 %v113
    %v1708 = vunpack.c.l.b16 %v114
    %v1709 = vunpack.c.h.b16 %v114
    %v1710 = vunpack.c.l.b16 %v115
    %v1711 = vunpack.c.l.b16 %v116
    %v1712 = vunpack.c.h.b16 %v116
    %v1713 = vunpack.c.l.b16 %v117
    %v1714 = vunpack.c.h.b16 %v117
    %v1715 = vunpack.c.l.b16 %v118
    %v1716 = vunpack.c.l.b16 %v119
    %v1717 = vunpack.c.h.b16 %v119
    %v1718 = vunpack.c.l.b16 %v120
    %v1719 = vunpack.c.h.b16 %v120
    %v1720 = vunpack.c.l.b16 %v121
    %v1721 = vunpack.c.l.b16 %v122
    %v1722 = vunpack.c.h.b16 %v122
    %v1723 = vunpack.c.l.b16 %v123
    %v1724 = vunpack.c.h.b16 %v123
    %v1725 = vunpack.c.l.b16 %v124
    %v1726 = vunpack.c.l.b16 %v125
    %v1727 = vunpack.c.h.b16 %v125
    %v1728 = vunpack.c.l.b16 %v126
    %v1729 = vunpack.c.h.b16 %v126
    %v1730 = vunpack.c.l.b16 %v127
    %v1731 = vunpack.c.l.b16 %v128
    %v1732 = vunpack.c.h.b16 %v128
    %v1733 = vunpack.c.l.b16 %v129
    %v1734 = vunpack.c.h.b16 %v129
    %v1735 = vunpack.c.l.b16 %v130
    %v1736 = vunpack.c.l.b16 %v131
    %v1737 = vunpack.c.h.b16 %v131
    %v1738 = vunpack.c.l.b16 %v132
    %v1739 = vunpack.c.h.b16 %v132
    %v1740 = vunpack.c.l.b16 %v133
    %v1741 = vunpack.c.l.b16 %v134
    %v1742 = vunpack.c.h.b16 %v134
    %v1743 = vunpack.c.l.b16 %v135
    %v1744 = vunpack.c.h.b16 %v135
    %v1745 = vunpack.c.l.b16 %v136
    %v1746 = vunpack.c.l.b16 %v137
    %v1747 = vunpack.c.h.b16 %v137
    %v1748 = vunpack.c.l.b16 %v138
    %v1749 = vunpack.c.h.b16 %v138
    %v1750 = vunpack.c.l.b16 %v139
    %v1751 = vunpack.c.l.b16 %v140
    %v1752 = vunpack.c.h.b16 %v140
    %v1753 = vunpack.c.l.b16 %v141
    %v1754 = vunpack.c.h.b16 %v141
    %v1755 = vunpack.c.l.b16 %v142
    %v1756 = vunpack.c.l.b16 %v143
    %v1757 = vunpack.c.h.b16 %v143
    %v1758 = vunpack.c.l.b16 %v144
    %v1759 = vunpack.c.h.b16 %v144
    %v1760 = vunpack.c.l.b16 %v145
    %v1761 = vunpack.c.l.b16 %v146
    %v1762 = vunpack.c.h.b16 %v146
    %v1763 = vunpack.c.l.b16 %v147
    %v1764 = vunpack.c.h.b16 %v147
    %v1765 = vunpack.c.l.b16 %v148
    %v1766 = vunpack.c.l.b16 %v149
    %v1767 = vunpack.c.h.b16 %v149
    %v1768 = vunpack.c.l.b16 %v150
    %v1769 = vunpack.c.h.b16 %v150
    %v1770 = vunpack.c.l.b16 %v151
    %v1771 = vunpack.c.l.b16 %v152
    %v1772 = vunpack.c.h.b16 %v152
    %v1773 = vunpack.c.l.b16 %v153
    %v1774 = vunpack.c.h.b16 %v153
    %v1775 = vunpack.c.l.b16 %v154
    %v1776 = vunpack.c.l.b16 %v155
    %v1777 = vunpack.c.h.b16 %v155
    %v1778 = vunpack.c.l.b16 %v156
    %v1779 = vunpack.c.h.b16 %v156
    %v1780 = vunpack.c.l.b16 %v157
    %v1781 = vunpack.c.l.b16 %v158
    %v1782 = vunpack.c.h.b16 %v158
    %v1783 = vunpack.c.l.b16 %v159
    %v1784 = vunpack.c.h.b16 %v159
    %v1785 = vunpack.c.l.b16 %v160
    %v1786 = vunpack.c.l.b16 %v161
    %v1787 = vunpack.c.h.b16 %v161
    %v1788 = vunpack.c.l.b16 %v162
    %v1789 = vunpack.c.h.b16 %v162
    %v1790 = vunpack.c.l.b16 %v163
    %v1791 = vunpack.c.l.b16 %v164
    %v1792 = vunpack.c.h.b16 %v164
    %v1793 = vunpack.c.l.b16 %v165
    %v1794 = vunpack.c.h.b16 %v165
    %v1795 = vunpack.c.l.b16 %v166
    %v1796 = vunpack.c.l.b16 %v167
    %v1797 = vunpack.c.h.b16 %v167
    %v1798 = vunpack.c.l.b16 %v168
    %v1799 = vunpack.c.h.b16 %v168
    %v1800 = vunpack.c.l.b16 %v169
    %v1801 = vunpack.c.l.b16 %v170
    %v1802 = vunpack.c.h.b16 %v170
    %v1803 = vunpack.c.l.b16 %v171
    %v1804 = vunpack.c.h.b16 %v171
    %v1805 = vunpack.c.l.b16 %v172
    %v1806 = vunpack.c.l.b16 %v173
    %v1807 = vunpack.c.h.b16 %v173
    %v1808 = vunpack.c.l.b16 %v174
    %v1809 = vunpack.c.h.b16 %v174
    %v1810 = vunpack.c.l.b16 %v175
    %v1811 = vunpack.c.l.b16 %v176
    %v1812 = vunpack.c.h.b16 %v176
    %v1813 = vunpack.c.l.b16 %v177
    %v1814 = vunpack.c.h.b16 %v177
    %v1815 = vunpack.c.l.b16 %v178
    %v1816 = vunpack.c.l.b16 %v179
    %v1817 = vunpack.c.h.b16 %v179
    %v1818 = vunpack.c.l.b16 %v180
    %v1819 = vunpack.c.h.b16 %v180
    %v1820 = vunpack.c.l.b16 %v181
    %v1821 = vunpack.c.l.b16 %v182
    %v1822 = vunpack.c.h.b16 %v182
    %v1823 = vunpack.c.l.b16 %v183
    %v1824 = vunpack.c.h.b16 %v183
    %v1825 = vunpack.c.l.b16 %v184
    %v1826 = vunpack.c.l.b16 %v185
    %v1827 = vunpack.c.h.b16 %v185
    %v1828 = vunpack.c.l.b16 %v186
    %v1829 = vunpack.c.h.b16 %v186
    %v1830 = vunpack.c.l.b16 %v187
    %v1831 = vunpack.c.l.b16 %v188
    %v1832 = vunpack.c.h.b16 %v188
    %v1833 = vunpack.c.l.b16 %v189
    %v1834 = vunpack.c.h.b16 %v189
    %v1835 = vunpack.c.l.b16 %v190
    %v1836 = vpack.c.b16 %v1681, %v1676
    %v1837 = vpack.c.b16 %v1682, %v1677
    %v1838 = vpack.c.b16 %v1683, %v1678
    %v1839 = vpack.c.b16 %v1684, %v1679
    %v1840 = vpack.c.b16 %v1685, %v1680
    %v1841 = vpack.c.b16 %v1691, %v1686
    %v1842 = vpack.c.b16 %v1692, %v1687
    %v1843 = vpack.c.b16 %v1693, %v1688
    %v1844 = vpack.c.b16 %v1694, %v1689
    %v1845 = vpack.c.b16 %v1695, %v1690
    %v1846 = vpack.c.b16 %v1701, %v1696
    %v1847 = vpack.c.b16 %v1702, %v1697
    %v1848 = vpack.c.b16 %v1703, %v1698
    %v1849 = vpack.c.b16 %v1704, %v1699
    %v1850 = vpack.c.b16 %v1705, %v1700
    %v1851 = vpack.c.b16 %v1711, %v1706
    %v1852 = vpack.c.b16 %v1712, %v1707
    %v1853 = vpack.c.b16 %v1713, %v1708
    %v1854 = vpack.c.b16 %v1714, %v1709
    %v1855 = vpack.c.b16 %v1715, %v1710
    %v1856 = vpack.c.b16 %v1721, %v1716
    %v1857 = vpack.c.b16 %v1722, %v1717
    %v1858 = vpack.c.b16 %v1723, %v1718
    %v1859 = vpack.c.b16 %v1724, %v1719
    %v1860 = vpack.c.b16 %v1725, %v1720
    %v1861 = vpack.c.b16 %v1731, %v1726
    %v1862 = vpack.c.b16 %v1732, %v1727
    %v1863 = vpack.c.b16 %v1733, %v1728
    %v1864 = vpack.c.b16 %v1734, %v1729
    %v1865 = vpack.c.b16 %v1735, %v1730
    %v1866 = vpack.c.b16 %v1741, %v1736
    %v1867 = vpack.c.b16 %v1742, %v1737
    %v1868 = vpack.c.b16 %v1743, %v1738
    %v1869 = vpack.c.b16 %v1744, %v1739
    %v1870 = vpack.c.b16 %v1745, %v1740
    %v1871 = vpack.c.b16 %v1751, %v1746
    %v1872 = vpack.c.b16 %v1752, %v1747
    %v1873 = vpack.c.b16 %v1753, %v1748
    %v1874 = vpack.c.b16 %v1754, %v1749
    %v1875 = vpack.c.b16 %v1755, %v1750
    %v1876 = vpack.c.b16 %v1761, %v1756
    %v1877 = vpack.c.b16 %v1762, %v1757
    %v1878 = vpack.c.b16 %v1763, %v1758
    %v1879 = vpack.c.b16 %v1764, %v1759
    %v1880 = vpack.c.b16 %v1765, %v1760
    %v1881 = vpack.c.b16 %v1771, %v1766
    %v1882 = vpack.c.b16 %v1772, %v1767
    %v1883 = vpack.c.b16 %v1773, %v1768
    %v1884 = vpack.c.b16 %v1774, %v1769
    %v1885 = vpack.c.b16 %v1775, %v1770
    %v1886 = vpack.c.b16 %v1781, %v1776
    %v1887 = vpack.c.b16 %v1782, %v1777
    %v1888 = vpack.c.b16 %v1783, %v1778
    %v1889 = vpack.c.b16 %v1784, %v1779
    %v1890 = vpack.c.b16 %v1785, %v1780
    %v1891 = vpack.c.b16 %v1791, %v1786
    %v1892 = vpack.c.b16 %v1792, %v1787
    %v1893 = vpack.c.b16 %v1793, %v1788
    %v1894 = vpack.c.b16 %v1794, %v1789
    %v1895 = vpack.c.b16 %v1795, %v1790
    %v1896 = vpack.c.b16 %v1801, %v1796
    %v1897 = vpack.c.b16 %v1802, %v1797
    %v1898 = vpack.c.b16 %v1803, %v1798
    %v1899 = vpack.c.b16 %v1804, %v1799
    %v1900 = vpack.c.b16 %v1805, %v1800
    %v1901 = vpack.c.b16 %v1811, %v1806
    %v1902 = vpack.c.b16 %v1812, %v1807
    %v1903 = vpack.c.b16 %v1813, %v1808
    %v1904 = vpack.c.b16 %v1814, %v1809
    %v1905 = vpack.c.b16 %v1815, %v1810
    %v1906 = vpack.c.b16 %v1821, %v1816
    %v1907 = vpack.c.b16 %v1822, %v1817
    %v1908 = vpack.c.b16 %v1823, %v1818
    %v1909 = vpack.c.b16 %v1824, %v1819
    %v1910 = vpack.c.b16 %v1825, %v1820
    %v1911 = vpack.c.b16 %v1831, %v1826
    %v1912 = vpack.c.b16 %v1832, %v1827
    %v1913 = vpack.c.b16 %v1833, %v1828
    %v1914 = vpack.c.b16 %v1834, %v1829
    %v1915 = vpack.c.b16 %v1835, %v1830
    %1996 = vmatpush.bf16.msra.mxu0 %v1871
    %1997 = vmatpush.bf16.msra.mxu0 %v1866
    %1998 = vmatpush.bf16.msra.mxu0 %v1861
    %1999 = vmatpush.bf16.msra.mxu0 %v1856
    %2000 = vmatpush.bf16.msra.mxu0 %v1851
    %2001 = vmatpush.bf16.msra.mxu0 %v1846
    %2002 = vmatpush.bf16.msra.mxu0 %v1841
    %2003 = vmatpush.bf16.msra.mxu0 %v1836
    %2004 = vmatmul.bf16.gmra.mxu0 %v1548
    %v2005 = vpop.f32.mrf.mxu0
    %v2006 = vadd.f32 %v1069, %v2005
    %v2007 = vpop.f32.mrf.mxu0
    %v2008 = vadd.f32 %v1071, %v2007
    %2009 = vmatmul.bf16.gmra.mxu0 %v1550
    %v2010 = vpop.f32.mrf.mxu0
    %v2011 = vadd.f32 %v1074, %v2010
    %v2012 = vpop.f32.mrf.mxu0
    %v2013 = vadd.f32 %v1076, %v2012
    %2014 = vmatmul.bf16.gmra.mxu0 %v1552
    %v2015 = vpop.f32.mrf.mxu0
    %v2016 = vadd.f32 %v1079, %v2015
    %v2017 = vpop.f32.mrf.mxu0
    %v2018 = vadd.f32 %v1081, %v2017
    %2019 = vmatmul.bf16.gmra.mxu0 %v1554
    %v2020 = vpop.f32.mrf.mxu0
    %v2021 = vadd.f32 %v1084, %v2020
    %v2022 = vpop.f32.mrf.mxu0
    %v2023 = vadd.f32 %v1086, %v2022
    %2024 = vmatmul.bf16.gmra.mxu0 %v1556
    %v2025 = vpop.f32.mrf.mxu0
    %v2026 = vadd.f32 %v1089, %v2025
    %v2027 = vpop.f32.mrf.mxu0
    %v2028 = vadd.f32 %v1091, %v2027
    %2029 = vmatmul.bf16.gmra.mxu0 %v1558
    %v2030 = vpop.f32.mrf.mxu0
    %v2031 = vadd.f32 %v1094, %v2030
    %v2032 = vpop.f32.mrf.mxu0
    %v2033 = vadd.f32 %v1096, %v2032
    %2034 = vmatmul.bf16.gmra.mxu0 %v1560
    %v2035 = vpop.f32.mrf.mxu0
    %v2036 = vadd.f32 %v1099, %v2035
    %v2037 = vpop.f32.mrf.mxu0
    %v2038 = vadd.f32 %v1101, %v2037
    %2039 = vmatmul.bf16.gmra.mxu0 %v1562
    %v2040 = vpop.f32.mrf.mxu0
    %v2041 = vadd.f32 %v1104, %v2040
    %v2042 = vpop.f32.mrf.mxu0
    %v2043 = vadd.f32 %v1106, %v2042
    %2044 = vdwg.mxu0
    %2045 = vmatpush.bf16.msra.mxu0 %v1911
    %2046 = vmatpush.bf16.msra.mxu0 %v1906
    %2047 = vmatpush.bf16.msra.mxu0 %v1901
    %2048 = vmatpush.bf16.msra.mxu0 %v1896
    %2049 = vmatpush.bf16.msra.mxu0 %v1891
    %2050 = vmatpush.bf16.msra.mxu0 %v1886
    %2051 = vmatpush.bf16.msra.mxu0 %v1881
    %2052 = vmatpush.bf16.msra.mxu0 %v1876
    %2053 = vmatmul.bf16.gmra.mxu0 %v1549
    %v2054 = vpop.f32.mrf.mxu0
    %v2055 = vadd.f32 %v2006, %v2054
    %v2056 = vpop.f32.mrf.mxu0
    %v2057 = vadd.f32 %v2008, %v2056
    %2058 = vmatmul.bf16.gmra.mxu0 %v1551
    %v2059 = vpop.f32.mrf.mxu0
    %v2060 = vadd.f32 %v2011, %v2059
    %v2061 = vpop.f32.mrf.mxu0
    %v2062 = vadd.f32 %v2013, %v2061
    %2063 = vmatmul.bf16.gmra.mxu0 %v1553
    %v2064 = vpop.f32.mrf.mxu0
    %v2065 = vadd.f32 %v2016, %v2064
    %v2066 = vpop.f32.mrf.mxu0
    %v2067 = vadd.f32 %v2018, %v2066
    %2068 = vmatmul.bf16.gmra.mxu0 %v1555
    %v2069 = vpop.f32.mrf.mxu0
    %v2070 = vadd.f32 %v2021, %v2069
    %v2071 = vpop.f32.mrf.mxu0
    %v2072 = vadd.f32 %v2023, %v2071
    %2073 = vmatmul.bf16.gmra.mxu0 %v1557
    %v2074 = vpop.f32.mrf.mxu0
    %v2075 = vadd.f32 %v2026, %v2074
    %v2076 = vpop.f32.mrf.mxu0
    %v2077 = vadd.f32 %v2028, %v2076
    %2078 = vmatmul.bf16.gmra.mxu0 %v1559
    %v2079 = vpop.f32.mrf.mxu0
    %v2080 = vadd.f32 %v2031, %v2079
    %v2081 = vpop.f32.mrf.mxu0
    %v2082 = vadd.f32 %v2033, %v2081
    %2083 = vmatmul.bf16.gmra.mxu0 %v1561
    %v2084 = vpop.f32.mrf.mxu0
    %v2085 = vadd.f32 %v2036, %v2084
    %v2086 = vpop.f32.mrf.mxu0
    %v2087 = vadd.f32 %v2038, %v2086
    %2088 = vmatmul.bf16.gmra.mxu0 %v1563
    %v2089 = vpop.f32.mrf.mxu0
    %v2090 = vadd.f32 %v2041, %v2089
    %v2091 = vpop.f32.mrf.mxu0
    %v2092 = vadd.f32 %v2043, %v2091
    %2093 = vdwg.mxu0
    %2094 = vmatpush.bf16.msra.mxu0 %v1872
    %2095 = vmatpush.bf16.msra.mxu0 %v1867
    %2096 = vmatpush.bf16.msra.mxu0 %v1862
    %2097 = vmatpush.bf16.msra.mxu0 %v1857
    %2098 = vmatpush.bf16.msra.mxu0 %v1852
    %2099 = vmatpush.bf16.msra.mxu0 %v1847
    %2100 = vmatpush.bf16.msra.mxu0 %v1842
    %2101 = vmatpush.bf16.msra.mxu0 %v1837
    %2102 = vmatmul.bf16.gmra.mxu0 %v1548
    %v2103 = vpop.f32.mrf.mxu0
    %v2104 = vadd.f32 %v1167, %v2103
    %v2105 = vpop.f32.mrf.mxu0
    %v2106 = vadd.f32 %v1169, %v2105
    %2107 = vmatmul.bf16.gmra.mxu0 %v1550
    %v2108 = vpop.f32.mrf.mxu0
    %v2109 = vadd.f32 %v1172, %v2108
    %v2110 = vpop.f32.mrf.mxu0
    %v2111 = vadd.f32 %v1174, %v2110
    %2112 = vmatmul.bf16.gmra.mxu0 %v1552
    %v2113 = vpop.f32.mrf.mxu0
    %v2114 = vadd.f32 %v1177, %v2113
    %v2115 = vpop.f32.mrf.mxu0
    %v2116 = vadd.f32 %v1179, %v2115
    %2117 = vmatmul.bf16.gmra.mxu0 %v1554
    %v2118 = vpop.f32.mrf.mxu0
    %v2119 = vadd.f32 %v1182, %v2118
    %v2120 = vpop.f32.mrf.mxu0
    %v2121 = vadd.f32 %v1184, %v2120
    %2122 = vmatmul.bf16.gmra.mxu0 %v1556
    %v2123 = vpop.f32.mrf.mxu0
    %v2124 = vadd.f32 %v1187, %v2123
    %v2125 = vpop.f32.mrf.mxu0
    %v2126 = vadd.f32 %v1189, %v2125
    %2127 = vmatmul.bf16.gmra.mxu0 %v1558
    %v2128 = vpop.f32.mrf.mxu0
    %v2129 = vadd.f32 %v1192, %v2128
    %v2130 = vpop.f32.mrf.mxu0
    %v2131 = vadd.f32 %v1194, %v2130
    %2132 = vmatmul.bf16.gmra.mxu0 %v1560
    %v2133 = vpop.f32.mrf.mxu0
    %v2134 = vadd.f32 %v1197, %v2133
    %v2135 = vpop.f32.mrf.mxu0
    %v2136 = vadd.f32 %v1199, %v2135
    %2137 = vmatmul.bf16.gmra.mxu0 %v1562
    %v2138 = vpop.f32.mrf.mxu0
    %v2139 = vadd.f32 %v1202, %v2138
    %v2140 = vpop.f32.mrf.mxu0
    %v2141 = vadd.f32 %v1204, %v2140
    %2142 = vdwg.mxu0
    %2143 = vmatpush.bf16.msra.mxu0 %v1912
    %2144 = vmatpush.bf16.msra.mxu0 %v1907
    %2145 = vmatpush.bf16.msra.mxu0 %v1902
    %2146 = vmatpush.bf16.msra.mxu0 %v1897
    %2147 = vmatpush.bf16.msra.mxu0 %v1892
    %2148 = vmatpush.bf16.msra.mxu0 %v1887
    %2149 = vmatpush.bf16.msra.mxu0 %v1882
    %2150 = vmatpush.bf16.msra.mxu0 %v1877
    %2151 = vmatmul.bf16.gmra.mxu0 %v1549
    %v2152 = vpop.f32.mrf.mxu0
    %v2153 = vadd.f32 %v2104, %v2152
    %v2154 = vpop.f32.mrf.mxu0
    %v2155 = vadd.f32 %v2106, %v2154
    %2156 = vmatmul.bf16.gmra.mxu0 %v1551
    %v2157 = vpop.f32.mrf.mxu0
    %v2158 = vadd.f32 %v2109, %v2157
    %v2159 = vpop.f32.mrf.mxu0
    %v2160 = vadd.f32 %v2111, %v2159
    %2161 = vmatmul.bf16.gmra.mxu0 %v1553
    %v2162 = vpop.f32.mrf.mxu0
    %v2163 = vadd.f32 %v2114, %v2162
    %v2164 = vpop.f32.mrf.mxu0
    %v2165 = vadd.f32 %v2116, %v2164
    %2166 = vmatmul.bf16.gmra.mxu0 %v1555
    %v2167 = vpop.f32.mrf.mxu0
    %v2168 = vadd.f32 %v2119, %v2167
    %v2169 = vpop.f32.mrf.mxu0
    %v2170 = vadd.f32 %v2121, %v2169
    %2171 = vmatmul.bf16.gmra.mxu0 %v1557
    %v2172 = vpop.f32.mrf.mxu0
    %v2173 = vadd.f32 %v2124, %v2172
    %v2174 = vpop.f32.mrf.mxu0
    %v2175 = vadd.f32 %v2126, %v2174
    %2176 = vmatmul.bf16.gmra.mxu0 %v1559
    %v2177 = vpop.f32.mrf.mxu0
    %v2178 = vadd.f32 %v2129, %v2177
    %v2179 = vpop.f32.mrf.mxu0
    %v2180 = vadd.f32 %v2131, %v2179
    %2181 = vmatmul.bf16.gmra.mxu0 %v1561
    %v2182 = vpop.f32.mrf.mxu0
    %v2183 = vadd.f32 %v2134, %v2182
    %v2184 = vpop.f32.mrf.mxu0
    %v2185 = vadd.f32 %v2136, %v2184
    %2186 = vmatmul.bf16.gmra.mxu0 %v1563
    %v2187 = vpop.f32.mrf.mxu0
    %v2188 = vadd.f32 %v2139, %v2187
    %v2189 = vpop.f32.mrf.mxu0
    %v2190 = vadd.f32 %v2141, %v2189
    %2191 = vdwg.mxu0
    %2192 = vmatpush.bf16.msra.mxu0 %v1873
    %2193 = vmatpush.bf16.msra.mxu0 %v1868
    %2194 = vmatpush.bf16.msra.mxu0 %v1863
    %2195 = vmatpush.bf16.msra.mxu0 %v1858
    %2196 = vmatpush.bf16.msra.mxu0 %v1853
    %2197 = vmatpush.bf16.msra.mxu0 %v1848
    %2198 = vmatpush.bf16.msra.mxu0 %v1843
    %2199 = vmatpush.bf16.msra.mxu0 %v1838
    %2200 = vmatmul.bf16.gmra.mxu0 %v1548
    %v2201 = vpop.f32.mrf.mxu0
    %v2202 = vadd.f32 %v1265, %v2201
    %v2203 = vpop.f32.mrf.mxu0
    %v2204 = vadd.f32 %v1267, %v2203
    %2205 = vmatmul.bf16.gmra.mxu0 %v1550
    %v2206 = vpop.f32.mrf.mxu0
    %v2207 = vadd.f32 %v1270, %v2206
    %v2208 = vpop.f32.mrf.mxu0
    %v2209 = vadd.f32 %v1272, %v2208
    %2210 = vmatmul.bf16.gmra.mxu0 %v1552
    %v2211 = vpop.f32.mrf.mxu0
    %v2212 = vadd.f32 %v1275, %v2211
    %v2213 = vpop.f32.mrf.mxu0
    %v2214 = vadd.f32 %v1277, %v2213
    %2215 = vmatmul.bf16.gmra.mxu0 %v1554
    %v2216 = vpop.f32.mrf.mxu0
    %v2217 = vadd.f32 %v1280, %v2216
    %v2218 = vpop.f32.mrf.mxu0
    %v2219 = vadd.f32 %v1282, %v2218
    %2220 = vmatmul.bf16.gmra.mxu0 %v1556
    %v2221 = vpop.f32.mrf.mxu0
    %v2222 = vadd.f32 %v1285, %v2221
    %v2223 = vpop.f32.mrf.mxu0
    %v2224 = vadd.f32 %v1287, %v2223
    %2225 = vmatmul.bf16.gmra.mxu0 %v1558
    %v2226 = vpop.f32.mrf.mxu0
    %v2227 = vadd.f32 %v1290, %v2226
    %v2228 = vpop.f32.mrf.mxu0
    %v2229 = vadd.f32 %v1292, %v2228
    %2230 = vmatmul.bf16.gmra.mxu0 %v1560
    %v2231 = vpop.f32.mrf.mxu0
    %v2232 = vadd.f32 %v1295, %v2231
    %v2233 = vpop.f32.mrf.mxu0
    %v2234 = vadd.f32 %v1297, %v2233
    %2235 = vmatmul.bf16.gmra.mxu0 %v1562
    %v2236 = vpop.f32.mrf.mxu0
    %v2237 = vadd.f32 %v1300, %v2236
    %v2238 = vpop.f32.mrf.mxu0
    %v2239 = vadd.f32 %v1302, %v2238
    %2240 = vdwg.mxu0
    %2241 = vmatpush.bf16.msra.mxu0 %v1913
    %2242 = vmatpush.bf16.msra.mxu0 %v1908
    %2243 = vmatpush.bf16.msra.mxu0 %v1903
    %2244 = vmatpush.bf16.msra.mxu0 %v1898
    %2245 = vmatpush.bf16.msra.mxu0 %v1893
    %2246 = vmatpush.bf16.msra.mxu0 %v1888
    %2247 = vmatpush.bf16.msra.mxu0 %v1883
    %2248 = vmatpush.bf16.msra.mxu0 %v1878
    %2249 = vmatmul.bf16.gmra.mxu0 %v1549
    %v2250 = vpop.f32.mrf.mxu0
    %v2251 = vadd.f32 %v2202, %v2250
    %v2252 = vpop.f32.mrf.mxu0
    %v2253 = vadd.f32 %v2204, %v2252
    %2254 = vmatmul.bf16.gmra.mxu0 %v1551
    %v2255 = vpop.f32.mrf.mxu0
    %v2256 = vadd.f32 %v2207, %v2255
    %v2257 = vpop.f32.mrf.mxu0
    %v2258 = vadd.f32 %v2209, %v2257
    %2259 = vmatmul.bf16.gmra.mxu0 %v1553
    %v2260 = vpop.f32.mrf.mxu0
    %v2261 = vadd.f32 %v2212, %v2260
    %v2262 = vpop.f32.mrf.mxu0
    %v2263 = vadd.f32 %v2214, %v2262
    %2264 = vmatmul.bf16.gmra.mxu0 %v1555
    %v2265 = vpop.f32.mrf.mxu0
    %v2266 = vadd.f32 %v2217, %v2265
    %v2267 = vpop.f32.mrf.mxu0
    %v2268 = vadd.f32 %v2219, %v2267
    %2269 = vmatmul.bf16.gmra.mxu0 %v1557
    %v2270 = vpop.f32.mrf.mxu0
    %v2271 = vadd.f32 %v2222, %v2270
    %v2272 = vpop.f32.mrf.mxu0
    %v2273 = vadd.f32 %v2224, %v2272
    %2274 = vmatmul.bf16.gmra.mxu0 %v1559
    %v2275 = vpop.f32.mrf.mxu0
    %v2276 = vadd.f32 %v2227, %v2275
    %v2277 = vpop.f32.mrf.mxu0
    %v2278 = vadd.f32 %v2229, %v2277
    %2279 = vmatmul.bf16.gmra.mxu0 %v1561
    %v2280 = vpop.f32.mrf.mxu0
    %v2281 = vadd.f32 %v2232, %v2280
    %v2282 = vpop.f32.mrf.mxu0
    %v2283 = vadd.f32 %v2234, %v2282
    %2284 = vmatmul.bf16.gmra.mxu0 %v1563
    %v2285 = vpop.f32.mrf.mxu0
    %v2286 = vadd.f32 %v2237, %v2285
    %v2287 = vpop.f32.mrf.mxu0
    %v2288 = vadd.f32 %v2239, %v2287
    %2289 = vdwg.mxu0
    %2290 = vmatpush.bf16.msra.mxu0 %v1874
    %2291 = vmatpush.bf16.msra.mxu0 %v1869
    %2292 = vmatpush.bf16.msra.mxu0 %v1864
    %2293 = vmatpush.bf16.msra.mxu0 %v1859
    %2294 = vmatpush.bf16.msra.mxu0 %v1854
    %2295 = vmatpush.bf16.msra.mxu0 %v1849
    %2296 = vmatpush.bf16.msra.mxu0 %v1844
    %2297 = vmatpush.bf16.msra.mxu0 %v1839
    %2298 = vmatmul.bf16.gmra.mxu0 %v1548
    %v2299 = vpop.f32.mrf.mxu0
    %v2300 = vadd.f32 %v1363, %v2299
    %v2301 = vpop.f32.mrf.mxu0
    %v2302 = vadd.f32 %v1365, %v2301
    %2303 = vmatmul.bf16.gmra.mxu0 %v1550
    %v2304 = vpop.f32.mrf.mxu0
    %v2305 = vadd.f32 %v1368, %v2304
    %v2306 = vpop.f32.mrf.mxu0
    %v2307 = vadd.f32 %v1370, %v2306
    %2308 = vmatmul.bf16.gmra.mxu0 %v1552
    %v2309 = vpop.f32.mrf.mxu0
    %v2310 = vadd.f32 %v1373, %v2309
    %v2311 = vpop.f32.mrf.mxu0
    %v2312 = vadd.f32 %v1375, %v2311
    %2313 = vmatmul.bf16.gmra.mxu0 %v1554
    %v2314 = vpop.f32.mrf.mxu0
    %v2315 = vadd.f32 %v1378, %v2314
    %v2316 = vpop.f32.mrf.mxu0
    %v2317 = vadd.f32 %v1380, %v2316
    %2318 = vmatmul.bf16.gmra.mxu0 %v1556
    %v2319 = vpop.f32.mrf.mxu0
    %v2320 = vadd.f32 %v1383, %v2319
    %v2321 = vpop.f32.mrf.mxu0
    %v2322 = vadd.f32 %v1385, %v2321
    %2323 = vmatmul.bf16.gmra.mxu0 %v1558
    %v2324 = vpop.f32.mrf.mxu0
    %v2325 = vadd.f32 %v1388, %v2324
    %v2326 = vpop.f32.mrf.mxu0
    %v2327 = vadd.f32 %v1390, %v2326
    %2328 = vmatmul.bf16.gmra.mxu0 %v1560
    %v2329 = vpop.f32.mrf.mxu0
    %v2330 = vadd.f32 %v1393, %v2329
    %v2331 = vpop.f32.mrf.mxu0
    %v2332 = vadd.f32 %v1395, %v2331
    %2333 = vmatmul.bf16.gmra.mxu0 %v1562
    %v2334 = vpop.f32.mrf.mxu0
    %v2335 = vadd.f32 %v1398, %v2334
    %v2336 = vpop.f32.mrf.mxu0
    %v2337 = vadd.f32 %v1400, %v2336
    %2338 = vdwg.mxu0
    %2339 = vmatpush.bf16.msra.mxu0 %v1914
    %2340 = vmatpush.bf16.msra.mxu0 %v1909
    %2341 = vmatpush.bf16.msra.mxu0 %v1904
    %2342 = vmatpush.bf16.msra.mxu0 %v1899
    %2343 = vmatpush.bf16.msra.mxu0 %v1894
    %2344 = vmatpush.bf16.msra.mxu0 %v1889
    %2345 = vmatpush.bf16.msra.mxu0 %v1884
    %2346 = vmatpush.bf16.msra.mxu0 %v1879
    %2347 = vmatmul.bf16.gmra.mxu0 %v1549
    %v2348 = vpop.f32.mrf.mxu0
    %v2349 = vadd.f32 %v2300, %v2348
    %v2350 = vpop.f32.mrf.mxu0
    %v2351 = vadd.f32 %v2302, %v2350
    %2352 = vmatmul.bf16.gmra.mxu0 %v1551
    %v2353 = vpop.f32.mrf.mxu0
    %v2354 = vadd.f32 %v2305, %v2353
    %v2355 = vpop.f32.mrf.mxu0
    %v2356 = vadd.f32 %v2307, %v2355
    %2357 = vmatmul.bf16.gmra.mxu0 %v1553
    %v2358 = vpop.f32.mrf.mxu0
    %v2359 = vadd.f32 %v2310, %v2358
    %v2360 = vpop.f32.mrf.mxu0
    %v2361 = vadd.f32 %v2312, %v2360
    %2362 = vmatmul.bf16.gmra.mxu0 %v1555
    %v2363 = vpop.f32.mrf.mxu0
    %v2364 = vadd.f32 %v2315, %v2363
    %v2365 = vpop.f32.mrf.mxu0
    %v2366 = vadd.f32 %v2317, %v2365
    %2367 = vmatmul.bf16.gmra.mxu0 %v1557
    %v2368 = vpop.f32.mrf.mxu0
    %v2369 = vadd.f32 %v2320, %v2368
    %v2370 = vpop.f32.mrf.mxu0
    %v2371 = vadd.f32 %v2322, %v2370
    %2372 = vmatmul.bf16.gmra.mxu0 %v1559
    %v2373 = vpop.f32.mrf.mxu0
    %v2374 = vadd.f32 %v2325, %v2373
    %v2375 = vpop.f32.mrf.mxu0
    %v2376 = vadd.f32 %v2327, %v2375
    %2377 = vmatmul.bf16.gmra.mxu0 %v1561
    %v2378 = vpop.f32.mrf.mxu0
    %v2379 = vadd.f32 %v2330, %v2378
    %v2380 = vpop.f32.mrf.mxu0
    %v2381 = vadd.f32 %v2332, %v2380
    %2382 = vmatmul.bf16.gmra.mxu0 %v1563
    %v2383 = vpop.f32.mrf.mxu0
    %v2384 = vadd.f32 %v2335, %v2383
    %v2385 = vpop.f32.mrf.mxu0
    %v2386 = vadd.f32 %v2337, %v2385
    %2387 = vdwg.mxu0
    %2388 = vmatpush.bf16.msra.mxu0 %v1875
    %2389 = vmatpush.bf16.msra.mxu0 %v1870
    %2390 = vmatpush.bf16.msra.mxu0 %v1865
    %2391 = vmatpush.bf16.msra.mxu0 %v1860
    %2392 = vmatpush.bf16.msra.mxu0 %v1855
    %2393 = vmatpush.bf16.msra.mxu0 %v1850
    %2394 = vmatpush.bf16.msra.mxu0 %v1845
    %2395 = vmatpush.bf16.msra.mxu0 %v1840
    %2396 = vmatmul.bf16.gmra.mxu0 %v1548
    %v2397 = vpop.f32.mrf.mxu0
    %v2398 = vadd.f32 %v1461, %v2397
    %v2399 = vpop.f32.mrf.mxu0
    %v2400 = vadd.f32 %v1463, %v2399
    %2401 = vmatmul.bf16.gmra.mxu0 %v1550
    %v2402 = vpop.f32.mrf.mxu0
    %v2403 = vadd.f32 %v1466, %v2402
    %v2404 = vpop.f32.mrf.mxu0
    %v2405 = vadd.f32 %v1468, %v2404
    %2406 = vmatmul.bf16.gmra.mxu0 %v1552
    %v2407 = vpop.f32.mrf.mxu0
    %v2408 = vadd.f32 %v1471, %v2407
    %v2409 = vpop.f32.mrf.mxu0
    %v2410 = vadd.f32 %v1473, %v2409
    %2411 = vmatmul.bf16.gmra.mxu0 %v1554
    %v2412 = vpop.f32.mrf.mxu0
    %v2413 = vadd.f32 %v1476, %v2412
    %v2414 = vpop.f32.mrf.mxu0
    %v2415 = vadd.f32 %v1478, %v2414
    %2416 = vmatmul.bf16.gmra.mxu0 %v1556
    %v2417 = vpop.f32.mrf.mxu0
    %v2418 = vadd.f32 %v1481, %v2417
    %v2419 = vpop.f32.mrf.mxu0
    %v2420 = vadd.f32 %v1483, %v2419
    %2421 = vmatmul.bf16.gmra.mxu0 %v1558
    %v2422 = vpop.f32.mrf.mxu0
    %v2423 = vadd.f32 %v1486, %v2422
    %v2424 = vpop.f32.mrf.mxu0
    %v2425 = vadd.f32 %v1488, %v2424
    %2426 = vmatmul.bf16.gmra.mxu0 %v1560
    %v2427 = vpop.f32.mrf.mxu0
    %v2428 = vadd.f32 %v1491, %v2427
    %v2429 = vpop.f32.mrf.mxu0
    %v2430 = vadd.f32 %v1493, %v2429
    %2431 = vmatmul.bf16.gmra.mxu0 %v1562
    %v2432 = vpop.f32.mrf.mxu0
    %v2433 = vadd.f32 %v1496, %v2432
    %v2434 = vpop.f32.mrf.mxu0
    %v2435 = vadd.f32 %v1498, %v2434
    %2436 = vdwg.mxu0
    %2437 = vmatpush.bf16.msra.mxu0 %v1915
    %2438 = vmatpush.bf16.msra.mxu0 %v1910
    %2439 = vmatpush.bf16.msra.mxu0 %v1905
    %2440 = vmatpush.bf16.msra.mxu0 %v1900
    %2441 = vmatpush.bf16.msra.mxu0 %v1895
    %2442 = vmatpush.bf16.msra.mxu0 %v1890
    %2443 = vmatpush.bf16.msra.mxu0 %v1885
    %2444 = vmatpush.bf16.msra.mxu0 %v1880
    %2445 = vmatmul.bf16.gmra.mxu0 %v1549
    %v2446 = vpop.f32.mrf.mxu0
    %v2447 = vadd.f32 %v2398, %v2446
    %v2448 = vpop.f32.mrf.mxu0
    %v2449 = vadd.f32 %v2400, %v2448
    %2450 = vmatmul.bf16.gmra.mxu0 %v1551
    %v2451 = vpop.f32.mrf.mxu0
    %v2452 = vadd.f32 %v2403, %v2451
    %v2453 = vpop.f32.mrf.mxu0
    %v2454 = vadd.f32 %v2405, %v2453
    %2455 = vmatmul.bf16.gmra.mxu0 %v1553
    %v2456 = vpop.f32.mrf.mxu0
    %v2457 = vadd.f32 %v2408, %v2456
    %v2458 = vpop.f32.mrf.mxu0
    %v2459 = vadd.f32 %v2410, %v2458
    %2460 = vmatmul.bf16.gmra.mxu0 %v1555
    %v2461 = vpop.f32.mrf.mxu0
    %v2462 = vadd.f32 %v2413, %v2461
    %v2463 = vpop.f32.mrf.mxu0
    %v2464 = vadd.f32 %v2415, %v2463
    %2465 = vmatmul.bf16.gmra.mxu0 %v1557
    %v2466 = vpop.f32.mrf.mxu0
    %v2467 = vadd.f32 %v2418, %v2466
    %v2468 = vpop.f32.mrf.mxu0
    %v2469 = vadd.f32 %v2420, %v2468
    %2470 = vmatmul.bf16.gmra.mxu0 %v1559
    %v2471 = vpop.f32.mrf.mxu0
    %v2472 = vadd.f32 %v2423, %v2471
    %v2473 = vpop.f32.mrf.mxu0
    %v2474 = vadd.f32 %v2425, %v2473
    %2475 = vmatmul.bf16.gmra.mxu0 %v1561
    %v2476 = vpop.f32.mrf.mxu0
    %v2477 = vadd.f32 %v2428, %v2476
    %v2478 = vpop.f32.mrf.mxu0
    %v2479 = vadd.f32 %v2430, %v2478
    %2480 = vmatmul.bf16.gmra.mxu0 %v1563
    %v2481 = vpop.f32.mrf.mxu0
    %v2482 = vadd.f32 %v2433, %v2481
    %v2483 = vpop.f32.mrf.mxu0
    %v2484 = vadd.f32 %v2435, %v2483
    %2485 = vdwg.mxu0
    %v2486 = vld [vmem:[%s0] sm:$0xee]
    %v2487 = vld [vmem:[%s0 + $0x10] sm:$0xee]
    %v2488 = vld [vmem:[%s0 + $0x20] sm:$0xee]
    %v2489 = vld [vmem:[%s0 + $0x30] sm:$0xee]
    %v2490 = vld [vmem:[%s0 + $0x40] sm:$0xee]
    %v2491 = vld [vmem:[%s0 + $0x50] sm:$0xee]
    %v2492 = vld [vmem:[%s0 + $0x60] sm:$0xee]
    %v2493 = vld [vmem:[%s0 + $0x70] sm:$0xee]
    %v2494 = vld [vmem:[%s0 + $0xa0] sm:$0xee]
    %v2495 = vld [vmem:[%s0 + $0xb0] sm:$0xee]
    %v2496 = vld [vmem:[%s0 + $0xc0] sm:$0xee]
    %v2497 = vld [vmem:[%s0 + $0xd0] sm:$0xee]
    %v2498 = vld [vmem:[%s0 + $0xe0] sm:$0xee]
    %v2499 = vld [vmem:[%s0 + $0xf0] sm:$0xee]
    %v2500 = vld [vmem:[%s0 + $0x100] sm:$0xee]
    %v2501 = vld [vmem:[%s0 + $0x110] sm:$0xee]
    %vm2534 = vcmask 1042432
    %vm2535 = vcmask 1046532
    %vm2536 = vmor %vm2534, %vm2535
    %v2537 = vrot.slane %v2486, 5
    %v2538 = vrot.slane %v2537, 4
    %v2539 = vrot.slane %v191, 5
    %v2540 = vsel %vm2536, %v2538, %v2539
    %v2541 = vrot.slane %v2487, 5
    %v2542 = vrot.slane %v2541, 4
    %v2543 = vrot.slane %v192, 5
    %v2544 = vsel %vm2536, %v2542, %v2543
    %v2545 = vrot.slane %v2488, 5
    %v2546 = vrot.slane %v2545, 4
    %v2547 = vrot.slane %v193, 5
    %v2548 = vsel %vm2536, %v2546, %v2547
    %v2549 = vrot.slane %v2489, 5
    %v2550 = vrot.slane %v2549, 4
    %v2551 = vrot.slane %v194, 5
    %v2552 = vsel %vm2536, %v2550, %v2551
    %v2553 = vrot.slane %v2490, 5
    %v2554 = vrot.slane %v2553, 4
    %v2555 = vrot.slane %v195, 5
    %v2556 = vsel %vm2536, %v2554, %v2555
    %v2557 = vrot.slane %v2491, 5
    %v2558 = vrot.slane %v2557, 4
    %v2559 = vrot.slane %v196, 5
    %v2560 = vsel %vm2536, %v2558, %v2559
    %v2561 = vrot.slane %v2492, 5
    %v2562 = vrot.slane %v2561, 4
    %v2563 = vrot.slane %v197, 5
    %v2564 = vsel %vm2536, %v2562, %v2563
    %v2565 = vrot.slane %v2493, 5
    %v2566 = vrot.slane %v2565, 4
    %v2567 = vrot.slane %v198, 5
    %v2568 = vsel %vm2536, %v2566, %v2567
    %v2569 = vrot.slane %v2494, 5
    %v2570 = vrot.slane %v2569, 4
    %v2571 = vrot.slane %v199, 5
    %v2572 = vsel %vm2536, %v2570, %v2571
    %v2573 = vrot.slane %v2495, 5
    %v2574 = vrot.slane %v2573, 4
    %v2575 = vrot.slane %v200, 5
    %v2576 = vsel %vm2536, %v2574, %v2575
    %v2577 = vrot.slane %v2496, 5
    %v2578 = vrot.slane %v2577, 4
    %v2579 = vrot.slane %v201, 5
    %v2580 = vsel %vm2536, %v2578, %v2579
    %v2581 = vrot.slane %v2497, 5
    %v2582 = vrot.slane %v2581, 4
    %v2583 = vrot.slane %v202, 5
    %v2584 = vsel %vm2536, %v2582, %v2583
    %v2585 = vrot.slane %v2498, 5
    %v2586 = vrot.slane %v2585, 4
    %v2587 = vrot.slane %v203, 5
    %v2588 = vsel %vm2536, %v2586, %v2587
    %v2589 = vrot.slane %v2499, 5
    %v2590 = vrot.slane %v2589, 4
    %v2591 = vrot.slane %v204, 5
    %v2592 = vsel %vm2536, %v2590, %v2591
    %v2593 = vrot.slane %v2500, 5
    %v2594 = vrot.slane %v2593, 4
    %v2595 = vrot.slane %v205, 5
    %v2596 = vsel %vm2536, %v2594, %v2595
    %v2597 = vrot.slane %v2501, 5
    %v2598 = vrot.slane %v2597, 4
    %v2599 = vrot.slane %v206, 5
    %v2600 = vsel %vm2536, %v2598, %v2599
    %v2601 = vld [vmem:[#allocation2 + $0x500] sm:$0xff]
    %v2602 = vld [vmem:[#allocation2 + $0x508] sm:$0xff]
    %v2603 = vld [vmem:[#allocation2 + $0x510] sm:$0xf]
    %v2604 = vld [vmem:[#allocation2 + $0x514] sm:$0xff]
    %v2605 = vld [vmem:[#allocation2 + $0x51c] sm:$0xff]
    %v2606 = vld [vmem:[#allocation2 + $0x524] sm:$0xf]
    %v2607 = vld [vmem:[#allocation2 + $0x528] sm:$0xff]
    %v2608 = vld [vmem:[#allocation2 + $0x530] sm:$0xff]
    %v2609 = vld [vmem:[#allocation2 + $0x538] sm:$0xf]
    %v2610 = vld [vmem:[#allocation2 + $0x53c] sm:$0xff]
    %v2611 = vld [vmem:[#allocation2 + $0x544] sm:$0xff]
    %v2612 = vld [vmem:[#allocation2 + $0x54c] sm:$0xf]
    %v2613 = vld [vmem:[#allocation2 + $0x550] sm:$0xff]
    %v2614 = vld [vmem:[#allocation2 + $0x558] sm:$0xff]
    %v2615 = vld [vmem:[#allocation2 + $0x560] sm:$0xf]
    %v2616 = vld [vmem:[#allocation2 + $0x564] sm:$0xff]
    %v2617 = vld [vmem:[#allocation2 + $0x56c] sm:$0xff]
    %v2618 = vld [vmem:[#allocation2 + $0x574] sm:$0xf]
    %v2619 = vld [vmem:[#allocation2 + $0x578] sm:$0xff]
    %v2620 = vld [vmem:[#allocation2 + $0x580] sm:$0xff]
    %v2621 = vld [vmem:[#allocation2 + $0x588] sm:$0xf]
    %v2622 = vld [vmem:[#allocation2 + $0x58c] sm:$0xff]
    %v2623 = vld [vmem:[#allocation2 + $0x594] sm:$0xff]
    %v2624 = vld [vmem:[#allocation2 + $0x59c] sm:$0xf]
    %v2625 = vld [vmem:[#allocation2 + $0x5a0] sm:$0xff]
    %v2626 = vld [vmem:[#allocation2 + $0x5a8] sm:$0xff]
    %v2627 = vld [vmem:[#allocation2 + $0x5b0] sm:$0xf]
    %v2628 = vld [vmem:[#allocation2 + $0x5b4] sm:$0xff]
    %v2629 = vld [vmem:[#allocation2 + $0x5bc] sm:$0xff]
    %v2630 = vld [vmem:[#allocation2 + $0x5c4] sm:$0xf]
    %v2631 = vld [vmem:[#allocation2 + $0x5c8] sm:$0xff]
    %v2632 = vld [vmem:[#allocation2 + $0x5d0] sm:$0xff]
    %v2633 = vld [vmem:[#allocation2 + $0x5d8] sm:$0xf]
    %v2634 = vld [vmem:[#allocation2 + $0x5dc] sm:$0xff]
    %v2635 = vld [vmem:[#allocation2 + $0x5e4] sm:$0xff]
    %v2636 = vld [vmem:[#allocation2 + $0x5ec] sm:$0xf]
    %v2637 = vld [vmem:[#allocation2 + $0x5f0] sm:$0xff]
    %v2638 = vld [vmem:[#allocation2 + $0x5f8] sm:$0xff]
    %v2639 = vld [vmem:[#allocation2 + $0x600] sm:$0xf]
    %v2640 = vld [vmem:[#allocation2 + $0x604] sm:$0xff]
    %v2641 = vld [vmem:[#allocation2 + $0x60c] sm:$0xff]
    %v2642 = vld [vmem:[#allocation2 + $0x614] sm:$0xf]
    %v2643 = vld [vmem:[#allocation2 + $0x618] sm:$0xff]
    %v2644 = vld [vmem:[#allocation2 + $0x620] sm:$0xff]
    %v2645 = vld [vmem:[#allocation2 + $0x628] sm:$0xf]
    %v2646 = vld [vmem:[#allocation2 + $0x62c] sm:$0xff]
    %v2647 = vld [vmem:[#allocation2 + $0x634] sm:$0xff]
    %v2648 = vld [vmem:[#allocation2 + $0x63c] sm:$0xf]
    %v2649 = vld [vmem:[#allocation2 + $0x640] sm:$0xff]
    %v2650 = vld [vmem:[#allocation2 + $0x648] sm:$0xff]
    %v2651 = vld [vmem:[#allocation2 + $0x650] sm:$0xf]
    %v2652 = vld [vmem:[#allocation2 + $0x654] sm:$0xff]
    %v2653 = vld [vmem:[#allocation2 + $0x65c] sm:$0xff]
    %v2654 = vld [vmem:[#allocation2 + $0x664] sm:$0xf]
    %v2655 = vld [vmem:[#allocation2 + $0x668] sm:$0xff]
    %v2656 = vld [vmem:[#allocation2 + $0x670] sm:$0xff]
    %v2657 = vld [vmem:[#allocation2 + $0x678] sm:$0xf]
    %v2658 = vld [vmem:[#allocation2 + $0x67c] sm:$0xff]
    %v2659 = vld [vmem:[#allocation2 + $0x684] sm:$0xff]
    %v2660 = vld [vmem:[#allocation2 + $0x68c] sm:$0xf]
    %v2661 = vld [vmem:[#allocation2 + $0x690] sm:$0xff]
    %v2662 = vld [vmem:[#allocation2 + $0x698] sm:$0xff]
    %v2663 = vld [vmem:[#allocation2 + $0x6a0] sm:$0xf]
    %v2664 = vld [vmem:[#allocation2 + $0x6a4] sm:$0xff]
    %v2665 = vld [vmem:[#allocation2 + $0x6ac] sm:$0xff]
    %v2666 = vld [vmem:[#allocation2 + $0x6b4] sm:$0xf]
    %v2667 = vld [vmem:[#allocation2 + $0x6b8] sm:$0xff]
    %v2668 = vld [vmem:[#allocation2 + $0x6c0] sm:$0xff]
    %v2669 = vld [vmem:[#allocation2 + $0x6c8] sm:$0xf]
    %v2670 = vld [vmem:[#allocation2 + $0x6cc] sm:$0xff]
    %v2671 = vld [vmem:[#allocation2 + $0x6d4] sm:$0xff]
    %v2672 = vld [vmem:[#allocation2 + $0x6dc] sm:$0xf]
    %v2673 = vld [vmem:[#allocation2 + $0x6e0] sm:$0xff]
    %v2674 = vld [vmem:[#allocation2 + $0x6e8] sm:$0xff]
    %v2675 = vld [vmem:[#allocation2 + $0x6f0] sm:$0xf]
    %v2676 = vld [vmem:[#allocation2 + $0x6f4] sm:$0xff]
    %v2677 = vld [vmem:[#allocation2 + $0x6fc] sm:$0xff]
    %v2678 = vld [vmem:[#allocation2 + $0x704] sm:$0xf]
    %v2679 = vld [vmem:[#allocation2 + $0x708] sm:$0xff]
    %v2680 = vld [vmem:[#allocation2 + $0x710] sm:$0xff]
    %v2681 = vld [vmem:[#allocation2 + $0x718] sm:$0xf]
    %v2682 = vld [vmem:[#allocation2 + $0x71c] sm:$0xff]
    %v2683 = vld [vmem:[#allocation2 + $0x724] sm:$0xff]
    %v2684 = vld [vmem:[#allocation2 + $0x72c] sm:$0xf]
    %v2685 = vld [vmem:[#allocation2 + $0x730] sm:$0xff]
    %v2686 = vld [vmem:[#allocation2 + $0x738] sm:$0xff]
    %v2687 = vld [vmem:[#allocation2 + $0x740] sm:$0xf]
    %v2688 = vld [vmem:[#allocation2 + $0x744] sm:$0xff]
    %v2689 = vld [vmem:[#allocation2 + $0x74c] sm:$0xff]
    %v2690 = vld [vmem:[#allocation2 + $0x754] sm:$0xf]
    %v2691 = vld [vmem:[#allocation2 + $0x758] sm:$0xff]
    %v2692 = vld [vmem:[#allocation2 + $0x760] sm:$0xff]
    %v2693 = vld [vmem:[#allocation2 + $0x768] sm:$0xf]
    %v2694 = vld [vmem:[#allocation2 + $0x76c] sm:$0xff]
    %v2695 = vld [vmem:[#allocation2 + $0x774] sm:$0xff]
    %v2696 = vld [vmem:[#allocation2 + $0x77c] sm:$0xf]
    %v2697 = vunpack.c.l.b16 %v2540
    %v2698 = vunpack.c.h.b16 %v2540
    %v2699 = vunpack.c.l.b16 %v2544
    %v2700 = vunpack.c.h.b16 %v2544
    %v2701 = vunpack.c.l.b16 %v2548
    %v2702 = vunpack.c.h.b16 %v2548
    %v2703 = vunpack.c.l.b16 %v2552
    %v2704 = vunpack.c.h.b16 %v2552
    %v2705 = vunpack.c.l.b16 %v2556
    %v2706 = vunpack.c.h.b16 %v2556
    %v2707 = vunpack.c.l.b16 %v2560
    %v2708 = vunpack.c.h.b16 %v2560
    %v2709 = vunpack.c.l.b16 %v2564
    %v2710 = vunpack.c.h.b16 %v2564
    %v2711 = vunpack.c.l.b16 %v2568
    %v2712 = vunpack.c.h.b16 %v2568
    %v2713 = vunpack.c.l.b16 %v2572
    %v2714 = vunpack.c.h.b16 %v2572
    %v2715 = vunpack.c.l.b16 %v2576
    %v2716 = vunpack.c.h.b16 %v2576
    %v2717 = vunpack.c.l.b16 %v2580
    %v2718 = vunpack.c.h.b16 %v2580
    %v2719 = vunpack.c.l.b16 %v2584
    %v2720 = vunpack.c.h.b16 %v2584
    %v2721 = vunpack.c.l.b16 %v2588
    %v2722 = vunpack.c.h.b16 %v2588
    %v2723 = vunpack.c.l.b16 %v2592
    %v2724 = vunpack.c.h.b16 %v2592
    %v2725 = vunpack.c.l.b16 %v2596
    %v2726 = vunpack.c.h.b16 %v2596
    %v2727 = vunpack.c.l.b16 %v2600
    %v2728 = vunpack.c.h.b16 %v2600
    %v2729 = vpack.c.b16 %v2699, %v2697
    %v2730 = vpack.c.b16 %v2700, %v2698
    %v2731 = vpack.c.b16 %v2703, %v2701
    %v2732 = vpack.c.b16 %v2704, %v2702
    %v2733 = vpack.c.b16 %v2707, %v2705
    %v2734 = vpack.c.b16 %v2708, %v2706
    %v2735 = vpack.c.b16 %v2711, %v2709
    %v2736 = vpack.c.b16 %v2712, %v2710
    %v2737 = vpack.c.b16 %v2715, %v2713
    %v2738 = vpack.c.b16 %v2716, %v2714
    %v2739 = vpack.c.b16 %v2719, %v2717
    %v2740 = vpack.c.b16 %v2720, %v2718
    %v2741 = vpack.c.b16 %v2723, %v2721
    %v2742 = vpack.c.b16 %v2724, %v2722
    %v2743 = vpack.c.b16 %v2727, %v2725
    %v2744 = vpack.c.b16 %v2728, %v2726
    %v2857 = vunpack.c.l.b16 %v2601
    %v2858 = vunpack.c.h.b16 %v2601
    %v2859 = vunpack.c.l.b16 %v2602
    %v2860 = vunpack.c.h.b16 %v2602
    %v2861 = vunpack.c.l.b16 %v2603
    %v2862 = vunpack.c.l.b16 %v2604
    %v2863 = vunpack.c.h.b16 %v2604
    %v2864 = vunpack.c.l.b16 %v2605
    %v2865 = vunpack.c.h.b16 %v2605
    %v2866 = vunpack.c.l.b16 %v2606
    %v2867 = vunpack.c.l.b16 %v2607
    %v2868 = vunpack.c.h.b16 %v2607
    %v2869 = vunpack.c.l.b16 %v2608
    %v2870 = vunpack.c.h.b16 %v2608
    %v2871 = vunpack.c.l.b16 %v2609
    %v2872 = vunpack.c.l.b16 %v2610
    %v2873 = vunpack.c.h.b16 %v2610
    %v2874 = vunpack.c.l.b16 %v2611
    %v2875 = vunpack.c.h.b16 %v2611
    %v2876 = vunpack.c.l.b16 %v2612
    %v2877 = vunpack.c.l.b16 %v2613
    %v2878 = vunpack.c.h.b16 %v2613
    %v2879 = vunpack.c.l.b16 %v2614
    %v2880 = vunpack.c.h.b16 %v2614
    %v2881 = vunpack.c.l.b16 %v2615
    %v2882 = vunpack.c.l.b16 %v2616
    %v2883 = vunpack.c.h.b16 %v2616
    %v2884 = vunpack.c.l.b16 %v2617
    %v2885 = vunpack.c.h.b16 %v2617
    %v2886 = vunpack.c.l.b16 %v2618
    %v2887 = vunpack.c.l.b16 %v2619
    %v2888 = vunpack.c.h.b16 %v2619
    %v2889 = vunpack.c.l.b16 %v2620
    %v2890 = vunpack.c.h.b16 %v2620
    %v2891 = vunpack.c.l.b16 %v2621
    %v2892 = vunpack.c.l.b16 %v2622
    %v2893 = vunpack.c.h.b16 %v2622
    %v2894 = vunpack.c.l.b16 %v2623
    %v2895 = vunpack.c.h.b16 %v2623
    %v2896 = vunpack.c.l.b16 %v2624
    %v2897 = vunpack.c.l.b16 %v2625
    %v2898 = vunpack.c.h.b16 %v2625
    %v2899 = vunpack.c.l.b16 %v2626
    %v2900 = vunpack.c.h.b16 %v2626
    %v2901 = vunpack.c.l.b16 %v2627
    %v2902 = vunpack.c.l.b16 %v2628
    %v2903 = vunpack.c.h.b16 %v2628
    %v2904 = vunpack.c.l.b16 %v2629
    %v2905 = vunpack.c.h.b16 %v2629
    %v2906 = vunpack.c.l.b16 %v2630
    %v2907 = vunpack.c.l.b16 %v2631
    %v2908 = vunpack.c.h.b16 %v2631
    %v2909 = vunpack.c.l.b16 %v2632
    %v2910 = vunpack.c.h.b16 %v2632
    %v2911 = vunpack.c.l.b16 %v2633
    %v2912 = vunpack.c.l.b16 %v2634
    %v2913 = vunpack.c.h.b16 %v2634
    %v2914 = vunpack.c.l.b16 %v2635
    %v2915 = vunpack.c.h.b16 %v2635
    %v2916 = vunpack.c.l.b16 %v2636
    %v2917 = vunpack.c.l.b16 %v2637
    %v2918 = vunpack.c.h.b16 %v2637
    %v2919 = vunpack.c.l.b16 %v2638
    %v2920 = vunpack.c.h.b16 %v2638
    %v2921 = vunpack.c.l.b16 %v2639
    %v2922 = vunpack.c.l.b16 %v2640
    %v2923 = vunpack.c.h.b16 %v2640
    %v2924 = vunpack.c.l.b16 %v2641
    %v2925 = vunpack.c.h.b16 %v2641
    %v2926 = vunpack.c.l.b16 %v2642
    %v2927 = vunpack.c.l.b16 %v2643
    %v2928 = vunpack.c.h.b16 %v2643
    %v2929 = vunpack.c.l.b16 %v2644
    %v2930 = vunpack.c.h.b16 %v2644
    %v2931 = vunpack.c.l.b16 %v2645
    %v2932 = vunpack.c.l.b16 %v2646
    %v2933 = vunpack.c.h.b16 %v2646
    %v2934 = vunpack.c.l.b16 %v2647
    %v2935 = vunpack.c.h.b16 %v2647
    %v2936 = vunpack.c.l.b16 %v2648
    %v2937 = vunpack.c.l.b16 %v2649
    %v2938 = vunpack.c.h.b16 %v2649
    %v2939 = vunpack.c.l.b16 %v2650
    %v2940 = vunpack.c.h.b16 %v2650
    %v2941 = vunpack.c.l.b16 %v2651
    %v2942 = vunpack.c.l.b16 %v2652
    %v2943 = vunpack.c.h.b16 %v2652
    %v2944 = vunpack.c.l.b16 %v2653
    %v2945 = vunpack.c.h.b16 %v2653
    %v2946 = vunpack.c.l.b16 %v2654
    %v2947 = vunpack.c.l.b16 %v2655
    %v2948 = vunpack.c.h.b16 %v2655
    %v2949 = vunpack.c.l.b16 %v2656
    %v2950 = vunpack.c.h.b16 %v2656
    %v2951 = vunpack.c.l.b16 %v2657
    %v2952 = vunpack.c.l.b16 %v2658
    %v2953 = vunpack.c.h.b16 %v2658
    %v2954 = vunpack.c.l.b16 %v2659
    %v2955 = vunpack.c.h.b16 %v2659
    %v2956 = vunpack.c.l.b16 %v2660
    %v2957 = vunpack.c.l.b16 %v2661
    %v2958 = vunpack.c.h.b16 %v2661
    %v2959 = vunpack.c.l.b16 %v2662
    %v2960 = vunpack.c.h.b16 %v2662
    %v2961 = vunpack.c.l.b16 %v2663
    %v2962 = vunpack.c.l.b16 %v2664
    %v2963 = vunpack.c.h.b16 %v2664
    %v2964 = vunpack.c.l.b16 %v2665
    %v2965 = vunpack.c.h.b16 %v2665
    %v2966 = vunpack.c.l.b16 %v2666
    %v2967 = vunpack.c.l.b16 %v2667
    %v2968 = vunpack.c.h.b16 %v2667
    %v2969 = vunpack.c.l.b16 %v2668
    %v2970 = vunpack.c.h.b16 %v2668
    %v2971 = vunpack.c.l.b16 %v2669
    %v2972 = vunpack.c.l.b16 %v2670
    %v2973 = vunpack.c.h.b16 %v2670
    %v2974 = vunpack.c.l.b16 %v2671
    %v2975 = vunpack.c.h.b16 %v2671
    %v2976 = vunpack.c.l.b16 %v2672
    %v2977 = vunpack.c.l.b16 %v2673
    %v2978 = vunpack.c.h.b16 %v2673
    %v2979 = vunpack.c.l.b16 %v2674
    %v2980 = vunpack.c.h.b16 %v2674
    %v2981 = vunpack.c.l.b16 %v2675
    %v2982 = vunpack.c.l.b16 %v2676
    %v2983 = vunpack.c.h.b16 %v2676
    %v2984 = vunpack.c.l.b16 %v2677
    %v2985 = vunpack.c.h.b16 %v2677
    %v2986 = vunpack.c.l.b16 %v2678
    %v2987 = vunpack.c.l.b16 %v2679
    %v2988 = vunpack.c.h.b16 %v2679
    %v2989 = vunpack.c.l.b16 %v2680
    %v2990 = vunpack.c.h.b16 %v2680
    %v2991 = vunpack.c.l.b16 %v2681
    %v2992 = vunpack.c.l.b16 %v2682
    %v2993 = vunpack.c.h.b16 %v2682
    %v2994 = vunpack.c.l.b16 %v2683
    %v2995 = vunpack.c.h.b16 %v2683
    %v2996 = vunpack.c.l.b16 %v2684
    %v2997 = vunpack.c.l.b16 %v2685
    %v2998 = vunpack.c.h.b16 %v2685
    %v2999 = vunpack.c.l.b16 %v2686
    %v3000 = vunpack.c.h.b16 %v2686
    %v3001 = vunpack.c.l.b16 %v2687
    %v3002 = vunpack.c.l.b16 %v2688
    %v3003 = vunpack.c.h.b16 %v2688
    %v3004 = vunpack.c.l.b16 %v2689
    %v3005 = vunpack.c.h.b16 %v2689
    %v3006 = vunpack.c.l.b16 %v2690
    %v3007 = vunpack.c.l.b16 %v2691
    %v3008 = vunpack.c.h.b16 %v2691
    %v3009 = vunpack.c.l.b16 %v2692
    %v3010 = vunpack.c.h.b16 %v2692
    %v3011 = vunpack.c.l.b16 %v2693
    %v3012 = vunpack.c.l.b16 %v2694
    %v3013 = vunpack.c.h.b16 %v2694
    %v3014 = vunpack.c.l.b16 %v2695
    %v3015 = vunpack.c.h.b16 %v2695
    %v3016 = vunpack.c.l.b16 %v2696
    %v3017 = vpack.c.b16 %v2862, %v2857
    %v3018 = vpack.c.b16 %v2863, %v2858
    %v3019 = vpack.c.b16 %v2864, %v2859
    %v3020 = vpack.c.b16 %v2865, %v2860
    %v3021 = vpack.c.b16 %v2866, %v2861
    %v3022 = vpack.c.b16 %v2872, %v2867
    %v3023 = vpack.c.b16 %v2873, %v2868
    %v3024 = vpack.c.b16 %v2874, %v2869
    %v3025 = vpack.c.b16 %v2875, %v2870
    %v3026 = vpack.c.b16 %v2876, %v2871
    %v3027 = vpack.c.b16 %v2882, %v2877
    %v3028 = vpack.c.b16 %v2883, %v2878
    %v3029 = vpack.c.b16 %v2884, %v2879
    %v3030 = vpack.c.b16 %v2885, %v2880
    %v3031 = vpack.c.b16 %v2886, %v2881
    %v3032 = vpack.c.b16 %v2892, %v2887
    %v3033 = vpack.c.b16 %v2893, %v2888
    %v3034 = vpack.c.b16 %v2894, %v2889
    %v3035 = vpack.c.b16 %v2895, %v2890
    %v3036 = vpack.c.b16 %v2896, %v2891
    %v3037 = vpack.c.b16 %v2902, %v2897
    %v3038 = vpack.c.b16 %v2903, %v2898
    %v3039 = vpack.c.b16 %v2904, %v2899
    %v3040 = vpack.c.b16 %v2905, %v2900
    %v3041 = vpack.c.b16 %v2906, %v2901
    %v3042 = vpack.c.b16 %v2912, %v2907
    %v3043 = vpack.c.b16 %v2913, %v2908
    %v3044 = vpack.c.b16 %v2914, %v2909
    %v3045 = vpack.c.b16 %v2915, %v2910
    %v3046 = vpack.c.b16 %v2916, %v2911
    %v3047 = vpack.c.b16 %v2922, %v2917
    %v3048 = vpack.c.b16 %v2923, %v2918
    %v3049 = vpack.c.b16 %v2924, %v2919
    %v3050 = vpack.c.b16 %v2925, %v2920
    %v3051 = vpack.c.b16 %v2926, %v2921
    %v3052 = vpack.c.b16 %v2932, %v2927
    %v3053 = vpack.c.b16 %v2933, %v2928
    %v3054 = vpack.c.b16 %v2934, %v2929
    %v3055 = vpack.c.b16 %v2935, %v2930
    %v3056 = vpack.c.b16 %v2936, %v2931
    %v3057 = vpack.c.b16 %v2942, %v2937
    %v3058 = vpack.c.b16 %v2943, %v2938
    %v3059 = vpack.c.b16 %v2944, %v2939
    %v3060 = vpack.c.b16 %v2945, %v2940
    %v3061 = vpack.c.b16 %v2946, %v2941
    %v3062 = vpack.c.b16 %v2952, %v2947
    %v3063 = vpack.c.b16 %v2953, %v2948
    %v3064 = vpack.c.b16 %v2954, %v2949
    %v3065 = vpack.c.b16 %v2955, %v2950
    %v3066 = vpack.c.b16 %v2956, %v2951
    %v3067 = vpack.c.b16 %v2962, %v2957
    %v3068 = vpack.c.b16 %v2963, %v2958
    %v3069 = vpack.c.b16 %v2964, %v2959
    %v3070 = vpack.c.b16 %v2965, %v2960
    %v3071 = vpack.c.b16 %v2966, %v2961
    %v3072 = vpack.c.b16 %v2972, %v2967
    %v3073 = vpack.c.b16 %v2973, %v2968
    %v3074 = vpack.c.b16 %v2974, %v2969
    %v3075 = vpack.c.b16 %v2975, %v2970
    %v3076 = vpack.c.b16 %v2976, %v2971
    %v3077 = vpack.c.b16 %v2982, %v2977
    %v3078 = vpack.c.b16 %v2983, %v2978
    %v3079 = vpack.c.b16 %v2984, %v2979
    %v3080 = vpack.c.b16 %v2985, %v2980
    %v3081 = vpack.c.b16 %v2986, %v2981
    %v3082 = vpack.c.b16 %v2992, %v2987
    %v3083 = vpack.c.b16 %v2993, %v2988
    %v3084 = vpack.c.b16 %v2994, %v2989
    %v3085 = vpack.c.b16 %v2995, %v2990
    %v3086 = vpack.c.b16 %v2996, %v2991
    %v3087 = vpack.c.b16 %v3002, %v2997
    %v3088 = vpack.c.b16 %v3003, %v2998
    %v3089 = vpack.c.b16 %v3004, %v2999
    %v3090 = vpack.c.b16 %v3005, %v3000
    %v3091 = vpack.c.b16 %v3006, %v3001
    %v3092 = vpack.c.b16 %v3012, %v3007
    %v3093 = vpack.c.b16 %v3013, %v3008
    %v3094 = vpack.c.b16 %v3014, %v3009
    %v3095 = vpack.c.b16 %v3015, %v3010
    %v3096 = vpack.c.b16 %v3016, %v3011
    %3177 = vmatpush.bf16.msra.mxu0 %v3052
    %3178 = vmatpush.bf16.msra.mxu0 %v3047
    %3179 = vmatpush.bf16.msra.mxu0 %v3042
    %3180 = vmatpush.bf16.msra.mxu0 %v3037
    %3181 = vmatpush.bf16.msra.mxu0 %v3032
    %3182 = vmatpush.bf16.msra.mxu0 %v3027
    %3183 = vmatpush.bf16.msra.mxu0 %v3022
    %3184 = vmatpush.bf16.msra.mxu0 %v3017
    %3185 = vmatmul.bf16.gmra.mxu0 %v2729
    %v3186 = vpop.f32.mrf.mxu0
    %v3187 = vadd.f32 0.0, %v3186
    %v3188 = vpop.f32.mrf.mxu0
    %v3189 = vadd.f32 0.0, %v3188
    %3190 = vmatmul.bf16.gmra.mxu0 %v2731
    %v3191 = vpop.f32.mrf.mxu0
    %v3192 = vadd.f32 0.0, %v3191
    %v3193 = vpop.f32.mrf.mxu0
    %v3194 = vadd.f32 0.0, %v3193
    %3195 = vmatmul.bf16.gmra.mxu0 %v2733
    %v3196 = vpop.f32.mrf.mxu0
    %v3197 = vadd.f32 0.0, %v3196
    %v3198 = vpop.f32.mrf.mxu0
    %v3199 = vadd.f32 0.0, %v3198
    %3200 = vmatmul.bf16.gmra.mxu0 %v2735
    %v3201 = vpop.f32.mrf.mxu0
    %v3202 = vadd.f32 0.0, %v3201
    %v3203 = vpop.f32.mrf.mxu0
    %v3204 = vadd.f32 0.0, %v3203
    %3205 = vmatmul.bf16.gmra.mxu0 %v2737
    %v3206 = vpop.f32.mrf.mxu0
    %v3207 = vadd.f32 0.0, %v3206
    %v3208 = vpop.f32.mrf.mxu0
    %v3209 = vadd.f32 0.0, %v3208
    %3210 = vmatmul.bf16.gmra.mxu0 %v2739
    %v3211 = vpop.f32.mrf.mxu0
    %v3212 = vadd.f32 0.0, %v3211
    %v3213 = vpop.f32.mrf.mxu0
    %v3214 = vadd.f32 0.0, %v3213
    %3215 = vmatmul.bf16.gmra.mxu0 %v2741
    %v3216 = vpop.f32.mrf.mxu0
    %v3217 = vadd.f32 0.0, %v3216
    %v3218 = vpop.f32.mrf.mxu0
    %v3219 = vadd.f32 0.0, %v3218
    %3220 = vmatmul.bf16.gmra.mxu0 %v2743
    %v3221 = vpop.f32.mrf.mxu0
    %v3222 = vadd.f32 0.0, %v3221
    %v3223 = vpop.f32.mrf.mxu0
    %v3224 = vadd.f32 0.0, %v3223
    %3225 = vdwg.mxu0
    %3226 = vmatpush.bf16.msra.mxu0 %v3092
    %3227 = vmatpush.bf16.msra.mxu0 %v3087
    %3228 = vmatpush.bf16.msra.mxu0 %v3082
    %3229 = vmatpush.bf16.msra.mxu0 %v3077
    %3230 = vmatpush.bf16.msra.mxu0 %v3072
    %3231 = vmatpush.bf16.msra.mxu0 %v3067
    %3232 = vmatpush.bf16.msra.mxu0 %v3062
    %3233 = vmatpush.bf16.msra.mxu0 %v3057
    %3234 = vmatmul.bf16.gmra.mxu0 %v2730
    %v3235 = vpop.f32.mrf.mxu0
    %v3236 = vadd.f32 %v3187, %v3235
    %v3237 = vpop.f32.mrf.mxu0
    %v3238 = vadd.f32 %v3189, %v3237
    %3239 = vmatmul.bf16.gmra.mxu0 %v2732
    %v3240 = vpop.f32.mrf.mxu0
    %v3241 = vadd.f32 %v3192, %v3240
    %v3242 = vpop.f32.mrf.mxu0
    %v3243 = vadd.f32 %v3194, %v3242
    %3244 = vmatmul.bf16.gmra.mxu0 %v2734
    %v3245 = vpop.f32.mrf.mxu0
    %v3246 = vadd.f32 %v3197, %v3245
    %v3247 = vpop.f32.mrf.mxu0
    %v3248 = vadd.f32 %v3199, %v3247
    %3249 = vmatmul.bf16.gmra.mxu0 %v2736
    %v3250 = vpop.f32.mrf.mxu0
    %v3251 = vadd.f32 %v3202, %v3250
    %v3252 = vpop.f32.mrf.mxu0
    %v3253 = vadd.f32 %v3204, %v3252
    %3254 = vmatmul.bf16.gmra.mxu0 %v2738
    %v3255 = vpop.f32.mrf.mxu0
    %v3256 = vadd.f32 %v3207, %v3255
    %v3257 = vpop.f32.mrf.mxu0
    %v3258 = vadd.f32 %v3209, %v3257
    %3259 = vmatmul.bf16.gmra.mxu0 %v2740
    %v3260 = vpop.f32.mrf.mxu0
    %v3261 = vadd.f32 %v3212, %v3260
    %v3262 = vpop.f32.mrf.mxu0
    %v3263 = vadd.f32 %v3214, %v3262
    %3264 = vmatmul.bf16.gmra.mxu0 %v2742
    %v3265 = vpop.f32.mrf.mxu0
    %v3266 = vadd.f32 %v3217, %v3265
    %v3267 = vpop.f32.mrf.mxu0
    %v3268 = vadd.f32 %v3219, %v3267
    %3269 = vmatmul.bf16.gmra.mxu0 %v2744
    %v3270 = vpop.f32.mrf.mxu0
    %v3271 = vadd.f32 %v3222, %v3270
    %v3272 = vpop.f32.mrf.mxu0
    %v3273 = vadd.f32 %v3224, %v3272
    %3274 = vdwg.mxu0
    %3275 = vmatpush.bf16.msra.mxu0 %v3053
    %3276 = vmatpush.bf16.msra.mxu0 %v3048
    %3277 = vmatpush.bf16.msra.mxu0 %v3043
    %3278 = vmatpush.bf16.msra.mxu0 %v3038
    %3279 = vmatpush.bf16.msra.mxu0 %v3033
    %3280 = vmatpush.bf16.msra.mxu0 %v3028
    %3281 = vmatpush.bf16.msra.mxu0 %v3023
    %3282 = vmatpush.bf16.msra.mxu0 %v3018
    %3283 = vmatmul.bf16.gmra.mxu0 %v2729
    %v3284 = vpop.f32.mrf.mxu0
    %v3285 = vadd.f32 0.0, %v3284
    %v3286 = vpop.f32.mrf.mxu0
    %v3287 = vadd.f32 0.0, %v3286
    %3288 = vmatmul.bf16.gmra.mxu0 %v2731
    %v3289 = vpop.f32.mrf.mxu0
    %v3290 = vadd.f32 0.0, %v3289
    %v3291 = vpop.f32.mrf.mxu0
    %v3292 = vadd.f32 0.0, %v3291
    %3293 = vmatmul.bf16.gmra.mxu0 %v2733
    %v3294 = vpop.f32.mrf.mxu0
    %v3295 = vadd.f32 0.0, %v3294
    %v3296 = vpop.f32.mrf.mxu0
    %v3297 = vadd.f32 0.0, %v3296
    %3298 = vmatmul.bf16.gmra.mxu0 %v2735
    %v3299 = vpop.f32.mrf.mxu0
    %v3300 = vadd.f32 0.0, %v3299
    %v3301 = vpop.f32.mrf.mxu0
    %v3302 = vadd.f32 0.0, %v3301
    %3303 = vmatmul.bf16.gmra.mxu0 %v2737
    %v3304 = vpop.f32.mrf.mxu0
    %v3305 = vadd.f32 0.0, %v3304
    %v3306 = vpop.f32.mrf.mxu0
    %v3307 = vadd.f32 0.0, %v3306
    %3308 = vmatmul.bf16.gmra.mxu0 %v2739
    %v3309 = vpop.f32.mrf.mxu0
    %v3310 = vadd.f32 0.0, %v3309
    %v3311 = vpop.f32.mrf.mxu0
    %v3312 = vadd.f32 0.0, %v3311
    %3313 = vmatmul.bf16.gmra.mxu0 %v2741
    %v3314 = vpop.f32.mrf.mxu0
    %v3315 = vadd.f32 0.0, %v3314
    %v3316 = vpop.f32.mrf.mxu0
    %v3317 = vadd.f32 0.0, %v3316
    %3318 = vmatmul.bf16.gmra.mxu0 %v2743
    %v3319 = vpop.f32.mrf.mxu0
    %v3320 = vadd.f32 0.0, %v3319
    %v3321 = vpop.f32.mrf.mxu0
    %v3322 = vadd.f32 0.0, %v3321
    %3323 = vdwg.mxu0
    %3324 = vmatpush.bf16.msra.mxu0 %v3093
    %3325 = vmatpush.bf16.msra.mxu0 %v3088
    %3326 = vmatpush.bf16.msra.mxu0 %v3083
    %3327 = vmatpush.bf16.msra.mxu0 %v3078
    %3328 = vmatpush.bf16.msra.mxu0 %v3073
    %3329 = vmatpush.bf16.msra.mxu0 %v3068
    %3330 = vmatpush.bf16.msra.mxu0 %v3063
    %3331 = vmatpush.bf16.msra.mxu0 %v3058
    %3332 = vmatmul.bf16.gmra.mxu0 %v2730
    %v3333 = vpop.f32.mrf.mxu0
    %v3334 = vadd.f32 %v3285, %v3333
    %v3335 = vpop.f32.mrf.mxu0
    %v3336 = vadd.f32 %v3287, %v3335
    %3337 = vmatmul.bf16.gmra.mxu0 %v2732
    %v3338 = vpop.f32.mrf.mxu0
    %v3339 = vadd.f32 %v3290, %v3338
    %v3340 = vpop.f32.mrf.mxu0
    %v3341 = vadd.f32 %v3292, %v3340
    %3342 = vmatmul.bf16.gmra.mxu0 %v2734
    %v3343 = vpop.f32.mrf.mxu0
    %v3344 = vadd.f32 %v3295, %v3343
    %v3345 = vpop.f32.mrf.mxu0
    %v3346 = vadd.f32 %v3297, %v3345
    %3347 = vmatmul.bf16.gmra.mxu0 %v2736
    %v3348 = vpop.f32.mrf.mxu0
    %v3349 = vadd.f32 %v3300, %v3348
    %v3350 = vpop.f32.mrf.mxu0
    %v3351 = vadd.f32 %v3302, %v3350
    %3352 = vmatmul.bf16.gmra.mxu0 %v2738
    %v3353 = vpop.f32.mrf.mxu0
    %v3354 = vadd.f32 %v3305, %v3353
    %v3355 = vpop.f32.mrf.mxu0
    %v3356 = vadd.f32 %v3307, %v3355
    %3357 = vmatmul.bf16.gmra.mxu0 %v2740
    %v3358 = vpop.f32.mrf.mxu0
    %v3359 = vadd.f32 %v3310, %v3358
    %v3360 = vpop.f32.mrf.mxu0
    %v3361 = vadd.f32 %v3312, %v3360
    %3362 = vmatmul.bf16.gmra.mxu0 %v2742
    %v3363 = vpop.f32.mrf.mxu0
    %v3364 = vadd.f32 %v3315, %v3363
    %v3365 = vpop.f32.mrf.mxu0
    %v3366 = vadd.f32 %v3317, %v3365
    %3367 = vmatmul.bf16.gmra.mxu0 %v2744
    %v3368 = vpop.f32.mrf.mxu0
    %v3369 = vadd.f32 %v3320, %v3368
    %v3370 = vpop.f32.mrf.mxu0
    %v3371 = vadd.f32 %v3322, %v3370
    %3372 = vdwg.mxu0
    %3373 = vmatpush.bf16.msra.mxu0 %v3054
    %3374 = vmatpush.bf16.msra.mxu0 %v3049
    %3375 = vmatpush.bf16.msra.mxu0 %v3044
    %3376 = vmatpush.bf16.msra.mxu0 %v3039
    %3377 = vmatpush.bf16.msra.mxu0 %v3034
    %3378 = vmatpush.bf16.msra.mxu0 %v3029
    %3379 = vmatpush.bf16.msra.mxu0 %v3024
    %3380 = vmatpush.bf16.msra.mxu0 %v3019
    %3381 = vmatmul.bf16.gmra.mxu0 %v2729
    %v3382 = vpop.f32.mrf.mxu0
    %v3383 = vadd.f32 0.0, %v3382
    %v3384 = vpop.f32.mrf.mxu0
    %v3385 = vadd.f32 0.0, %v3384
    %3386 = vmatmul.bf16.gmra.mxu0 %v2731
    %v3387 = vpop.f32.mrf.mxu0
    %v3388 = vadd.f32 0.0, %v3387
    %v3389 = vpop.f32.mrf.mxu0
    %v3390 = vadd.f32 0.0, %v3389
    %3391 = vmatmul.bf16.gmra.mxu0 %v2733
    %v3392 = vpop.f32.mrf.mxu0
    %v3393 = vadd.f32 0.0, %v3392
    %v3394 = vpop.f32.mrf.mxu0
    %v3395 = vadd.f32 0.0, %v3394
    %3396 = vmatmul.bf16.gmra.mxu0 %v2735
    %v3397 = vpop.f32.mrf.mxu0
    %v3398 = vadd.f32 0.0, %v3397
    %v3399 = vpop.f32.mrf.mxu0
    %v3400 = vadd.f32 0.0, %v3399
    %3401 = vmatmul.bf16.gmra.mxu0 %v2737
    %v3402 = vpop.f32.mrf.mxu0
    %v3403 = vadd.f32 0.0, %v3402
    %v3404 = vpop.f32.mrf.mxu0
    %v3405 = vadd.f32 0.0, %v3404
    %3406 = vmatmul.bf16.gmra.mxu0 %v2739
    %v3407 = vpop.f32.mrf.mxu0
    %v3408 = vadd.f32 0.0, %v3407
    %v3409 = vpop.f32.mrf.mxu0
    %v3410 = vadd.f32 0.0, %v3409
    %3411 = vmatmul.bf16.gmra.mxu0 %v2741
    %v3412 = vpop.f32.mrf.mxu0
    %v3413 = vadd.f32 0.0, %v3412
    %v3414 = vpop.f32.mrf.mxu0
    %v3415 = vadd.f32 0.0, %v3414
    %3416 = vmatmul.bf16.gmra.mxu0 %v2743
    %v3417 = vpop.f32.mrf.mxu0
    %v3418 = vadd.f32 0.0, %v3417
    %v3419 = vpop.f32.mrf.mxu0
    %v3420 = vadd.f32 0.0, %v3419
    %3421 = vdwg.mxu0
    %3422 = vmatpush.bf16.msra.mxu0 %v3094
    %3423 = vmatpush.bf16.msra.mxu0 %v3089
    %3424 = vmatpush.bf16.msra.mxu0 %v3084
    %3425 = vmatpush.bf16.msra.mxu0 %v3079
    %3426 = vmatpush.bf16.msra.mxu0 %v3074
    %3427 = vmatpush.bf16.msra.mxu0 %v3069
    %3428 = vmatpush.bf16.msra.mxu0 %v3064
    %3429 = vmatpush.bf16.msra.mxu0 %v3059
    %3430 = vmatmul.bf16.gmra.mxu0 %v2730
    %v3431 = vpop.f32.mrf.mxu0
    %v3432 = vadd.f32 %v3383, %v3431
    %v3433 = vpop.f32.mrf.mxu0
    %v3434 = vadd.f32 %v3385, %v3433
    %3435 = vmatmul.bf16.gmra.mxu0 %v2732
    %v3436 = vpop.f32.mrf.mxu0
    %v3437 = vadd.f32 %v3388, %v3436
    %v3438 = vpop.f32.mrf.mxu0
    %v3439 = vadd.f32 %v3390, %v3438
    %3440 = vmatmul.bf16.gmra.mxu0 %v2734
    %v3441 = vpop.f32.mrf.mxu0
    %v3442 = vadd.f32 %v3393, %v3441
    %v3443 = vpop.f32.mrf.mxu0
    %v3444 = vadd.f32 %v3395, %v3443
    %3445 = vmatmul.bf16.gmra.mxu0 %v2736
    %v3446 = vpop.f32.mrf.mxu0
    %v3447 = vadd.f32 %v3398, %v3446
    %v3448 = vpop.f32.mrf.mxu0
    %v3449 = vadd.f32 %v3400, %v3448
    %3450 = vmatmul.bf16.gmra.mxu0 %v2738
    %v3451 = vpop.f32.mrf.mxu0
    %v3452 = vadd.f32 %v3403, %v3451
    %v3453 = vpop.f32.mrf.mxu0
    %v3454 = vadd.f32 %v3405, %v3453
    %3455 = vmatmul.bf16.gmra.mxu0 %v2740
    %v3456 = vpop.f32.mrf.mxu0
    %v3457 = vadd.f32 %v3408, %v3456
    %v3458 = vpop.f32.mrf.mxu0
    %v3459 = vadd.f32 %v3410, %v3458
    %3460 = vmatmul.bf16.gmra.mxu0 %v2742
    %v3461 = vpop.f32.mrf.mxu0
    %v3462 = vadd.f32 %v3413, %v3461
    %v3463 = vpop.f32.mrf.mxu0
    %v3464 = vadd.f32 %v3415, %v3463
    %3465 = vmatmul.bf16.gmra.mxu0 %v2744
    %v3466 = vpop.f32.mrf.mxu0
    %v3467 = vadd.f32 %v3418, %v3466
    %v3468 = vpop.f32.mrf.mxu0
    %v3469 = vadd.f32 %v3420, %v3468
    %3470 = vdwg.mxu0
    %3471 = vmatpush.bf16.msra.mxu0 %v3055
    %3472 = vmatpush.bf16.msra.mxu0 %v3050
    %3473 = vmatpush.bf16.msra.mxu0 %v3045
    %3474 = vmatpush.bf16.msra.mxu0 %v3040
    %3475 = vmatpush.bf16.msra.mxu0 %v3035
    %3476 = vmatpush.bf16.msra.mxu0 %v3030
    %3477 = vmatpush.bf16.msra.mxu0 %v3025
    %3478 = vmatpush.bf16.msra.mxu0 %v3020
    %3479 = vmatmul.bf16.gmra.mxu0 %v2729
    %v3480 = vpop.f32.mrf.mxu0
    %v3481 = vadd.f32 0.0, %v3480
    %v3482 = vpop.f32.mrf.mxu0
    %v3483 = vadd.f32 0.0, %v3482
    %3484 = vmatmul.bf16.gmra.mxu0 %v2731
    %v3485 = vpop.f32.mrf.mxu0
    %v3486 = vadd.f32 0.0, %v3485
    %v3487 = vpop.f32.mrf.mxu0
    %v3488 = vadd.f32 0.0, %v3487
    %3489 = vmatmul.bf16.gmra.mxu0 %v2733
    %v3490 = vpop.f32.mrf.mxu0
    %v3491 = vadd.f32 0.0, %v3490
    %v3492 = vpop.f32.mrf.mxu0
    %v3493 = vadd.f32 0.0, %v3492
    %3494 = vmatmul.bf16.gmra.mxu0 %v2735
    %v3495 = vpop.f32.mrf.mxu0
    %v3496 = vadd.f32 0.0, %v3495
    %v3497 = vpop.f32.mrf.mxu0
    %v3498 = vadd.f32 0.0, %v3497
    %3499 = vmatmul.bf16.gmra.mxu0 %v2737
    %v3500 = vpop.f32.mrf.mxu0
    %v3501 = vadd.f32 0.0, %v3500
    %v3502 = vpop.f32.mrf.mxu0
    %v3503 = vadd.f32 0.0, %v3502
    %3504 = vmatmul.bf16.gmra.mxu0 %v2739
    %v3505 = vpop.f32.mrf.mxu0
    %v3506 = vadd.f32 0.0, %v3505
    %v3507 = vpop.f32.mrf.mxu0
    %v3508 = vadd.f32 0.0, %v3507
    %3509 = vmatmul.bf16.gmra.mxu0 %v2741
    %v3510 = vpop.f32.mrf.mxu0
    %v3511 = vadd.f32 0.0, %v3510
    %v3512 = vpop.f32.mrf.mxu0
    %v3513 = vadd.f32 0.0, %v3512
    %3514 = vmatmul.bf16.gmra.mxu0 %v2743
    %v3515 = vpop.f32.mrf.mxu0
    %v3516 = vadd.f32 0.0, %v3515
    %v3517 = vpop.f32.mrf.mxu0
    %v3518 = vadd.f32 0.0, %v3517
    %3519 = vdwg.mxu0
    %3520 = vmatpush.bf16.msra.mxu0 %v3095
    %3521 = vmatpush.bf16.msra.mxu0 %v3090
    %3522 = vmatpush.bf16.msra.mxu0 %v3085
    %3523 = vmatpush.bf16.msra.mxu0 %v3080
    %3524 = vmatpush.bf16.msra.mxu0 %v3075
    %3525 = vmatpush.bf16.msra.mxu0 %v3070
    %3526 = vmatpush.bf16.msra.mxu0 %v3065
    %3527 = vmatpush.bf16.msra.mxu0 %v3060
    %3528 = vmatmul.bf16.gmra.mxu0 %v2730
    %v3529 = vpop.f32.mrf.mxu0
    %v3530 = vadd.f32 %v3481, %v3529
    %v3531 = vpop.f32.mrf.mxu0
    %v3532 = vadd.f32 %v3483, %v3531
    %3533 = vmatmul.bf16.gmra.mxu0 %v2732
    %v3534 = vpop.f32.mrf.mxu0
    %v3535 = vadd.f32 %v3486, %v3534
    %v3536 = vpop.f32.mrf.mxu0
    %v3537 = vadd.f32 %v3488, %v3536
    %3538 = vmatmul.bf16.gmra.mxu0 %v2734
    %v3539 = vpop.f32.mrf.mxu0
    %v3540 = vadd.f32 %v3491, %v3539
    %v3541 = vpop.f32.mrf.mxu0
    %v3542 = vadd.f32 %v3493, %v3541
    %3543 = vmatmul.bf16.gmra.mxu0 %v2736
    %v3544 = vpop.f32.mrf.mxu0
    %v3545 = vadd.f32 %v3496, %v3544
    %v3546 = vpop.f32.mrf.mxu0
    %v3547 = vadd.f32 %v3498, %v3546
    %3548 = vmatmul.bf16.gmra.mxu0 %v2738
    %v3549 = vpop.f32.mrf.mxu0
    %v3550 = vadd.f32 %v3501, %v3549
    %v3551 = vpop.f32.mrf.mxu0
    %v3552 = vadd.f32 %v3503, %v3551
    %3553 = vmatmul.bf16.gmra.mxu0 %v2740
    %v3554 = vpop.f32.mrf.mxu0
    %v3555 = vadd.f32 %v3506, %v3554
    %v3556 = vpop.f32.mrf.mxu0
    %v3557 = vadd.f32 %v3508, %v3556
    %3558 = vmatmul.bf16.gmra.mxu0 %v2742
    %v3559 = vpop.f32.mrf.mxu0
    %v3560 = vadd.f32 %v3511, %v3559
    %v3561 = vpop.f32.mrf.mxu0
    %v3562 = vadd.f32 %v3513, %v3561
    %3563 = vmatmul.bf16.gmra.mxu0 %v2744
    %v3564 = vpop.f32.mrf.mxu0
    %v3565 = vadd.f32 %v3516, %v3564
    %v3566 = vpop.f32.mrf.mxu0
    %v3567 = vadd.f32 %v3518, %v3566
    %3568 = vdwg.mxu0
    %3569 = vmatpush.bf16.msra.mxu0 %v3056
    %3570 = vmatpush.bf16.msra.mxu0 %v3051
    %3571 = vmatpush.bf16.msra.mxu0 %v3046
    %3572 = vmatpush.bf16.msra.mxu0 %v3041
    %3573 = vmatpush.bf16.msra.mxu0 %v3036
    %3574 = vmatpush.bf16.msra.mxu0 %v3031
    %3575 = vmatpush.bf16.msra.mxu0 %v3026
    %3576 = vmatpush.bf16.msra.mxu0 %v3021
    %3577 = vmatmul.bf16.gmra.mxu0 %v2729
    %v3578 = vpop.f32.mrf.mxu0
    %v3579 = vadd.f32 0.0, %v3578
    %v3580 = vpop.f32.mrf.mxu0
    %v3581 = vadd.f32 0.0, %v3580
    %3582 = vmatmul.bf16.gmra.mxu0 %v2731
    %v3583 = vpop.f32.mrf.mxu0
    %v3584 = vadd.f32 0.0, %v3583
    %v3585 = vpop.f32.mrf.mxu0
    %v3586 = vadd.f32 0.0, %v3585
    %3587 = vmatmul.bf16.gmra.mxu0 %v2733
    %v3588 = vpop.f32.mrf.mxu0
    %v3589 = vadd.f32 0.0, %v3588
    %v3590 = vpop.f32.mrf.mxu0
    %v3591 = vadd.f32 0.0, %v3590
    %3592 = vmatmul.bf16.gmra.mxu0 %v2735
    %v3593 = vpop.f32.mrf.mxu0
    %v3594 = vadd.f32 0.0, %v3593
    %v3595 = vpop.f32.mrf.mxu0
    %v3596 = vadd.f32 0.0, %v3595
    %3597 = vmatmul.bf16.gmra.mxu0 %v2737
    %v3598 = vpop.f32.mrf.mxu0
    %v3599 = vadd.f32 0.0, %v3598
    %v3600 = vpop.f32.mrf.mxu0
    %v3601 = vadd.f32 0.0, %v3600
    %3602 = vmatmul.bf16.gmra.mxu0 %v2739
    %v3603 = vpop.f32.mrf.mxu0
    %v3604 = vadd.f32 0.0, %v3603
    %v3605 = vpop.f32.mrf.mxu0
    %v3606 = vadd.f32 0.0, %v3605
    %3607 = vmatmul.bf16.gmra.mxu0 %v2741
    %v3608 = vpop.f32.mrf.mxu0
    %v3609 = vadd.f32 0.0, %v3608
    %v3610 = vpop.f32.mrf.mxu0
    %v3611 = vadd.f32 0.0, %v3610
    %3612 = vmatmul.bf16.gmra.mxu0 %v2743
    %v3613 = vpop.f32.mrf.mxu0
    %v3614 = vadd.f32 0.0, %v3613
    %v3615 = vpop.f32.mrf.mxu0
    %v3616 = vadd.f32 0.0, %v3615
    %3617 = vdwg.mxu0
    %3618 = vmatpush.bf16.msra.mxu0 %v3096
    %3619 = vmatpush.bf16.msra.mxu0 %v3091
    %3620 = vmatpush.bf16.msra.mxu0 %v3086
    %3621 = vmatpush.bf16.msra.mxu0 %v3081
    %3622 = vmatpush.bf16.msra.mxu0 %v3076
    %3623 = vmatpush.bf16.msra.mxu0 %v3071
    %3624 = vmatpush.bf16.msra.mxu0 %v3066
    %3625 = vmatpush.bf16.msra.mxu0 %v3061
    %3626 = vmatmul.bf16.gmra.mxu0 %v2730
    %v3627 = vpop.f32.mrf.mxu0
    %v3628 = vadd.f32 %v3579, %v3627
    %v3629 = vpop.f32.mrf.mxu0
    %v3630 = vadd.f32 %v3581, %v3629
    %3631 = vmatmul.bf16.gmra.mxu0 %v2732
    %v3632 = vpop.f32.mrf.mxu0
    %v3633 = vadd.f32 %v3584, %v3632
    %v3634 = vpop.f32.mrf.mxu0
    %v3635 = vadd.f32 %v3586, %v3634
    %3636 = vmatmul.bf16.gmra.mxu0 %v2734
    %v3637 = vpop.f32.mrf.mxu0
    %v3638 = vadd.f32 %v3589, %v3637
    %v3639 = vpop.f32.mrf.mxu0
    %v3640 = vadd.f32 %v3591, %v3639
    %3641 = vmatmul.bf16.gmra.mxu0 %v2736
    %v3642 = vpop.f32.mrf.mxu0
    %v3643 = vadd.f32 %v3594, %v3642
    %v3644 = vpop.f32.mrf.mxu0
    %v3645 = vadd.f32 %v3596, %v3644
    %3646 = vmatmul.bf16.gmra.mxu0 %v2738
    %v3647 = vpop.f32.mrf.mxu0
    %v3648 = vadd.f32 %v3599, %v3647
    %v3649 = vpop.f32.mrf.mxu0
    %v3650 = vadd.f32 %v3601, %v3649
    %3651 = vmatmul.bf16.gmra.mxu0 %v2740
    %v3652 = vpop.f32.mrf.mxu0
    %v3653 = vadd.f32 %v3604, %v3652
    %v3654 = vpop.f32.mrf.mxu0
    %v3655 = vadd.f32 %v3606, %v3654
    %3656 = vmatmul.bf16.gmra.mxu0 %v2742
    %v3657 = vpop.f32.mrf.mxu0
    %v3658 = vadd.f32 %v3609, %v3657
    %v3659 = vpop.f32.mrf.mxu0
    %v3660 = vadd.f32 %v3611, %v3659
    %3661 = vmatmul.bf16.gmra.mxu0 %v2744
    %v3662 = vpop.f32.mrf.mxu0
    %v3663 = vadd.f32 %v3614, %v3662
    %v3664 = vpop.f32.mrf.mxu0
    %v3665 = vadd.f32 %v3616, %v3664
    %3666 = vdwg.mxu0
    %v3667 = vadd.f32 %v2055, %v3236
    %v3668 = vadd.f32 %v2153, %v3334
    %v3669 = vadd.f32 %v2251, %v3432
    %v3670 = vadd.f32 %v2349, %v3530
    %v3671 = vadd.f32 %v2447, %v3628
    %v3672 = vadd.f32 %v2057, %v3238
    %v3673 = vadd.f32 %v2155, %v3336
    %v3674 = vadd.f32 %v2253, %v3434
    %v3675 = vadd.f32 %v2351, %v3532
    %v3676 = vadd.f32 %v2449, %v3630
    %v3677 = vadd.f32 %v2060, %v3241
    %v3678 = vadd.f32 %v2158, %v3339
    %v3679 = vadd.f32 %v2256, %v3437
    %v3680 = vadd.f32 %v2354, %v3535
    %v3681 = vadd.f32 %v2452, %v3633
    %v3682 = vadd.f32 %v2062, %v3243
    %v3683 = vadd.f32 %v2160, %v3341
    %v3684 = vadd.f32 %v2258, %v3439
    %v3685 = vadd.f32 %v2356, %v3537
    %v3686 = vadd.f32 %v2454, %v3635
    %v3687 = vadd.f32 %v2065, %v3246
    %v3688 = vadd.f32 %v2163, %v3344
    %v3689 = vadd.f32 %v2261, %v3442
    %v3690 = vadd.f32 %v2359, %v3540
    %v3691 = vadd.f32 %v2457, %v3638
    %v3692 = vadd.f32 %v2067, %v3248
    %v3693 = vadd.f32 %v2165, %v3346
    %v3694 = vadd.f32 %v2263, %v3444
    %v3695 = vadd.f32 %v2361, %v3542
    %v3696 = vadd.f32 %v2459, %v3640
    %v3697 = vadd.f32 %v2070, %v3251
    %v3698 = vadd.f32 %v2168, %v3349
    %v3699 = vadd.f32 %v2266, %v3447
    %v3700 = vadd.f32 %v2364, %v3545
    %v3701 = vadd.f32 %v2462, %v3643
    %v3702 = vadd.f32 %v2072, %v3253
    %v3703 = vadd.f32 %v2170, %v3351
    %v3704 = vadd.f32 %v2268, %v3449
    %v3705 = vadd.f32 %v2366, %v3547
    %v3706 = vadd.f32 %v2464, %v3645
    %v3707 = vadd.f32 %v2075, %v3256
    %v3708 = vadd.f32 %v2173, %v3354
    %v3709 = vadd.f32 %v2271, %v3452
    %v3710 = vadd.f32 %v2369, %v3550
    %v3711 = vadd.f32 %v2467, %v3648
    %v3712 = vadd.f32 %v2077, %v3258
    %v3713 = vadd.f32 %v2175, %v3356
    %v3714 = vadd.f32 %v2273, %v3454
    %v3715 = vadd.f32 %v2371, %v3552
    %v3716 = vadd.f32 %v2469, %v3650
    %v3717 = vadd.f32 %v2080, %v3261
    %v3718 = vadd.f32 %v2178, %v3359
    %v3719 = vadd.f32 %v2276, %v3457
    %v3720 = vadd.f32 %v2374, %v3555
    %v3721 = vadd.f32 %v2472, %v3653
    %v3722 = vadd.f32 %v2082, %v3263
    %v3723 = vadd.f32 %v2180, %v3361
    %v3724 = vadd.f32 %v2278, %v3459
    %v3725 = vadd.f32 %v2376, %v3557
    %v3726 = vadd.f32 %v2474, %v3655
    %v3727 = vadd.f32 %v2085, %v3266
    %v3728 = vadd.f32 %v2183, %v3364
    %v3729 = vadd.f32 %v2281, %v3462
    %v3730 = vadd.f32 %v2379, %v3560
    %v3731 = vadd.f32 %v2477, %v3658
    %v3732 = vadd.f32 %v2087, %v3268
    %v3733 = vadd.f32 %v2185, %v3366
    %v3734 = vadd.f32 %v2283, %v3464
    %v3735 = vadd.f32 %v2381, %v3562
    %v3736 = vadd.f32 %v2479, %v3660
    %v3737 = vadd.f32 %v2090, %v3271
    %v3738 = vadd.f32 %v2188, %v3369
    %v3739 = vadd.f32 %v2286, %v3467
    %v3740 = vadd.f32 %v2384, %v3565
    %v3741 = vadd.f32 %v2482, %v3663
    %v3742 = vadd.f32 %v2092, %v3273
    %v3743 = vadd.f32 %v2190, %v3371
    %v3744 = vadd.f32 %v2288, %v3469
    %v3745 = vadd.f32 %v2386, %v3567
    %v3746 = vadd.f32 %v2484, %v3665
    %s3747 = scalar_lea.vmem %s0, 16
    %v3748 = vld [vmem:[%s3747] sm:$0xff]
    %v3749 = vld [vmem:[%s3747 + $0x10] sm:$0xff]
    %v3750 = vld [vmem:[%s3747 + $0x20] sm:$0xff]
    %v3751 = vld [vmem:[%s3747 + $0x30] sm:$0xff]
    %v3752 = vld [vmem:[%s3747 + $0x40] sm:$0xff]
    %v3753 = vld [vmem:[%s3747 + $0x50] sm:$0xff]
    %v3754 = vld [vmem:[%s3747 + $0x60] sm:$0xff]
    %v3755 = vld [vmem:[%s3747 + $0x70] sm:$0xff]
    %v3756 = vld [vmem:[%s3747 + $0xa0] sm:$0xff]
    %v3757 = vld [vmem:[%s3747 + $0xb0] sm:$0xff]
    %v3758 = vld [vmem:[%s3747 + $0xc0] sm:$0xff]
    %v3759 = vld [vmem:[%s3747 + $0xd0] sm:$0xff]
    %v3760 = vld [vmem:[%s3747 + $0xe0] sm:$0xff]
    %v3761 = vld [vmem:[%s3747 + $0xf0] sm:$0xff]
    %v3762 = vld [vmem:[%s3747 + $0x100] sm:$0xff]
    %v3763 = vld [vmem:[%s3747 + $0x110] sm:$0xff]
    %v3764 = vld [vmem:[#allocation2 + $0x780] sm:$0xff]
    %v3765 = vld [vmem:[#allocation2 + $0x788] sm:$0xff]
    %v3766 = vld [vmem:[#allocation2 + $0x790] sm:$0xf]
    %v3767 = vld [vmem:[#allocation2 + $0x794] sm:$0xff]
    %v3768 = vld [vmem:[#allocation2 + $0x79c] sm:$0xff]
    %v3769 = vld [vmem:[#allocation2 + $0x7a4] sm:$0xf]
    %v3770 = vld [vmem:[#allocation2 + $0x7a8] sm:$0xff]
    %v3771 = vld [vmem:[#allocation2 + $0x7b0] sm:$0xff]
    %v3772 = vld [vmem:[#allocation2 + $0x7b8] sm:$0xf]
    %v3773 = vld [vmem:[#allocation2 + $0x7bc] sm:$0xff]
    %v3774 = vld [vmem:[#allocation2 + $0x7c4] sm:$0xff]
    %v3775 = vld [vmem:[#allocation2 + $0x7cc] sm:$0xf]
    %v3776 = vld [vmem:[#allocation2 + $0x7d0] sm:$0xff]
    %v3777 = vld [vmem:[#allocation2 + $0x7d8] sm:$0xff]
    %v3778 = vld [vmem:[#allocation2 + $0x7e0] sm:$0xf]
    %v3779 = vld [vmem:[#allocation2 + $0x7e4] sm:$0xff]
    %v3780 = vld [vmem:[#allocation2 + $0x7ec] sm:$0xff]
    %v3781 = vld [vmem:[#allocation2 + $0x7f4] sm:$0xf]
    %v3782 = vld [vmem:[#allocation2 + $0x7f8] sm:$0xff]
    %v3783 = vld [vmem:[#allocation2 + $0x800] sm:$0xff]
    %v3784 = vld [vmem:[#allocation2 + $0x808] sm:$0xf]
    %v3785 = vld [vmem:[#allocation2 + $0x80c] sm:$0xff]
    %v3786 = vld [vmem:[#allocation2 + $0x814] sm:$0xff]
    %v3787 = vld [vmem:[#allocation2 + $0x81c] sm:$0xf]
    %v3788 = vld [vmem:[#allocation2 + $0x820] sm:$0xff]
    %v3789 = vld [vmem:[#allocation2 + $0x828] sm:$0xff]
    %v3790 = vld [vmem:[#allocation2 + $0x830] sm:$0xf]
    %v3791 = vld [vmem:[#allocation2 + $0x834] sm:$0xff]
    %v3792 = vld [vmem:[#allocation2 + $0x83c] sm:$0xff]
    %v3793 = vld [vmem:[#allocation2 + $0x844] sm:$0xf]
    %v3794 = vld [vmem:[#allocation2 + $0x848] sm:$0xff]
    %v3795 = vld [vmem:[#allocation2 + $0x850] sm:$0xff]
    %v3796 = vld [vmem:[#allocation2 + $0x858] sm:$0xf]
    %v3797 = vld [vmem:[#allocation2 + $0x85c] sm:$0xff]
    %v3798 = vld [vmem:[#allocation2 + $0x864] sm:$0xff]
    %v3799 = vld [vmem:[#allocation2 + $0x86c] sm:$0xf]
    %v3800 = vld [vmem:[#allocation2 + $0x870] sm:$0xff]
    %v3801 = vld [vmem:[#allocation2 + $0x878] sm:$0xff]
    %v3802 = vld [vmem:[#allocation2 + $0x880] sm:$0xf]
    %v3803 = vld [vmem:[#allocation2 + $0x884] sm:$0xff]
    %v3804 = vld [vmem:[#allocation2 + $0x88c] sm:$0xff]
    %v3805 = vld [vmem:[#allocation2 + $0x894] sm:$0xf]
    %v3806 = vld [vmem:[#allocation2 + $0x898] sm:$0xff]
    %v3807 = vld [vmem:[#allocation2 + $0x8a0] sm:$0xff]
    %v3808 = vld [vmem:[#allocation2 + $0x8a8] sm:$0xf]
    %v3809 = vld [vmem:[#allocation2 + $0x8ac] sm:$0xff]
    %v3810 = vld [vmem:[#allocation2 + $0x8b4] sm:$0xff]
    %v3811 = vld [vmem:[#allocation2 + $0x8bc] sm:$0xf]
    %v3812 = vld [vmem:[#allocation2 + $0x8c0] sm:$0xff]
    %v3813 = vld [vmem:[#allocation2 + $0x8c8] sm:$0xff]
    %v3814 = vld [vmem:[#allocation2 + $0x8d0] sm:$0xf]
    %v3815 = vld [vmem:[#allocation2 + $0x8d4] sm:$0xff]
    %v3816 = vld [vmem:[#allocation2 + $0x8dc] sm:$0xff]
    %v3817 = vld [vmem:[#allocation2 + $0x8e4] sm:$0xf]
    %v3818 = vld [vmem:[#allocation2 + $0x8e8] sm:$0xff]
    %v3819 = vld [vmem:[#allocation2 + $0x8f0] sm:$0xff]
    %v3820 = vld [vmem:[#allocation2 + $0x8f8] sm:$0xf]
    %v3821 = vld [vmem:[#allocation2 + $0x8fc] sm:$0xff]
    %v3822 = vld [vmem:[#allocation2 + $0x904] sm:$0xff]
    %v3823 = vld [vmem:[#allocation2 + $0x90c] sm:$0xf]
    %v3824 = vld [vmem:[#allocation2 + $0x910] sm:$0xff]
    %v3825 = vld [vmem:[#allocation2 + $0x918] sm:$0xff]
    %v3826 = vld [vmem:[#allocation2 + $0x920] sm:$0xf]
    %v3827 = vld [vmem:[#allocation2 + $0x924] sm:$0xff]
    %v3828 = vld [vmem:[#allocation2 + $0x92c] sm:$0xff]
    %v3829 = vld [vmem:[#allocation2 + $0x934] sm:$0xf]
    %v3830 = vld [vmem:[#allocation2 + $0x938] sm:$0xff]
    %v3831 = vld [vmem:[#allocation2 + $0x940] sm:$0xff]
    %v3832 = vld [vmem:[#allocation2 + $0x948] sm:$0xf]
    %v3833 = vld [vmem:[#allocation2 + $0x94c] sm:$0xff]
    %v3834 = vld [vmem:[#allocation2 + $0x954] sm:$0xff]
    %v3835 = vld [vmem:[#allocation2 + $0x95c] sm:$0xf]
    %v3836 = vld [vmem:[#allocation2 + $0x960] sm:$0xff]
    %v3837 = vld [vmem:[#allocation2 + $0x968] sm:$0xff]
    %v3838 = vld [vmem:[#allocation2 + $0x970] sm:$0xf]
    %v3839 = vld [vmem:[#allocation2 + $0x974] sm:$0xff]
    %v3840 = vld [vmem:[#allocation2 + $0x97c] sm:$0xff]
    %v3841 = vld [vmem:[#allocation2 + $0x984] sm:$0xf]
    %v3842 = vld [vmem:[#allocation2 + $0x988] sm:$0xff]
    %v3843 = vld [vmem:[#allocation2 + $0x990] sm:$0xff]
    %v3844 = vld [vmem:[#allocation2 + $0x998] sm:$0xf]
    %v3845 = vld [vmem:[#allocation2 + $0x99c] sm:$0xff]
    %v3846 = vld [vmem:[#allocation2 + $0x9a4] sm:$0xff]
    %v3847 = vld [vmem:[#allocation2 + $0x9ac] sm:$0xf]
    %v3848 = vld [vmem:[#allocation2 + $0x9b0] sm:$0xff]
    %v3849 = vld [vmem:[#allocation2 + $0x9b8] sm:$0xff]
    %v3850 = vld [vmem:[#allocation2 + $0x9c0] sm:$0xf]
    %v3851 = vld [vmem:[#allocation2 + $0x9c4] sm:$0xff]
    %v3852 = vld [vmem:[#allocation2 + $0x9cc] sm:$0xff]
    %v3853 = vld [vmem:[#allocation2 + $0x9d4] sm:$0xf]
    %v3854 = vld [vmem:[#allocation2 + $0x9d8] sm:$0xff]
    %v3855 = vld [vmem:[#allocation2 + $0x9e0] sm:$0xff]
    %v3856 = vld [vmem:[#allocation2 + $0x9e8] sm:$0xf]
    %v3857 = vld [vmem:[#allocation2 + $0x9ec] sm:$0xff]
    %v3858 = vld [vmem:[#allocation2 + $0x9f4] sm:$0xff]
    %v3859 = vld [vmem:[#allocation2 + $0x9fc] sm:$0xf]
    %v3876 = vunpack.c.l.b16 %v3748
    %v3877 = vunpack.c.h.b16 %v3748
    %v3878 = vunpack.c.l.b16 %v3749
    %v3879 = vunpack.c.h.b16 %v3749
    %v3880 = vunpack.c.l.b16 %v3750
    %v3881 = vunpack.c.h.b16 %v3750
    %v3882 = vunpack.c.l.b16 %v3751
    %v3883 = vunpack.c.h.b16 %v3751
    %v3884 = vunpack.c.l.b16 %v3752
    %v3885 = vunpack.c.h.b16 %v3752
    %v3886 = vunpack.c.l.b16 %v3753
    %v3887 = vunpack.c.h.b16 %v3753
    %v3888 = vunpack.c.l.b16 %v3754
    %v3889 = vunpack.c.h.b16 %v3754
    %v3890 = vunpack.c.l.b16 %v3755
    %v3891 = vunpack.c.h.b16 %v3755
    %v3892 = vunpack.c.l.b16 %v3756
    %v3893 = vunpack.c.h.b16 %v3756
    %v3894 = vunpack.c.l.b16 %v3757
    %v3895 = vunpack.c.h.b16 %v3757
    %v3896 = vunpack.c.l.b16 %v3758
    %v3897 = vunpack.c.h.b16 %v3758
    %v3898 = vunpack.c.l.b16 %v3759
    %v3899 = vunpack.c.h.b16 %v3759
    %v3900 = vunpack.c.l.b16 %v3760
    %v3901 = vunpack.c.h.b16 %v3760
    %v3902 = vunpack.c.l.b16 %v3761
    %v3903 = vunpack.c.h.b16 %v3761
    %v3904 = vunpack.c.l.b16 %v3762
    %v3905 = vunpack.c.h.b16 %v3762
    %v3906 = vunpack.c.l.b16 %v3763
    %v3907 = vunpack.c.h.b16 %v3763
    %v3908 = vpack.c.b16 %v3878, %v3876
    %v3909 = vpack.c.b16 %v3879, %v3877
    %v3910 = vpack.c.b16 %v3882, %v3880
    %v3911 = vpack.c.b16 %v3883, %v3881
    %v3912 = vpack.c.b16 %v3886, %v3884
    %v3913 = vpack.c.b16 %v3887, %v3885
    %v3914 = vpack.c.b16 %v3890, %v3888
    %v3915 = vpack.c.b16 %v3891, %v3889
    %v3916 = vpack.c.b16 %v3894, %v3892
    %v3917 = vpack.c.b16 %v3895, %v3893
    %v3918 = vpack.c.b16 %v3898, %v3896
    %v3919 = vpack.c.b16 %v3899, %v3897
    %v3920 = vpack.c.b16 %v3902, %v3900
    %v3921 = vpack.c.b16 %v3903, %v3901
    %v3922 = vpack.c.b16 %v3906, %v3904
    %v3923 = vpack.c.b16 %v3907, %v3905
    %v4036 = vunpack.c.l.b16 %v3764
    %v4037 = vunpack.c.h.b16 %v3764
    %v4038 = vunpack.c.l.b16 %v3765
    %v4039 = vunpack.c.h.b16 %v3765
    %v4040 = vunpack.c.l.b16 %v3766
    %v4041 = vunpack.c.l.b16 %v3767
    %v4042 = vunpack.c.h.b16 %v3767
    %v4043 = vunpack.c.l.b16 %v3768
    %v4044 = vunpack.c.h.b16 %v3768
    %v4045 = vunpack.c.l.b16 %v3769
    %v4046 = vunpack.c.l.b16 %v3770
    %v4047 = vunpack.c.h.b16 %v3770
    %v4048 = vunpack.c.l.b16 %v3771
    %v4049 = vunpack.c.h.b16 %v3771
    %v4050 = vunpack.c.l.b16 %v3772
    %v4051 = vunpack.c.l.b16 %v3773
    %v4052 = vunpack.c.h.b16 %v3773
    %v4053 = vunpack.c.l.b16 %v3774
    %v4054 = vunpack.c.h.b16 %v3774
    %v4055 = vunpack.c.l.b16 %v3775
    %v4056 = vunpack.c.l.b16 %v3776
    %v4057 = vunpack.c.h.b16 %v3776
    %v4058 = vunpack.c.l.b16 %v3777
    %v4059 = vunpack.c.h.b16 %v3777
    %v4060 = vunpack.c.l.b16 %v3778
    %v4061 = vunpack.c.l.b16 %v3779
    %v4062 = vunpack.c.h.b16 %v3779
    %v4063 = vunpack.c.l.b16 %v3780
    %v4064 = vunpack.c.h.b16 %v3780
    %v4065 = vunpack.c.l.b16 %v3781
    %v4066 = vunpack.c.l.b16 %v3782
    %v4067 = vunpack.c.h.b16 %v3782
    %v4068 = vunpack.c.l.b16 %v3783
    %v4069 = vunpack.c.h.b16 %v3783
    %v4070 = vunpack.c.l.b16 %v3784
    %v4071 = vunpack.c.l.b16 %v3785
    %v4072 = vunpack.c.h.b16 %v3785
    %v4073 = vunpack.c.l.b16 %v3786
    %v4074 = vunpack.c.h.b16 %v3786
    %v4075 = vunpack.c.l.b16 %v3787
    %v4076 = vunpack.c.l.b16 %v3788
    %v4077 = vunpack.c.h.b16 %v3788
    %v4078 = vunpack.c.l.b16 %v3789
    %v4079 = vunpack.c.h.b16 %v3789
    %v4080 = vunpack.c.l.b16 %v3790
    %v4081 = vunpack.c.l.b16 %v3791
    %v4082 = vunpack.c.h.b16 %v3791
    %v4083 = vunpack.c.l.b16 %v3792
    %v4084 = vunpack.c.h.b16 %v3792
    %v4085 = vunpack.c.l.b16 %v3793
    %v4086 = vunpack.c.l.b16 %v3794
    %v4087 = vunpack.c.h.b16 %v3794
    %v4088 = vunpack.c.l.b16 %v3795
    %v4089 = vunpack.c.h.b16 %v3795
    %v4090 = vunpack.c.l.b16 %v3796
    %v4091 = vunpack.c.l.b16 %v3797
    %v4092 = vunpack.c.h.b16 %v3797
    %v4093 = vunpack.c.l.b16 %v3798
    %v4094 = vunpack.c.h.b16 %v3798
    %v4095 = vunpack.c.l.b16 %v3799
    %v4096 = vunpack.c.l.b16 %v3800
    %v4097 = vunpack.c.h.b16 %v3800
    %v4098 = vunpack.c.l.b16 %v3801
    %v4099 = vunpack.c.h.b16 %v3801
    %v4100 = vunpack.c.l.b16 %v3802
    %v4101 = vunpack.c.l.b16 %v3803
    %v4102 = vunpack.c.h.b16 %v3803
    %v4103 = vunpack.c.l.b16 %v3804
    %v4104 = vunpack.c.h.b16 %v3804
    %v4105 = vunpack.c.l.b16 %v3805
    %v4106 = vunpack.c.l.b16 %v3806
    %v4107 = vunpack.c.h.b16 %v3806
    %v4108 = vunpack.c.l.b16 %v3807
    %v4109 = vunpack.c.h.b16 %v3807
    %v4110 = vunpack.c.l.b16 %v3808
    %v4111 = vunpack.c.l.b16 %v3809
    %v4112 = vunpack.c.h.b16 %v3809
    %v4113 = vunpack.c.l.b16 %v3810
    %v4114 = vunpack.c.h.b16 %v3810
    %v4115 = vunpack.c.l.b16 %v3811
    %v4116 = vunpack.c.l.b16 %v3812
    %v4117 = vunpack.c.h.b16 %v3812
    %v4118 = vunpack.c.l.b16 %v3813
    %v4119 = vunpack.c.h.b16 %v3813
    %v4120 = vunpack.c.l.b16 %v3814
    %v4121 = vunpack.c.l.b16 %v3815
    %v4122 = vunpack.c.h.b16 %v3815
    %v4123 = vunpack.c.l.b16 %v3816
    %v4124 = vunpack.c.h.b16 %v3816
    %v4125 = vunpack.c.l.b16 %v3817
    %v4126 = vunpack.c.l.b16 %v3818
    %v4127 = vunpack.c.h.b16 %v3818
    %v4128 = vunpack.c.l.b16 %v3819
    %v4129 = vunpack.c.h.b16 %v3819
    %v4130 = vunpack.c.l.b16 %v3820
    %v4131 = vunpack.c.l.b16 %v3821
    %v4132 = vunpack.c.h.b16 %v3821
    %v4133 = vunpack.c.l.b16 %v3822
    %v4134 = vunpack.c.h.b16 %v3822
    %v4135 = vunpack.c.l.b16 %v3823
    %v4136 = vunpack.c.l.b16 %v3824
    %v4137 = vunpack.c.h.b16 %v3824
    %v4138 = vunpack.c.l.b16 %v3825
    %v4139 = vunpack.c.h.b16 %v3825
    %v4140 = vunpack.c.l.b16 %v3826
    %v4141 = vunpack.c.l.b16 %v3827
    %v4142 = vunpack.c.h.b16 %v3827
    %v4143 = vunpack.c.l.b16 %v3828
    %v4144 = vunpack.c.h.b16 %v3828
    %v4145 = vunpack.c.l.b16 %v3829
    %v4146 = vunpack.c.l.b16 %v3830
    %v4147 = vunpack.c.h.b16 %v3830
    %v4148 = vunpack.c.l.b16 %v3831
    %v4149 = vunpack.c.h.b16 %v3831
    %v4150 = vunpack.c.l.b16 %v3832
    %v4151 = vunpack.c.l.b16 %v3833
    %v4152 = vunpack.c.h.b16 %v3833
    %v4153 = vunpack.c.l.b16 %v3834
    %v4154 = vunpack.c.h.b16 %v3834
    %v4155 = vunpack.c.l.b16 %v3835
    %v4156 = vunpack.c.l.b16 %v3836
    %v4157 = vunpack.c.h.b16 %v3836
    %v4158 = vunpack.c.l.b16 %v3837
    %v4159 = vunpack.c.h.b16 %v3837
    %v4160 = vunpack.c.l.b16 %v3838
    %v4161 = vunpack.c.l.b16 %v3839
    %v4162 = vunpack.c.h.b16 %v3839
    %v4163 = vunpack.c.l.b16 %v3840
    %v4164 = vunpack.c.h.b16 %v3840
    %v4165 = vunpack.c.l.b16 %v3841
    %v4166 = vunpack.c.l.b16 %v3842
    %v4167 = vunpack.c.h.b16 %v3842
    %v4168 = vunpack.c.l.b16 %v3843
    %v4169 = vunpack.c.h.b16 %v3843
    %v4170 = vunpack.c.l.b16 %v3844
    %v4171 = vunpack.c.l.b16 %v3845
    %v4172 = vunpack.c.h.b16 %v3845
    %v4173 = vunpack.c.l.b16 %v3846
    %v4174 = vunpack.c.h.b16 %v3846
    %v4175 = vunpack.c.l.b16 %v3847
    %v4176 = vunpack.c.l.b16 %v3848
    %v4177 = vunpack.c.h.b16 %v3848
    %v4178 = vunpack.c.l.b16 %v3849
    %v4179 = vunpack.c.h.b16 %v3849
    %v4180 = vunpack.c.l.b16 %v3850
    %v4181 = vunpack.c.l.b16 %v3851
    %v4182 = vunpack.c.h.b16 %v3851
    %v4183 = vunpack.c.l.b16 %v3852
    %v4184 = vunpack.c.h.b16 %v3852
    %v4185 = vunpack.c.l.b16 %v3853
    %v4186 = vunpack.c.l.b16 %v3854
    %v4187 = vunpack.c.h.b16 %v3854
    %v4188 = vunpack.c.l.b16 %v3855
    %v4189 = vunpack.c.h.b16 %v3855
    %v4190 = vunpack.c.l.b16 %v3856
    %v4191 = vunpack.c.l.b16 %v3857
    %v4192 = vunpack.c.h.b16 %v3857
    %v4193 = vunpack.c.l.b16 %v3858
    %v4194 = vunpack.c.h.b16 %v3858
    %v4195 = vunpack.c.l.b16 %v3859
    %v4196 = vpack.c.b16 %v4041, %v4036
    %v4197 = vpack.c.b16 %v4042, %v4037
    %v4198 = vpack.c.b16 %v4043, %v4038
    %v4199 = vpack.c.b16 %v4044, %v4039
    %v4200 = vpack.c.b16 %v4045, %v4040
    %v4201 = vpack.c.b16 %v4051, %v4046
    %v4202 = vpack.c.b16 %v4052, %v4047
    %v4203 = vpack.c.b16 %v4053, %v4048
    %v4204 = vpack.c.b16 %v4054, %v4049
    %v4205 = vpack.c.b16 %v4055, %v4050
    %v4206 = vpack.c.b16 %v4061, %v4056
    %v4207 = vpack.c.b16 %v4062, %v4057
    %v4208 = vpack.c.b16 %v4063, %v4058
    %v4209 = vpack.c.b16 %v4064, %v4059
    %v4210 = vpack.c.b16 %v4065, %v4060
    %v4211 = vpack.c.b16 %v4071, %v4066
    %v4212 = vpack.c.b16 %v4072, %v4067
    %v4213 = vpack.c.b16 %v4073, %v4068
    %v4214 = vpack.c.b16 %v4074, %v4069
    %v4215 = vpack.c.b16 %v4075, %v4070
    %v4216 = vpack.c.b16 %v4081, %v4076
    %v4217 = vpack.c.b16 %v4082, %v4077
    %v4218 = vpack.c.b16 %v4083, %v4078
    %v4219 = vpack.c.b16 %v4084, %v4079
    %v4220 = vpack.c.b16 %v4085, %v4080
    %v4221 = vpack.c.b16 %v4091, %v4086
    %v4222 = vpack.c.b16 %v4092, %v4087
    %v4223 = vpack.c.b16 %v4093, %v4088
    %v4224 = vpack.c.b16 %v4094, %v4089
    %v4225 = vpack.c.b16 %v4095, %v4090
    %v4226 = vpack.c.b16 %v4101, %v4096
    %v4227 = vpack.c.b16 %v4102, %v4097
    %v4228 = vpack.c.b16 %v4103, %v4098
    %v4229 = vpack.c.b16 %v4104, %v4099
    %v4230 = vpack.c.b16 %v4105, %v4100
    %v4231 = vpack.c.b16 %v4111, %v4106
    %v4232 = vpack.c.b16 %v4112, %v4107
    %v4233 = vpack.c.b16 %v4113, %v4108
    %v4234 = vpack.c.b16 %v4114, %v4109
    %v4235 = vpack.c.b16 %v4115, %v4110
    %v4236 = vpack.c.b16 %v4121, %v4116
    %v4237 = vpack.c.b16 %v4122, %v4117
    %v4238 = vpack.c.b16 %v4123, %v4118
    %v4239 = vpack.c.b16 %v4124, %v4119
    %v4240 = vpack.c.b16 %v4125, %v4120
    %v4241 = vpack.c.b16 %v4131, %v4126
    %v4242 = vpack.c.b16 %v4132, %v4127
    %v4243 = vpack.c.b16 %v4133, %v4128
    %v4244 = vpack.c.b16 %v4134, %v4129
    %v4245 = vpack.c.b16 %v4135, %v4130
    %v4246 = vpack.c.b16 %v4141, %v4136
    %v4247 = vpack.c.b16 %v4142, %v4137
    %v4248 = vpack.c.b16 %v4143, %v4138
    %v4249 = vpack.c.b16 %v4144, %v4139
    %v4250 = vpack.c.b16 %v4145, %v4140
    %v4251 = vpack.c.b16 %v4151, %v4146
    %v4252 = vpack.c.b16 %v4152, %v4147
    %v4253 = vpack.c.b16 %v4153, %v4148
    %v4254 = vpack.c.b16 %v4154, %v4149
    %v4255 = vpack.c.b16 %v4155, %v4150
    %v4256 = vpack.c.b16 %v4161, %v4156
    %v4257 = vpack.c.b16 %v4162, %v4157
    %v4258 = vpack.c.b16 %v4163, %v4158
    %v4259 = vpack.c.b16 %v4164, %v4159
    %v4260 = vpack.c.b16 %v4165, %v4160
    %v4261 = vpack.c.b16 %v4171, %v4166
    %v4262 = vpack.c.b16 %v4172, %v4167
    %v4263 = vpack.c.b16 %v4173, %v4168
    %v4264 = vpack.c.b16 %v4174, %v4169
    %v4265 = vpack.c.b16 %v4175, %v4170
    %v4266 = vpack.c.b16 %v4181, %v4176
    %v4267 = vpack.c.b16 %v4182, %v4177
    %v4268 = vpack.c.b16 %v4183, %v4178
    %v4269 = vpack.c.b16 %v4184, %v4179
    %v4270 = vpack.c.b16 %v4185, %v4180
    %v4271 = vpack.c.b16 %v4191, %v4186
    %v4272 = vpack.c.b16 %v4192, %v4187
    %v4273 = vpack.c.b16 %v4193, %v4188
    %v4274 = vpack.c.b16 %v4194, %v4189
    %v4275 = vpack.c.b16 %v4195, %v4190
    %4356 = vmatpush.bf16.msra.mxu0 %v4231
    %4357 = vmatpush.bf16.msra.mxu0 %v4226
    %4358 = vmatpush.bf16.msra.mxu0 %v4221
    %4359 = vmatpush.bf16.msra.mxu0 %v4216
    %4360 = vmatpush.bf16.msra.mxu0 %v4211
    %4361 = vmatpush.bf16.msra.mxu0 %v4206
    %4362 = vmatpush.bf16.msra.mxu0 %v4201
    %4363 = vmatpush.bf16.msra.mxu0 %v4196
    %4364 = vmatmul.bf16.gmra.mxu0 %v3908
    %v4365 = vpop.f32.mrf.mxu0
    %v4366 = vadd.f32 0.0, %v4365
    %v4367 = vpop.f32.mrf.mxu0
    %v4368 = vadd.f32 0.0, %v4367
    %4369 = vmatmul.bf16.gmra.mxu0 %v3910
    %v4370 = vpop.f32.mrf.mxu0
    %v4371 = vadd.f32 0.0, %v4370
    %v4372 = vpop.f32.mrf.mxu0
    %v4373 = vadd.f32 0.0, %v4372
    %4374 = vmatmul.bf16.gmra.mxu0 %v3912
    %v4375 = vpop.f32.mrf.mxu0
    %v4376 = vadd.f32 0.0, %v4375
    %v4377 = vpop.f32.mrf.mxu0
    %v4378 = vadd.f32 0.0, %v4377
    %4379 = vmatmul.bf16.gmra.mxu0 %v3914
    %v4380 = vpop.f32.mrf.mxu0
    %v4381 = vadd.f32 0.0, %v4380
    %v4382 = vpop.f32.mrf.mxu0
    %v4383 = vadd.f32 0.0, %v4382
    %4384 = vmatmul.bf16.gmra.mxu0 %v3916
    %v4385 = vpop.f32.mrf.mxu0
    %v4386 = vadd.f32 0.0, %v4385
    %v4387 = vpop.f32.mrf.mxu0
    %v4388 = vadd.f32 0.0, %v4387
    %4389 = vmatmul.bf16.gmra.mxu0 %v3918
    %v4390 = vpop.f32.mrf.mxu0
    %v4391 = vadd.f32 0.0, %v4390
    %v4392 = vpop.f32.mrf.mxu0
    %v4393 = vadd.f32 0.0, %v4392
    %4394 = vmatmul.bf16.gmra.mxu0 %v3920
    %v4395 = vpop.f32.mrf.mxu0
    %v4396 = vadd.f32 0.0, %v4395
    %v4397 = vpop.f32.mrf.mxu0
    %v4398 = vadd.f32 0.0, %v4397
    %4399 = vmatmul.bf16.gmra.mxu0 %v3922
    %v4400 = vpop.f32.mrf.mxu0
    %v4401 = vadd.f32 0.0, %v4400
    %v4402 = vpop.f32.mrf.mxu0
    %v4403 = vadd.f32 0.0, %v4402
    %4404 = vdwg.mxu0
    %4405 = vmatpush.bf16.msra.mxu0 %v4271
    %4406 = vmatpush.bf16.msra.mxu0 %v4266
    %4407 = vmatpush.bf16.msra.mxu0 %v4261
    %4408 = vmatpush.bf16.msra.mxu0 %v4256
    %4409 = vmatpush.bf16.msra.mxu0 %v4251
    %4410 = vmatpush.bf16.msra.mxu0 %v4246
    %4411 = vmatpush.bf16.msra.mxu0 %v4241
    %4412 = vmatpush.bf16.msra.mxu0 %v4236
    %4413 = vmatmul.bf16.gmra.mxu0 %v3909
    %v4414 = vpop.f32.mrf.mxu0
    %v4415 = vadd.f32 %v4366, %v4414
    %v4416 = vpop.f32.mrf.mxu0
    %v4417 = vadd.f32 %v4368, %v4416
    %4418 = vmatmul.bf16.gmra.mxu0 %v3911
    %v4419 = vpop.f32.mrf.mxu0
    %v4420 = vadd.f32 %v4371, %v4419
    %v4421 = vpop.f32.mrf.mxu0
    %v4422 = vadd.f32 %v4373, %v4421
    %4423 = vmatmul.bf16.gmra.mxu0 %v3913
    %v4424 = vpop.f32.mrf.mxu0
    %v4425 = vadd.f32 %v4376, %v4424
    %v4426 = vpop.f32.mrf.mxu0
    %v4427 = vadd.f32 %v4378, %v4426
    %4428 = vmatmul.bf16.gmra.mxu0 %v3915
    %v4429 = vpop.f32.mrf.mxu0
    %v4430 = vadd.f32 %v4381, %v4429
    %v4431 = vpop.f32.mrf.mxu0
    %v4432 = vadd.f32 %v4383, %v4431
    %4433 = vmatmul.bf16.gmra.mxu0 %v3917
    %v4434 = vpop.f32.mrf.mxu0
    %v4435 = vadd.f32 %v4386, %v4434
    %v4436 = vpop.f32.mrf.mxu0
    %v4437 = vadd.f32 %v4388, %v4436
    %4438 = vmatmul.bf16.gmra.mxu0 %v3919
    %v4439 = vpop.f32.mrf.mxu0
    %v4440 = vadd.f32 %v4391, %v4439
    %v4441 = vpop.f32.mrf.mxu0
    %v4442 = vadd.f32 %v4393, %v4441
    %4443 = vmatmul.bf16.gmra.mxu0 %v3921
    %v4444 = vpop.f32.mrf.mxu0
    %v4445 = vadd.f32 %v4396, %v4444
    %v4446 = vpop.f32.mrf.mxu0
    %v4447 = vadd.f32 %v4398, %v4446
    %4448 = vmatmul.bf16.gmra.mxu0 %v3923
    %v4449 = vpop.f32.mrf.mxu0
    %v4450 = vadd.f32 %v4401, %v4449
    %v4451 = vpop.f32.mrf.mxu0
    %v4452 = vadd.f32 %v4403, %v4451
    %4453 = vdwg.mxu0
    %4454 = vmatpush.bf16.msra.mxu0 %v4232
    %4455 = vmatpush.bf16.msra.mxu0 %v4227
    %4456 = vmatpush.bf16.msra.mxu0 %v4222
    %4457 = vmatpush.bf16.msra.mxu0 %v4217
    %4458 = vmatpush.bf16.msra.mxu0 %v4212
    %4459 = vmatpush.bf16.msra.mxu0 %v4207
    %4460 = vmatpush.bf16.msra.mxu0 %v4202
    %4461 = vmatpush.bf16.msra.mxu0 %v4197
    %4462 = vmatmul.bf16.gmra.mxu0 %v3908
    %v4463 = vpop.f32.mrf.mxu0
    %v4464 = vadd.f32 0.0, %v4463
    %v4465 = vpop.f32.mrf.mxu0
    %v4466 = vadd.f32 0.0, %v4465
    %4467 = vmatmul.bf16.gmra.mxu0 %v3910
    %v4468 = vpop.f32.mrf.mxu0
    %v4469 = vadd.f32 0.0, %v4468
    %v4470 = vpop.f32.mrf.mxu0
    %v4471 = vadd.f32 0.0, %v4470
    %4472 = vmatmul.bf16.gmra.mxu0 %v3912
    %v4473 = vpop.f32.mrf.mxu0
    %v4474 = vadd.f32 0.0, %v4473
    %v4475 = vpop.f32.mrf.mxu0
    %v4476 = vadd.f32 0.0, %v4475
    %4477 = vmatmul.bf16.gmra.mxu0 %v3914
    %v4478 = vpop.f32.mrf.mxu0
    %v4479 = vadd.f32 0.0, %v4478
    %v4480 = vpop.f32.mrf.mxu0
    %v4481 = vadd.f32 0.0, %v4480
    %4482 = vmatmul.bf16.gmra.mxu0 %v3916
    %v4483 = vpop.f32.mrf.mxu0
    %v4484 = vadd.f32 0.0, %v4483
    %v4485 = vpop.f32.mrf.mxu0
    %v4486 = vadd.f32 0.0, %v4485
    %4487 = vmatmul.bf16.gmra.mxu0 %v3918
    %v4488 = vpop.f32.mrf.mxu0
    %v4489 = vadd.f32 0.0, %v4488
    %v4490 = vpop.f32.mrf.mxu0
    %v4491 = vadd.f32 0.0, %v4490
    %4492 = vmatmul.bf16.gmra.mxu0 %v3920
    %v4493 = vpop.f32.mrf.mxu0
    %v4494 = vadd.f32 0.0, %v4493
    %v4495 = vpop.f32.mrf.mxu0
    %v4496 = vadd.f32 0.0, %v4495
    %4497 = vmatmul.bf16.gmra.mxu0 %v3922
    %v4498 = vpop.f32.mrf.mxu0
    %v4499 = vadd.f32 0.0, %v4498
    %v4500 = vpop.f32.mrf.mxu0
    %v4501 = vadd.f32 0.0, %v4500
    %4502 = vdwg.mxu0
    %4503 = vmatpush.bf16.msra.mxu0 %v4272
    %4504 = vmatpush.bf16.msra.mxu0 %v4267
    %4505 = vmatpush.bf16.msra.mxu0 %v4262
    %4506 = vmatpush.bf16.msra.mxu0 %v4257
    %4507 = vmatpush.bf16.msra.mxu0 %v4252
    %4508 = vmatpush.bf16.msra.mxu0 %v4247
    %4509 = vmatpush.bf16.msra.mxu0 %v4242
    %4510 = vmatpush.bf16.msra.mxu0 %v4237
    %4511 = vmatmul.bf16.gmra.mxu0 %v3909
    %v4512 = vpop.f32.mrf.mxu0
    %v4513 = vadd.f32 %v4464, %v4512
    %v4514 = vpop.f32.mrf.mxu0
    %v4515 = vadd.f32 %v4466, %v4514
    %4516 = vmatmul.bf16.gmra.mxu0 %v3911
    %v4517 = vpop.f32.mrf.mxu0
    %v4518 = vadd.f32 %v4469, %v4517
    %v4519 = vpop.f32.mrf.mxu0
    %v4520 = vadd.f32 %v4471, %v4519
    %4521 = vmatmul.bf16.gmra.mxu0 %v3913
    %v4522 = vpop.f32.mrf.mxu0
    %v4523 = vadd.f32 %v4474, %v4522
    %v4524 = vpop.f32.mrf.mxu0
    %v4525 = vadd.f32 %v4476, %v4524
    %4526 = vmatmul.bf16.gmra.mxu0 %v3915
    %v4527 = vpop.f32.mrf.mxu0
    %v4528 = vadd.f32 %v4479, %v4527
    %v4529 = vpop.f32.mrf.mxu0
    %v4530 = vadd.f32 %v4481, %v4529
    %4531 = vmatmul.bf16.gmra.mxu0 %v3917
    %v4532 = vpop.f32.mrf.mxu0
    %v4533 = vadd.f32 %v4484, %v4532
    %v4534 = vpop.f32.mrf.mxu0
    %v4535 = vadd.f32 %v4486, %v4534
    %4536 = vmatmul.bf16.gmra.mxu0 %v3919
    %v4537 = vpop.f32.mrf.mxu0
    %v4538 = vadd.f32 %v4489, %v4537
    %v4539 = vpop.f32.mrf.mxu0
    %v4540 = vadd.f32 %v4491, %v4539
    %4541 = vmatmul.bf16.gmra.mxu0 %v3921
    %v4542 = vpop.f32.mrf.mxu0
    %v4543 = vadd.f32 %v4494, %v4542
    %v4544 = vpop.f32.mrf.mxu0
    %v4545 = vadd.f32 %v4496, %v4544
    %4546 = vmatmul.bf16.gmra.mxu0 %v3923
    %v4547 = vpop.f32.mrf.mxu0
    %v4548 = vadd.f32 %v4499, %v4547
    %v4549 = vpop.f32.mrf.mxu0
    %v4550 = vadd.f32 %v4501, %v4549
    %4551 = vdwg.mxu0
    %4552 = vmatpush.bf16.msra.mxu0 %v4233
    %4553 = vmatpush.bf16.msra.mxu0 %v4228
    %4554 = vmatpush.bf16.msra.mxu0 %v4223
    %4555 = vmatpush.bf16.msra.mxu0 %v4218
    %4556 = vmatpush.bf16.msra.mxu0 %v4213
    %4557 = vmatpush.bf16.msra.mxu0 %v4208
    %4558 = vmatpush.bf16.msra.mxu0 %v4203
    %4559 = vmatpush.bf16.msra.mxu0 %v4198
    %4560 = vmatmul.bf16.gmra.mxu0 %v3908
    %v4561 = vpop.f32.mrf.mxu0
    %v4562 = vadd.f32 0.0, %v4561
    %v4563 = vpop.f32.mrf.mxu0
    %v4564 = vadd.f32 0.0, %v4563
    %4565 = vmatmul.bf16.gmra.mxu0 %v3910
    %v4566 = vpop.f32.mrf.mxu0
    %v4567 = vadd.f32 0.0, %v4566
    %v4568 = vpop.f32.mrf.mxu0
    %v4569 = vadd.f32 0.0, %v4568
    %4570 = vmatmul.bf16.gmra.mxu0 %v3912
    %v4571 = vpop.f32.mrf.mxu0
    %v4572 = vadd.f32 0.0, %v4571
    %v4573 = vpop.f32.mrf.mxu0
    %v4574 = vadd.f32 0.0, %v4573
    %4575 = vmatmul.bf16.gmra.mxu0 %v3914
    %v4576 = vpop.f32.mrf.mxu0
    %v4577 = vadd.f32 0.0, %v4576
    %v4578 = vpop.f32.mrf.mxu0
    %v4579 = vadd.f32 0.0, %v4578
    %4580 = vmatmul.bf16.gmra.mxu0 %v3916
    %v4581 = vpop.f32.mrf.mxu0
    %v4582 = vadd.f32 0.0, %v4581
    %v4583 = vpop.f32.mrf.mxu0
    %v4584 = vadd.f32 0.0, %v4583
    %4585 = vmatmul.bf16.gmra.mxu0 %v3918
    %v4586 = vpop.f32.mrf.mxu0
    %v4587 = vadd.f32 0.0, %v4586
    %v4588 = vpop.f32.mrf.mxu0
    %v4589 = vadd.f32 0.0, %v4588
    %4590 = vmatmul.bf16.gmra.mxu0 %v3920
    %v4591 = vpop.f32.mrf.mxu0
    %v4592 = vadd.f32 0.0, %v4591
    %v4593 = vpop.f32.mrf.mxu0
    %v4594 = vadd.f32 0.0, %v4593
    %4595 = vmatmul.bf16.gmra.mxu0 %v3922
    %v4596 = vpop.f32.mrf.mxu0
    %v4597 = vadd.f32 0.0, %v4596
    %v4598 = vpop.f32.mrf.mxu0
    %v4599 = vadd.f32 0.0, %v4598
    %4600 = vdwg.mxu0
    %4601 = vmatpush.bf16.msra.mxu0 %v4273
    %4602 = vmatpush.bf16.msra.mxu0 %v4268
    %4603 = vmatpush.bf16.msra.mxu0 %v4263
    %4604 = vmatpush.bf16.msra.mxu0 %v4258
    %4605 = vmatpush.bf16.msra.mxu0 %v4253
    %4606 = vmatpush.bf16.msra.mxu0 %v4248
    %4607 = vmatpush.bf16.msra.mxu0 %v4243
    %4608 = vmatpush.bf16.msra.mxu0 %v4238
    %4609 = vmatmul.bf16.gmra.mxu0 %v3909
    %v4610 = vpop.f32.mrf.mxu0
    %v4611 = vadd.f32 %v4562, %v4610
    %v4612 = vpop.f32.mrf.mxu0
    %v4613 = vadd.f32 %v4564, %v4612
    %4614 = vmatmul.bf16.gmra.mxu0 %v3911
    %v4615 = vpop.f32.mrf.mxu0
    %v4616 = vadd.f32 %v4567, %v4615
    %v4617 = vpop.f32.mrf.mxu0
    %v4618 = vadd.f32 %v4569, %v4617
    %4619 = vmatmul.bf16.gmra.mxu0 %v3913
    %v4620 = vpop.f32.mrf.mxu0
    %v4621 = vadd.f32 %v4572, %v4620
    %v4622 = vpop.f32.mrf.mxu0
    %v4623 = vadd.f32 %v4574, %v4622
    %4624 = vmatmul.bf16.gmra.mxu0 %v3915
    %v4625 = vpop.f32.mrf.mxu0
    %v4626 = vadd.f32 %v4577, %v4625
    %v4627 = vpop.f32.mrf.mxu0
    %v4628 = vadd.f32 %v4579, %v4627
    %4629 = vmatmul.bf16.gmra.mxu0 %v3917
    %v4630 = vpop.f32.mrf.mxu0
    %v4631 = vadd.f32 %v4582, %v4630
    %v4632 = vpop.f32.mrf.mxu0
    %v4633 = vadd.f32 %v4584, %v4632
    %4634 = vmatmul.bf16.gmra.mxu0 %v3919
    %v4635 = vpop.f32.mrf.mxu0
    %v4636 = vadd.f32 %v4587, %v4635
    %v4637 = vpop.f32.mrf.mxu0
    %v4638 = vadd.f32 %v4589, %v4637
    %4639 = vmatmul.bf16.gmra.mxu0 %v3921
    %v4640 = vpop.f32.mrf.mxu0
    %v4641 = vadd.f32 %v4592, %v4640
    %v4642 = vpop.f32.mrf.mxu0
    %v4643 = vadd.f32 %v4594, %v4642
    %4644 = vmatmul.bf16.gmra.mxu0 %v3923
    %v4645 = vpop.f32.mrf.mxu0
    %v4646 = vadd.f32 %v4597, %v4645
    %v4647 = vpop.f32.mrf.mxu0
    %v4648 = vadd.f32 %v4599, %v4647
    %4649 = vdwg.mxu0
    %4650 = vmatpush.bf16.msra.mxu0 %v4234
    %4651 = vmatpush.bf16.msra.mxu0 %v4229
    %4652 = vmatpush.bf16.msra.mxu0 %v4224
    %4653 = vmatpush.bf16.msra.mxu0 %v4219
    %4654 = vmatpush.bf16.msra.mxu0 %v4214
    %4655 = vmatpush.bf16.msra.mxu0 %v4209
    %4656 = vmatpush.bf16.msra.mxu0 %v4204
    %4657 = vmatpush.bf16.msra.mxu0 %v4199
    %4658 = vmatmul.bf16.gmra.mxu0 %v3908
    %v4659 = vpop.f32.mrf.mxu0
    %v4660 = vadd.f32 0.0, %v4659
    %v4661 = vpop.f32.mrf.mxu0
    %v4662 = vadd.f32 0.0, %v4661
    %4663 = vmatmul.bf16.gmra.mxu0 %v3910
    %v4664 = vpop.f32.mrf.mxu0
    %v4665 = vadd.f32 0.0, %v4664
    %v4666 = vpop.f32.mrf.mxu0
    %v4667 = vadd.f32 0.0, %v4666
    %4668 = vmatmul.bf16.gmra.mxu0 %v3912
    %v4669 = vpop.f32.mrf.mxu0
    %v4670 = vadd.f32 0.0, %v4669
    %v4671 = vpop.f32.mrf.mxu0
    %v4672 = vadd.f32 0.0, %v4671
    %4673 = vmatmul.bf16.gmra.mxu0 %v3914
    %v4674 = vpop.f32.mrf.mxu0
    %v4675 = vadd.f32 0.0, %v4674
    %v4676 = vpop.f32.mrf.mxu0
    %v4677 = vadd.f32 0.0, %v4676
    %4678 = vmatmul.bf16.gmra.mxu0 %v3916
    %v4679 = vpop.f32.mrf.mxu0
    %v4680 = vadd.f32 0.0, %v4679
    %v4681 = vpop.f32.mrf.mxu0
    %v4682 = vadd.f32 0.0, %v4681
    %4683 = vmatmul.bf16.gmra.mxu0 %v3918
    %v4684 = vpop.f32.mrf.mxu0
    %v4685 = vadd.f32 0.0, %v4684
    %v4686 = vpop.f32.mrf.mxu0
    %v4687 = vadd.f32 0.0, %v4686
    %4688 = vmatmul.bf16.gmra.mxu0 %v3920
    %v4689 = vpop.f32.mrf.mxu0
    %v4690 = vadd.f32 0.0, %v4689
    %v4691 = vpop.f32.mrf.mxu0
    %v4692 = vadd.f32 0.0, %v4691
    %4693 = vmatmul.bf16.gmra.mxu0 %v3922
    %v4694 = vpop.f32.mrf.mxu0
    %v4695 = vadd.f32 0.0, %v4694
    %v4696 = vpop.f32.mrf.mxu0
    %v4697 = vadd.f32 0.0, %v4696
    %4698 = vdwg.mxu0
    %4699 = vmatpush.bf16.msra.mxu0 %v4274
    %4700 = vmatpush.bf16.msra.mxu0 %v4269
    %4701 = vmatpush.bf16.msra.mxu0 %v4264
    %4702 = vmatpush.bf16.msra.mxu0 %v4259
    %4703 = vmatpush.bf16.msra.mxu0 %v4254
    %4704 = vmatpush.bf16.msra.mxu0 %v4249
    %4705 = vmatpush.bf16.msra.mxu0 %v4244
    %4706 = vmatpush.bf16.msra.mxu0 %v4239
    %4707 = vmatmul.bf16.gmra.mxu0 %v3909
    %v4708 = vpop.f32.mrf.mxu0
    %v4709 = vadd.f32 %v4660, %v4708
    %v4710 = vpop.f32.mrf.mxu0
    %v4711 = vadd.f32 %v4662, %v4710
    %4712 = vmatmul.bf16.gmra.mxu0 %v3911
    %v4713 = vpop.f32.mrf.mxu0
    %v4714 = vadd.f32 %v4665, %v4713
    %v4715 = vpop.f32.mrf.mxu0
    %v4716 = vadd.f32 %v4667, %v4715
    %4717 = vmatmul.bf16.gmra.mxu0 %v3913
    %v4718 = vpop.f32.mrf.mxu0
    %v4719 = vadd.f32 %v4670, %v4718
    %v4720 = vpop.f32.mrf.mxu0
    %v4721 = vadd.f32 %v4672, %v4720
    %4722 = vmatmul.bf16.gmra.mxu0 %v3915
    %v4723 = vpop.f32.mrf.mxu0
    %v4724 = vadd.f32 %v4675, %v4723
    %v4725 = vpop.f32.mrf.mxu0
    %v4726 = vadd.f32 %v4677, %v4725
    %4727 = vmatmul.bf16.gmra.mxu0 %v3917
    %v4728 = vpop.f32.mrf.mxu0
    %v4729 = vadd.f32 %v4680, %v4728
    %v4730 = vpop.f32.mrf.mxu0
    %v4731 = vadd.f32 %v4682, %v4730
    %4732 = vmatmul.bf16.gmra.mxu0 %v3919
    %v4733 = vpop.f32.mrf.mxu0
    %v4734 = vadd.f32 %v4685, %v4733
    %v4735 = vpop.f32.mrf.mxu0
    %v4736 = vadd.f32 %v4687, %v4735
    %4737 = vmatmul.bf16.gmra.mxu0 %v3921
    %v4738 = vpop.f32.mrf.mxu0
    %v4739 = vadd.f32 %v4690, %v4738
    %v4740 = vpop.f32.mrf.mxu0
    %v4741 = vadd.f32 %v4692, %v4740
    %4742 = vmatmul.bf16.gmra.mxu0 %v3923
    %v4743 = vpop.f32.mrf.mxu0
    %v4744 = vadd.f32 %v4695, %v4743
    %v4745 = vpop.f32.mrf.mxu0
    %v4746 = vadd.f32 %v4697, %v4745
    %4747 = vdwg.mxu0
    %4748 = vmatpush.bf16.msra.mxu0 %v4235
    %4749 = vmatpush.bf16.msra.mxu0 %v4230
    %4750 = vmatpush.bf16.msra.mxu0 %v4225
    %4751 = vmatpush.bf16.msra.mxu0 %v4220
    %4752 = vmatpush.bf16.msra.mxu0 %v4215
    %4753 = vmatpush.bf16.msra.mxu0 %v4210
    %4754 = vmatpush.bf16.msra.mxu0 %v4205
    %4755 = vmatpush.bf16.msra.mxu0 %v4200
    %4756 = vmatmul.bf16.gmra.mxu0 %v3908
    %v4757 = vpop.f32.mrf.mxu0
    %v4758 = vadd.f32 0.0, %v4757
    %v4759 = vpop.f32.mrf.mxu0
    %v4760 = vadd.f32 0.0, %v4759
    %4761 = vmatmul.bf16.gmra.mxu0 %v3910
    %v4762 = vpop.f32.mrf.mxu0
    %v4763 = vadd.f32 0.0, %v4762
    %v4764 = vpop.f32.mrf.mxu0
    %v4765 = vadd.f32 0.0, %v4764
    %4766 = vmatmul.bf16.gmra.mxu0 %v3912
    %v4767 = vpop.f32.mrf.mxu0
    %v4768 = vadd.f32 0.0, %v4767
    %v4769 = vpop.f32.mrf.mxu0
    %v4770 = vadd.f32 0.0, %v4769
    %4771 = vmatmul.bf16.gmra.mxu0 %v3914
    %v4772 = vpop.f32.mrf.mxu0
    %v4773 = vadd.f32 0.0, %v4772
    %v4774 = vpop.f32.mrf.mxu0
    %v4775 = vadd.f32 0.0, %v4774
    %4776 = vmatmul.bf16.gmra.mxu0 %v3916
    %v4777 = vpop.f32.mrf.mxu0
    %v4778 = vadd.f32 0.0, %v4777
    %v4779 = vpop.f32.mrf.mxu0
    %v4780 = vadd.f32 0.0, %v4779
    %4781 = vmatmul.bf16.gmra.mxu0 %v3918
    %v4782 = vpop.f32.mrf.mxu0
    %v4783 = vadd.f32 0.0, %v4782
    %v4784 = vpop.f32.mrf.mxu0
    %v4785 = vadd.f32 0.0, %v4784
    %4786 = vmatmul.bf16.gmra.mxu0 %v3920
    %v4787 = vpop.f32.mrf.mxu0
    %v4788 = vadd.f32 0.0, %v4787
    %v4789 = vpop.f32.mrf.mxu0
    %v4790 = vadd.f32 0.0, %v4789
    %4791 = vmatmul.bf16.gmra.mxu0 %v3922
    %v4792 = vpop.f32.mrf.mxu0
    %v4793 = vadd.f32 0.0, %v4792
    %v4794 = vpop.f32.mrf.mxu0
    %v4795 = vadd.f32 0.0, %v4794
    %4796 = vdwg.mxu0
    %4797 = vmatpush.bf16.msra.mxu0 %v4275
    %4798 = vmatpush.bf16.msra.mxu0 %v4270
    %4799 = vmatpush.bf16.msra.mxu0 %v4265
    %4800 = vmatpush.bf16.msra.mxu0 %v4260
    %4801 = vmatpush.bf16.msra.mxu0 %v4255
    %4802 = vmatpush.bf16.msra.mxu0 %v4250
    %4803 = vmatpush.bf16.msra.mxu0 %v4245
    %4804 = vmatpush.bf16.msra.mxu0 %v4240
    %4805 = vmatmul.bf16.gmra.mxu0 %v3909
    %v4806 = vpop.f32.mrf.mxu0
    %v4807 = vadd.f32 %v4758, %v4806
    %v4808 = vpop.f32.mrf.mxu0
    %v4809 = vadd.f32 %v4760, %v4808
    %4810 = vmatmul.bf16.gmra.mxu0 %v3911
    %v4811 = vpop.f32.mrf.mxu0
    %v4812 = vadd.f32 %v4763, %v4811
    %v4813 = vpop.f32.mrf.mxu0
    %v4814 = vadd.f32 %v4765, %v4813
    %4815 = vmatmul.bf16.gmra.mxu0 %v3913
    %v4816 = vpop.f32.mrf.mxu0
    %v4817 = vadd.f32 %v4768, %v4816
    %v4818 = vpop.f32.mrf.mxu0
    %v4819 = vadd.f32 %v4770, %v4818
    %4820 = vmatmul.bf16.gmra.mxu0 %v3915
    %v4821 = vpop.f32.mrf.mxu0
    %v4822 = vadd.f32 %v4773, %v4821
    %v4823 = vpop.f32.mrf.mxu0
    %v4824 = vadd.f32 %v4775, %v4823
    %4825 = vmatmul.bf16.gmra.mxu0 %v3917
    %v4826 = vpop.f32.mrf.mxu0
    %v4827 = vadd.f32 %v4778, %v4826
    %v4828 = vpop.f32.mrf.mxu0
    %v4829 = vadd.f32 %v4780, %v4828
    %4830 = vmatmul.bf16.gmra.mxu0 %v3919
    %v4831 = vpop.f32.mrf.mxu0
    %v4832 = vadd.f32 %v4783, %v4831
    %v4833 = vpop.f32.mrf.mxu0
    %v4834 = vadd.f32 %v4785, %v4833
    %4835 = vmatmul.bf16.gmra.mxu0 %v3921
    %v4836 = vpop.f32.mrf.mxu0
    %v4837 = vadd.f32 %v4788, %v4836
    %v4838 = vpop.f32.mrf.mxu0
    %v4839 = vadd.f32 %v4790, %v4838
    %4840 = vmatmul.bf16.gmra.mxu0 %v3923
    %v4841 = vpop.f32.mrf.mxu0
    %v4842 = vadd.f32 %v4793, %v4841
    %v4843 = vpop.f32.mrf.mxu0
    %v4844 = vadd.f32 %v4795, %v4843
    %4845 = vdwg.mxu0
    %v4846 = vadd.f32 %v3667, %v4415
    %v4847 = vadd.f32 %v3668, %v4513
    %v4848 = vadd.f32 %v3669, %v4611
    %v4849 = vadd.f32 %v3670, %v4709
    %v4850 = vadd.f32 %v3671, %v4807
    %v4851 = vadd.f32 %v3672, %v4417
    %v4852 = vadd.f32 %v3673, %v4515
    %v4853 = vadd.f32 %v3674, %v4613
    %v4854 = vadd.f32 %v3675, %v4711
    %v4855 = vadd.f32 %v3676, %v4809
    %v4856 = vadd.f32 %v3677, %v4420
    %v4857 = vadd.f32 %v3678, %v4518
    %v4858 = vadd.f32 %v3679, %v4616
    %v4859 = vadd.f32 %v3680, %v4714
    %v4860 = vadd.f32 %v3681, %v4812
    %v4861 = vadd.f32 %v3682, %v4422
    %v4862 = vadd.f32 %v3683, %v4520
    %v4863 = vadd.f32 %v3684, %v4618
    %v4864 = vadd.f32 %v3685, %v4716
    %v4865 = vadd.f32 %v3686, %v4814
    %v4866 = vadd.f32 %v3687, %v4425
    %v4867 = vadd.f32 %v3688, %v4523
    %v4868 = vadd.f32 %v3689, %v4621
    %v4869 = vadd.f32 %v3690, %v4719
    %v4870 = vadd.f32 %v3691, %v4817
    %v4871 = vadd.f32 %v3692, %v4427
    %v4872 = vadd.f32 %v3693, %v4525
    %v4873 = vadd.f32 %v3694, %v4623
    %v4874 = vadd.f32 %v3695, %v4721
    %v4875 = vadd.f32 %v3696, %v4819
    %v4876 = vadd.f32 %v3697, %v4430
    %v4877 = vadd.f32 %v3698, %v4528
    %v4878 = vadd.f32 %v3699, %v4626
    %v4879 = vadd.f32 %v3700, %v4724
    %v4880 = vadd.f32 %v3701, %v4822
    %v4881 = vadd.f32 %v3702, %v4432
    %v4882 = vadd.f32 %v3703, %v4530
    %v4883 = vadd.f32 %v3704, %v4628
    %v4884 = vadd.f32 %v3705, %v4726
    %v4885 = vadd.f32 %v3706, %v4824
    %v4886 = vadd.f32 %v3707, %v4435
    %v4887 = vadd.f32 %v3708, %v4533
    %v4888 = vadd.f32 %v3709, %v4631
    %v4889 = vadd.f32 %v3710, %v4729
    %v4890 = vadd.f32 %v3711, %v4827
    %v4891 = vadd.f32 %v3712, %v4437
    %v4892 = vadd.f32 %v3713, %v4535
    %v4893 = vadd.f32 %v3714, %v4633
    %v4894 = vadd.f32 %v3715, %v4731
    %v4895 = vadd.f32 %v3716, %v4829
    %v4896 = vadd.f32 %v3717, %v4440
    %v4897 = vadd.f32 %v3718, %v4538
    %v4898 = vadd.f32 %v3719, %v4636
    %v4899 = vadd.f32 %v3720, %v4734
    %v4900 = vadd.f32 %v3721, %v4832
    %v4901 = vadd.f32 %v3722, %v4442
    %v4902 = vadd.f32 %v3723, %v4540
    %v4903 = vadd.f32 %v3724, %v4638
    %v4904 = vadd.f32 %v3725, %v4736
    %v4905 = vadd.f32 %v3726, %v4834
    %v4906 = vadd.f32 %v3727, %v4445
    %v4907 = vadd.f32 %v3728, %v4543
    %v4908 = vadd.f32 %v3729, %v4641
    %v4909 = vadd.f32 %v3730, %v4739
    %v4910 = vadd.f32 %v3731, %v4837
    %v4911 = vadd.f32 %v3732, %v4447
    %v4912 = vadd.f32 %v3733, %v4545
    %v4913 = vadd.f32 %v3734, %v4643
    %v4914 = vadd.f32 %v3735, %v4741
    %v4915 = vadd.f32 %v3736, %v4839
    %v4916 = vadd.f32 %v3737, %v4450
    %v4917 = vadd.f32 %v3738, %v4548
    %v4918 = vadd.f32 %v3739, %v4646
    %v4919 = vadd.f32 %v3740, %v4744
    %v4920 = vadd.f32 %v3741, %v4842
    %v4921 = vadd.f32 %v3742, %v4452
    %v4922 = vadd.f32 %v3743, %v4550
    %v4923 = vadd.f32 %v3744, %v4648
    %v4924 = vadd.f32 %v3745, %v4746
    %v4925 = vadd.f32 %v3746, %v4844
    %v4926 = vld [vmem:[%s3747] sm:$0xff]
    %v4927 = vld [vmem:[%s3747 + $0x8] sm:$0x11]
    %v4928 = vld [vmem:[%s3747 + $0x10] sm:$0xff]
    %v4929 = vld [vmem:[%s3747 + $0x18] sm:$0x11]
    %v4930 = vld [vmem:[%s3747 + $0x20] sm:$0xff]
    %v4931 = vld [vmem:[%s3747 + $0x28] sm:$0x11]
    %v4932 = vld [vmem:[%s3747 + $0x30] sm:$0xff]
    %v4933 = vld [vmem:[%s3747 + $0x38] sm:$0x11]
    %v4934 = vld [vmem:[%s3747 + $0x40] sm:$0xff]
    %v4935 = vld [vmem:[%s3747 + $0x48] sm:$0x11]
    %v4936 = vld [vmem:[%s3747 + $0x50] sm:$0xff]
    %v4937 = vld [vmem:[%s3747 + $0x58] sm:$0x11]
    %v4938 = vld [vmem:[%s3747 + $0x60] sm:$0xff]
    %v4939 = vld [vmem:[%s3747 + $0x68] sm:$0x11]
    %v4940 = vld [vmem:[%s3747 + $0x70] sm:$0xff]
    %v4941 = vld [vmem:[%s3747 + $0x78] sm:$0x11]
    %v4942 = vld [vmem:[%s3747 + $0xa0] sm:$0xff]
    %v4943 = vld [vmem:[%s3747 + $0xa8] sm:$0x11]
    %v4944 = vld [vmem:[%s3747 + $0xb0] sm:$0xff]
    %v4945 = vld [vmem:[%s3747 + $0xb8] sm:$0x11]
    %v4946 = vld [vmem:[%s3747 + $0xc0] sm:$0xff]
    %v4947 = vld [vmem:[%s3747 + $0xc8] sm:$0x11]
    %v4948 = vld [vmem:[%s3747 + $0xd0] sm:$0xff]
    %v4949 = vld [vmem:[%s3747 + $0xd8] sm:$0x11]
    %v4950 = vld [vmem:[%s3747 + $0xe0] sm:$0xff]
    %v4951 = vld [vmem:[%s3747 + $0xe8] sm:$0x11]
    %v4952 = vld [vmem:[%s3747 + $0xf0] sm:$0xff]
    %v4953 = vld [vmem:[%s3747 + $0xf8] sm:$0x11]
    %v4954 = vld [vmem:[%s3747 + $0x100] sm:$0xff]
    %v4955 = vld [vmem:[%s3747 + $0x108] sm:$0x11]
    %v4956 = vld [vmem:[%s3747 + $0x110] sm:$0xff]
    %v4957 = vld [vmem:[%s3747 + $0x118] sm:$0x11]
    %v4959 = vshrl.u32 %v4926, 16
    %v4961 = vrot.slane %v4959, 4
    %v4962 = vshll.u32 %v4926, 16
    %v4964 = vrot.slane %v4962, 5
    %v4965 = vor.u32 %v4961, %v4964
    %v4966 = vrot.slane %v4965, 4
    %v4968 = vshll.u32 %v4927, 16
    %v4970 = vrot.slane %v4968, 5
    %v4971 = vsel %vm209, %v4966, %v4970
    %v4973 = vshrl.u32 %v4928, 16
    %v4975 = vrot.slane %v4973, 4
    %v4976 = vshll.u32 %v4928, 16
    %v4978 = vrot.slane %v4976, 5
    %v4979 = vor.u32 %v4975, %v4978
    %v4980 = vrot.slane %v4979, 4
    %v4982 = vshll.u32 %v4929, 16
    %v4984 = vrot.slane %v4982, 5
    %v4985 = vsel %vm209, %v4980, %v4984
    %v4987 = vshrl.u32 %v4930, 16
    %v4989 = vrot.slane %v4987, 4
    %v4990 = vshll.u32 %v4930, 16
    %v4992 = vrot.slane %v4990, 5
    %v4993 = vor.u32 %v4989, %v4992
    %v4994 = vrot.slane %v4993, 4
    %v4996 = vshll.u32 %v4931, 16
    %v4998 = vrot.slane %v4996, 5
    %v4999 = vsel %vm209, %v4994, %v4998
    %v5001 = vshrl.u32 %v4932, 16
    %v5003 = vrot.slane %v5001, 4
    %v5004 = vshll.u32 %v4932, 16
    %v5006 = vrot.slane %v5004, 5
    %v5007 = vor.u32 %v5003, %v5006
    %v5008 = vrot.slane %v5007, 4
    %v5010 = vshll.u32 %v4933, 16
    %v5012 = vrot.slane %v5010, 5
    %v5013 = vsel %vm209, %v5008, %v5012
    %v5015 = vshrl.u32 %v4934, 16
    %v5017 = vrot.slane %v5015, 4
    %v5018 = vshll.u32 %v4934, 16
    %v5020 = vrot.slane %v5018, 5
    %v5021 = vor.u32 %v5017, %v5020
    %v5022 = vrot.slane %v5021, 4
    %v5024 = vshll.u32 %v4935, 16
    %v5026 = vrot.slane %v5024, 5
    %v5027 = vsel %vm209, %v5022, %v5026
    %v5029 = vshrl.u32 %v4936, 16
    %v5031 = vrot.slane %v5029, 4
    %v5032 = vshll.u32 %v4936, 16
    %v5034 = vrot.slane %v5032, 5
    %v5035 = vor.u32 %v5031, %v5034
    %v5036 = vrot.slane %v5035, 4
    %v5038 = vshll.u32 %v4937, 16
    %v5040 = vrot.slane %v5038, 5
    %v5041 = vsel %vm209, %v5036, %v5040
    %v5043 = vshrl.u32 %v4938, 16
    %v5045 = vrot.slane %v5043, 4
    %v5046 = vshll.u32 %v4938, 16
    %v5048 = vrot.slane %v5046, 5
    %v5049 = vor.u32 %v5045, %v5048
    %v5050 = vrot.slane %v5049, 4
    %v5052 = vshll.u32 %v4939, 16
    %v5054 = vrot.slane %v5052, 5
    %v5055 = vsel %vm209, %v5050, %v5054
    %v5057 = vshrl.u32 %v4940, 16
    %v5059 = vrot.slane %v5057, 4
    %v5060 = vshll.u32 %v4940, 16
    %v5062 = vrot.slane %v5060, 5
    %v5063 = vor.u32 %v5059, %v5062
    %v5064 = vrot.slane %v5063, 4
    %v5066 = vshll.u32 %v4941, 16
    %v5068 = vrot.slane %v5066, 5
    %v5069 = vsel %vm209, %v5064, %v5068
    %v5071 = vshrl.u32 %v4942, 16
    %v5073 = vrot.slane %v5071, 4
    %v5074 = vshll.u32 %v4942, 16
    %v5076 = vrot.slane %v5074, 5
    %v5077 = vor.u32 %v5073, %v5076
    %v5078 = vrot.slane %v5077, 4
    %v5080 = vshll.u32 %v4943, 16
    %v5082 = vrot.slane %v5080, 5
    %v5083 = vsel %vm209, %v5078, %v5082
    %v5085 = vshrl.u32 %v4944, 16
    %v5087 = vrot.slane %v5085, 4
    %v5088 = vshll.u32 %v4944, 16
    %v5090 = vrot.slane %v5088, 5
    %v5091 = vor.u32 %v5087, %v5090
    %v5092 = vrot.slane %v5091, 4
    %v5094 = vshll.u32 %v4945, 16
    %v5096 = vrot.slane %v5094, 5
    %v5097 = vsel %vm209, %v5092, %v5096
    %v5099 = vshrl.u32 %v4946, 16
    %v5101 = vrot.slane %v5099, 4
    %v5102 = vshll.u32 %v4946, 16
    %v5104 = vrot.slane %v5102, 5
    %v5105 = vor.u32 %v5101, %v5104
    %v5106 = vrot.slane %v5105, 4
    %v5108 = vshll.u32 %v4947, 16
    %v5110 = vrot.slane %v5108, 5
    %v5111 = vsel %vm209, %v5106, %v5110
    %v5113 = vshrl.u32 %v4948, 16
    %v5115 = vrot.slane %v5113, 4
    %v5116 = vshll.u32 %v4948, 16
    %v5118 = vrot.slane %v5116, 5
    %v5119 = vor.u32 %v5115, %v5118
    %v5120 = vrot.slane %v5119, 4
    %v5122 = vshll.u32 %v4949, 16
    %v5124 = vrot.slane %v5122, 5
    %v5125 = vsel %vm209, %v5120, %v5124
    %v5127 = vshrl.u32 %v4950, 16
    %v5129 = vrot.slane %v5127, 4
    %v5130 = vshll.u32 %v4950, 16
    %v5132 = vrot.slane %v5130, 5
    %v5133 = vor.u32 %v5129, %v5132
    %v5134 = vrot.slane %v5133, 4
    %v5136 = vshll.u32 %v4951, 16
    %v5138 = vrot.slane %v5136, 5
    %v5139 = vsel %vm209, %v5134, %v5138
    %v5141 = vshrl.u32 %v4952, 16
    %v5143 = vrot.slane %v5141, 4
    %v5144 = vshll.u32 %v4952, 16
    %v5146 = vrot.slane %v5144, 5
    %v5147 = vor.u32 %v5143, %v5146
    %v5148 = vrot.slane %v5147, 4
    %v5150 = vshll.u32 %v4953, 16
    %v5152 = vrot.slane %v5150, 5
    %v5153 = vsel %vm209, %v5148, %v5152
    %v5155 = vshrl.u32 %v4954, 16
    %v5157 = vrot.slane %v5155, 4
    %v5158 = vshll.u32 %v4954, 16
    %v5160 = vrot.slane %v5158, 5
    %v5161 = vor.u32 %v5157, %v5160
    %v5162 = vrot.slane %v5161, 4
    %v5164 = vshll.u32 %v4955, 16
    %v5166 = vrot.slane %v5164, 5
    %v5167 = vsel %vm209, %v5162, %v5166
    %v5169 = vshrl.u32 %v4956, 16
    %v5171 = vrot.slane %v5169, 4
    %v5172 = vshll.u32 %v4956, 16
    %v5174 = vrot.slane %v5172, 5
    %v5175 = vor.u32 %v5171, %v5174
    %v5176 = vrot.slane %v5175, 4
    %v5178 = vshll.u32 %v4957, 16
    %v5180 = vrot.slane %v5178, 5
    %v5181 = vsel %vm209, %v5176, %v5180
    %v5182 = vld [vmem:[#allocation2 + $0xa00] sm:$0xff]
    %v5183 = vld [vmem:[#allocation2 + $0xa08] sm:$0xff]
    %v5184 = vld [vmem:[#allocation2 + $0xa10] sm:$0xf]
    %v5185 = vld [vmem:[#allocation2 + $0xa14] sm:$0xff]
    %v5186 = vld [vmem:[#allocation2 + $0xa1c] sm:$0xff]
    %v5187 = vld [vmem:[#allocation2 + $0xa24] sm:$0xf]
    %v5188 = vld [vmem:[#allocation2 + $0xa28] sm:$0xff]
    %v5189 = vld [vmem:[#allocation2 + $0xa30] sm:$0xff]
    %v5190 = vld [vmem:[#allocation2 + $0xa38] sm:$0xf]
    %v5191 = vld [vmem:[#allocation2 + $0xa3c] sm:$0xff]
    %v5192 = vld [vmem:[#allocation2 + $0xa44] sm:$0xff]
    %v5193 = vld [vmem:[#allocation2 + $0xa4c] sm:$0xf]
    %v5194 = vld [vmem:[#allocation2 + $0xa50] sm:$0xff]
    %v5195 = vld [vmem:[#allocation2 + $0xa58] sm:$0xff]
    %v5196 = vld [vmem:[#allocation2 + $0xa60] sm:$0xf]
    %v5197 = vld [vmem:[#allocation2 + $0xa64] sm:$0xff]
    %v5198 = vld [vmem:[#allocation2 + $0xa6c] sm:$0xff]
    %v5199 = vld [vmem:[#allocation2 + $0xa74] sm:$0xf]
    %v5200 = vld [vmem:[#allocation2 + $0xa78] sm:$0xff]
    %v5201 = vld [vmem:[#allocation2 + $0xa80] sm:$0xff]
    %v5202 = vld [vmem:[#allocation2 + $0xa88] sm:$0xf]
    %v5203 = vld [vmem:[#allocation2 + $0xa8c] sm:$0xff]
    %v5204 = vld [vmem:[#allocation2 + $0xa94] sm:$0xff]
    %v5205 = vld [vmem:[#allocation2 + $0xa9c] sm:$0xf]
    %v5206 = vld [vmem:[#allocation2 + $0xaa0] sm:$0xff]
    %v5207 = vld [vmem:[#allocation2 + $0xaa8] sm:$0xff]
    %v5208 = vld [vmem:[#allocation2 + $0xab0] sm:$0xf]
    %v5209 = vld [vmem:[#allocation2 + $0xab4] sm:$0xff]
    %v5210 = vld [vmem:[#allocation2 + $0xabc] sm:$0xff]
    %v5211 = vld [vmem:[#allocation2 + $0xac4] sm:$0xf]
    %v5212 = vld [vmem:[#allocation2 + $0xac8] sm:$0xff]
    %v5213 = vld [vmem:[#allocation2 + $0xad0] sm:$0xff]
    %v5214 = vld [vmem:[#allocation2 + $0xad8] sm:$0xf]
    %v5215 = vld [vmem:[#allocation2 + $0xadc] sm:$0xff]
    %v5216 = vld [vmem:[#allocation2 + $0xae4] sm:$0xff]
    %v5217 = vld [vmem:[#allocation2 + $0xaec] sm:$0xf]
    %v5218 = vld [vmem:[#allocation2 + $0xaf0] sm:$0xff]
    %v5219 = vld [vmem:[#allocation2 + $0xaf8] sm:$0xff]
    %v5220 = vld [vmem:[#allocation2 + $0xb00] sm:$0xf]
    %v5221 = vld [vmem:[#allocation2 + $0xb04] sm:$0xff]
    %v5222 = vld [vmem:[#allocation2 + $0xb0c] sm:$0xff]
    %v5223 = vld [vmem:[#allocation2 + $0xb14] sm:$0xf]
    %v5224 = vld [vmem:[#allocation2 + $0xb18] sm:$0xff]
    %v5225 = vld [vmem:[#allocation2 + $0xb20] sm:$0xff]
    %v5226 = vld [vmem:[#allocation2 + $0xb28] sm:$0xf]
    %v5227 = vld [vmem:[#allocation2 + $0xb2c] sm:$0xff]
    %v5228 = vld [vmem:[#allocation2 + $0xb34] sm:$0xff]
    %v5229 = vld [vmem:[#allocation2 + $0xb3c] sm:$0xf]
    %v5230 = vld [vmem:[#allocation2 + $0xb40] sm:$0xff]
    %v5231 = vld [vmem:[#allocation2 + $0xb48] sm:$0xff]
    %v5232 = vld [vmem:[#allocation2 + $0xb50] sm:$0xf]
    %v5233 = vld [vmem:[#allocation2 + $0xb54] sm:$0xff]
    %v5234 = vld [vmem:[#allocation2 + $0xb5c] sm:$0xff]
    %v5235 = vld [vmem:[#allocation2 + $0xb64] sm:$0xf]
    %v5236 = vld [vmem:[#allocation2 + $0xb68] sm:$0xff]
    %v5237 = vld [vmem:[#allocation2 + $0xb70] sm:$0xff]
    %v5238 = vld [vmem:[#allocation2 + $0xb78] sm:$0xf]
    %v5239 = vld [vmem:[#allocation2 + $0xb7c] sm:$0xff]
    %v5240 = vld [vmem:[#allocation2 + $0xb84] sm:$0xff]
    %v5241 = vld [vmem:[#allocation2 + $0xb8c] sm:$0xf]
    %v5242 = vld [vmem:[#allocation2 + $0xb90] sm:$0xff]
    %v5243 = vld [vmem:[#allocation2 + $0xb98] sm:$0xff]
    %v5244 = vld [vmem:[#allocation2 + $0xba0] sm:$0xf]
    %v5245 = vld [vmem:[#allocation2 + $0xba4] sm:$0xff]
    %v5246 = vld [vmem:[#allocation2 + $0xbac] sm:$0xff]
    %v5247 = vld [vmem:[#allocation2 + $0xbb4] sm:$0xf]
    %v5248 = vld [vmem:[#allocation2 + $0xbb8] sm:$0xff]
    %v5249 = vld [vmem:[#allocation2 + $0xbc0] sm:$0xff]
    %v5250 = vld [vmem:[#allocation2 + $0xbc8] sm:$0xf]
    %v5251 = vld [vmem:[#allocation2 + $0xbcc] sm:$0xff]
    %v5252 = vld [vmem:[#allocation2 + $0xbd4] sm:$0xff]
    %v5253 = vld [vmem:[#allocation2 + $0xbdc] sm:$0xf]
    %v5254 = vld [vmem:[#allocation2 + $0xbe0] sm:$0xff]
    %v5255 = vld [vmem:[#allocation2 + $0xbe8] sm:$0xff]
    %v5256 = vld [vmem:[#allocation2 + $0xbf0] sm:$0xf]
    %v5257 = vld [vmem:[#allocation2 + $0xbf4] sm:$0xff]
    %v5258 = vld [vmem:[#allocation2 + $0xbfc] sm:$0xff]
    %v5259 = vld [vmem:[#allocation2 + $0xc04] sm:$0xf]
    %v5260 = vld [vmem:[#allocation2 + $0xc08] sm:$0xff]
    %v5261 = vld [vmem:[#allocation2 + $0xc10] sm:$0xff]
    %v5262 = vld [vmem:[#allocation2 + $0xc18] sm:$0xf]
    %v5263 = vld [vmem:[#allocation2 + $0xc1c] sm:$0xff]
    %v5264 = vld [vmem:[#allocation2 + $0xc24] sm:$0xff]
    %v5265 = vld [vmem:[#allocation2 + $0xc2c] sm:$0xf]
    %v5266 = vld [vmem:[#allocation2 + $0xc30] sm:$0xff]
    %v5267 = vld [vmem:[#allocation2 + $0xc38] sm:$0xff]
    %v5268 = vld [vmem:[#allocation2 + $0xc40] sm:$0xf]
    %v5269 = vld [vmem:[#allocation2 + $0xc44] sm:$0xff]
    %v5270 = vld [vmem:[#allocation2 + $0xc4c] sm:$0xff]
    %v5271 = vld [vmem:[#allocation2 + $0xc54] sm:$0xf]
    %v5272 = vld [vmem:[#allocation2 + $0xc58] sm:$0xff]
    %v5273 = vld [vmem:[#allocation2 + $0xc60] sm:$0xff]
    %v5274 = vld [vmem:[#allocation2 + $0xc68] sm:$0xf]
    %v5275 = vld [vmem:[#allocation2 + $0xc6c] sm:$0xff]
    %v5276 = vld [vmem:[#allocation2 + $0xc74] sm:$0xff]
    %v5277 = vld [vmem:[#allocation2 + $0xc7c] sm:$0xf]
    %v5278 = vunpack.c.l.b16 %v4971
    %v5279 = vunpack.c.h.b16 %v4971
    %v5280 = vunpack.c.l.b16 %v4985
    %v5281 = vunpack.c.h.b16 %v4985
    %v5282 = vunpack.c.l.b16 %v4999
    %v5283 = vunpack.c.h.b16 %v4999
    %v5284 = vunpack.c.l.b16 %v5013
    %v5285 = vunpack.c.h.b16 %v5013
    %v5286 = vunpack.c.l.b16 %v5027
    %v5287 = vunpack.c.h.b16 %v5027
    %v5288 = vunpack.c.l.b16 %v5041
    %v5289 = vunpack.c.h.b16 %v5041
    %v5290 = vunpack.c.l.b16 %v5055
    %v5291 = vunpack.c.h.b16 %v5055
    %v5292 = vunpack.c.l.b16 %v5069
    %v5293 = vunpack.c.h.b16 %v5069
    %v5294 = vunpack.c.l.b16 %v5083
    %v5295 = vunpack.c.h.b16 %v5083
    %v5296 = vunpack.c.l.b16 %v5097
    %v5297 = vunpack.c.h.b16 %v5097
    %v5298 = vunpack.c.l.b16 %v5111
    %v5299 = vunpack.c.h.b16 %v5111
    %v5300 = vunpack.c.l.b16 %v5125
    %v5301 = vunpack.c.h.b16 %v5125
    %v5302 = vunpack.c.l.b16 %v5139
    %v5303 = vunpack.c.h.b16 %v5139
    %v5304 = vunpack.c.l.b16 %v5153
    %v5305 = vunpack.c.h.b16 %v5153
    %v5306 = vunpack.c.l.b16 %v5167
    %v5307 = vunpack.c.h.b16 %v5167
    %v5308 = vunpack.c.l.b16 %v5181
    %v5309 = vunpack.c.h.b16 %v5181
    %v5310 = vpack.c.b16 %v5280, %v5278
    %v5311 = vpack.c.b16 %v5281, %v5279
    %v5312 = vpack.c.b16 %v5284, %v5282
    %v5313 = vpack.c.b16 %v5285, %v5283
    %v5314 = vpack.c.b16 %v5288, %v5286
    %v5315 = vpack.c.b16 %v5289, %v5287
    %v5316 = vpack.c.b16 %v5292, %v5290
    %v5317 = vpack.c.b16 %v5293, %v5291
    %v5318 = vpack.c.b16 %v5296, %v5294
    %v5319 = vpack.c.b16 %v5297, %v5295
    %v5320 = vpack.c.b16 %v5300, %v5298
    %v5321 = vpack.c.b16 %v5301, %v5299
    %v5322 = vpack.c.b16 %v5304, %v5302
    %v5323 = vpack.c.b16 %v5305, %v5303
    %v5324 = vpack.c.b16 %v5308, %v5306
    %v5325 = vpack.c.b16 %v5309, %v5307
    %v5438 = vunpack.c.l.b16 %v5182
    %v5439 = vunpack.c.h.b16 %v5182
    %v5440 = vunpack.c.l.b16 %v5183
    %v5441 = vunpack.c.h.b16 %v5183
    %v5442 = vunpack.c.l.b16 %v5184
    %v5443 = vunpack.c.l.b16 %v5185
    %v5444 = vunpack.c.h.b16 %v5185
    %v5445 = vunpack.c.l.b16 %v5186
    %v5446 = vunpack.c.h.b16 %v5186
    %v5447 = vunpack.c.l.b16 %v5187
    %v5448 = vunpack.c.l.b16 %v5188
    %v5449 = vunpack.c.h.b16 %v5188
    %v5450 = vunpack.c.l.b16 %v5189
    %v5451 = vunpack.c.h.b16 %v5189
    %v5452 = vunpack.c.l.b16 %v5190
    %v5453 = vunpack.c.l.b16 %v5191
    %v5454 = vunpack.c.h.b16 %v5191
    %v5455 = vunpack.c.l.b16 %v5192
    %v5456 = vunpack.c.h.b16 %v5192
    %v5457 = vunpack.c.l.b16 %v5193
    %v5458 = vunpack.c.l.b16 %v5194
    %v5459 = vunpack.c.h.b16 %v5194
    %v5460 = vunpack.c.l.b16 %v5195
    %v5461 = vunpack.c.h.b16 %v5195
    %v5462 = vunpack.c.l.b16 %v5196
    %v5463 = vunpack.c.l.b16 %v5197
    %v5464 = vunpack.c.h.b16 %v5197
    %v5465 = vunpack.c.l.b16 %v5198
    %v5466 = vunpack.c.h.b16 %v5198
    %v5467 = vunpack.c.l.b16 %v5199
    %v5468 = vunpack.c.l.b16 %v5200
    %v5469 = vunpack.c.h.b16 %v5200
    %v5470 = vunpack.c.l.b16 %v5201
    %v5471 = vunpack.c.h.b16 %v5201
    %v5472 = vunpack.c.l.b16 %v5202
    %v5473 = vunpack.c.l.b16 %v5203
    %v5474 = vunpack.c.h.b16 %v5203
    %v5475 = vunpack.c.l.b16 %v5204
    %v5476 = vunpack.c.h.b16 %v5204
    %v5477 = vunpack.c.l.b16 %v5205
    %v5478 = vunpack.c.l.b16 %v5206
    %v5479 = vunpack.c.h.b16 %v5206
    %v5480 = vunpack.c.l.b16 %v5207
    %v5481 = vunpack.c.h.b16 %v5207
    %v5482 = vunpack.c.l.b16 %v5208
    %v5483 = vunpack.c.l.b16 %v5209
    %v5484 = vunpack.c.h.b16 %v5209
    %v5485 = vunpack.c.l.b16 %v5210
    %v5486 = vunpack.c.h.b16 %v5210
    %v5487 = vunpack.c.l.b16 %v5211
    %v5488 = vunpack.c.l.b16 %v5212
    %v5489 = vunpack.c.h.b16 %v5212
    %v5490 = vunpack.c.l.b16 %v5213
    %v5491 = vunpack.c.h.b16 %v5213
    %v5492 = vunpack.c.l.b16 %v5214
    %v5493 = vunpack.c.l.b16 %v5215
    %v5494 = vunpack.c.h.b16 %v5215
    %v5495 = vunpack.c.l.b16 %v5216
    %v5496 = vunpack.c.h.b16 %v5216
    %v5497 = vunpack.c.l.b16 %v5217
    %v5498 = vunpack.c.l.b16 %v5218
    %v5499 = vunpack.c.h.b16 %v5218
    %v5500 = vunpack.c.l.b16 %v5219
    %v5501 = vunpack.c.h.b16 %v5219
    %v5502 = vunpack.c.l.b16 %v5220
    %v5503 = vunpack.c.l.b16 %v5221
    %v5504 = vunpack.c.h.b16 %v5221
    %v5505 = vunpack.c.l.b16 %v5222
    %v5506 = vunpack.c.h.b16 %v5222
    %v5507 = vunpack.c.l.b16 %v5223
    %v5508 = vunpack.c.l.b16 %v5224
    %v5509 = vunpack.c.h.b16 %v5224
    %v5510 = vunpack.c.l.b16 %v5225
    %v5511 = vunpack.c.h.b16 %v5225
    %v5512 = vunpack.c.l.b16 %v5226
    %v5513 = vunpack.c.l.b16 %v5227
    %v5514 = vunpack.c.h.b16 %v5227
    %v5515 = vunpack.c.l.b16 %v5228
    %v5516 = vunpack.c.h.b16 %v5228
    %v5517 = vunpack.c.l.b16 %v5229
    %v5518 = vunpack.c.l.b16 %v5230
    %v5519 = vunpack.c.h.b16 %v5230
    %v5520 = vunpack.c.l.b16 %v5231
    %v5521 = vunpack.c.h.b16 %v5231
    %v5522 = vunpack.c.l.b16 %v5232
    %v5523 = vunpack.c.l.b16 %v5233
    %v5524 = vunpack.c.h.b16 %v5233
    %v5525 = vunpack.c.l.b16 %v5234
    %v5526 = vunpack.c.h.b16 %v5234
    %v5527 = vunpack.c.l.b16 %v5235
    %v5528 = vunpack.c.l.b16 %v5236
    %v5529 = vunpack.c.h.b16 %v5236
    %v5530 = vunpack.c.l.b16 %v5237
    %v5531 = vunpack.c.h.b16 %v5237
    %v5532 = vunpack.c.l.b16 %v5238
    %v5533 = vunpack.c.l.b16 %v5239
    %v5534 = vunpack.c.h.b16 %v5239
    %v5535 = vunpack.c.l.b16 %v5240
    %v5536 = vunpack.c.h.b16 %v5240
    %v5537 = vunpack.c.l.b16 %v5241
    %v5538 = vunpack.c.l.b16 %v5242
    %v5539 = vunpack.c.h.b16 %v5242
    %v5540 = vunpack.c.l.b16 %v5243
    %v5541 = vunpack.c.h.b16 %v5243
    %v5542 = vunpack.c.l.b16 %v5244
    %v5543 = vunpack.c.l.b16 %v5245
    %v5544 = vunpack.c.h.b16 %v5245
    %v5545 = vunpack.c.l.b16 %v5246
    %v5546 = vunpack.c.h.b16 %v5246
    %v5547 = vunpack.c.l.b16 %v5247
    %v5548 = vunpack.c.l.b16 %v5248
    %v5549 = vunpack.c.h.b16 %v5248
    %v5550 = vunpack.c.l.b16 %v5249
    %v5551 = vunpack.c.h.b16 %v5249
    %v5552 = vunpack.c.l.b16 %v5250
    %v5553 = vunpack.c.l.b16 %v5251
    %v5554 = vunpack.c.h.b16 %v5251
    %v5555 = vunpack.c.l.b16 %v5252
    %v5556 = vunpack.c.h.b16 %v5252
    %v5557 = vunpack.c.l.b16 %v5253
    %v5558 = vunpack.c.l.b16 %v5254
    %v5559 = vunpack.c.h.b16 %v5254
    %v5560 = vunpack.c.l.b16 %v5255
    %v5561 = vunpack.c.h.b16 %v5255
    %v5562 = vunpack.c.l.b16 %v5256
    %v5563 = vunpack.c.l.b16 %v5257
    %v5564 = vunpack.c.h.b16 %v5257
    %v5565 = vunpack.c.l.b16 %v5258
    %v5566 = vunpack.c.h.b16 %v5258
    %v5567 = vunpack.c.l.b16 %v5259
    %v5568 = vunpack.c.l.b16 %v5260
    %v5569 = vunpack.c.h.b16 %v5260
    %v5570 = vunpack.c.l.b16 %v5261
    %v5571 = vunpack.c.h.b16 %v5261
    %v5572 = vunpack.c.l.b16 %v5262
    %v5573 = vunpack.c.l.b16 %v5263
    %v5574 = vunpack.c.h.b16 %v5263
    %v5575 = vunpack.c.l.b16 %v5264
    %v5576 = vunpack.c.h.b16 %v5264
    %v5577 = vunpack.c.l.b16 %v5265
    %v5578 = vunpack.c.l.b16 %v5266
    %v5579 = vunpack.c.h.b16 %v5266
    %v5580 = vunpack.c.l.b16 %v5267
    %v5581 = vunpack.c.h.b16 %v5267
    %v5582 = vunpack.c.l.b16 %v5268
    %v5583 = vunpack.c.l.b16 %v5269
    %v5584 = vunpack.c.h.b16 %v5269
    %v5585 = vunpack.c.l.b16 %v5270
    %v5586 = vunpack.c.h.b16 %v5270
    %v5587 = vunpack.c.l.b16 %v5271
    %v5588 = vunpack.c.l.b16 %v5272
    %v5589 = vunpack.c.h.b16 %v5272
    %v5590 = vunpack.c.l.b16 %v5273
    %v5591 = vunpack.c.h.b16 %v5273
    %v5592 = vunpack.c.l.b16 %v5274
    %v5593 = vunpack.c.l.b16 %v5275
    %v5594 = vunpack.c.h.b16 %v5275
    %v5595 = vunpack.c.l.b16 %v5276
    %v5596 = vunpack.c.h.b16 %v5276
    %v5597 = vunpack.c.l.b16 %v5277
    %v5598 = vpack.c.b16 %v5443, %v5438
    %v5599 = vpack.c.b16 %v5444, %v5439
    %v5600 = vpack.c.b16 %v5445, %v5440
    %v5601 = vpack.c.b16 %v5446, %v5441
    %v5602 = vpack.c.b16 %v5447, %v5442
    %v5603 = vpack.c.b16 %v5453, %v5448
    %v5604 = vpack.c.b16 %v5454, %v5449
    %v5605 = vpack.c.b16 %v5455, %v5450
    %v5606 = vpack.c.b16 %v5456, %v5451
    %v5607 = vpack.c.b16 %v5457, %v5452
    %v5608 = vpack.c.b16 %v5463, %v5458
    %v5609 = vpack.c.b16 %v5464, %v5459
    %v5610 = vpack.c.b16 %v5465, %v5460
    %v5611 = vpack.c.b16 %v5466, %v5461
    %v5612 = vpack.c.b16 %v5467, %v5462
    %v5613 = vpack.c.b16 %v5473, %v5468
    %v5614 = vpack.c.b16 %v5474, %v5469
    %v5615 = vpack.c.b16 %v5475, %v5470
    %v5616 = vpack.c.b16 %v5476, %v5471
    %v5617 = vpack.c.b16 %v5477, %v5472
    %v5618 = vpack.c.b16 %v5483, %v5478
    %v5619 = vpack.c.b16 %v5484, %v5479
    %v5620 = vpack.c.b16 %v5485, %v5480
    %v5621 = vpack.c.b16 %v5486, %v5481
    %v5622 = vpack.c.b16 %v5487, %v5482
    %v5623 = vpack.c.b16 %v5493, %v5488
    %v5624 = vpack.c.b16 %v5494, %v5489
    %v5625 = vpack.c.b16 %v5495, %v5490
    %v5626 = vpack.c.b16 %v5496, %v5491
    %v5627 = vpack.c.b16 %v5497, %v5492
    %v5628 = vpack.c.b16 %v5503, %v5498
    %v5629 = vpack.c.b16 %v5504, %v5499
    %v5630 = vpack.c.b16 %v5505, %v5500
    %v5631 = vpack.c.b16 %v5506, %v5501
    %v5632 = vpack.c.b16 %v5507, %v5502
    %v5633 = vpack.c.b16 %v5513, %v5508
    %v5634 = vpack.c.b16 %v5514, %v5509
    %v5635 = vpack.c.b16 %v5515, %v5510
    %v5636 = vpack.c.b16 %v5516, %v5511
    %v5637 = vpack.c.b16 %v5517, %v5512
    %v5638 = vpack.c.b16 %v5523, %v5518
    %v5639 = vpack.c.b16 %v5524, %v5519
    %v5640 = vpack.c.b16 %v5525, %v5520
    %v5641 = vpack.c.b16 %v5526, %v5521
    %v5642 = vpack.c.b16 %v5527, %v5522
    %v5643 = vpack.c.b16 %v5533, %v5528
    %v5644 = vpack.c.b16 %v5534, %v5529
    %v5645 = vpack.c.b16 %v5535, %v5530
    %v5646 = vpack.c.b16 %v5536, %v5531
    %v5647 = vpack.c.b16 %v5537, %v5532
    %v5648 = vpack.c.b16 %v5543, %v5538
    %v5649 = vpack.c.b16 %v5544, %v5539
    %v5650 = vpack.c.b16 %v5545, %v5540
    %v5651 = vpack.c.b16 %v5546, %v5541
    %v5652 = vpack.c.b16 %v5547, %v5542
    %v5653 = vpack.c.b16 %v5553, %v5548
    %v5654 = vpack.c.b16 %v5554, %v5549
    %v5655 = vpack.c.b16 %v5555, %v5550
    %v5656 = vpack.c.b16 %v5556, %v5551
    %v5657 = vpack.c.b16 %v5557, %v5552
    %v5658 = vpack.c.b16 %v5563, %v5558
    %v5659 = vpack.c.b16 %v5564, %v5559
    %v5660 = vpack.c.b16 %v5565, %v5560
    %v5661 = vpack.c.b16 %v5566, %v5561
    %v5662 = vpack.c.b16 %v5567, %v5562
    %v5663 = vpack.c.b16 %v5573, %v5568
    %v5664 = vpack.c.b16 %v5574, %v5569
    %v5665 = vpack.c.b16 %v5575, %v5570
    %v5666 = vpack.c.b16 %v5576, %v5571
    %v5667 = vpack.c.b16 %v5577, %v5572
    %v5668 = vpack.c.b16 %v5583, %v5578
    %v5669 = vpack.c.b16 %v5584, %v5579
    %v5670 = vpack.c.b16 %v5585, %v5580
    %v5671 = vpack.c.b16 %v5586, %v5581
    %v5672 = vpack.c.b16 %v5587, %v5582
    %v5673 = vpack.c.b16 %v5593, %v5588
    %v5674 = vpack.c.b16 %v5594, %v5589
    %v5675 = vpack.c.b16 %v5595, %v5590
    %v5676 = vpack.c.b16 %v5596, %v5591
    %v5677 = vpack.c.b16 %v5597, %v5592
    %5758 = vmatpush.bf16.msra.mxu0 %v5633
    %5759 = vmatpush.bf16.msra.mxu0 %v5628
    %5760 = vmatpush.bf16.msra.mxu0 %v5623
    %5761 = vmatpush.bf16.msra.mxu0 %v5618
    %5762 = vmatpush.bf16.msra.mxu0 %v5613
    %5763 = vmatpush.bf16.msra.mxu0 %v5608
    %5764 = vmatpush.bf16.msra.mxu0 %v5603
    %5765 = vmatpush.bf16.msra.mxu0 %v5598
    %5766 = vmatmul.bf16.gmra.mxu0 %v5310
    %v5767 = vpop.f32.mrf.mxu0
    %v5768 = vadd.f32 0.0, %v5767
    %v5769 = vpop.f32.mrf.mxu0
    %v5770 = vadd.f32 0.0, %v5769
    %5771 = vmatmul.bf16.gmra.mxu0 %v5312
    %v5772 = vpop.f32.mrf.mxu0
    %v5773 = vadd.f32 0.0, %v5772
    %v5774 = vpop.f32.mrf.mxu0
    %v5775 = vadd.f32 0.0, %v5774
    %5776 = vmatmul.bf16.gmra.mxu0 %v5314
    %v5777 = vpop.f32.mrf.mxu0
    %v5778 = vadd.f32 0.0, %v5777
    %v5779 = vpop.f32.mrf.mxu0
    %v5780 = vadd.f32 0.0, %v5779
    %5781 = vmatmul.bf16.gmra.mxu0 %v5316
    %v5782 = vpop.f32.mrf.mxu0
    %v5783 = vadd.f32 0.0, %v5782
    %v5784 = vpop.f32.mrf.mxu0
    %v5785 = vadd.f32 0.0, %v5784
    %5786 = vmatmul.bf16.gmra.mxu0 %v5318
    %v5787 = vpop.f32.mrf.mxu0
    %v5788 = vadd.f32 0.0, %v5787
    %v5789 = vpop.f32.mrf.mxu0
    %v5790 = vadd.f32 0.0, %v5789
    %5791 = vmatmul.bf16.gmra.mxu0 %v5320
    %v5792 = vpop.f32.mrf.mxu0
    %v5793 = vadd.f32 0.0, %v5792
    %v5794 = vpop.f32.mrf.mxu0
    %v5795 = vadd.f32 0.0, %v5794
    %5796 = vmatmul.bf16.gmra.mxu0 %v5322
    %v5797 = vpop.f32.mrf.mxu0
    %v5798 = vadd.f32 0.0, %v5797
    %v5799 = vpop.f32.mrf.mxu0
    %v5800 = vadd.f32 0.0, %v5799
    %5801 = vmatmul.bf16.gmra.mxu0 %v5324
    %v5802 = vpop.f32.mrf.mxu0
    %v5803 = vadd.f32 0.0, %v5802
    %v5804 = vpop.f32.mrf.mxu0
    %v5805 = vadd.f32 0.0, %v5804
    %5806 = vdwg.mxu0
    %5807 = vmatpush.bf16.msra.mxu0 %v5673
    %5808 = vmatpush.bf16.msra.mxu0 %v5668
    %5809 = vmatpush.bf16.msra.mxu0 %v5663
    %5810 = vmatpush.bf16.msra.mxu0 %v5658
    %5811 = vmatpush.bf16.msra.mxu0 %v5653
    %5812 = vmatpush.bf16.msra.mxu0 %v5648
    %5813 = vmatpush.bf16.msra.mxu0 %v5643
    %5814 = vmatpush.bf16.msra.mxu0 %v5638
    %5815 = vmatmul.bf16.gmra.mxu0 %v5311
    %v5816 = vpop.f32.mrf.mxu0
    %v5817 = vadd.f32 %v5768, %v5816
    %v5818 = vpop.f32.mrf.mxu0
    %v5819 = vadd.f32 %v5770, %v5818
    %5820 = vmatmul.bf16.gmra.mxu0 %v5313
    %v5821 = vpop.f32.mrf.mxu0
    %v5822 = vadd.f32 %v5773, %v5821
    %v5823 = vpop.f32.mrf.mxu0
    %v5824 = vadd.f32 %v5775, %v5823
    %5825 = vmatmul.bf16.gmra.mxu0 %v5315
    %v5826 = vpop.f32.mrf.mxu0
    %v5827 = vadd.f32 %v5778, %v5826
    %v5828 = vpop.f32.mrf.mxu0
    %v5829 = vadd.f32 %v5780, %v5828
    %5830 = vmatmul.bf16.gmra.mxu0 %v5317
    %v5831 = vpop.f32.mrf.mxu0
    %v5832 = vadd.f32 %v5783, %v5831
    %v5833 = vpop.f32.mrf.mxu0
    %v5834 = vadd.f32 %v5785, %v5833
    %5835 = vmatmul.bf16.gmra.mxu0 %v5319
    %v5836 = vpop.f32.mrf.mxu0
    %v5837 = vadd.f32 %v5788, %v5836
    %v5838 = vpop.f32.mrf.mxu0
    %v5839 = vadd.f32 %v5790, %v5838
    %5840 = vmatmul.bf16.gmra.mxu0 %v5321
    %v5841 = vpop.f32.mrf.mxu0
    %v5842 = vadd.f32 %v5793, %v5841
    %v5843 = vpop.f32.mrf.mxu0
    %v5844 = vadd.f32 %v5795, %v5843
    %5845 = vmatmul.bf16.gmra.mxu0 %v5323
    %v5846 = vpop.f32.mrf.mxu0
    %v5847 = vadd.f32 %v5798, %v5846
    %v5848 = vpop.f32.mrf.mxu0
    %v5849 = vadd.f32 %v5800, %v5848
    %5850 = vmatmul.bf16.gmra.mxu0 %v5325
    %v5851 = vpop.f32.mrf.mxu0
    %v5852 = vadd.f32 %v5803, %v5851
    %v5853 = vpop.f32.mrf.mxu0
    %v5854 = vadd.f32 %v5805, %v5853
    %5855 = vdwg.mxu0
    %5856 = vmatpush.bf16.msra.mxu0 %v5634
    %5857 = vmatpush.bf16.msra.mxu0 %v5629
    %5858 = vmatpush.bf16.msra.mxu0 %v5624
    %5859 = vmatpush.bf16.msra.mxu0 %v5619
    %5860 = vmatpush.bf16.msra.mxu0 %v5614
    %5861 = vmatpush.bf16.msra.mxu0 %v5609
    %5862 = vmatpush.bf16.msra.mxu0 %v5604
    %5863 = vmatpush.bf16.msra.mxu0 %v5599
    %5864 = vmatmul.bf16.gmra.mxu0 %v5310
    %v5865 = vpop.f32.mrf.mxu0
    %v5866 = vadd.f32 0.0, %v5865
    %v5867 = vpop.f32.mrf.mxu0
    %v5868 = vadd.f32 0.0, %v5867
    %5869 = vmatmul.bf16.gmra.mxu0 %v5312
    %v5870 = vpop.f32.mrf.mxu0
    %v5871 = vadd.f32 0.0, %v5870
    %v5872 = vpop.f32.mrf.mxu0
    %v5873 = vadd.f32 0.0, %v5872
    %5874 = vmatmul.bf16.gmra.mxu0 %v5314
    %v5875 = vpop.f32.mrf.mxu0
    %v5876 = vadd.f32 0.0, %v5875
    %v5877 = vpop.f32.mrf.mxu0
    %v5878 = vadd.f32 0.0, %v5877
    %5879 = vmatmul.bf16.gmra.mxu0 %v5316
    %v5880 = vpop.f32.mrf.mxu0
    %v5881 = vadd.f32 0.0, %v5880
    %v5882 = vpop.f32.mrf.mxu0
    %v5883 = vadd.f32 0.0, %v5882
    %5884 = vmatmul.bf16.gmra.mxu0 %v5318
    %v5885 = vpop.f32.mrf.mxu0
    %v5886 = vadd.f32 0.0, %v5885
    %v5887 = vpop.f32.mrf.mxu0
    %v5888 = vadd.f32 0.0, %v5887
    %5889 = vmatmul.bf16.gmra.mxu0 %v5320
    %v5890 = vpop.f32.mrf.mxu0
    %v5891 = vadd.f32 0.0, %v5890
    %v5892 = vpop.f32.mrf.mxu0
    %v5893 = vadd.f32 0.0, %v5892
    %5894 = vmatmul.bf16.gmra.mxu0 %v5322
    %v5895 = vpop.f32.mrf.mxu0
    %v5896 = vadd.f32 0.0, %v5895
    %v5897 = vpop.f32.mrf.mxu0
    %v5898 = vadd.f32 0.0, %v5897
    %5899 = vmatmul.bf16.gmra.mxu0 %v5324
    %v5900 = vpop.f32.mrf.mxu0
    %v5901 = vadd.f32 0.0, %v5900
    %v5902 = vpop.f32.mrf.mxu0
    %v5903 = vadd.f32 0.0, %v5902
    %5904 = vdwg.mxu0
    %5905 = vmatpush.bf16.msra.mxu0 %v5674
    %5906 = vmatpush.bf16.msra.mxu0 %v5669
    %5907 = vmatpush.bf16.msra.mxu0 %v5664
    %5908 = vmatpush.bf16.msra.mxu0 %v5659
    %5909 = vmatpush.bf16.msra.mxu0 %v5654
    %5910 = vmatpush.bf16.msra.mxu0 %v5649
    %5911 = vmatpush.bf16.msra.mxu0 %v5644
    %5912 = vmatpush.bf16.msra.mxu0 %v5639
    %5913 = vmatmul.bf16.gmra.mxu0 %v5311
    %v5914 = vpop.f32.mrf.mxu0
    %v5915 = vadd.f32 %v5866, %v5914
    %v5916 = vpop.f32.mrf.mxu0
    %v5917 = vadd.f32 %v5868, %v5916
    %5918 = vmatmul.bf16.gmra.mxu0 %v5313
    %v5919 = vpop.f32.mrf.mxu0
    %v5920 = vadd.f32 %v5871, %v5919
    %v5921 = vpop.f32.mrf.mxu0
    %v5922 = vadd.f32 %v5873, %v5921
    %5923 = vmatmul.bf16.gmra.mxu0 %v5315
    %v5924 = vpop.f32.mrf.mxu0
    %v5925 = vadd.f32 %v5876, %v5924
    %v5926 = vpop.f32.mrf.mxu0
    %v5927 = vadd.f32 %v5878, %v5926
    %5928 = vmatmul.bf16.gmra.mxu0 %v5317
    %v5929 = vpop.f32.mrf.mxu0
    %v5930 = vadd.f32 %v5881, %v5929
    %v5931 = vpop.f32.mrf.mxu0
    %v5932 = vadd.f32 %v5883, %v5931
    %5933 = vmatmul.bf16.gmra.mxu0 %v5319
    %v5934 = vpop.f32.mrf.mxu0
    %v5935 = vadd.f32 %v5886, %v5934
    %v5936 = vpop.f32.mrf.mxu0
    %v5937 = vadd.f32 %v5888, %v5936
    %5938 = vmatmul.bf16.gmra.mxu0 %v5321
    %v5939 = vpop.f32.mrf.mxu0
    %v5940 = vadd.f32 %v5891, %v5939
    %v5941 = vpop.f32.mrf.mxu0
    %v5942 = vadd.f32 %v5893, %v5941
    %5943 = vmatmul.bf16.gmra.mxu0 %v5323
    %v5944 = vpop.f32.mrf.mxu0
    %v5945 = vadd.f32 %v5896, %v5944
    %v5946 = vpop.f32.mrf.mxu0
    %v5947 = vadd.f32 %v5898, %v5946
    %5948 = vmatmul.bf16.gmra.mxu0 %v5325
    %v5949 = vpop.f32.mrf.mxu0
    %v5950 = vadd.f32 %v5901, %v5949
    %v5951 = vpop.f32.mrf.mxu0
    %v5952 = vadd.f32 %v5903, %v5951
    %5953 = vdwg.mxu0
    %5954 = vmatpush.bf16.msra.mxu0 %v5635
    %5955 = vmatpush.bf16.msra.mxu0 %v5630
    %5956 = vmatpush.bf16.msra.mxu0 %v5625
    %5957 = vmatpush.bf16.msra.mxu0 %v5620
    %5958 = vmatpush.bf16.msra.mxu0 %v5615
    %5959 = vmatpush.bf16.msra.mxu0 %v5610
    %5960 = vmatpush.bf16.msra.mxu0 %v5605
    %5961 = vmatpush.bf16.msra.mxu0 %v5600
    %5962 = vmatmul.bf16.gmra.mxu0 %v5310
    %v5963 = vpop.f32.mrf.mxu0
    %v5964 = vadd.f32 0.0, %v5963
    %v5965 = vpop.f32.mrf.mxu0
    %v5966 = vadd.f32 0.0, %v5965
    %5967 = vmatmul.bf16.gmra.mxu0 %v5312
    %v5968 = vpop.f32.mrf.mxu0
    %v5969 = vadd.f32 0.0, %v5968
    %v5970 = vpop.f32.mrf.mxu0
    %v5971 = vadd.f32 0.0, %v5970
    %5972 = vmatmul.bf16.gmra.mxu0 %v5314
    %v5973 = vpop.f32.mrf.mxu0
    %v5974 = vadd.f32 0.0, %v5973
    %v5975 = vpop.f32.mrf.mxu0
    %v5976 = vadd.f32 0.0, %v5975
    %5977 = vmatmul.bf16.gmra.mxu0 %v5316
    %v5978 = vpop.f32.mrf.mxu0
    %v5979 = vadd.f32 0.0, %v5978
    %v5980 = vpop.f32.mrf.mxu0
    %v5981 = vadd.f32 0.0, %v5980
    %5982 = vmatmul.bf16.gmra.mxu0 %v5318
    %v5983 = vpop.f32.mrf.mxu0
    %v5984 = vadd.f32 0.0, %v5983
    %v5985 = vpop.f32.mrf.mxu0
    %v5986 = vadd.f32 0.0, %v5985
    %5987 = vmatmul.bf16.gmra.mxu0 %v5320
    %v5988 = vpop.f32.mrf.mxu0
    %v5989 = vadd.f32 0.0, %v5988
    %v5990 = vpop.f32.mrf.mxu0
    %v5991 = vadd.f32 0.0, %v5990
    %5992 = vmatmul.bf16.gmra.mxu0 %v5322
    %v5993 = vpop.f32.mrf.mxu0
    %v5994 = vadd.f32 0.0, %v5993
    %v5995 = vpop.f32.mrf.mxu0
    %v5996 = vadd.f32 0.0, %v5995
    %5997 = vmatmul.bf16.gmra.mxu0 %v5324
    %v5998 = vpop.f32.mrf.mxu0
    %v5999 = vadd.f32 0.0, %v5998
    %v6000 = vpop.f32.mrf.mxu0
    %v6001 = vadd.f32 0.0, %v6000
    %6002 = vdwg.mxu0
    %6003 = vmatpush.bf16.msra.mxu0 %v5675
    %6004 = vmatpush.bf16.msra.mxu0 %v5670
    %6005 = vmatpush.bf16.msra.mxu0 %v5665
    %6006 = vmatpush.bf16.msra.mxu0 %v5660
    %6007 = vmatpush.bf16.msra.mxu0 %v5655
    %6008 = vmatpush.bf16.msra.mxu0 %v5650
    %6009 = vmatpush.bf16.msra.mxu0 %v5645
    %6010 = vmatpush.bf16.msra.mxu0 %v5640
    %6011 = vmatmul.bf16.gmra.mxu0 %v5311
    %v6012 = vpop.f32.mrf.mxu0
    %v6013 = vadd.f32 %v5964, %v6012
    %v6014 = vpop.f32.mrf.mxu0
    %v6015 = vadd.f32 %v5966, %v6014
    %6016 = vmatmul.bf16.gmra.mxu0 %v5313
    %v6017 = vpop.f32.mrf.mxu0
    %v6018 = vadd.f32 %v5969, %v6017
    %v6019 = vpop.f32.mrf.mxu0
    %v6020 = vadd.f32 %v5971, %v6019
    %6021 = vmatmul.bf16.gmra.mxu0 %v5315
    %v6022 = vpop.f32.mrf.mxu0
    %v6023 = vadd.f32 %v5974, %v6022
    %v6024 = vpop.f32.mrf.mxu0
    %v6025 = vadd.f32 %v5976, %v6024
    %6026 = vmatmul.bf16.gmra.mxu0 %v5317
    %v6027 = vpop.f32.mrf.mxu0
    %v6028 = vadd.f32 %v5979, %v6027
    %v6029 = vpop.f32.mrf.mxu0
    %v6030 = vadd.f32 %v5981, %v6029
    %6031 = vmatmul.bf16.gmra.mxu0 %v5319
    %v6032 = vpop.f32.mrf.mxu0
    %v6033 = vadd.f32 %v5984, %v6032
    %v6034 = vpop.f32.mrf.mxu0
    %v6035 = vadd.f32 %v5986, %v6034
    %6036 = vmatmul.bf16.gmra.mxu0 %v5321
    %v6037 = vpop.f32.mrf.mxu0
    %v6038 = vadd.f32 %v5989, %v6037
    %v6039 = vpop.f32.mrf.mxu0
    %v6040 = vadd.f32 %v5991, %v6039
    %6041 = vmatmul.bf16.gmra.mxu0 %v5323
    %v6042 = vpop.f32.mrf.mxu0
    %v6043 = vadd.f32 %v5994, %v6042
    %v6044 = vpop.f32.mrf.mxu0
    %v6045 = vadd.f32 %v5996, %v6044
    %6046 = vmatmul.bf16.gmra.mxu0 %v5325
    %v6047 = vpop.f32.mrf.mxu0
    %v6048 = vadd.f32 %v5999, %v6047
    %v6049 = vpop.f32.mrf.mxu0
    %v6050 = vadd.f32 %v6001, %v6049
    %6051 = vdwg.mxu0
    %6052 = vmatpush.bf16.msra.mxu0 %v5636
    %6053 = vmatpush.bf16.msra.mxu0 %v5631
    %6054 = vmatpush.bf16.msra.mxu0 %v5626
    %6055 = vmatpush.bf16.msra.mxu0 %v5621
    %6056 = vmatpush.bf16.msra.mxu0 %v5616
    %6057 = vmatpush.bf16.msra.mxu0 %v5611
    %6058 = vmatpush.bf16.msra.mxu0 %v5606
    %6059 = vmatpush.bf16.msra.mxu0 %v5601
    %6060 = vmatmul.bf16.gmra.mxu0 %v5310
    %v6061 = vpop.f32.mrf.mxu0
    %v6062 = vadd.f32 0.0, %v6061
    %v6063 = vpop.f32.mrf.mxu0
    %v6064 = vadd.f32 0.0, %v6063
    %6065 = vmatmul.bf16.gmra.mxu0 %v5312
    %v6066 = vpop.f32.mrf.mxu0
    %v6067 = vadd.f32 0.0, %v6066
    %v6068 = vpop.f32.mrf.mxu0
    %v6069 = vadd.f32 0.0, %v6068
    %6070 = vmatmul.bf16.gmra.mxu0 %v5314
    %v6071 = vpop.f32.mrf.mxu0
    %v6072 = vadd.f32 0.0, %v6071
    %v6073 = vpop.f32.mrf.mxu0
    %v6074 = vadd.f32 0.0, %v6073
    %6075 = vmatmul.bf16.gmra.mxu0 %v5316
    %v6076 = vpop.f32.mrf.mxu0
    %v6077 = vadd.f32 0.0, %v6076
    %v6078 = vpop.f32.mrf.mxu0
    %v6079 = vadd.f32 0.0, %v6078
    %6080 = vmatmul.bf16.gmra.mxu0 %v5318
    %v6081 = vpop.f32.mrf.mxu0
    %v6082 = vadd.f32 0.0, %v6081
    %v6083 = vpop.f32.mrf.mxu0
    %v6084 = vadd.f32 0.0, %v6083
    %6085 = vmatmul.bf16.gmra.mxu0 %v5320
    %v6086 = vpop.f32.mrf.mxu0
    %v6087 = vadd.f32 0.0, %v6086
    %v6088 = vpop.f32.mrf.mxu0
    %v6089 = vadd.f32 0.0, %v6088
    %6090 = vmatmul.bf16.gmra.mxu0 %v5322
    %v6091 = vpop.f32.mrf.mxu0
    %v6092 = vadd.f32 0.0, %v6091
    %v6093 = vpop.f32.mrf.mxu0
    %v6094 = vadd.f32 0.0, %v6093
    %6095 = vmatmul.bf16.gmra.mxu0 %v5324
    %v6096 = vpop.f32.mrf.mxu0
    %v6097 = vadd.f32 0.0, %v6096
    %v6098 = vpop.f32.mrf.mxu0
    %v6099 = vadd.f32 0.0, %v6098
    %6100 = vdwg.mxu0
    %6101 = vmatpush.bf16.msra.mxu0 %v5676
    %6102 = vmatpush.bf16.msra.mxu0 %v5671
    %6103 = vmatpush.bf16.msra.mxu0 %v5666
    %6104 = vmatpush.bf16.msra.mxu0 %v5661
    %6105 = vmatpush.bf16.msra.mxu0 %v5656
    %6106 = vmatpush.bf16.msra.mxu0 %v5651
    %6107 = vmatpush.bf16.msra.mxu0 %v5646
    %6108 = vmatpush.bf16.msra.mxu0 %v5641
    %6109 = vmatmul.bf16.gmra.mxu0 %v5311
    %v6110 = vpop.f32.mrf.mxu0
    %v6111 = vadd.f32 %v6062, %v6110
    %v6112 = vpop.f32.mrf.mxu0
    %v6113 = vadd.f32 %v6064, %v6112
    %6114 = vmatmul.bf16.gmra.mxu0 %v5313
    %v6115 = vpop.f32.mrf.mxu0
    %v6116 = vadd.f32 %v6067, %v6115
    %v6117 = vpop.f32.mrf.mxu0
    %v6118 = vadd.f32 %v6069, %v6117
    %6119 = vmatmul.bf16.gmra.mxu0 %v5315
    %v6120 = vpop.f32.mrf.mxu0
    %v6121 = vadd.f32 %v6072, %v6120
    %v6122 = vpop.f32.mrf.mxu0
    %v6123 = vadd.f32 %v6074, %v6122
    %6124 = vmatmul.bf16.gmra.mxu0 %v5317
    %v6125 = vpop.f32.mrf.mxu0
    %v6126 = vadd.f32 %v6077, %v6125
    %v6127 = vpop.f32.mrf.mxu0
    %v6128 = vadd.f32 %v6079, %v6127
    %6129 = vmatmul.bf16.gmra.mxu0 %v5319
    %v6130 = vpop.f32.mrf.mxu0
    %v6131 = vadd.f32 %v6082, %v6130
    %v6132 = vpop.f32.mrf.mxu0
    %v6133 = vadd.f32 %v6084, %v6132
    %6134 = vmatmul.bf16.gmra.mxu0 %v5321
    %v6135 = vpop.f32.mrf.mxu0
    %v6136 = vadd.f32 %v6087, %v6135
    %v6137 = vpop.f32.mrf.mxu0
    %v6138 = vadd.f32 %v6089, %v6137
    %6139 = vmatmul.bf16.gmra.mxu0 %v5323
    %v6140 = vpop.f32.mrf.mxu0
    %v6141 = vadd.f32 %v6092, %v6140
    %v6142 = vpop.f32.mrf.mxu0
    %v6143 = vadd.f32 %v6094, %v6142
    %6144 = vmatmul.bf16.gmra.mxu0 %v5325
    %v6145 = vpop.f32.mrf.mxu0
    %v6146 = vadd.f32 %v6097, %v6145
    %v6147 = vpop.f32.mrf.mxu0
    %v6148 = vadd.f32 %v6099, %v6147
    %6149 = vdwg.mxu0
    %6150 = vmatpush.bf16.msra.mxu0 %v5637
    %6151 = vmatpush.bf16.msra.mxu0 %v5632
    %6152 = vmatpush.bf16.msra.mxu0 %v5627
    %6153 = vmatpush.bf16.msra.mxu0 %v5622
    %6154 = vmatpush.bf16.msra.mxu0 %v5617
    %6155 = vmatpush.bf16.msra.mxu0 %v5612
    %6156 = vmatpush.bf16.msra.mxu0 %v5607
    %6157 = vmatpush.bf16.msra.mxu0 %v5602
    %6158 = vmatmul.bf16.gmra.mxu0 %v5310
    %v6159 = vpop.f32.mrf.mxu0
    %v6160 = vadd.f32 0.0, %v6159
    %v6161 = vpop.f32.mrf.mxu0
    %v6162 = vadd.f32 0.0, %v6161
    %6163 = vmatmul.bf16.gmra.mxu0 %v5312
    %v6164 = vpop.f32.mrf.mxu0
    %v6165 = vadd.f32 0.0, %v6164
    %v6166 = vpop.f32.mrf.mxu0
    %v6167 = vadd.f32 0.0, %v6166
    %6168 = vmatmul.bf16.gmra.mxu0 %v5314
    %v6169 = vpop.f32.mrf.mxu0
    %v6170 = vadd.f32 0.0, %v6169
    %v6171 = vpop.f32.mrf.mxu0
    %v6172 = vadd.f32 0.0, %v6171
    %6173 = vmatmul.bf16.gmra.mxu0 %v5316
    %v6174 = vpop.f32.mrf.mxu0
    %v6175 = vadd.f32 0.0, %v6174
    %v6176 = vpop.f32.mrf.mxu0
    %v6177 = vadd.f32 0.0, %v6176
    %6178 = vmatmul.bf16.gmra.mxu0 %v5318
    %v6179 = vpop.f32.mrf.mxu0
    %v6180 = vadd.f32 0.0, %v6179
    %v6181 = vpop.f32.mrf.mxu0
    %v6182 = vadd.f32 0.0, %v6181
    %6183 = vmatmul.bf16.gmra.mxu0 %v5320
    %v6184 = vpop.f32.mrf.mxu0
    %v6185 = vadd.f32 0.0, %v6184
    %v6186 = vpop.f32.mrf.mxu0
    %v6187 = vadd.f32 0.0, %v6186
    %6188 = vmatmul.bf16.gmra.mxu0 %v5322
    %v6189 = vpop.f32.mrf.mxu0
    %v6190 = vadd.f32 0.0, %v6189
    %v6191 = vpop.f32.mrf.mxu0
    %v6192 = vadd.f32 0.0, %v6191
    %6193 = vmatmul.bf16.gmra.mxu0 %v5324
    %v6194 = vpop.f32.mrf.mxu0
    %v6195 = vadd.f32 0.0, %v6194
    %v6196 = vpop.f32.mrf.mxu0
    %v6197 = vadd.f32 0.0, %v6196
    %6198 = vdwg.mxu0
    %6199 = vmatpush.bf16.msra.mxu0 %v5677
    %6200 = vmatpush.bf16.msra.mxu0 %v5672
    %6201 = vmatpush.bf16.msra.mxu0 %v5667
    %6202 = vmatpush.bf16.msra.mxu0 %v5662
    %6203 = vmatpush.bf16.msra.mxu0 %v5657
    %6204 = vmatpush.bf16.msra.mxu0 %v5652
    %6205 = vmatpush.bf16.msra.mxu0 %v5647
    %6206 = vmatpush.bf16.msra.mxu0 %v5642
    %6207 = vmatmul.bf16.gmra.mxu0 %v5311
    %v6208 = vpop.f32.mrf.mxu0
    %v6209 = vadd.f32 %v6160, %v6208
    %v6210 = vpop.f32.mrf.mxu0
    %v6211 = vadd.f32 %v6162, %v6210
    %6212 = vmatmul.bf16.gmra.mxu0 %v5313
    %v6213 = vpop.f32.mrf.mxu0
    %v6214 = vadd.f32 %v6165, %v6213
    %v6215 = vpop.f32.mrf.mxu0
    %v6216 = vadd.f32 %v6167, %v6215
    %6217 = vmatmul.bf16.gmra.mxu0 %v5315
    %v6218 = vpop.f32.mrf.mxu0
    %v6219 = vadd.f32 %v6170, %v6218
    %v6220 = vpop.f32.mrf.mxu0
    %v6221 = vadd.f32 %v6172, %v6220
    %6222 = vmatmul.bf16.gmra.mxu0 %v5317
    %v6223 = vpop.f32.mrf.mxu0
    %v6224 = vadd.f32 %v6175, %v6223
    %v6225 = vpop.f32.mrf.mxu0
    %v6226 = vadd.f32 %v6177, %v6225
    %6227 = vmatmul.bf16.gmra.mxu0 %v5319
    %v6228 = vpop.f32.mrf.mxu0
    %v6229 = vadd.f32 %v6180, %v6228
    %v6230 = vpop.f32.mrf.mxu0
    %v6231 = vadd.f32 %v6182, %v6230
    %6232 = vmatmul.bf16.gmra.mxu0 %v5321
    %v6233 = vpop.f32.mrf.mxu0
    %v6234 = vadd.f32 %v6185, %v6233
    %v6235 = vpop.f32.mrf.mxu0
    %v6236 = vadd.f32 %v6187, %v6235
    %6237 = vmatmul.bf16.gmra.mxu0 %v5323
    %v6238 = vpop.f32.mrf.mxu0
    %v6239 = vadd.f32 %v6190, %v6238
    %v6240 = vpop.f32.mrf.mxu0
    %v6241 = vadd.f32 %v6192, %v6240
    %6242 = vmatmul.bf16.gmra.mxu0 %v5325
    %v6243 = vpop.f32.mrf.mxu0
    %v6244 = vadd.f32 %v6195, %v6243
    %v6245 = vpop.f32.mrf.mxu0
    %v6246 = vadd.f32 %v6197, %v6245
    %6247 = vdwg.mxu0
    %v6248 = vadd.f32 %v4846, %v5817
    %v6249 = vadd.f32 %v4847, %v5915
    %v6250 = vadd.f32 %v4848, %v6013
    %v6251 = vadd.f32 %v4849, %v6111
    %v6252 = vadd.f32 %v4850, %v6209
    %v6253 = vadd.f32 %v4851, %v5819
    %v6254 = vadd.f32 %v4852, %v5917
    %v6255 = vadd.f32 %v4853, %v6015
    %v6256 = vadd.f32 %v4854, %v6113
    %v6257 = vadd.f32 %v4855, %v6211
    %v6258 = vadd.f32 %v4856, %v5822
    %v6259 = vadd.f32 %v4857, %v5920
    %v6260 = vadd.f32 %v4858, %v6018
    %v6261 = vadd.f32 %v4859, %v6116
    %v6262 = vadd.f32 %v4860, %v6214
    %v6263 = vadd.f32 %v4861, %v5824
    %v6264 = vadd.f32 %v4862, %v5922
    %v6265 = vadd.f32 %v4863, %v6020
    %v6266 = vadd.f32 %v4864, %v6118
    %v6267 = vadd.f32 %v4865, %v6216
    %v6268 = vadd.f32 %v4866, %v5827
    %v6269 = vadd.f32 %v4867, %v5925
    %v6270 = vadd.f32 %v4868, %v6023
    %v6271 = vadd.f32 %v4869, %v6121
    %v6272 = vadd.f32 %v4870, %v6219
    %v6273 = vadd.f32 %v4871, %v5829
    %v6274 = vadd.f32 %v4872, %v5927
    %v6275 = vadd.f32 %v4873, %v6025
    %v6276 = vadd.f32 %v4874, %v6123
    %v6277 = vadd.f32 %v4875, %v6221
    %v6278 = vadd.f32 %v4876, %v5832
    %v6279 = vadd.f32 %v4877, %v5930
    %v6280 = vadd.f32 %v4878, %v6028
    %v6281 = vadd.f32 %v4879, %v6126
    %v6282 = vadd.f32 %v4880, %v6224
    %v6283 = vadd.f32 %v4881, %v5834
    %v6284 = vadd.f32 %v4882, %v5932
    %v6285 = vadd.f32 %v4883, %v6030
    %v6286 = vadd.f32 %v4884, %v6128
    %v6287 = vadd.f32 %v4885, %v6226
    %v6288 = vadd.f32 %v4886, %v5837
    %v6289 = vadd.f32 %v4887, %v5935
    %v6290 = vadd.f32 %v4888, %v6033
    %v6291 = vadd.f32 %v4889, %v6131
    %v6292 = vadd.f32 %v4890, %v6229
    %v6293 = vadd.f32 %v4891, %v5839
    %v6294 = vadd.f32 %v4892, %v5937
    %v6295 = vadd.f32 %v4893, %v6035
    %v6296 = vadd.f32 %v4894, %v6133
    %v6297 = vadd.f32 %v4895, %v6231
    %v6298 = vadd.f32 %v4896, %v5842
    %v6299 = vadd.f32 %v4897, %v5940
    %v6300 = vadd.f32 %v4898, %v6038
    %v6301 = vadd.f32 %v4899, %v6136
    %v6302 = vadd.f32 %v4900, %v6234
    %v6303 = vadd.f32 %v4901, %v5844
    %v6304 = vadd.f32 %v4902, %v5942
    %v6305 = vadd.f32 %v4903, %v6040
    %v6306 = vadd.f32 %v4904, %v6138
    %v6307 = vadd.f32 %v4905, %v6236
    %v6308 = vadd.f32 %v4906, %v5847
    %v6309 = vadd.f32 %v4907, %v5945
    %v6310 = vadd.f32 %v4908, %v6043
    %v6311 = vadd.f32 %v4909, %v6141
    %v6312 = vadd.f32 %v4910, %v6239
    %v6313 = vadd.f32 %v4911, %v5849
    %v6314 = vadd.f32 %v4912, %v5947
    %v6315 = vadd.f32 %v4913, %v6045
    %v6316 = vadd.f32 %v4914, %v6143
    %v6317 = vadd.f32 %v4915, %v6241
    %v6318 = vadd.f32 %v4916, %v5852
    %v6319 = vadd.f32 %v4917, %v5950
    %v6320 = vadd.f32 %v4918, %v6048
    %v6321 = vadd.f32 %v4919, %v6146
    %v6322 = vadd.f32 %v4920, %v6244
    %v6323 = vadd.f32 %v4921, %v5854
    %v6324 = vadd.f32 %v4922, %v5952
    %v6325 = vadd.f32 %v4923, %v6050
    %v6326 = vadd.f32 %v4924, %v6148
    %v6327 = vadd.f32 %v4925, %v6246
    %v6328 = vld [vmem:[%s3747] sm:$0xee]
    %v6329 = vld [vmem:[%s3747 + $0x10] sm:$0xee]
    %v6330 = vld [vmem:[%s3747 + $0x20] sm:$0xee]
    %v6331 = vld [vmem:[%s3747 + $0x30] sm:$0xee]
    %v6332 = vld [vmem:[%s3747 + $0x40] sm:$0xee]
    %v6333 = vld [vmem:[%s3747 + $0x50] sm:$0xee]
    %v6334 = vld [vmem:[%s3747 + $0x60] sm:$0xee]
    %v6335 = vld [vmem:[%s3747 + $0x70] sm:$0xee]
    %v6336 = vld [vmem:[%s3747 + $0xa0] sm:$0xee]
    %v6337 = vld [vmem:[%s3747 + $0xb0] sm:$0xee]
    %v6338 = vld [vmem:[%s3747 + $0xc0] sm:$0xee]
    %v6339 = vld [vmem:[%s3747 + $0xd0] sm:$0xee]
    %v6340 = vld [vmem:[%s3747 + $0xe0] sm:$0xee]
    %v6341 = vld [vmem:[%s3747 + $0xf0] sm:$0xee]
    %v6342 = vld [vmem:[%s3747 + $0x100] sm:$0xee]
    %v6343 = vld [vmem:[%s3747 + $0x110] sm:$0xee]
    %v6376 = vrot.slane %v6328, 5
    %v6377 = vrot.slane %v6376, 4
    %v6378 = vrot.slane %v4927, 5
    %v6379 = vsel %vm2536, %v6377, %v6378
    %v6380 = vrot.slane %v6329, 5
    %v6381 = vrot.slane %v6380, 4
    %v6382 = vrot.slane %v4929, 5
    %v6383 = vsel %vm2536, %v6381, %v6382
    %v6384 = vrot.slane %v6330, 5
    %v6385 = vrot.slane %v6384, 4
    %v6386 = vrot.slane %v4931, 5
    %v6387 = vsel %vm2536, %v6385, %v6386
    %v6388 = vrot.slane %v6331, 5
    %v6389 = vrot.slane %v6388, 4
    %v6390 = vrot.slane %v4933, 5
    %v6391 = vsel %vm2536, %v6389, %v6390
    %v6392 = vrot.slane %v6332, 5
    %v6393 = vrot.slane %v6392, 4
    %v6394 = vrot.slane %v4935, 5
    %v6395 = vsel %vm2536, %v6393, %v6394
    %v6396 = vrot.slane %v6333, 5
    %v6397 = vrot.slane %v6396, 4
    %v6398 = vrot.slane %v4937, 5
    %v6399 = vsel %vm2536, %v6397, %v6398
    %v6400 = vrot.slane %v6334, 5
    %v6401 = vrot.slane %v6400, 4
    %v6402 = vrot.slane %v4939, 5
    %v6403 = vsel %vm2536, %v6401, %v6402
    %v6404 = vrot.slane %v6335, 5
    %v6405 = vrot.slane %v6404, 4
    %v6406 = vrot.slane %v4941, 5
    %v6407 = vsel %vm2536, %v6405, %v6406
    %v6408 = vrot.slane %v6336, 5
    %v6409 = vrot.slane %v6408, 4
    %v6410 = vrot.slane %v4943, 5
    %v6411 = vsel %vm2536, %v6409, %v6410
    %v6412 = vrot.slane %v6337, 5
    %v6413 = vrot.slane %v6412, 4
    %v6414 = vrot.slane %v4945, 5
    %v6415 = vsel %vm2536, %v6413, %v6414
    %v6416 = vrot.slane %v6338, 5
    %v6417 = vrot.slane %v6416, 4
    %v6418 = vrot.slane %v4947, 5
    %v6419 = vsel %vm2536, %v6417, %v6418
    %v6420 = vrot.slane %v6339, 5
    %v6421 = vrot.slane %v6420, 4
    %v6422 = vrot.slane %v4949, 5
    %v6423 = vsel %vm2536, %v6421, %v6422
    %v6424 = vrot.slane %v6340, 5
    %v6425 = vrot.slane %v6424, 4
    %v6426 = vrot.slane %v4951, 5
    %v6427 = vsel %vm2536, %v6425, %v6426
    %v6428 = vrot.slane %v6341, 5
    %v6429 = vrot.slane %v6428, 4
    %v6430 = vrot.slane %v4953, 5
    %v6431 = vsel %vm2536, %v6429, %v6430
    %v6432 = vrot.slane %v6342, 5
    %v6433 = vrot.slane %v6432, 4
    %v6434 = vrot.slane %v4955, 5
    %v6435 = vsel %vm2536, %v6433, %v6434
    %v6436 = vrot.slane %v6343, 5
    %v6437 = vrot.slane %v6436, 4
    %v6438 = vrot.slane %v4957, 5
    %v6439 = vsel %vm2536, %v6437, %v6438
    %v6440 = vld [vmem:[#allocation2 + $0xc80] sm:$0xff]
    %v6441 = vld [vmem:[#allocation2 + $0xc88] sm:$0xff]
    %v6442 = vld [vmem:[#allocation2 + $0xc90] sm:$0xf]
    %v6443 = vld [vmem:[#allocation2 + $0xc94] sm:$0xff]
    %v6444 = vld [vmem:[#allocation2 + $0xc9c] sm:$0xff]
    %v6445 = vld [vmem:[#allocation2 + $0xca4] sm:$0xf]
    %v6446 = vld [vmem:[#allocation2 + $0xca8] sm:$0xff]
    %v6447 = vld [vmem:[#allocation2 + $0xcb0] sm:$0xff]
    %v6448 = vld [vmem:[#allocation2 + $0xcb8] sm:$0xf]
    %v6449 = vld [vmem:[#allocation2 + $0xcbc] sm:$0xff]
    %v6450 = vld [vmem:[#allocation2 + $0xcc4] sm:$0xff]
    %v6451 = vld [vmem:[#allocation2 + $0xccc] sm:$0xf]
    %v6452 = vld [vmem:[#allocation2 + $0xcd0] sm:$0xff]
    %v6453 = vld [vmem:[#allocation2 + $0xcd8] sm:$0xff]
    %v6454 = vld [vmem:[#allocation2 + $0xce0] sm:$0xf]
    %v6455 = vld [vmem:[#allocation2 + $0xce4] sm:$0xff]
    %v6456 = vld [vmem:[#allocation2 + $0xcec] sm:$0xff]
    %v6457 = vld [vmem:[#allocation2 + $0xcf4] sm:$0xf]
    %v6458 = vld [vmem:[#allocation2 + $0xcf8] sm:$0xff]
    %v6459 = vld [vmem:[#allocation2 + $0xd00] sm:$0xff]
    %v6460 = vld [vmem:[#allocation2 + $0xd08] sm:$0xf]
    %v6461 = vld [vmem:[#allocation2 + $0xd0c] sm:$0xff]
    %v6462 = vld [vmem:[#allocation2 + $0xd14] sm:$0xff]
    %v6463 = vld [vmem:[#allocation2 + $0xd1c] sm:$0xf]
    %v6464 = vld [vmem:[#allocation2 + $0xd20] sm:$0xff]
    %v6465 = vld [vmem:[#allocation2 + $0xd28] sm:$0xff]
    %v6466 = vld [vmem:[#allocation2 + $0xd30] sm:$0xf]
    %v6467 = vld [vmem:[#allocation2 + $0xd34] sm:$0xff]
    %v6468 = vld [vmem:[#allocation2 + $0xd3c] sm:$0xff]
    %v6469 = vld [vmem:[#allocation2 + $0xd44] sm:$0xf]
    %v6470 = vld [vmem:[#allocation2 + $0xd48] sm:$0xff]
    %v6471 = vld [vmem:[#allocation2 + $0xd50] sm:$0xff]
    %v6472 = vld [vmem:[#allocation2 + $0xd58] sm:$0xf]
    %v6473 = vld [vmem:[#allocation2 + $0xd5c] sm:$0xff]
    %v6474 = vld [vmem:[#allocation2 + $0xd64] sm:$0xff]
    %v6475 = vld [vmem:[#allocation2 + $0xd6c] sm:$0xf]
    %v6476 = vld [vmem:[#allocation2 + $0xd70] sm:$0xff]
    %v6477 = vld [vmem:[#allocation2 + $0xd78] sm:$0xff]
    %v6478 = vld [vmem:[#allocation2 + $0xd80] sm:$0xf]
    %v6479 = vld [vmem:[#allocation2 + $0xd84] sm:$0xff]
    %v6480 = vld [vmem:[#allocation2 + $0xd8c] sm:$0xff]
    %v6481 = vld [vmem:[#allocation2 + $0xd94] sm:$0xf]
    %v6482 = vld [vmem:[#allocation2 + $0xd98] sm:$0xff]
    %v6483 = vld [vmem:[#allocation2 + $0xda0] sm:$0xff]
    %v6484 = vld [vmem:[#allocation2 + $0xda8] sm:$0xf]
    %v6485 = vld [vmem:[#allocation2 + $0xdac] sm:$0xff]
    %v6486 = vld [vmem:[#allocation2 + $0xdb4] sm:$0xff]
    %v6487 = vld [vmem:[#allocation2 + $0xdbc] sm:$0xf]
    %v6488 = vld [vmem:[#allocation2 + $0xdc0] sm:$0xff]
    %v6489 = vld [vmem:[#allocation2 + $0xdc8] sm:$0xff]
    %v6490 = vld [vmem:[#allocation2 + $0xdd0] sm:$0xf]
    %v6491 = vld [vmem:[#allocation2 + $0xdd4] sm:$0xff]
    %v6492 = vld [vmem:[#allocation2 + $0xddc] sm:$0xff]
    %v6493 = vld [vmem:[#allocation2 + $0xde4] sm:$0xf]
    %v6494 = vld [vmem:[#allocation2 + $0xde8] sm:$0xff]
    %v6495 = vld [vmem:[#allocation2 + $0xdf0] sm:$0xff]
    %v6496 = vld [vmem:[#allocation2 + $0xdf8] sm:$0xf]
    %v6497 = vld [vmem:[#allocation2 + $0xdfc] sm:$0xff]
    %v6498 = vld [vmem:[#allocation2 + $0xe04] sm:$0xff]
    %v6499 = vld [vmem:[#allocation2 + $0xe0c] sm:$0xf]
    %v6500 = vld [vmem:[#allocation2 + $0xe10] sm:$0xff]
    %v6501 = vld [vmem:[#allocation2 + $0xe18] sm:$0xff]
    %v6502 = vld [vmem:[#allocation2 + $0xe20] sm:$0xf]
    %v6503 = vld [vmem:[#allocation2 + $0xe24] sm:$0xff]
    %v6504 = vld [vmem:[#allocation2 + $0xe2c] sm:$0xff]
    %v6505 = vld [vmem:[#allocation2 + $0xe34] sm:$0xf]
    %v6506 = vld [vmem:[#allocation2 + $0xe38] sm:$0xff]
    %v6507 = vld [vmem:[#allocation2 + $0xe40] sm:$0xff]
    %v6508 = vld [vmem:[#allocation2 + $0xe48] sm:$0xf]
    %v6509 = vld [vmem:[#allocation2 + $0xe4c] sm:$0xff]
    %v6510 = vld [vmem:[#allocation2 + $0xe54] sm:$0xff]
    %v6511 = vld [vmem:[#allocation2 + $0xe5c] sm:$0xf]
    %v6512 = vld [vmem:[#allocation2 + $0xe60] sm:$0xff]
    %v6513 = vld [vmem:[#allocation2 + $0xe68] sm:$0xff]
    %v6514 = vld [vmem:[#allocation2 + $0xe70] sm:$0xf]
    %v6515 = vld [vmem:[#allocation2 + $0xe74] sm:$0xff]
    %v6516 = vld [vmem:[#allocation2 + $0xe7c] sm:$0xff]
    %v6517 = vld [vmem:[#allocation2 + $0xe84] sm:$0xf]
    %v6518 = vld [vmem:[#allocation2 + $0xe88] sm:$0xff]
    %v6519 = vld [vmem:[#allocation2 + $0xe90] sm:$0xff]
    %v6520 = vld [vmem:[#allocation2 + $0xe98] sm:$0xf]
    %v6521 = vld [vmem:[#allocation2 + $0xe9c] sm:$0xff]
    %v6522 = vld [vmem:[#allocation2 + $0xea4] sm:$0xff]
    %v6523 = vld [vmem:[#allocation2 + $0xeac] sm:$0xf]
    %v6524 = vld [vmem:[#allocation2 + $0xeb0] sm:$0xff]
    %v6525 = vld [vmem:[#allocation2 + $0xeb8] sm:$0xff]
    %v6526 = vld [vmem:[#allocation2 + $0xec0] sm:$0xf]
    %v6527 = vld [vmem:[#allocation2 + $0xec4] sm:$0xff]
    %v6528 = vld [vmem:[#allocation2 + $0xecc] sm:$0xff]
    %v6529 = vld [vmem:[#allocation2 + $0xed4] sm:$0xf]
    %v6530 = vld [vmem:[#allocation2 + $0xed8] sm:$0xff]
    %v6531 = vld [vmem:[#allocation2 + $0xee0] sm:$0xff]
    %v6532 = vld [vmem:[#allocation2 + $0xee8] sm:$0xf]
    %v6533 = vld [vmem:[#allocation2 + $0xeec] sm:$0xff]
    %v6534 = vld [vmem:[#allocation2 + $0xef4] sm:$0xff]
    %v6535 = vld [vmem:[#allocation2 + $0xefc] sm:$0xf]
    %v6536 = vunpack.c.l.b16 %v6379
    %v6537 = vunpack.c.h.b16 %v6379
    %v6538 = vunpack.c.l.b16 %v6383
    %v6539 = vunpack.c.h.b16 %v6383
    %v6540 = vunpack.c.l.b16 %v6387
    %v6541 = vunpack.c.h.b16 %v6387
    %v6542 = vunpack.c.l.b16 %v6391
    %v6543 = vunpack.c.h.b16 %v6391
    %v6544 = vunpack.c.l.b16 %v6395
    %v6545 = vunpack.c.h.b16 %v6395
    %v6546 = vunpack.c.l.b16 %v6399
    %v6547 = vunpack.c.h.b16 %v6399
    %v6548 = vunpack.c.l.b16 %v6403
    %v6549 = vunpack.c.h.b16 %v6403
    %v6550 = vunpack.c.l.b16 %v6407
    %v6551 = vunpack.c.h.b16 %v6407
    %v6552 = vunpack.c.l.b16 %v6411
    %v6553 = vunpack.c.h.b16 %v6411
    %v6554 = vunpack.c.l.b16 %v6415
    %v6555 = vunpack.c.h.b16 %v6415
    %v6556 = vunpack.c.l.b16 %v6419
    %v6557 = vunpack.c.h.b16 %v6419
    %v6558 = vunpack.c.l.b16 %v6423
    %v6559 = vunpack.c.h.b16 %v6423
    %v6560 = vunpack.c.l.b16 %v6427
    %v6561 = vunpack.c.h.b16 %v6427
    %v6562 = vunpack.c.l.b16 %v6431
    %v6563 = vunpack.c.h.b16 %v6431
    %v6564 = vunpack.c.l.b16 %v6435
    %v6565 = vunpack.c.h.b16 %v6435
    %v6566 = vunpack.c.l.b16 %v6439
    %v6567 = vunpack.c.h.b16 %v6439
    %v6568 = vpack.c.b16 %v6538, %v6536
    %v6569 = vpack.c.b16 %v6539, %v6537
    %v6570 = vpack.c.b16 %v6542, %v6540
    %v6571 = vpack.c.b16 %v6543, %v6541
    %v6572 = vpack.c.b16 %v6546, %v6544
    %v6573 = vpack.c.b16 %v6547, %v6545
    %v6574 = vpack.c.b16 %v6550, %v6548
    %v6575 = vpack.c.b16 %v6551, %v6549
    %v6576 = vpack.c.b16 %v6554, %v6552
    %v6577 = vpack.c.b16 %v6555, %v6553
    %v6578 = vpack.c.b16 %v6558, %v6556
    %v6579 = vpack.c.b16 %v6559, %v6557
    %v6580 = vpack.c.b16 %v6562, %v6560
    %v6581 = vpack.c.b16 %v6563, %v6561
    %v6582 = vpack.c.b16 %v6566, %v6564
    %v6583 = vpack.c.b16 %v6567, %v6565
    %v6696 = vunpack.c.l.b16 %v6440
    %v6697 = vunpack.c.h.b16 %v6440
    %v6698 = vunpack.c.l.b16 %v6441
    %v6699 = vunpack.c.h.b16 %v6441
    %v6700 = vunpack.c.l.b16 %v6442
    %v6701 = vunpack.c.l.b16 %v6443
    %v6702 = vunpack.c.h.b16 %v6443
    %v6703 = vunpack.c.l.b16 %v6444
    %v6704 = vunpack.c.h.b16 %v6444
    %v6705 = vunpack.c.l.b16 %v6445
    %v6706 = vunpack.c.l.b16 %v6446
    %v6707 = vunpack.c.h.b16 %v6446
    %v6708 = vunpack.c.l.b16 %v6447
    %v6709 = vunpack.c.h.b16 %v6447
    %v6710 = vunpack.c.l.b16 %v6448
    %v6711 = vunpack.c.l.b16 %v6449
    %v6712 = vunpack.c.h.b16 %v6449
    %v6713 = vunpack.c.l.b16 %v6450
    %v6714 = vunpack.c.h.b16 %v6450
    %v6715 = vunpack.c.l.b16 %v6451
    %v6716 = vunpack.c.l.b16 %v6452
    %v6717 = vunpack.c.h.b16 %v6452
    %v6718 = vunpack.c.l.b16 %v6453
    %v6719 = vunpack.c.h.b16 %v6453
    %v6720 = vunpack.c.l.b16 %v6454
    %v6721 = vunpack.c.l.b16 %v6455
    %v6722 = vunpack.c.h.b16 %v6455
    %v6723 = vunpack.c.l.b16 %v6456
    %v6724 = vunpack.c.h.b16 %v6456
    %v6725 = vunpack.c.l.b16 %v6457
    %v6726 = vunpack.c.l.b16 %v6458
    %v6727 = vunpack.c.h.b16 %v6458
    %v6728 = vunpack.c.l.b16 %v6459
    %v6729 = vunpack.c.h.b16 %v6459
    %v6730 = vunpack.c.l.b16 %v6460
    %v6731 = vunpack.c.l.b16 %v6461
    %v6732 = vunpack.c.h.b16 %v6461
    %v6733 = vunpack.c.l.b16 %v6462
    %v6734 = vunpack.c.h.b16 %v6462
    %v6735 = vunpack.c.l.b16 %v6463
    %v6736 = vunpack.c.l.b16 %v6464
    %v6737 = vunpack.c.h.b16 %v6464
    %v6738 = vunpack.c.l.b16 %v6465
    %v6739 = vunpack.c.h.b16 %v6465
    %v6740 = vunpack.c.l.b16 %v6466
    %v6741 = vunpack.c.l.b16 %v6467
    %v6742 = vunpack.c.h.b16 %v6467
    %v6743 = vunpack.c.l.b16 %v6468
    %v6744 = vunpack.c.h.b16 %v6468
    %v6745 = vunpack.c.l.b16 %v6469
    %v6746 = vunpack.c.l.b16 %v6470
    %v6747 = vunpack.c.h.b16 %v6470
    %v6748 = vunpack.c.l.b16 %v6471
    %v6749 = vunpack.c.h.b16 %v6471
    %v6750 = vunpack.c.l.b16 %v6472
    %v6751 = vunpack.c.l.b16 %v6473
    %v6752 = vunpack.c.h.b16 %v6473
    %v6753 = vunpack.c.l.b16 %v6474
    %v6754 = vunpack.c.h.b16 %v6474
    %v6755 = vunpack.c.l.b16 %v6475
    %v6756 = vunpack.c.l.b16 %v6476
    %v6757 = vunpack.c.h.b16 %v6476
    %v6758 = vunpack.c.l.b16 %v6477
    %v6759 = vunpack.c.h.b16 %v6477
    %v6760 = vunpack.c.l.b16 %v6478
    %v6761 = vunpack.c.l.b16 %v6479
    %v6762 = vunpack.c.h.b16 %v6479
    %v6763 = vunpack.c.l.b16 %v6480
    %v6764 = vunpack.c.h.b16 %v6480
    %v6765 = vunpack.c.l.b16 %v6481
    %v6766 = vunpack.c.l.b16 %v6482
    %v6767 = vunpack.c.h.b16 %v6482
    %v6768 = vunpack.c.l.b16 %v6483
    %v6769 = vunpack.c.h.b16 %v6483
    %v6770 = vunpack.c.l.b16 %v6484
    %v6771 = vunpack.c.l.b16 %v6485
    %v6772 = vunpack.c.h.b16 %v6485
    %v6773 = vunpack.c.l.b16 %v6486
    %v6774 = vunpack.c.h.b16 %v6486
    %v6775 = vunpack.c.l.b16 %v6487
    %v6776 = vunpack.c.l.b16 %v6488
    %v6777 = vunpack.c.h.b16 %v6488
    %v6778 = vunpack.c.l.b16 %v6489
    %v6779 = vunpack.c.h.b16 %v6489
    %v6780 = vunpack.c.l.b16 %v6490
    %v6781 = vunpack.c.l.b16 %v6491
    %v6782 = vunpack.c.h.b16 %v6491
    %v6783 = vunpack.c.l.b16 %v6492
    %v6784 = vunpack.c.h.b16 %v6492
    %v6785 = vunpack.c.l.b16 %v6493
    %v6786 = vunpack.c.l.b16 %v6494
    %v6787 = vunpack.c.h.b16 %v6494
    %v6788 = vunpack.c.l.b16 %v6495
    %v6789 = vunpack.c.h.b16 %v6495
    %v6790 = vunpack.c.l.b16 %v6496
    %v6791 = vunpack.c.l.b16 %v6497
    %v6792 = vunpack.c.h.b16 %v6497
    %v6793 = vunpack.c.l.b16 %v6498
    %v6794 = vunpack.c.h.b16 %v6498
    %v6795 = vunpack.c.l.b16 %v6499
    %v6796 = vunpack.c.l.b16 %v6500
    %v6797 = vunpack.c.h.b16 %v6500
    %v6798 = vunpack.c.l.b16 %v6501
    %v6799 = vunpack.c.h.b16 %v6501
    %v6800 = vunpack.c.l.b16 %v6502
    %v6801 = vunpack.c.l.b16 %v6503
    %v6802 = vunpack.c.h.b16 %v6503
    %v6803 = vunpack.c.l.b16 %v6504
    %v6804 = vunpack.c.h.b16 %v6504
    %v6805 = vunpack.c.l.b16 %v6505
    %v6806 = vunpack.c.l.b16 %v6506
    %v6807 = vunpack.c.h.b16 %v6506
    %v6808 = vunpack.c.l.b16 %v6507
    %v6809 = vunpack.c.h.b16 %v6507
    %v6810 = vunpack.c.l.b16 %v6508
    %v6811 = vunpack.c.l.b16 %v6509
    %v6812 = vunpack.c.h.b16 %v6509
    %v6813 = vunpack.c.l.b16 %v6510
    %v6814 = vunpack.c.h.b16 %v6510
    %v6815 = vunpack.c.l.b16 %v6511
    %v6816 = vunpack.c.l.b16 %v6512
    %v6817 = vunpack.c.h.b16 %v6512
    %v6818 = vunpack.c.l.b16 %v6513
    %v6819 = vunpack.c.h.b16 %v6513
    %v6820 = vunpack.c.l.b16 %v6514
    %v6821 = vunpack.c.l.b16 %v6515
    %v6822 = vunpack.c.h.b16 %v6515
    %v6823 = vunpack.c.l.b16 %v6516
    %v6824 = vunpack.c.h.b16 %v6516
    %v6825 = vunpack.c.l.b16 %v6517
    %v6826 = vunpack.c.l.b16 %v6518
    %v6827 = vunpack.c.h.b16 %v6518
    %v6828 = vunpack.c.l.b16 %v6519
    %v6829 = vunpack.c.h.b16 %v6519
    %v6830 = vunpack.c.l.b16 %v6520
    %v6831 = vunpack.c.l.b16 %v6521
    %v6832 = vunpack.c.h.b16 %v6521
    %v6833 = vunpack.c.l.b16 %v6522
    %v6834 = vunpack.c.h.b16 %v6522
    %v6835 = vunpack.c.l.b16 %v6523
    %v6836 = vunpack.c.l.b16 %v6524
    %v6837 = vunpack.c.h.b16 %v6524
    %v6838 = vunpack.c.l.b16 %v6525
    %v6839 = vunpack.c.h.b16 %v6525
    %v6840 = vunpack.c.l.b16 %v6526
    %v6841 = vunpack.c.l.b16 %v6527
    %v6842 = vunpack.c.h.b16 %v6527
    %v6843 = vunpack.c.l.b16 %v6528
    %v6844 = vunpack.c.h.b16 %v6528
    %v6845 = vunpack.c.l.b16 %v6529
    %v6846 = vunpack.c.l.b16 %v6530
    %v6847 = vunpack.c.h.b16 %v6530
    %v6848 = vunpack.c.l.b16 %v6531
    %v6849 = vunpack.c.h.b16 %v6531
    %v6850 = vunpack.c.l.b16 %v6532
    %v6851 = vunpack.c.l.b16 %v6533
    %v6852 = vunpack.c.h.b16 %v6533
    %v6853 = vunpack.c.l.b16 %v6534
    %v6854 = vunpack.c.h.b16 %v6534
    %v6855 = vunpack.c.l.b16 %v6535
    %v6856 = vpack.c.b16 %v6701, %v6696
    %v6857 = vpack.c.b16 %v6702, %v6697
    %v6858 = vpack.c.b16 %v6703, %v6698
    %v6859 = vpack.c.b16 %v6704, %v6699
    %v6860 = vpack.c.b16 %v6705, %v6700
    %v6861 = vpack.c.b16 %v6711, %v6706
    %v6862 = vpack.c.b16 %v6712, %v6707
    %v6863 = vpack.c.b16 %v6713, %v6708
    %v6864 = vpack.c.b16 %v6714, %v6709
    %v6865 = vpack.c.b16 %v6715, %v6710
    %v6866 = vpack.c.b16 %v6721, %v6716
    %v6867 = vpack.c.b16 %v6722, %v6717
    %v6868 = vpack.c.b16 %v6723, %v6718
    %v6869 = vpack.c.b16 %v6724, %v6719
    %v6870 = vpack.c.b16 %v6725, %v6720
    %v6871 = vpack.c.b16 %v6731, %v6726
    %v6872 = vpack.c.b16 %v6732, %v6727
    %v6873 = vpack.c.b16 %v6733, %v6728
    %v6874 = vpack.c.b16 %v6734, %v6729
    %v6875 = vpack.c.b16 %v6735, %v6730
    %v6876 = vpack.c.b16 %v6741, %v6736
    %v6877 = vpack.c.b16 %v6742, %v6737
    %v6878 = vpack.c.b16 %v6743, %v6738
    %v6879 = vpack.c.b16 %v6744, %v6739
    %v6880 = vpack.c.b16 %v6745, %v6740
    %v6881 = vpack.c.b16 %v6751, %v6746
    %v6882 = vpack.c.b16 %v6752, %v6747
    %v6883 = vpack.c.b16 %v6753, %v6748
    %v6884 = vpack.c.b16 %v6754, %v6749
    %v6885 = vpack.c.b16 %v6755, %v6750
    %v6886 = vpack.c.b16 %v6761, %v6756
    %v6887 = vpack.c.b16 %v6762, %v6757
    %v6888 = vpack.c.b16 %v6763, %v6758
    %v6889 = vpack.c.b16 %v6764, %v6759
    %v6890 = vpack.c.b16 %v6765, %v6760
    %v6891 = vpack.c.b16 %v6771, %v6766
    %v6892 = vpack.c.b16 %v6772, %v6767
    %v6893 = vpack.c.b16 %v6773, %v6768
    %v6894 = vpack.c.b16 %v6774, %v6769
    %v6895 = vpack.c.b16 %v6775, %v6770
    %v6896 = vpack.c.b16 %v6781, %v6776
    %v6897 = vpack.c.b16 %v6782, %v6777
    %v6898 = vpack.c.b16 %v6783, %v6778
    %v6899 = vpack.c.b16 %v6784, %v6779
    %v6900 = vpack.c.b16 %v6785, %v6780
    %v6901 = vpack.c.b16 %v6791, %v6786
    %v6902 = vpack.c.b16 %v6792, %v6787
    %v6903 = vpack.c.b16 %v6793, %v6788
    %v6904 = vpack.c.b16 %v6794, %v6789
    %v6905 = vpack.c.b16 %v6795, %v6790
    %v6906 = vpack.c.b16 %v6801, %v6796
    %v6907 = vpack.c.b16 %v6802, %v6797
    %v6908 = vpack.c.b16 %v6803, %v6798
    %v6909 = vpack.c.b16 %v6804, %v6799
    %v6910 = vpack.c.b16 %v6805, %v6800
    %v6911 = vpack.c.b16 %v6811, %v6806
    %v6912 = vpack.c.b16 %v6812, %v6807
    %v6913 = vpack.c.b16 %v6813, %v6808
    %v6914 = vpack.c.b16 %v6814, %v6809
    %v6915 = vpack.c.b16 %v6815, %v6810
    %v6916 = vpack.c.b16 %v6821, %v6816
    %v6917 = vpack.c.b16 %v6822, %v6817
    %v6918 = vpack.c.b16 %v6823, %v6818
    %v6919 = vpack.c.b16 %v6824, %v6819
    %v6920 = vpack.c.b16 %v6825, %v6820
    %v6921 = vpack.c.b16 %v6831, %v6826
    %v6922 = vpack.c.b16 %v6832, %v6827
    %v6923 = vpack.c.b16 %v6833, %v6828
    %v6924 = vpack.c.b16 %v6834, %v6829
    %v6925 = vpack.c.b16 %v6835, %v6830
    %v6926 = vpack.c.b16 %v6841, %v6836
    %v6927 = vpack.c.b16 %v6842, %v6837
    %v6928 = vpack.c.b16 %v6843, %v6838
    %v6929 = vpack.c.b16 %v6844, %v6839
    %v6930 = vpack.c.b16 %v6845, %v6840
    %v6931 = vpack.c.b16 %v6851, %v6846
    %v6932 = vpack.c.b16 %v6852, %v6847
    %v6933 = vpack.c.b16 %v6853, %v6848
    %v6934 = vpack.c.b16 %v6854, %v6849
    %v6935 = vpack.c.b16 %v6855, %v6850
    %7016 = vmatpush.bf16.msra.mxu0 %v6891
    %7017 = vmatpush.bf16.msra.mxu0 %v6886
    %7018 = vmatpush.bf16.msra.mxu0 %v6881
    %7019 = vmatpush.bf16.msra.mxu0 %v6876
    %7020 = vmatpush.bf16.msra.mxu0 %v6871
    %7021 = vmatpush.bf16.msra.mxu0 %v6866
    %7022 = vmatpush.bf16.msra.mxu0 %v6861
    %7023 = vmatpush.bf16.msra.mxu0 %v6856
    %7024 = vmatmul.bf16.gmra.mxu0 %v6568
    %v7025 = vpop.f32.mrf.mxu0
    %v7026 = vadd.f32 0.0, %v7025
    %v7027 = vpop.f32.mrf.mxu0
    %v7028 = vadd.f32 0.0, %v7027
    %7029 = vmatmul.bf16.gmra.mxu0 %v6570
    %v7030 = vpop.f32.mrf.mxu0
    %v7031 = vadd.f32 0.0, %v7030
    %v7032 = vpop.f32.mrf.mxu0
    %v7033 = vadd.f32 0.0, %v7032
    %7034 = vmatmul.bf16.gmra.mxu0 %v6572
    %v7035 = vpop.f32.mrf.mxu0
    %v7036 = vadd.f32 0.0, %v7035
    %v7037 = vpop.f32.mrf.mxu0
    %v7038 = vadd.f32 0.0, %v7037
    %7039 = vmatmul.bf16.gmra.mxu0 %v6574
    %v7040 = vpop.f32.mrf.mxu0
    %v7041 = vadd.f32 0.0, %v7040
    %v7042 = vpop.f32.mrf.mxu0
    %v7043 = vadd.f32 0.0, %v7042
    %7044 = vmatmul.bf16.gmra.mxu0 %v6576
    %v7045 = vpop.f32.mrf.mxu0
    %v7046 = vadd.f32 0.0, %v7045
    %v7047 = vpop.f32.mrf.mxu0
    %v7048 = vadd.f32 0.0, %v7047
    %7049 = vmatmul.bf16.gmra.mxu0 %v6578
    %v7050 = vpop.f32.mrf.mxu0
    %v7051 = vadd.f32 0.0, %v7050
    %v7052 = vpop.f32.mrf.mxu0
    %v7053 = vadd.f32 0.0, %v7052
    %7054 = vmatmul.bf16.gmra.mxu0 %v6580
    %v7055 = vpop.f32.mrf.mxu0
    %v7056 = vadd.f32 0.0, %v7055
    %v7057 = vpop.f32.mrf.mxu0
    %v7058 = vadd.f32 0.0, %v7057
    %7059 = vmatmul.bf16.gmra.mxu0 %v6582
    %v7060 = vpop.f32.mrf.mxu0
    %v7061 = vadd.f32 0.0, %v7060
    %v7062 = vpop.f32.mrf.mxu0
    %v7063 = vadd.f32 0.0, %v7062
    %7064 = vdwg.mxu0
    %7065 = vmatpush.bf16.msra.mxu0 %v6931
    %7066 = vmatpush.bf16.msra.mxu0 %v6926
    %7067 = vmatpush.bf16.msra.mxu0 %v6921
    %7068 = vmatpush.bf16.msra.mxu0 %v6916
    %7069 = vmatpush.bf16.msra.mxu0 %v6911
    %7070 = vmatpush.bf16.msra.mxu0 %v6906
    %7071 = vmatpush.bf16.msra.mxu0 %v6901
    %7072 = vmatpush.bf16.msra.mxu0 %v6896
    %7073 = vmatmul.bf16.gmra.mxu0 %v6569
    %v7074 = vpop.f32.mrf.mxu0
    %v7075 = vadd.f32 %v7026, %v7074
    %v7076 = vpop.f32.mrf.mxu0
    %v7077 = vadd.f32 %v7028, %v7076
    %7078 = vmatmul.bf16.gmra.mxu0 %v6571
    %v7079 = vpop.f32.mrf.mxu0
    %v7080 = vadd.f32 %v7031, %v7079
    %v7081 = vpop.f32.mrf.mxu0
    %v7082 = vadd.f32 %v7033, %v7081
    %7083 = vmatmul.bf16.gmra.mxu0 %v6573
    %v7084 = vpop.f32.mrf.mxu0
    %v7085 = vadd.f32 %v7036, %v7084
    %v7086 = vpop.f32.mrf.mxu0
    %v7087 = vadd.f32 %v7038, %v7086
    %7088 = vmatmul.bf16.gmra.mxu0 %v6575
    %v7089 = vpop.f32.mrf.mxu0
    %v7090 = vadd.f32 %v7041, %v7089
    %v7091 = vpop.f32.mrf.mxu0
    %v7092 = vadd.f32 %v7043, %v7091
    %7093 = vmatmul.bf16.gmra.mxu0 %v6577
    %v7094 = vpop.f32.mrf.mxu0
    %v7095 = vadd.f32 %v7046, %v7094
    %v7096 = vpop.f32.mrf.mxu0
    %v7097 = vadd.f32 %v7048, %v7096
    %7098 = vmatmul.bf16.gmra.mxu0 %v6579
    %v7099 = vpop.f32.mrf.mxu0
    %v7100 = vadd.f32 %v7051, %v7099
    %v7101 = vpop.f32.mrf.mxu0
    %v7102 = vadd.f32 %v7053, %v7101
    %7103 = vmatmul.bf16.gmra.mxu0 %v6581
    %v7104 = vpop.f32.mrf.mxu0
    %v7105 = vadd.f32 %v7056, %v7104
    %v7106 = vpop.f32.mrf.mxu0
    %v7107 = vadd.f32 %v7058, %v7106
    %7108 = vmatmul.bf16.gmra.mxu0 %v6583
    %v7109 = vpop.f32.mrf.mxu0
    %v7110 = vadd.f32 %v7061, %v7109
    %v7111 = vpop.f32.mrf.mxu0
    %v7112 = vadd.f32 %v7063, %v7111
    %7113 = vdwg.mxu0
    %7114 = vmatpush.bf16.msra.mxu0 %v6892
    %7115 = vmatpush.bf16.msra.mxu0 %v6887
    %7116 = vmatpush.bf16.msra.mxu0 %v6882
    %7117 = vmatpush.bf16.msra.mxu0 %v6877
    %7118 = vmatpush.bf16.msra.mxu0 %v6872
    %7119 = vmatpush.bf16.msra.mxu0 %v6867
    %7120 = vmatpush.bf16.msra.mxu0 %v6862
    %7121 = vmatpush.bf16.msra.mxu0 %v6857
    %7122 = vmatmul.bf16.gmra.mxu0 %v6568
    %v7123 = vpop.f32.mrf.mxu0
    %v7124 = vadd.f32 0.0, %v7123
    %v7125 = vpop.f32.mrf.mxu0
    %v7126 = vadd.f32 0.0, %v7125
    %7127 = vmatmul.bf16.gmra.mxu0 %v6570
    %v7128 = vpop.f32.mrf.mxu0
    %v7129 = vadd.f32 0.0, %v7128
    %v7130 = vpop.f32.mrf.mxu0
    %v7131 = vadd.f32 0.0, %v7130
    %7132 = vmatmul.bf16.gmra.mxu0 %v6572
    %v7133 = vpop.f32.mrf.mxu0
    %v7134 = vadd.f32 0.0, %v7133
    %v7135 = vpop.f32.mrf.mxu0
    %v7136 = vadd.f32 0.0, %v7135
    %7137 = vmatmul.bf16.gmra.mxu0 %v6574
    %v7138 = vpop.f32.mrf.mxu0
    %v7139 = vadd.f32 0.0, %v7138
    %v7140 = vpop.f32.mrf.mxu0
    %v7141 = vadd.f32 0.0, %v7140
    %7142 = vmatmul.bf16.gmra.mxu0 %v6576
    %v7143 = vpop.f32.mrf.mxu0
    %v7144 = vadd.f32 0.0, %v7143
    %v7145 = vpop.f32.mrf.mxu0
    %v7146 = vadd.f32 0.0, %v7145
    %7147 = vmatmul.bf16.gmra.mxu0 %v6578
    %v7148 = vpop.f32.mrf.mxu0
    %v7149 = vadd.f32 0.0, %v7148
    %v7150 = vpop.f32.mrf.mxu0
    %v7151 = vadd.f32 0.0, %v7150
    %7152 = vmatmul.bf16.gmra.mxu0 %v6580
    %v7153 = vpop.f32.mrf.mxu0
    %v7154 = vadd.f32 0.0, %v7153
    %v7155 = vpop.f32.mrf.mxu0
    %v7156 = vadd.f32 0.0, %v7155
    %7157 = vmatmul.bf16.gmra.mxu0 %v6582
    %v7158 = vpop.f32.mrf.mxu0
    %v7159 = vadd.f32 0.0, %v7158
    %v7160 = vpop.f32.mrf.mxu0
    %v7161 = vadd.f32 0.0, %v7160
    %7162 = vdwg.mxu0
    %7163 = vmatpush.bf16.msra.mxu0 %v6932
    %7164 = vmatpush.bf16.msra.mxu0 %v6927
    %7165 = vmatpush.bf16.msra.mxu0 %v6922
    %7166 = vmatpush.bf16.msra.mxu0 %v6917
    %7167 = vmatpush.bf16.msra.mxu0 %v6912
    %7168 = vmatpush.bf16.msra.mxu0 %v6907
    %7169 = vmatpush.bf16.msra.mxu0 %v6902
    %7170 = vmatpush.bf16.msra.mxu0 %v6897
    %7171 = vmatmul.bf16.gmra.mxu0 %v6569
    %v7172 = vpop.f32.mrf.mxu0
    %v7173 = vadd.f32 %v7124, %v7172
    %v7174 = vpop.f32.mrf.mxu0
    %v7175 = vadd.f32 %v7126, %v7174
    %7176 = vmatmul.bf16.gmra.mxu0 %v6571
    %v7177 = vpop.f32.mrf.mxu0
    %v7178 = vadd.f32 %v7129, %v7177
    %v7179 = vpop.f32.mrf.mxu0
    %v7180 = vadd.f32 %v7131, %v7179
    %7181 = vmatmul.bf16.gmra.mxu0 %v6573
    %v7182 = vpop.f32.mrf.mxu0
    %v7183 = vadd.f32 %v7134, %v7182
    %v7184 = vpop.f32.mrf.mxu0
    %v7185 = vadd.f32 %v7136, %v7184
    %7186 = vmatmul.bf16.gmra.mxu0 %v6575
    %v7187 = vpop.f32.mrf.mxu0
    %v7188 = vadd.f32 %v7139, %v7187
    %v7189 = vpop.f32.mrf.mxu0
    %v7190 = vadd.f32 %v7141, %v7189
    %7191 = vmatmul.bf16.gmra.mxu0 %v6577
    %v7192 = vpop.f32.mrf.mxu0
    %v7193 = vadd.f32 %v7144, %v7192
    %v7194 = vpop.f32.mrf.mxu0
    %v7195 = vadd.f32 %v7146, %v7194
    %7196 = vmatmul.bf16.gmra.mxu0 %v6579
    %v7197 = vpop.f32.mrf.mxu0
    %v7198 = vadd.f32 %v7149, %v7197
    %v7199 = vpop.f32.mrf.mxu0
    %v7200 = vadd.f32 %v7151, %v7199
    %7201 = vmatmul.bf16.gmra.mxu0 %v6581
    %v7202 = vpop.f32.mrf.mxu0
    %v7203 = vadd.f32 %v7154, %v7202
    %v7204 = vpop.f32.mrf.mxu0
    %v7205 = vadd.f32 %v7156, %v7204
    %7206 = vmatmul.bf16.gmra.mxu0 %v6583
    %v7207 = vpop.f32.mrf.mxu0
    %v7208 = vadd.f32 %v7159, %v7207
    %v7209 = vpop.f32.mrf.mxu0
    %v7210 = vadd.f32 %v7161, %v7209
    %7211 = vdwg.mxu0
    %7212 = vmatpush.bf16.msra.mxu0 %v6893
    %7213 = vmatpush.bf16.msra.mxu0 %v6888
    %7214 = vmatpush.bf16.msra.mxu0 %v6883
    %7215 = vmatpush.bf16.msra.mxu0 %v6878
    %7216 = vmatpush.bf16.msra.mxu0 %v6873
    %7217 = vmatpush.bf16.msra.mxu0 %v6868
    %7218 = vmatpush.bf16.msra.mxu0 %v6863
    %7219 = vmatpush.bf16.msra.mxu0 %v6858
    %7220 = vmatmul.bf16.gmra.mxu0 %v6568
    %v7221 = vpop.f32.mrf.mxu0
    %v7222 = vadd.f32 0.0, %v7221
    %v7223 = vpop.f32.mrf.mxu0
    %v7224 = vadd.f32 0.0, %v7223
    %7225 = vmatmul.bf16.gmra.mxu0 %v6570
    %v7226 = vpop.f32.mrf.mxu0
    %v7227 = vadd.f32 0.0, %v7226
    %v7228 = vpop.f32.mrf.mxu0
    %v7229 = vadd.f32 0.0, %v7228
    %7230 = vmatmul.bf16.gmra.mxu0 %v6572
    %v7231 = vpop.f32.mrf.mxu0
    %v7232 = vadd.f32 0.0, %v7231
    %v7233 = vpop.f32.mrf.mxu0
    %v7234 = vadd.f32 0.0, %v7233
    %7235 = vmatmul.bf16.gmra.mxu0 %v6574
    %v7236 = vpop.f32.mrf.mxu0
    %v7237 = vadd.f32 0.0, %v7236
    %v7238 = vpop.f32.mrf.mxu0
    %v7239 = vadd.f32 0.0, %v7238
    %7240 = vmatmul.bf16.gmra.mxu0 %v6576
    %v7241 = vpop.f32.mrf.mxu0
    %v7242 = vadd.f32 0.0, %v7241
    %v7243 = vpop.f32.mrf.mxu0
    %v7244 = vadd.f32 0.0, %v7243
    %7245 = vmatmul.bf16.gmra.mxu0 %v6578
    %v7246 = vpop.f32.mrf.mxu0
    %v7247 = vadd.f32 0.0, %v7246
    %v7248 = vpop.f32.mrf.mxu0
    %v7249 = vadd.f32 0.0, %v7248
    %7250 = vmatmul.bf16.gmra.mxu0 %v6580
    %v7251 = vpop.f32.mrf.mxu0
    %v7252 = vadd.f32 0.0, %v7251
    %v7253 = vpop.f32.mrf.mxu0
    %v7254 = vadd.f32 0.0, %v7253
    %7255 = vmatmul.bf16.gmra.mxu0 %v6582
    %v7256 = vpop.f32.mrf.mxu0
    %v7257 = vadd.f32 0.0, %v7256
    %v7258 = vpop.f32.mrf.mxu0
    %v7259 = vadd.f32 0.0, %v7258
    %7260 = vdwg.mxu0
    %7261 = vmatpush.bf16.msra.mxu0 %v6933
    %7262 = vmatpush.bf16.msra.mxu0 %v6928
    %7263 = vmatpush.bf16.msra.mxu0 %v6923
    %7264 = vmatpush.bf16.msra.mxu0 %v6918
    %7265 = vmatpush.bf16.msra.mxu0 %v6913
    %7266 = vmatpush.bf16.msra.mxu0 %v6908
    %7267 = vmatpush.bf16.msra.mxu0 %v6903
    %7268 = vmatpush.bf16.msra.mxu0 %v6898
    %7269 = vmatmul.bf16.gmra.mxu0 %v6569
    %v7270 = vpop.f32.mrf.mxu0
    %v7271 = vadd.f32 %v7222, %v7270
    %v7272 = vpop.f32.mrf.mxu0
    %v7273 = vadd.f32 %v7224, %v7272
    %7274 = vmatmul.bf16.gmra.mxu0 %v6571
    %v7275 = vpop.f32.mrf.mxu0
    %v7276 = vadd.f32 %v7227, %v7275
    %v7277 = vpop.f32.mrf.mxu0
    %v7278 = vadd.f32 %v7229, %v7277
    %7279 = vmatmul.bf16.gmra.mxu0 %v6573
    %v7280 = vpop.f32.mrf.mxu0
    %v7281 = vadd.f32 %v7232, %v7280
    %v7282 = vpop.f32.mrf.mxu0
    %v7283 = vadd.f32 %v7234, %v7282
    %7284 = vmatmul.bf16.gmra.mxu0 %v6575
    %v7285 = vpop.f32.mrf.mxu0
    %v7286 = vadd.f32 %v7237, %v7285
    %v7287 = vpop.f32.mrf.mxu0
    %v7288 = vadd.f32 %v7239, %v7287
    %7289 = vmatmul.bf16.gmra.mxu0 %v6577
    %v7290 = vpop.f32.mrf.mxu0
    %v7291 = vadd.f32 %v7242, %v7290
    %v7292 = vpop.f32.mrf.mxu0
    %v7293 = vadd.f32 %v7244, %v7292
    %7294 = vmatmul.bf16.gmra.mxu0 %v6579
    %v7295 = vpop.f32.mrf.mxu0
    %v7296 = vadd.f32 %v7247, %v7295
    %v7297 = vpop.f32.mrf.mxu0
    %v7298 = vadd.f32 %v7249, %v7297
    %7299 = vmatmul.bf16.gmra.mxu0 %v6581
    %v7300 = vpop.f32.mrf.mxu0
    %v7301 = vadd.f32 %v7252, %v7300
    %v7302 = vpop.f32.mrf.mxu0
    %v7303 = vadd.f32 %v7254, %v7302
    %7304 = vmatmul.bf16.gmra.mxu0 %v6583
    %v7305 = vpop.f32.mrf.mxu0
    %v7306 = vadd.f32 %v7257, %v7305
    %v7307 = vpop.f32.mrf.mxu0
    %v7308 = vadd.f32 %v7259, %v7307
    %7309 = vdwg.mxu0
    %7310 = vmatpush.bf16.msra.mxu0 %v6894
    %7311 = vmatpush.bf16.msra.mxu0 %v6889
    %7312 = vmatpush.bf16.msra.mxu0 %v6884
    %7313 = vmatpush.bf16.msra.mxu0 %v6879
    %7314 = vmatpush.bf16.msra.mxu0 %v6874
    %7315 = vmatpush.bf16.msra.mxu0 %v6869
    %7316 = vmatpush.bf16.msra.mxu0 %v6864
    %7317 = vmatpush.bf16.msra.mxu0 %v6859
    %7318 = vmatmul.bf16.gmra.mxu0 %v6568
    %v7319 = vpop.f32.mrf.mxu0
    %v7320 = vadd.f32 0.0, %v7319
    %v7321 = vpop.f32.mrf.mxu0
    %v7322 = vadd.f32 0.0, %v7321
    %7323 = vmatmul.bf16.gmra.mxu0 %v6570
    %v7324 = vpop.f32.mrf.mxu0
    %v7325 = vadd.f32 0.0, %v7324
    %v7326 = vpop.f32.mrf.mxu0
    %v7327 = vadd.f32 0.0, %v7326
    %7328 = vmatmul.bf16.gmra.mxu0 %v6572
    %v7329 = vpop.f32.mrf.mxu0
    %v7330 = vadd.f32 0.0, %v7329
    %v7331 = vpop.f32.mrf.mxu0
    %v7332 = vadd.f32 0.0, %v7331
    %7333 = vmatmul.bf16.gmra.mxu0 %v6574
    %v7334 = vpop.f32.mrf.mxu0
    %v7335 = vadd.f32 0.0, %v7334
    %v7336 = vpop.f32.mrf.mxu0
    %v7337 = vadd.f32 0.0, %v7336
    %7338 = vmatmul.bf16.gmra.mxu0 %v6576
    %v7339 = vpop.f32.mrf.mxu0
    %v7340 = vadd.f32 0.0, %v7339
    %v7341 = vpop.f32.mrf.mxu0
    %v7342 = vadd.f32 0.0, %v7341
    %7343 = vmatmul.bf16.gmra.mxu0 %v6578
    %v7344 = vpop.f32.mrf.mxu0
    %v7345 = vadd.f32 0.0, %v7344
    %v7346 = vpop.f32.mrf.mxu0
    %v7347 = vadd.f32 0.0, %v7346
    %7348 = vmatmul.bf16.gmra.mxu0 %v6580
    %v7349 = vpop.f32.mrf.mxu0
    %v7350 = vadd.f32 0.0, %v7349
    %v7351 = vpop.f32.mrf.mxu0
    %v7352 = vadd.f32 0.0, %v7351
    %7353 = vmatmul.bf16.gmra.mxu0 %v6582
    %v7354 = vpop.f32.mrf.mxu0
    %v7355 = vadd.f32 0.0, %v7354
    %v7356 = vpop.f32.mrf.mxu0
    %v7357 = vadd.f32 0.0, %v7356
    %7358 = vdwg.mxu0
    %7359 = vmatpush.bf16.msra.mxu0 %v6934
    %7360 = vmatpush.bf16.msra.mxu0 %v6929
    %7361 = vmatpush.bf16.msra.mxu0 %v6924
    %7362 = vmatpush.bf16.msra.mxu0 %v6919
    %7363 = vmatpush.bf16.msra.mxu0 %v6914
    %7364 = vmatpush.bf16.msra.mxu0 %v6909
    %7365 = vmatpush.bf16.msra.mxu0 %v6904
    %7366 = vmatpush.bf16.msra.mxu0 %v6899
    %7367 = vmatmul.bf16.gmra.mxu0 %v6569
    %v7368 = vpop.f32.mrf.mxu0
    %v7369 = vadd.f32 %v7320, %v7368
    %v7370 = vpop.f32.mrf.mxu0
    %v7371 = vadd.f32 %v7322, %v7370
    %7372 = vmatmul.bf16.gmra.mxu0 %v6571
    %v7373 = vpop.f32.mrf.mxu0
    %v7374 = vadd.f32 %v7325, %v7373
    %v7375 = vpop.f32.mrf.mxu0
    %v7376 = vadd.f32 %v7327, %v7375
    %7377 = vmatmul.bf16.gmra.mxu0 %v6573
    %v7378 = vpop.f32.mrf.mxu0
    %v7379 = vadd.f32 %v7330, %v7378
    %v7380 = vpop.f32.mrf.mxu0
    %v7381 = vadd.f32 %v7332, %v7380
    %7382 = vmatmul.bf16.gmra.mxu0 %v6575
    %v7383 = vpop.f32.mrf.mxu0
    %v7384 = vadd.f32 %v7335, %v7383
    %v7385 = vpop.f32.mrf.mxu0
    %v7386 = vadd.f32 %v7337, %v7385
    %7387 = vmatmul.bf16.gmra.mxu0 %v6577
    %v7388 = vpop.f32.mrf.mxu0
    %v7389 = vadd.f32 %v7340, %v7388
    %v7390 = vpop.f32.mrf.mxu0
    %v7391 = vadd.f32 %v7342, %v7390
    %7392 = vmatmul.bf16.gmra.mxu0 %v6579
    %v7393 = vpop.f32.mrf.mxu0
    %v7394 = vadd.f32 %v7345, %v7393
    %v7395 = vpop.f32.mrf.mxu0
    %v7396 = vadd.f32 %v7347, %v7395
    %7397 = vmatmul.bf16.gmra.mxu0 %v6581
    %v7398 = vpop.f32.mrf.mxu0
    %v7399 = vadd.f32 %v7350, %v7398
    %v7400 = vpop.f32.mrf.mxu0
    %v7401 = vadd.f32 %v7352, %v7400
    %7402 = vmatmul.bf16.gmra.mxu0 %v6583
    %v7403 = vpop.f32.mrf.mxu0
    %v7404 = vadd.f32 %v7355, %v7403
    %v7405 = vpop.f32.mrf.mxu0
    %v7406 = vadd.f32 %v7357, %v7405
    %7407 = vdwg.mxu0
    %7408 = vmatpush.bf16.msra.mxu0 %v6895
    %7409 = vmatpush.bf16.msra.mxu0 %v6890
    %7410 = vmatpush.bf16.msra.mxu0 %v6885
    %7411 = vmatpush.bf16.msra.mxu0 %v6880
    %7412 = vmatpush.bf16.msra.mxu0 %v6875
    %7413 = vmatpush.bf16.msra.mxu0 %v6870
    %7414 = vmatpush.bf16.msra.mxu0 %v6865
    %7415 = vmatpush.bf16.msra.mxu0 %v6860
    %7416 = vmatmul.bf16.gmra.mxu0 %v6568
    %v7417 = vpop.f32.mrf.mxu0
    %v7418 = vadd.f32 0.0, %v7417
    %v7419 = vpop.f32.mrf.mxu0
    %v7420 = vadd.f32 0.0, %v7419
    %7421 = vmatmul.bf16.gmra.mxu0 %v6570
    %v7422 = vpop.f32.mrf.mxu0
    %v7423 = vadd.f32 0.0, %v7422
    %v7424 = vpop.f32.mrf.mxu0
    %v7425 = vadd.f32 0.0, %v7424
    %7426 = vmatmul.bf16.gmra.mxu0 %v6572
    %v7427 = vpop.f32.mrf.mxu0
    %v7428 = vadd.f32 0.0, %v7427
    %v7429 = vpop.f32.mrf.mxu0
    %v7430 = vadd.f32 0.0, %v7429
    %7431 = vmatmul.bf16.gmra.mxu0 %v6574
    %v7432 = vpop.f32.mrf.mxu0
    %v7433 = vadd.f32 0.0, %v7432
    %v7434 = vpop.f32.mrf.mxu0
    %v7435 = vadd.f32 0.0, %v7434
    %7436 = vmatmul.bf16.gmra.mxu0 %v6576
    %v7437 = vpop.f32.mrf.mxu0
    %v7438 = vadd.f32 0.0, %v7437
    %v7439 = vpop.f32.mrf.mxu0
    %v7440 = vadd.f32 0.0, %v7439
    %7441 = vmatmul.bf16.gmra.mxu0 %v6578
    %v7442 = vpop.f32.mrf.mxu0
    %v7443 = vadd.f32 0.0, %v7442
    %v7444 = vpop.f32.mrf.mxu0
    %v7445 = vadd.f32 0.0, %v7444
    %7446 = vmatmul.bf16.gmra.mxu0 %v6580
    %v7447 = vpop.f32.mrf.mxu0
    %v7448 = vadd.f32 0.0, %v7447
    %v7449 = vpop.f32.mrf.mxu0
    %v7450 = vadd.f32 0.0, %v7449
    %7451 = vmatmul.bf16.gmra.mxu0 %v6582
    %v7452 = vpop.f32.mrf.mxu0
    %v7453 = vadd.f32 0.0, %v7452
    %v7454 = vpop.f32.mrf.mxu0
    %v7455 = vadd.f32 0.0, %v7454
    %7456 = vdwg.mxu0
    %7457 = vmatpush.bf16.msra.mxu0 %v6935
    %7458 = vmatpush.bf16.msra.mxu0 %v6930
    %7459 = vmatpush.bf16.msra.mxu0 %v6925
    %7460 = vmatpush.bf16.msra.mxu0 %v6920
    %7461 = vmatpush.bf16.msra.mxu0 %v6915
    %7462 = vmatpush.bf16.msra.mxu0 %v6910
    %7463 = vmatpush.bf16.msra.mxu0 %v6905
    %7464 = vmatpush.bf16.msra.mxu0 %v6900
    %7465 = vmatmul.bf16.gmra.mxu0 %v6569
    %v7466 = vpop.f32.mrf.mxu0
    %v7467 = vadd.f32 %v7418, %v7466
    %v7468 = vpop.f32.mrf.mxu0
    %v7469 = vadd.f32 %v7420, %v7468
    %7470 = vmatmul.bf16.gmra.mxu0 %v6571
    %v7471 = vpop.f32.mrf.mxu0
    %v7472 = vadd.f32 %v7423, %v7471
    %v7473 = vpop.f32.mrf.mxu0
    %v7474 = vadd.f32 %v7425, %v7473
    %7475 = vmatmul.bf16.gmra.mxu0 %v6573
    %v7476 = vpop.f32.mrf.mxu0
    %v7477 = vadd.f32 %v7428, %v7476
    %v7478 = vpop.f32.mrf.mxu0
    %v7479 = vadd.f32 %v7430, %v7478
    %7480 = vmatmul.bf16.gmra.mxu0 %v6575
    %v7481 = vpop.f32.mrf.mxu0
    %v7482 = vadd.f32 %v7433, %v7481
    %v7483 = vpop.f32.mrf.mxu0
    %v7484 = vadd.f32 %v7435, %v7483
    %7485 = vmatmul.bf16.gmra.mxu0 %v6577
    %v7486 = vpop.f32.mrf.mxu0
    %v7487 = vadd.f32 %v7438, %v7486
    %v7488 = vpop.f32.mrf.mxu0
    %v7489 = vadd.f32 %v7440, %v7488
    %7490 = vmatmul.bf16.gmra.mxu0 %v6579
    %v7491 = vpop.f32.mrf.mxu0
    %v7492 = vadd.f32 %v7443, %v7491
    %v7493 = vpop.f32.mrf.mxu0
    %v7494 = vadd.f32 %v7445, %v7493
    %7495 = vmatmul.bf16.gmra.mxu0 %v6581
    %v7496 = vpop.f32.mrf.mxu0
    %v7497 = vadd.f32 %v7448, %v7496
    %v7498 = vpop.f32.mrf.mxu0
    %v7499 = vadd.f32 %v7450, %v7498
    %7500 = vmatmul.bf16.gmra.mxu0 %v6583
    %v7501 = vpop.f32.mrf.mxu0
    %v7502 = vadd.f32 %v7453, %v7501
    %v7503 = vpop.f32.mrf.mxu0
    %v7504 = vadd.f32 %v7455, %v7503
    %7505 = vdwg.mxu0
    %v7506 = vadd.f32 %v6248, %v7075
    %v7507 = vadd.f32 %v6249, %v7173
    %v7508 = vadd.f32 %v6250, %v7271
    %v7509 = vadd.f32 %v6251, %v7369
    %v7510 = vadd.f32 %v6252, %v7467
    %v7511 = vadd.f32 %v6253, %v7077
    %v7512 = vadd.f32 %v6254, %v7175
    %v7513 = vadd.f32 %v6255, %v7273
    %v7514 = vadd.f32 %v6256, %v7371
    %v7515 = vadd.f32 %v6257, %v7469
    %v7516 = vadd.f32 %v6258, %v7080
    %v7517 = vadd.f32 %v6259, %v7178
    %v7518 = vadd.f32 %v6260, %v7276
    %v7519 = vadd.f32 %v6261, %v7374
    %v7520 = vadd.f32 %v6262, %v7472
    %v7521 = vadd.f32 %v6263, %v7082
    %v7522 = vadd.f32 %v6264, %v7180
    %v7523 = vadd.f32 %v6265, %v7278
    %v7524 = vadd.f32 %v6266, %v7376
    %v7525 = vadd.f32 %v6267, %v7474
    %v7526 = vadd.f32 %v6268, %v7085
    %v7527 = vadd.f32 %v6269, %v7183
    %v7528 = vadd.f32 %v6270, %v7281
    %v7529 = vadd.f32 %v6271, %v7379
    %v7530 = vadd.f32 %v6272, %v7477
    %v7531 = vadd.f32 %v6273, %v7087
    %v7532 = vadd.f32 %v6274, %v7185
    %v7533 = vadd.f32 %v6275, %v7283
    %v7534 = vadd.f32 %v6276, %v7381
    %v7535 = vadd.f32 %v6277, %v7479
    %v7536 = vadd.f32 %v6278, %v7090
    %v7537 = vadd.f32 %v6279, %v7188
    %v7538 = vadd.f32 %v6280, %v7286
    %v7539 = vadd.f32 %v6281, %v7384
    %v7540 = vadd.f32 %v6282, %v7482
    %v7541 = vadd.f32 %v6283, %v7092
    %v7542 = vadd.f32 %v6284, %v7190
    %v7543 = vadd.f32 %v6285, %v7288
    %v7544 = vadd.f32 %v6286, %v7386
    %v7545 = vadd.f32 %v6287, %v7484
    %v7546 = vadd.f32 %v6288, %v7095
    %v7547 = vadd.f32 %v6289, %v7193
    %v7548 = vadd.f32 %v6290, %v7291
    %v7549 = vadd.f32 %v6291, %v7389
    %v7550 = vadd.f32 %v6292, %v7487
    %v7551 = vadd.f32 %v6293, %v7097
    %v7552 = vadd.f32 %v6294, %v7195
    %v7553 = vadd.f32 %v6295, %v7293
    %v7554 = vadd.f32 %v6296, %v7391
    %v7555 = vadd.f32 %v6297, %v7489
    %v7556 = vadd.f32 %v6298, %v7100
    %v7557 = vadd.f32 %v6299, %v7198
    %v7558 = vadd.f32 %v6300, %v7296
    %v7559 = vadd.f32 %v6301, %v7394
    %v7560 = vadd.f32 %v6302, %v7492
    %v7561 = vadd.f32 %v6303, %v7102
    %v7562 = vadd.f32 %v6304, %v7200
    %v7563 = vadd.f32 %v6305, %v7298
    %v7564 = vadd.f32 %v6306, %v7396
    %v7565 = vadd.f32 %v6307, %v7494
    %v7566 = vadd.f32 %v6308, %v7105
    %v7567 = vadd.f32 %v6309, %v7203
    %v7568 = vadd.f32 %v6310, %v7301
    %v7569 = vadd.f32 %v6311, %v7399
    %v7570 = vadd.f32 %v6312, %v7497
    %v7571 = vadd.f32 %v6313, %v7107
    %v7572 = vadd.f32 %v6314, %v7205
    %v7573 = vadd.f32 %v6315, %v7303
    %v7574 = vadd.f32 %v6316, %v7401
    %v7575 = vadd.f32 %v6317, %v7499
    %v7576 = vadd.f32 %v6318, %v7110
    %v7577 = vadd.f32 %v6319, %v7208
    %v7578 = vadd.f32 %v6320, %v7306
    %v7579 = vadd.f32 %v6321, %v7404
    %v7580 = vadd.f32 %v6322, %v7502
    %v7581 = vadd.f32 %v6323, %v7112
    %v7582 = vadd.f32 %v6324, %v7210
    %v7583 = vadd.f32 %v6325, %v7308
    %v7584 = vadd.f32 %v6326, %v7406
    %v7585 = vadd.f32 %v6327, %v7504
    %s7586 = scalar_lea.vmem %s0, 32
    %v7587 = vld [vmem:[%s7586] sm:$0xff]
    %v7588 = vld [vmem:[%s7586 + $0x10] sm:$0xff]
    %v7589 = vld [vmem:[%s7586 + $0x20] sm:$0xff]
    %v7590 = vld [vmem:[%s7586 + $0x30] sm:$0xff]
    %v7591 = vld [vmem:[%s7586 + $0x40] sm:$0xff]
    %v7592 = vld [vmem:[%s7586 + $0x50] sm:$0xff]
    %v7593 = vld [vmem:[%s7586 + $0x60] sm:$0xff]
    %v7594 = vld [vmem:[%s7586 + $0x70] sm:$0xff]
    %v7595 = vld [vmem:[%s7586 + $0xa0] sm:$0xff]
    %v7596 = vld [vmem:[%s7586 + $0xb0] sm:$0xff]
    %v7597 = vld [vmem:[%s7586 + $0xc0] sm:$0xff]
    %v7598 = vld [vmem:[%s7586 + $0xd0] sm:$0xff]
    %v7599 = vld [vmem:[%s7586 + $0xe0] sm:$0xff]
    %v7600 = vld [vmem:[%s7586 + $0xf0] sm:$0xff]
    %v7601 = vld [vmem:[%s7586 + $0x100] sm:$0xff]
    %v7602 = vld [vmem:[%s7586 + $0x110] sm:$0xff]
    %v7603 = vld [vmem:[#allocation2 + $0xf00] sm:$0xff]
    %v7604 = vld [vmem:[#allocation2 + $0xf08] sm:$0xff]
    %v7605 = vld [vmem:[#allocation2 + $0xf10] sm:$0xf]
    %v7606 = vld [vmem:[#allocation2 + $0xf14] sm:$0xff]
    %v7607 = vld [vmem:[#allocation2 + $0xf1c] sm:$0xff]
    %v7608 = vld [vmem:[#allocation2 + $0xf24] sm:$0xf]
    %v7609 = vld [vmem:[#allocation2 + $0xf28] sm:$0xff]
    %v7610 = vld [vmem:[#allocation2 + $0xf30] sm:$0xff]
    %v7611 = vld [vmem:[#allocation2 + $0xf38] sm:$0xf]
    %v7612 = vld [vmem:[#allocation2 + $0xf3c] sm:$0xff]
    %v7613 = vld [vmem:[#allocation2 + $0xf44] sm:$0xff]
    %v7614 = vld [vmem:[#allocation2 + $0xf4c] sm:$0xf]
    %v7615 = vld [vmem:[#allocation2 + $0xf50] sm:$0xff]
    %v7616 = vld [vmem:[#allocation2 + $0xf58] sm:$0xff]
    %v7617 = vld [vmem:[#allocation2 + $0xf60] sm:$0xf]
    %v7618 = vld [vmem:[#allocation2 + $0xf64] sm:$0xff]
    %v7619 = vld [vmem:[#allocation2 + $0xf6c] sm:$0xff]
    %v7620 = vld [vmem:[#allocation2 + $0xf74] sm:$0xf]
    %v7621 = vld [vmem:[#allocation2 + $0xf78] sm:$0xff]
    %v7622 = vld [vmem:[#allocation2 + $0xf80] sm:$0xff]
    %v7623 = vld [vmem:[#allocation2 + $0xf88] sm:$0xf]
    %v7624 = vld [vmem:[#allocation2 + $0xf8c] sm:$0xff]
    %v7625 = vld [vmem:[#allocation2 + $0xf94] sm:$0xff]
    %v7626 = vld [vmem:[#allocation2 + $0xf9c] sm:$0xf]
    %v7627 = vld [vmem:[#allocation2 + $0xfa0] sm:$0xff]
    %v7628 = vld [vmem:[#allocation2 + $0xfa8] sm:$0xff]
    %v7629 = vld [vmem:[#allocation2 + $0xfb0] sm:$0xf]
    %v7630 = vld [vmem:[#allocation2 + $0xfb4] sm:$0xff]
    %v7631 = vld [vmem:[#allocation2 + $0xfbc] sm:$0xff]
    %v7632 = vld [vmem:[#allocation2 + $0xfc4] sm:$0xf]
    %v7633 = vld [vmem:[#allocation2 + $0xfc8] sm:$0xff]
    %v7634 = vld [vmem:[#allocation2 + $0xfd0] sm:$0xff]
    %v7635 = vld [vmem:[#allocation2 + $0xfd8] sm:$0xf]
    %v7636 = vld [vmem:[#allocation2 + $0xfdc] sm:$0xff]
    %v7637 = vld [vmem:[#allocation2 + $0xfe4] sm:$0xff]
    %v7638 = vld [vmem:[#allocation2 + $0xfec] sm:$0xf]
    %v7639 = vld [vmem:[#allocation2 + $0xff0] sm:$0xff]
    %v7640 = vld [vmem:[#allocation2 + $0xff8] sm:$0xff]
    %v7641 = vld [vmem:[#allocation2 + $0x1000] sm:$0xf]
    %v7642 = vld [vmem:[#allocation2 + $0x1004] sm:$0xff]
    %v7643 = vld [vmem:[#allocation2 + $0x100c] sm:$0xff]
    %v7644 = vld [vmem:[#allocation2 + $0x1014] sm:$0xf]
    %v7645 = vld [vmem:[#allocation2 + $0x1018] sm:$0xff]
    %v7646 = vld [vmem:[#allocation2 + $0x1020] sm:$0xff]
    %v7647 = vld [vmem:[#allocation2 + $0x1028] sm:$0xf]
    %v7648 = vld [vmem:[#allocation2 + $0x102c] sm:$0xff]
    %v7649 = vld [vmem:[#allocation2 + $0x1034] sm:$0xff]
    %v7650 = vld [vmem:[#allocation2 + $0x103c] sm:$0xf]
    %v7651 = vld [vmem:[#allocation2 + $0x1040] sm:$0xff]
    %v7652 = vld [vmem:[#allocation2 + $0x1048] sm:$0xff]
    %v7653 = vld [vmem:[#allocation2 + $0x1050] sm:$0xf]
    %v7654 = vld [vmem:[#allocation2 + $0x1054] sm:$0xff]
    %v7655 = vld [vmem:[#allocation2 + $0x105c] sm:$0xff]
    %v7656 = vld [vmem:[#allocation2 + $0x1064] sm:$0xf]
    %v7657 = vld [vmem:[#allocation2 + $0x1068] sm:$0xff]
    %v7658 = vld [vmem:[#allocation2 + $0x1070] sm:$0xff]
    %v7659 = vld [vmem:[#allocation2 + $0x1078] sm:$0xf]
    %v7660 = vld [vmem:[#allocation2 + $0x107c] sm:$0xff]
    %v7661 = vld [vmem:[#allocation2 + $0x1084] sm:$0xff]
    %v7662 = vld [vmem:[#allocation2 + $0x108c] sm:$0xf]
    %v7663 = vld [vmem:[#allocation2 + $0x1090] sm:$0xff]
    %v7664 = vld [vmem:[#allocation2 + $0x1098] sm:$0xff]
    %v7665 = vld [vmem:[#allocation2 + $0x10a0] sm:$0xf]
    %v7666 = vld [vmem:[#allocation2 + $0x10a4] sm:$0xff]
    %v7667 = vld [vmem:[#allocation2 + $0x10ac] sm:$0xff]
    %v7668 = vld [vmem:[#allocation2 + $0x10b4] sm:$0xf]
    %v7669 = vld [vmem:[#allocation2 + $0x10b8] sm:$0xff]
    %v7670 = vld [vmem:[#allocation2 + $0x10c0] sm:$0xff]
    %v7671 = vld [vmem:[#allocation2 + $0x10c8] sm:$0xf]
    %v7672 = vld [vmem:[#allocation2 + $0x10cc] sm:$0xff]
    %v7673 = vld [vmem:[#allocation2 + $0x10d4] sm:$0xff]
    %v7674 = vld [vmem:[#allocation2 + $0x10dc] sm:$0xf]
    %v7675 = vld [vmem:[#allocation2 + $0x10e0] sm:$0xff]
    %v7676 = vld [vmem:[#allocation2 + $0x10e8] sm:$0xff]
    %v7677 = vld [vmem:[#allocation2 + $0x10f0] sm:$0xf]
    %v7678 = vld [vmem:[#allocation2 + $0x10f4] sm:$0xff]
    %v7679 = vld [vmem:[#allocation2 + $0x10fc] sm:$0xff]
    %v7680 = vld [vmem:[#allocation2 + $0x1104] sm:$0xf]
    %v7681 = vld [vmem:[#allocation2 + $0x1108] sm:$0xff]
    %v7682 = vld [vmem:[#allocation2 + $0x1110] sm:$0xff]
    %v7683 = vld [vmem:[#allocation2 + $0x1118] sm:$0xf]
    %v7684 = vld [vmem:[#allocation2 + $0x111c] sm:$0xff]
    %v7685 = vld [vmem:[#allocation2 + $0x1124] sm:$0xff]
    %v7686 = vld [vmem:[#allocation2 + $0x112c] sm:$0xf]
    %v7687 = vld [vmem:[#allocation2 + $0x1130] sm:$0xff]
    %v7688 = vld [vmem:[#allocation2 + $0x1138] sm:$0xff]
    %v7689 = vld [vmem:[#allocation2 + $0x1140] sm:$0xf]
    %v7690 = vld [vmem:[#allocation2 + $0x1144] sm:$0xff]
    %v7691 = vld [vmem:[#allocation2 + $0x114c] sm:$0xff]
    %v7692 = vld [vmem:[#allocation2 + $0x1154] sm:$0xf]
    %v7693 = vld [vmem:[#allocation2 + $0x1158] sm:$0xff]
    %v7694 = vld [vmem:[#allocation2 + $0x1160] sm:$0xff]
    %v7695 = vld [vmem:[#allocation2 + $0x1168] sm:$0xf]
    %v7696 = vld [vmem:[#allocation2 + $0x116c] sm:$0xff]
    %v7697 = vld [vmem:[#allocation2 + $0x1174] sm:$0xff]
    %v7698 = vld [vmem:[#allocation2 + $0x117c] sm:$0xf]
    %v7715 = vunpack.c.l.b16 %v7587
    %v7716 = vunpack.c.h.b16 %v7587
    %v7717 = vunpack.c.l.b16 %v7588
    %v7718 = vunpack.c.h.b16 %v7588
    %v7719 = vunpack.c.l.b16 %v7589
    %v7720 = vunpack.c.h.b16 %v7589
    %v7721 = vunpack.c.l.b16 %v7590
    %v7722 = vunpack.c.h.b16 %v7590
    %v7723 = vunpack.c.l.b16 %v7591
    %v7724 = vunpack.c.h.b16 %v7591
    %v7725 = vunpack.c.l.b16 %v7592
    %v7726 = vunpack.c.h.b16 %v7592
    %v7727 = vunpack.c.l.b16 %v7593
    %v7728 = vunpack.c.h.b16 %v7593
    %v7729 = vunpack.c.l.b16 %v7594
    %v7730 = vunpack.c.h.b16 %v7594
    %v7731 = vunpack.c.l.b16 %v7595
    %v7732 = vunpack.c.h.b16 %v7595
    %v7733 = vunpack.c.l.b16 %v7596
    %v7734 = vunpack.c.h.b16 %v7596
    %v7735 = vunpack.c.l.b16 %v7597
    %v7736 = vunpack.c.h.b16 %v7597
    %v7737 = vunpack.c.l.b16 %v7598
    %v7738 = vunpack.c.h.b16 %v7598
    %v7739 = vunpack.c.l.b16 %v7599
    %v7740 = vunpack.c.h.b16 %v7599
    %v7741 = vunpack.c.l.b16 %v7600
    %v7742 = vunpack.c.h.b16 %v7600
    %v7743 = vunpack.c.l.b16 %v7601
    %v7744 = vunpack.c.h.b16 %v7601
    %v7745 = vunpack.c.l.b16 %v7602
    %v7746 = vunpack.c.h.b16 %v7602
    %v7747 = vpack.c.b16 %v7717, %v7715
    %v7748 = vpack.c.b16 %v7718, %v7716
    %v7749 = vpack.c.b16 %v7721, %v7719
    %v7750 = vpack.c.b16 %v7722, %v7720
    %v7751 = vpack.c.b16 %v7725, %v7723
    %v7752 = vpack.c.b16 %v7726, %v7724
    %v7753 = vpack.c.b16 %v7729, %v7727
    %v7754 = vpack.c.b16 %v7730, %v7728
    %v7755 = vpack.c.b16 %v7733, %v7731
    %v7756 = vpack.c.b16 %v7734, %v7732
    %v7757 = vpack.c.b16 %v7737, %v7735
    %v7758 = vpack.c.b16 %v7738, %v7736
    %v7759 = vpack.c.b16 %v7741, %v7739
    %v7760 = vpack.c.b16 %v7742, %v7740
    %v7761 = vpack.c.b16 %v7745, %v7743
    %v7762 = vpack.c.b16 %v7746, %v7744
    %v7875 = vunpack.c.l.b16 %v7603
    %v7876 = vunpack.c.h.b16 %v7603
    %v7877 = vunpack.c.l.b16 %v7604
    %v7878 = vunpack.c.h.b16 %v7604
    %v7879 = vunpack.c.l.b16 %v7605
    %v7880 = vunpack.c.l.b16 %v7606
    %v7881 = vunpack.c.h.b16 %v7606
    %v7882 = vunpack.c.l.b16 %v7607
    %v7883 = vunpack.c.h.b16 %v7607
    %v7884 = vunpack.c.l.b16 %v7608
    %v7885 = vunpack.c.l.b16 %v7609
    %v7886 = vunpack.c.h.b16 %v7609
    %v7887 = vunpack.c.l.b16 %v7610
    %v7888 = vunpack.c.h.b16 %v7610
    %v7889 = vunpack.c.l.b16 %v7611
    %v7890 = vunpack.c.l.b16 %v7612
    %v7891 = vunpack.c.h.b16 %v7612
    %v7892 = vunpack.c.l.b16 %v7613
    %v7893 = vunpack.c.h.b16 %v7613
    %v7894 = vunpack.c.l.b16 %v7614
    %v7895 = vunpack.c.l.b16 %v7615
    %v7896 = vunpack.c.h.b16 %v7615
    %v7897 = vunpack.c.l.b16 %v7616
    %v7898 = vunpack.c.h.b16 %v7616
    %v7899 = vunpack.c.l.b16 %v7617
    %v7900 = vunpack.c.l.b16 %v7618
    %v7901 = vunpack.c.h.b16 %v7618
    %v7902 = vunpack.c.l.b16 %v7619
    %v7903 = vunpack.c.h.b16 %v7619
    %v7904 = vunpack.c.l.b16 %v7620
    %v7905 = vunpack.c.l.b16 %v7621
    %v7906 = vunpack.c.h.b16 %v7621
    %v7907 = vunpack.c.l.b16 %v7622
    %v7908 = vunpack.c.h.b16 %v7622
    %v7909 = vunpack.c.l.b16 %v7623
    %v7910 = vunpack.c.l.b16 %v7624
    %v7911 = vunpack.c.h.b16 %v7624
    %v7912 = vunpack.c.l.b16 %v7625
    %v7913 = vunpack.c.h.b16 %v7625
    %v7914 = vunpack.c.l.b16 %v7626
    %v7915 = vunpack.c.l.b16 %v7627
    %v7916 = vunpack.c.h.b16 %v7627
    %v7917 = vunpack.c.l.b16 %v7628
    %v7918 = vunpack.c.h.b16 %v7628
    %v7919 = vunpack.c.l.b16 %v7629
    %v7920 = vunpack.c.l.b16 %v7630
    %v7921 = vunpack.c.h.b16 %v7630
    %v7922 = vunpack.c.l.b16 %v7631
    %v7923 = vunpack.c.h.b16 %v7631
    %v7924 = vunpack.c.l.b16 %v7632
    %v7925 = vunpack.c.l.b16 %v7633
    %v7926 = vunpack.c.h.b16 %v7633
    %v7927 = vunpack.c.l.b16 %v7634
    %v7928 = vunpack.c.h.b16 %v7634
    %v7929 = vunpack.c.l.b16 %v7635
    %v7930 = vunpack.c.l.b16 %v7636
    %v7931 = vunpack.c.h.b16 %v7636
    %v7932 = vunpack.c.l.b16 %v7637
    %v7933 = vunpack.c.h.b16 %v7637
    %v7934 = vunpack.c.l.b16 %v7638
    %v7935 = vunpack.c.l.b16 %v7639
    %v7936 = vunpack.c.h.b16 %v7639
    %v7937 = vunpack.c.l.b16 %v7640
    %v7938 = vunpack.c.h.b16 %v7640
    %v7939 = vunpack.c.l.b16 %v7641
    %v7940 = vunpack.c.l.b16 %v7642
    %v7941 = vunpack.c.h.b16 %v7642
    %v7942 = vunpack.c.l.b16 %v7643
    %v7943 = vunpack.c.h.b16 %v7643
    %v7944 = vunpack.c.l.b16 %v7644
    %v7945 = vunpack.c.l.b16 %v7645
    %v7946 = vunpack.c.h.b16 %v7645
    %v7947 = vunpack.c.l.b16 %v7646
    %v7948 = vunpack.c.h.b16 %v7646
    %v7949 = vunpack.c.l.b16 %v7647
    %v7950 = vunpack.c.l.b16 %v7648
    %v7951 = vunpack.c.h.b16 %v7648
    %v7952 = vunpack.c.l.b16 %v7649
    %v7953 = vunpack.c.h.b16 %v7649
    %v7954 = vunpack.c.l.b16 %v7650
    %v7955 = vunpack.c.l.b16 %v7651
    %v7956 = vunpack.c.h.b16 %v7651
    %v7957 = vunpack.c.l.b16 %v7652
    %v7958 = vunpack.c.h.b16 %v7652
    %v7959 = vunpack.c.l.b16 %v7653
    %v7960 = vunpack.c.l.b16 %v7654
    %v7961 = vunpack.c.h.b16 %v7654
    %v7962 = vunpack.c.l.b16 %v7655
    %v7963 = vunpack.c.h.b16 %v7655
    %v7964 = vunpack.c.l.b16 %v7656
    %v7965 = vunpack.c.l.b16 %v7657
    %v7966 = vunpack.c.h.b16 %v7657
    %v7967 = vunpack.c.l.b16 %v7658
    %v7968 = vunpack.c.h.b16 %v7658
    %v7969 = vunpack.c.l.b16 %v7659
    %v7970 = vunpack.c.l.b16 %v7660
    %v7971 = vunpack.c.h.b16 %v7660
    %v7972 = vunpack.c.l.b16 %v7661
    %v7973 = vunpack.c.h.b16 %v7661
    %v7974 = vunpack.c.l.b16 %v7662
    %v7975 = vunpack.c.l.b16 %v7663
    %v7976 = vunpack.c.h.b16 %v7663
    %v7977 = vunpack.c.l.b16 %v7664
    %v7978 = vunpack.c.h.b16 %v7664
    %v7979 = vunpack.c.l.b16 %v7665
    %v7980 = vunpack.c.l.b16 %v7666
    %v7981 = vunpack.c.h.b16 %v7666
    %v7982 = vunpack.c.l.b16 %v7667
    %v7983 = vunpack.c.h.b16 %v7667
    %v7984 = vunpack.c.l.b16 %v7668
    %v7985 = vunpack.c.l.b16 %v7669
    %v7986 = vunpack.c.h.b16 %v7669
    %v7987 = vunpack.c.l.b16 %v7670
    %v7988 = vunpack.c.h.b16 %v7670
    %v7989 = vunpack.c.l.b16 %v7671
    %v7990 = vunpack.c.l.b16 %v7672
    %v7991 = vunpack.c.h.b16 %v7672
    %v7992 = vunpack.c.l.b16 %v7673
    %v7993 = vunpack.c.h.b16 %v7673
    %v7994 = vunpack.c.l.b16 %v7674
    %v7995 = vunpack.c.l.b16 %v7675
    %v7996 = vunpack.c.h.b16 %v7675
    %v7997 = vunpack.c.l.b16 %v7676
    %v7998 = vunpack.c.h.b16 %v7676
    %v7999 = vunpack.c.l.b16 %v7677
    %v8000 = vunpack.c.l.b16 %v7678
    %v8001 = vunpack.c.h.b16 %v7678
    %v8002 = vunpack.c.l.b16 %v7679
    %v8003 = vunpack.c.h.b16 %v7679
    %v8004 = vunpack.c.l.b16 %v7680
    %v8005 = vunpack.c.l.b16 %v7681
    %v8006 = vunpack.c.h.b16 %v7681
    %v8007 = vunpack.c.l.b16 %v7682
    %v8008 = vunpack.c.h.b16 %v7682
    %v8009 = vunpack.c.l.b16 %v7683
    %v8010 = vunpack.c.l.b16 %v7684
    %v8011 = vunpack.c.h.b16 %v7684
    %v8012 = vunpack.c.l.b16 %v7685
    %v8013 = vunpack.c.h.b16 %v7685
    %v8014 = vunpack.c.l.b16 %v7686
    %v8015 = vunpack.c.l.b16 %v7687
    %v8016 = vunpack.c.h.b16 %v7687
    %v8017 = vunpack.c.l.b16 %v7688
    %v8018 = vunpack.c.h.b16 %v7688
    %v8019 = vunpack.c.l.b16 %v7689
    %v8020 = vunpack.c.l.b16 %v7690
    %v8021 = vunpack.c.h.b16 %v7690
    %v8022 = vunpack.c.l.b16 %v7691
    %v8023 = vunpack.c.h.b16 %v7691
    %v8024 = vunpack.c.l.b16 %v7692
    %v8025 = vunpack.c.l.b16 %v7693
    %v8026 = vunpack.c.h.b16 %v7693
    %v8027 = vunpack.c.l.b16 %v7694
    %v8028 = vunpack.c.h.b16 %v7694
    %v8029 = vunpack.c.l.b16 %v7695
    %v8030 = vunpack.c.l.b16 %v7696
    %v8031 = vunpack.c.h.b16 %v7696
    %v8032 = vunpack.c.l.b16 %v7697
    %v8033 = vunpack.c.h.b16 %v7697
    %v8034 = vunpack.c.l.b16 %v7698
    %v8035 = vpack.c.b16 %v7880, %v7875
    %v8036 = vpack.c.b16 %v7881, %v7876
    %v8037 = vpack.c.b16 %v7882, %v7877
    %v8038 = vpack.c.b16 %v7883, %v7878
    %v8039 = vpack.c.b16 %v7884, %v7879
    %v8040 = vpack.c.b16 %v7890, %v7885
    %v8041 = vpack.c.b16 %v7891, %v7886
    %v8042 = vpack.c.b16 %v7892, %v7887
    %v8043 = vpack.c.b16 %v7893, %v7888
    %v8044 = vpack.c.b16 %v7894, %v7889
    %v8045 = vpack.c.b16 %v7900, %v7895
    %v8046 = vpack.c.b16 %v7901, %v7896
    %v8047 = vpack.c.b16 %v7902, %v7897
    %v8048 = vpack.c.b16 %v7903, %v7898
    %v8049 = vpack.c.b16 %v7904, %v7899
    %v8050 = vpack.c.b16 %v7910, %v7905
    %v8051 = vpack.c.b16 %v7911, %v7906
    %v8052 = vpack.c.b16 %v7912, %v7907
    %v8053 = vpack.c.b16 %v7913, %v7908
    %v8054 = vpack.c.b16 %v7914, %v7909
    %v8055 = vpack.c.b16 %v7920, %v7915
    %v8056 = vpack.c.b16 %v7921, %v7916
    %v8057 = vpack.c.b16 %v7922, %v7917
    %v8058 = vpack.c.b16 %v7923, %v7918
    %v8059 = vpack.c.b16 %v7924, %v7919
    %v8060 = vpack.c.b16 %v7930, %v7925
    %v8061 = vpack.c.b16 %v7931, %v7926
    %v8062 = vpack.c.b16 %v7932, %v7927
    %v8063 = vpack.c.b16 %v7933, %v7928
    %v8064 = vpack.c.b16 %v7934, %v7929
    %v8065 = vpack.c.b16 %v7940, %v7935
    %v8066 = vpack.c.b16 %v7941, %v7936
    %v8067 = vpack.c.b16 %v7942, %v7937
    %v8068 = vpack.c.b16 %v7943, %v7938
    %v8069 = vpack.c.b16 %v7944, %v7939
    %v8070 = vpack.c.b16 %v7950, %v7945
    %v8071 = vpack.c.b16 %v7951, %v7946
    %v8072 = vpack.c.b16 %v7952, %v7947
    %v8073 = vpack.c.b16 %v7953, %v7948
    %v8074 = vpack.c.b16 %v7954, %v7949
    %v8075 = vpack.c.b16 %v7960, %v7955
    %v8076 = vpack.c.b16 %v7961, %v7956
    %v8077 = vpack.c.b16 %v7962, %v7957
    %v8078 = vpack.c.b16 %v7963, %v7958
    %v8079 = vpack.c.b16 %v7964, %v7959
    %v8080 = vpack.c.b16 %v7970, %v7965
    %v8081 = vpack.c.b16 %v7971, %v7966
    %v8082 = vpack.c.b16 %v7972, %v7967
    %v8083 = vpack.c.b16 %v7973, %v7968
    %v8084 = vpack.c.b16 %v7974, %v7969
    %v8085 = vpack.c.b16 %v7980, %v7975
    %v8086 = vpack.c.b16 %v7981, %v7976
    %v8087 = vpack.c.b16 %v7982, %v7977
    %v8088 = vpack.c.b16 %v7983, %v7978
    %v8089 = vpack.c.b16 %v7984, %v7979
    %v8090 = vpack.c.b16 %v7990, %v7985
    %v8091 = vpack.c.b16 %v7991, %v7986
    %v8092 = vpack.c.b16 %v7992, %v7987
    %v8093 = vpack.c.b16 %v7993, %v7988
    %v8094 = vpack.c.b16 %v7994, %v7989
    %v8095 = vpack.c.b16 %v8000, %v7995
    %v8096 = vpack.c.b16 %v8001, %v7996
    %v8097 = vpack.c.b16 %v8002, %v7997
    %v8098 = vpack.c.b16 %v8003, %v7998
    %v8099 = vpack.c.b16 %v8004, %v7999
    %v8100 = vpack.c.b16 %v8010, %v8005
    %v8101 = vpack.c.b16 %v8011, %v8006
    %v8102 = vpack.c.b16 %v8012, %v8007
    %v8103 = vpack.c.b16 %v8013, %v8008
    %v8104 = vpack.c.b16 %v8014, %v8009
    %v8105 = vpack.c.b16 %v8020, %v8015
    %v8106 = vpack.c.b16 %v8021, %v8016
    %v8107 = vpack.c.b16 %v8022, %v8017
    %v8108 = vpack.c.b16 %v8023, %v8018
    %v8109 = vpack.c.b16 %v8024, %v8019
    %v8110 = vpack.c.b16 %v8030, %v8025
    %v8111 = vpack.c.b16 %v8031, %v8026
    %v8112 = vpack.c.b16 %v8032, %v8027
    %v8113 = vpack.c.b16 %v8033, %v8028
    %v8114 = vpack.c.b16 %v8034, %v8029
    %8195 = vmatpush.bf16.msra.mxu0 %v8070
    %8196 = vmatpush.bf16.msra.mxu0 %v8065
    %8197 = vmatpush.bf16.msra.mxu0 %v8060
    %8198 = vmatpush.bf16.msra.mxu0 %v8055
    %8199 = vmatpush.bf16.msra.mxu0 %v8050
    %8200 = vmatpush.bf16.msra.mxu0 %v8045
    %8201 = vmatpush.bf16.msra.mxu0 %v8040
    %8202 = vmatpush.bf16.msra.mxu0 %v8035
    %8203 = vmatmul.bf16.gmra.mxu0 %v7747
    %v8204 = vpop.f32.mrf.mxu0
    %v8205 = vadd.f32 0.0, %v8204
    %v8206 = vpop.f32.mrf.mxu0
    %v8207 = vadd.f32 0.0, %v8206
    %8208 = vmatmul.bf16.gmra.mxu0 %v7749
    %v8209 = vpop.f32.mrf.mxu0
    %v8210 = vadd.f32 0.0, %v8209
    %v8211 = vpop.f32.mrf.mxu0
    %v8212 = vadd.f32 0.0, %v8211
    %8213 = vmatmul.bf16.gmra.mxu0 %v7751
    %v8214 = vpop.f32.mrf.mxu0
    %v8215 = vadd.f32 0.0, %v8214
    %v8216 = vpop.f32.mrf.mxu0
    %v8217 = vadd.f32 0.0, %v8216
    %8218 = vmatmul.bf16.gmra.mxu0 %v7753
    %v8219 = vpop.f32.mrf.mxu0
    %v8220 = vadd.f32 0.0, %v8219
    %v8221 = vpop.f32.mrf.mxu0
    %v8222 = vadd.f32 0.0, %v8221
    %8223 = vmatmul.bf16.gmra.mxu0 %v7755
    %v8224 = vpop.f32.mrf.mxu0
    %v8225 = vadd.f32 0.0, %v8224
    %v8226 = vpop.f32.mrf.mxu0
    %v8227 = vadd.f32 0.0, %v8226
    %8228 = vmatmul.bf16.gmra.mxu0 %v7757
    %v8229 = vpop.f32.mrf.mxu0
    %v8230 = vadd.f32 0.0, %v8229
    %v8231 = vpop.f32.mrf.mxu0
    %v8232 = vadd.f32 0.0, %v8231
    %8233 = vmatmul.bf16.gmra.mxu0 %v7759
    %v8234 = vpop.f32.mrf.mxu0
    %v8235 = vadd.f32 0.0, %v8234
    %v8236 = vpop.f32.mrf.mxu0
    %v8237 = vadd.f32 0.0, %v8236
    %8238 = vmatmul.bf16.gmra.mxu0 %v7761
    %v8239 = vpop.f32.mrf.mxu0
    %v8240 = vadd.f32 0.0, %v8239
    %v8241 = vpop.f32.mrf.mxu0
    %v8242 = vadd.f32 0.0, %v8241
    %8243 = vdwg.mxu0
    %8244 = vmatpush.bf16.msra.mxu0 %v8110
    %8245 = vmatpush.bf16.msra.mxu0 %v8105
    %8246 = vmatpush.bf16.msra.mxu0 %v8100
    %8247 = vmatpush.bf16.msra.mxu0 %v8095
    %8248 = vmatpush.bf16.msra.mxu0 %v8090
    %8249 = vmatpush.bf16.msra.mxu0 %v8085
    %8250 = vmatpush.bf16.msra.mxu0 %v8080
    %8251 = vmatpush.bf16.msra.mxu0 %v8075
    %8252 = vmatmul.bf16.gmra.mxu0 %v7748
    %v8253 = vpop.f32.mrf.mxu0
    %v8254 = vadd.f32 %v8205, %v8253
    %v8255 = vpop.f32.mrf.mxu0
    %v8256 = vadd.f32 %v8207, %v8255
    %8257 = vmatmul.bf16.gmra.mxu0 %v7750
    %v8258 = vpop.f32.mrf.mxu0
    %v8259 = vadd.f32 %v8210, %v8258
    %v8260 = vpop.f32.mrf.mxu0
    %v8261 = vadd.f32 %v8212, %v8260
    %8262 = vmatmul.bf16.gmra.mxu0 %v7752
    %v8263 = vpop.f32.mrf.mxu0
    %v8264 = vadd.f32 %v8215, %v8263
    %v8265 = vpop.f32.mrf.mxu0
    %v8266 = vadd.f32 %v8217, %v8265
    %8267 = vmatmul.bf16.gmra.mxu0 %v7754
    %v8268 = vpop.f32.mrf.mxu0
    %v8269 = vadd.f32 %v8220, %v8268
    %v8270 = vpop.f32.mrf.mxu0
    %v8271 = vadd.f32 %v8222, %v8270
    %8272 = vmatmul.bf16.gmra.mxu0 %v7756
    %v8273 = vpop.f32.mrf.mxu0
    %v8274 = vadd.f32 %v8225, %v8273
    %v8275 = vpop.f32.mrf.mxu0
    %v8276 = vadd.f32 %v8227, %v8275
    %8277 = vmatmul.bf16.gmra.mxu0 %v7758
    %v8278 = vpop.f32.mrf.mxu0
    %v8279 = vadd.f32 %v8230, %v8278
    %v8280 = vpop.f32.mrf.mxu0
    %v8281 = vadd.f32 %v8232, %v8280
    %8282 = vmatmul.bf16.gmra.mxu0 %v7760
    %v8283 = vpop.f32.mrf.mxu0
    %v8284 = vadd.f32 %v8235, %v8283
    %v8285 = vpop.f32.mrf.mxu0
    %v8286 = vadd.f32 %v8237, %v8285
    %8287 = vmatmul.bf16.gmra.mxu0 %v7762
    %v8288 = vpop.f32.mrf.mxu0
    %v8289 = vadd.f32 %v8240, %v8288
    %v8290 = vpop.f32.mrf.mxu0
    %v8291 = vadd.f32 %v8242, %v8290
    %8292 = vdwg.mxu0
    %8293 = vmatpush.bf16.msra.mxu0 %v8071
    %8294 = vmatpush.bf16.msra.mxu0 %v8066
    %8295 = vmatpush.bf16.msra.mxu0 %v8061
    %8296 = vmatpush.bf16.msra.mxu0 %v8056
    %8297 = vmatpush.bf16.msra.mxu0 %v8051
    %8298 = vmatpush.bf16.msra.mxu0 %v8046
    %8299 = vmatpush.bf16.msra.mxu0 %v8041
    %8300 = vmatpush.bf16.msra.mxu0 %v8036
    %8301 = vmatmul.bf16.gmra.mxu0 %v7747
    %v8302 = vpop.f32.mrf.mxu0
    %v8303 = vadd.f32 0.0, %v8302
    %v8304 = vpop.f32.mrf.mxu0
    %v8305 = vadd.f32 0.0, %v8304
    %8306 = vmatmul.bf16.gmra.mxu0 %v7749
    %v8307 = vpop.f32.mrf.mxu0
    %v8308 = vadd.f32 0.0, %v8307
    %v8309 = vpop.f32.mrf.mxu0
    %v8310 = vadd.f32 0.0, %v8309
    %8311 = vmatmul.bf16.gmra.mxu0 %v7751
    %v8312 = vpop.f32.mrf.mxu0
    %v8313 = vadd.f32 0.0, %v8312
    %v8314 = vpop.f32.mrf.mxu0
    %v8315 = vadd.f32 0.0, %v8314
    %8316 = vmatmul.bf16.gmra.mxu0 %v7753
    %v8317 = vpop.f32.mrf.mxu0
    %v8318 = vadd.f32 0.0, %v8317
    %v8319 = vpop.f32.mrf.mxu0
    %v8320 = vadd.f32 0.0, %v8319
    %8321 = vmatmul.bf16.gmra.mxu0 %v7755
    %v8322 = vpop.f32.mrf.mxu0
    %v8323 = vadd.f32 0.0, %v8322
    %v8324 = vpop.f32.mrf.mxu0
    %v8325 = vadd.f32 0.0, %v8324
    %8326 = vmatmul.bf16.gmra.mxu0 %v7757
    %v8327 = vpop.f32.mrf.mxu0
    %v8328 = vadd.f32 0.0, %v8327
    %v8329 = vpop.f32.mrf.mxu0
    %v8330 = vadd.f32 0.0, %v8329
    %8331 = vmatmul.bf16.gmra.mxu0 %v7759
    %v8332 = vpop.f32.mrf.mxu0
    %v8333 = vadd.f32 0.0, %v8332
    %v8334 = vpop.f32.mrf.mxu0
    %v8335 = vadd.f32 0.0, %v8334
    %8336 = vmatmul.bf16.gmra.mxu0 %v7761
    %v8337 = vpop.f32.mrf.mxu0
    %v8338 = vadd.f32 0.0, %v8337
    %v8339 = vpop.f32.mrf.mxu0
    %v8340 = vadd.f32 0.0, %v8339
    %8341 = vdwg.mxu0
    %8342 = vmatpush.bf16.msra.mxu0 %v8111
    %8343 = vmatpush.bf16.msra.mxu0 %v8106
    %8344 = vmatpush.bf16.msra.mxu0 %v8101
    %8345 = vmatpush.bf16.msra.mxu0 %v8096
    %8346 = vmatpush.bf16.msra.mxu0 %v8091
    %8347 = vmatpush.bf16.msra.mxu0 %v8086
    %8348 = vmatpush.bf16.msra.mxu0 %v8081
    %8349 = vmatpush.bf16.msra.mxu0 %v8076
    %8350 = vmatmul.bf16.gmra.mxu0 %v7748
    %v8351 = vpop.f32.mrf.mxu0
    %v8352 = vadd.f32 %v8303, %v8351
    %v8353 = vpop.f32.mrf.mxu0
    %v8354 = vadd.f32 %v8305, %v8353
    %8355 = vmatmul.bf16.gmra.mxu0 %v7750
    %v8356 = vpop.f32.mrf.mxu0
    %v8357 = vadd.f32 %v8308, %v8356
    %v8358 = vpop.f32.mrf.mxu0
    %v8359 = vadd.f32 %v8310, %v8358
    %8360 = vmatmul.bf16.gmra.mxu0 %v7752
    %v8361 = vpop.f32.mrf.mxu0
    %v8362 = vadd.f32 %v8313, %v8361
    %v8363 = vpop.f32.mrf.mxu0
    %v8364 = vadd.f32 %v8315, %v8363
    %8365 = vmatmul.bf16.gmra.mxu0 %v7754
    %v8366 = vpop.f32.mrf.mxu0
    %v8367 = vadd.f32 %v8318, %v8366
    %v8368 = vpop.f32.mrf.mxu0
    %v8369 = vadd.f32 %v8320, %v8368
    %8370 = vmatmul.bf16.gmra.mxu0 %v7756
    %v8371 = vpop.f32.mrf.mxu0
    %v8372 = vadd.f32 %v8323, %v8371
    %v8373 = vpop.f32.mrf.mxu0
    %v8374 = vadd.f32 %v8325, %v8373
    %8375 = vmatmul.bf16.gmra.mxu0 %v7758
    %v8376 = vpop.f32.mrf.mxu0
    %v8377 = vadd.f32 %v8328, %v8376
    %v8378 = vpop.f32.mrf.mxu0
    %v8379 = vadd.f32 %v8330, %v8378
    %8380 = vmatmul.bf16.gmra.mxu0 %v7760
    %v8381 = vpop.f32.mrf.mxu0
    %v8382 = vadd.f32 %v8333, %v8381
    %v8383 = vpop.f32.mrf.mxu0
    %v8384 = vadd.f32 %v8335, %v8383
    %8385 = vmatmul.bf16.gmra.mxu0 %v7762
    %v8386 = vpop.f32.mrf.mxu0
    %v8387 = vadd.f32 %v8338, %v8386
    %v8388 = vpop.f32.mrf.mxu0
    %v8389 = vadd.f32 %v8340, %v8388
    %8390 = vdwg.mxu0
    %8391 = vmatpush.bf16.msra.mxu0 %v8072
    %8392 = vmatpush.bf16.msra.mxu0 %v8067
    %8393 = vmatpush.bf16.msra.mxu0 %v8062
    %8394 = vmatpush.bf16.msra.mxu0 %v8057
    %8395 = vmatpush.bf16.msra.mxu0 %v8052
    %8396 = vmatpush.bf16.msra.mxu0 %v8047
    %8397 = vmatpush.bf16.msra.mxu0 %v8042
    %8398 = vmatpush.bf16.msra.mxu0 %v8037
    %8399 = vmatmul.bf16.gmra.mxu0 %v7747
    %v8400 = vpop.f32.mrf.mxu0
    %v8401 = vadd.f32 0.0, %v8400
    %v8402 = vpop.f32.mrf.mxu0
    %v8403 = vadd.f32 0.0, %v8402
    %8404 = vmatmul.bf16.gmra.mxu0 %v7749
    %v8405 = vpop.f32.mrf.mxu0
    %v8406 = vadd.f32 0.0, %v8405
    %v8407 = vpop.f32.mrf.mxu0
    %v8408 = vadd.f32 0.0, %v8407
    %8409 = vmatmul.bf16.gmra.mxu0 %v7751
    %v8410 = vpop.f32.mrf.mxu0
    %v8411 = vadd.f32 0.0, %v8410
    %v8412 = vpop.f32.mrf.mxu0
    %v8413 = vadd.f32 0.0, %v8412
    %8414 = vmatmul.bf16.gmra.mxu0 %v7753
    %v8415 = vpop.f32.mrf.mxu0
    %v8416 = vadd.f32 0.0, %v8415
    %v8417 = vpop.f32.mrf.mxu0
    %v8418 = vadd.f32 0.0, %v8417
    %8419 = vmatmul.bf16.gmra.mxu0 %v7755
    %v8420 = vpop.f32.mrf.mxu0
    %v8421 = vadd.f32 0.0, %v8420
    %v8422 = vpop.f32.mrf.mxu0
    %v8423 = vadd.f32 0.0, %v8422
    %8424 = vmatmul.bf16.gmra.mxu0 %v7757
    %v8425 = vpop.f32.mrf.mxu0
    %v8426 = vadd.f32 0.0, %v8425
    %v8427 = vpop.f32.mrf.mxu0
    %v8428 = vadd.f32 0.0, %v8427
    %8429 = vmatmul.bf16.gmra.mxu0 %v7759
    %v8430 = vpop.f32.mrf.mxu0
    %v8431 = vadd.f32 0.0, %v8430
    %v8432 = vpop.f32.mrf.mxu0
    %v8433 = vadd.f32 0.0, %v8432
    %8434 = vmatmul.bf16.gmra.mxu0 %v7761
    %v8435 = vpop.f32.mrf.mxu0
    %v8436 = vadd.f32 0.0, %v8435
    %v8437 = vpop.f32.mrf.mxu0
    %v8438 = vadd.f32 0.0, %v8437
    %8439 = vdwg.mxu0
    %8440 = vmatpush.bf16.msra.mxu0 %v8112
    %8441 = vmatpush.bf16.msra.mxu0 %v8107
    %8442 = vmatpush.bf16.msra.mxu0 %v8102
    %8443 = vmatpush.bf16.msra.mxu0 %v8097
    %8444 = vmatpush.bf16.msra.mxu0 %v8092
    %8445 = vmatpush.bf16.msra.mxu0 %v8087
    %8446 = vmatpush.bf16.msra.mxu0 %v8082
    %8447 = vmatpush.bf16.msra.mxu0 %v8077
    %8448 = vmatmul.bf16.gmra.mxu0 %v7748
    %v8449 = vpop.f32.mrf.mxu0
    %v8450 = vadd.f32 %v8401, %v8449
    %v8451 = vpop.f32.mrf.mxu0
    %v8452 = vadd.f32 %v8403, %v8451
    %8453 = vmatmul.bf16.gmra.mxu0 %v7750
    %v8454 = vpop.f32.mrf.mxu0
    %v8455 = vadd.f32 %v8406, %v8454
    %v8456 = vpop.f32.mrf.mxu0
    %v8457 = vadd.f32 %v8408, %v8456
    %8458 = vmatmul.bf16.gmra.mxu0 %v7752
    %v8459 = vpop.f32.mrf.mxu0
    %v8460 = vadd.f32 %v8411, %v8459
    %v8461 = vpop.f32.mrf.mxu0
    %v8462 = vadd.f32 %v8413, %v8461
    %8463 = vmatmul.bf16.gmra.mxu0 %v7754
    %v8464 = vpop.f32.mrf.mxu0
    %v8465 = vadd.f32 %v8416, %v8464
    %v8466 = vpop.f32.mrf.mxu0
    %v8467 = vadd.f32 %v8418, %v8466
    %8468 = vmatmul.bf16.gmra.mxu0 %v7756
    %v8469 = vpop.f32.mrf.mxu0
    %v8470 = vadd.f32 %v8421, %v8469
    %v8471 = vpop.f32.mrf.mxu0
    %v8472 = vadd.f32 %v8423, %v8471
    %8473 = vmatmul.bf16.gmra.mxu0 %v7758
    %v8474 = vpop.f32.mrf.mxu0
    %v8475 = vadd.f32 %v8426, %v8474
    %v8476 = vpop.f32.mrf.mxu0
    %v8477 = vadd.f32 %v8428, %v8476
    %8478 = vmatmul.bf16.gmra.mxu0 %v7760
    %v8479 = vpop.f32.mrf.mxu0
    %v8480 = vadd.f32 %v8431, %v8479
    %v8481 = vpop.f32.mrf.mxu0
    %v8482 = vadd.f32 %v8433, %v8481
    %8483 = vmatmul.bf16.gmra.mxu0 %v7762
    %v8484 = vpop.f32.mrf.mxu0
    %v8485 = vadd.f32 %v8436, %v8484
    %v8486 = vpop.f32.mrf.mxu0
    %v8487 = vadd.f32 %v8438, %v8486
    %8488 = vdwg.mxu0
    %8489 = vmatpush.bf16.msra.mxu0 %v8073
    %8490 = vmatpush.bf16.msra.mxu0 %v8068
    %8491 = vmatpush.bf16.msra.mxu0 %v8063
    %8492 = vmatpush.bf16.msra.mxu0 %v8058
    %8493 = vmatpush.bf16.msra.mxu0 %v8053
    %8494 = vmatpush.bf16.msra.mxu0 %v8048
    %8495 = vmatpush.bf16.msra.mxu0 %v8043
    %8496 = vmatpush.bf16.msra.mxu0 %v8038
    %8497 = vmatmul.bf16.gmra.mxu0 %v7747
    %v8498 = vpop.f32.mrf.mxu0
    %v8499 = vadd.f32 0.0, %v8498
    %v8500 = vpop.f32.mrf.mxu0
    %v8501 = vadd.f32 0.0, %v8500
    %8502 = vmatmul.bf16.gmra.mxu0 %v7749
    %v8503 = vpop.f32.mrf.mxu0
    %v8504 = vadd.f32 0.0, %v8503
    %v8505 = vpop.f32.mrf.mxu0
    %v8506 = vadd.f32 0.0, %v8505
    %8507 = vmatmul.bf16.gmra.mxu0 %v7751
    %v8508 = vpop.f32.mrf.mxu0
    %v8509 = vadd.f32 0.0, %v8508
    %v8510 = vpop.f32.mrf.mxu0
    %v8511 = vadd.f32 0.0, %v8510
    %8512 = vmatmul.bf16.gmra.mxu0 %v7753
    %v8513 = vpop.f32.mrf.mxu0
    %v8514 = vadd.f32 0.0, %v8513
    %v8515 = vpop.f32.mrf.mxu0
    %v8516 = vadd.f32 0.0, %v8515
    %8517 = vmatmul.bf16.gmra.mxu0 %v7755
    %v8518 = vpop.f32.mrf.mxu0
    %v8519 = vadd.f32 0.0, %v8518
    %v8520 = vpop.f32.mrf.mxu0
    %v8521 = vadd.f32 0.0, %v8520
    %8522 = vmatmul.bf16.gmra.mxu0 %v7757
    %v8523 = vpop.f32.mrf.mxu0
    %v8524 = vadd.f32 0.0, %v8523
    %v8525 = vpop.f32.mrf.mxu0
    %v8526 = vadd.f32 0.0, %v8525
    %8527 = vmatmul.bf16.gmra.mxu0 %v7759
    %v8528 = vpop.f32.mrf.mxu0
    %v8529 = vadd.f32 0.0, %v8528
    %v8530 = vpop.f32.mrf.mxu0
    %v8531 = vadd.f32 0.0, %v8530
    %8532 = vmatmul.bf16.gmra.mxu0 %v7761
    %v8533 = vpop.f32.mrf.mxu0
    %v8534 = vadd.f32 0.0, %v8533
    %v8535 = vpop.f32.mrf.mxu0
    %v8536 = vadd.f32 0.0, %v8535
    %8537 = vdwg.mxu0
    %8538 = vmatpush.bf16.msra.mxu0 %v8113
    %8539 = vmatpush.bf16.msra.mxu0 %v8108
    %8540 = vmatpush.bf16.msra.mxu0 %v8103
    %8541 = vmatpush.bf16.msra.mxu0 %v8098
    %8542 = vmatpush.bf16.msra.mxu0 %v8093
    %8543 = vmatpush.bf16.msra.mxu0 %v8088
    %8544 = vmatpush.bf16.msra.mxu0 %v8083
    %8545 = vmatpush.bf16.msra.mxu0 %v8078
    %8546 = vmatmul.bf16.gmra.mxu0 %v7748
    %v8547 = vpop.f32.mrf.mxu0
    %v8548 = vadd.f32 %v8499, %v8547
    %v8549 = vpop.f32.mrf.mxu0
    %v8550 = vadd.f32 %v8501, %v8549
    %8551 = vmatmul.bf16.gmra.mxu0 %v7750
    %v8552 = vpop.f32.mrf.mxu0
    %v8553 = vadd.f32 %v8504, %v8552
    %v8554 = vpop.f32.mrf.mxu0
    %v8555 = vadd.f32 %v8506, %v8554
    %8556 = vmatmul.bf16.gmra.mxu0 %v7752
    %v8557 = vpop.f32.mrf.mxu0
    %v8558 = vadd.f32 %v8509, %v8557
    %v8559 = vpop.f32.mrf.mxu0
    %v8560 = vadd.f32 %v8511, %v8559
    %8561 = vmatmul.bf16.gmra.mxu0 %v7754
    %v8562 = vpop.f32.mrf.mxu0
    %v8563 = vadd.f32 %v8514, %v8562
    %v8564 = vpop.f32.mrf.mxu0
    %v8565 = vadd.f32 %v8516, %v8564
    %8566 = vmatmul.bf16.gmra.mxu0 %v7756
    %v8567 = vpop.f32.mrf.mxu0
    %v8568 = vadd.f32 %v8519, %v8567
    %v8569 = vpop.f32.mrf.mxu0
    %v8570 = vadd.f32 %v8521, %v8569
    %8571 = vmatmul.bf16.gmra.mxu0 %v7758
    %v8572 = vpop.f32.mrf.mxu0
    %v8573 = vadd.f32 %v8524, %v8572
    %v8574 = vpop.f32.mrf.mxu0
    %v8575 = vadd.f32 %v8526, %v8574
    %8576 = vmatmul.bf16.gmra.mxu0 %v7760
    %v8577 = vpop.f32.mrf.mxu0
    %v8578 = vadd.f32 %v8529, %v8577
    %v8579 = vpop.f32.mrf.mxu0
    %v8580 = vadd.f32 %v8531, %v8579
    %8581 = vmatmul.bf16.gmra.mxu0 %v7762
    %v8582 = vpop.f32.mrf.mxu0
    %v8583 = vadd.f32 %v8534, %v8582
    %v8584 = vpop.f32.mrf.mxu0
    %v8585 = vadd.f32 %v8536, %v8584
    %8586 = vdwg.mxu0
    %8587 = vmatpush.bf16.msra.mxu0 %v8074
    %8588 = vmatpush.bf16.msra.mxu0 %v8069
    %8589 = vmatpush.bf16.msra.mxu0 %v8064
    %8590 = vmatpush.bf16.msra.mxu0 %v8059
    %8591 = vmatpush.bf16.msra.mxu0 %v8054
    %8592 = vmatpush.bf16.msra.mxu0 %v8049
    %8593 = vmatpush.bf16.msra.mxu0 %v8044
    %8594 = vmatpush.bf16.msra.mxu0 %v8039
    %8595 = vmatmul.bf16.gmra.mxu0 %v7747
    %v8596 = vpop.f32.mrf.mxu0
    %v8597 = vadd.f32 0.0, %v8596
    %v8598 = vpop.f32.mrf.mxu0
    %v8599 = vadd.f32 0.0, %v8598
    %8600 = vmatmul.bf16.gmra.mxu0 %v7749
    %v8601 = vpop.f32.mrf.mxu0
    %v8602 = vadd.f32 0.0, %v8601
    %v8603 = vpop.f32.mrf.mxu0
    %v8604 = vadd.f32 0.0, %v8603
    %8605 = vmatmul.bf16.gmra.mxu0 %v7751
    %v8606 = vpop.f32.mrf.mxu0
    %v8607 = vadd.f32 0.0, %v8606
    %v8608 = vpop.f32.mrf.mxu0
    %v8609 = vadd.f32 0.0, %v8608
    %8610 = vmatmul.bf16.gmra.mxu0 %v7753
    %v8611 = vpop.f32.mrf.mxu0
    %v8612 = vadd.f32 0.0, %v8611
    %v8613 = vpop.f32.mrf.mxu0
    %v8614 = vadd.f32 0.0, %v8613
    %8615 = vmatmul.bf16.gmra.mxu0 %v7755
    %v8616 = vpop.f32.mrf.mxu0
    %v8617 = vadd.f32 0.0, %v8616
    %v8618 = vpop.f32.mrf.mxu0
    %v8619 = vadd.f32 0.0, %v8618
    %8620 = vmatmul.bf16.gmra.mxu0 %v7757
    %v8621 = vpop.f32.mrf.mxu0
    %v8622 = vadd.f32 0.0, %v8621
    %v8623 = vpop.f32.mrf.mxu0
    %v8624 = vadd.f32 0.0, %v8623
    %8625 = vmatmul.bf16.gmra.mxu0 %v7759
    %v8626 = vpop.f32.mrf.mxu0
    %v8627 = vadd.f32 0.0, %v8626
    %v8628 = vpop.f32.mrf.mxu0
    %v8629 = vadd.f32 0.0, %v8628
    %8630 = vmatmul.bf16.gmra.mxu0 %v7761
    %v8631 = vpop.f32.mrf.mxu0
    %v8632 = vadd.f32 0.0, %v8631
    %v8633 = vpop.f32.mrf.mxu0
    %v8634 = vadd.f32 0.0, %v8633
    %8635 = vdwg.mxu0
    %8636 = vmatpush.bf16.msra.mxu0 %v8114
    %8637 = vmatpush.bf16.msra.mxu0 %v8109
    %8638 = vmatpush.bf16.msra.mxu0 %v8104
    %8639 = vmatpush.bf16.msra.mxu0 %v8099
    %8640 = vmatpush.bf16.msra.mxu0 %v8094
    %8641 = vmatpush.bf16.msra.mxu0 %v8089
    %8642 = vmatpush.bf16.msra.mxu0 %v8084
    %8643 = vmatpush.bf16.msra.mxu0 %v8079
    %8644 = vmatmul.bf16.gmra.mxu0 %v7748
    %v8645 = vpop.f32.mrf.mxu0
    %v8646 = vadd.f32 %v8597, %v8645
    %v8647 = vpop.f32.mrf.mxu0
    %v8648 = vadd.f32 %v8599, %v8647
    %8649 = vmatmul.bf16.gmra.mxu0 %v7750
    %v8650 = vpop.f32.mrf.mxu0
    %v8651 = vadd.f32 %v8602, %v8650
    %v8652 = vpop.f32.mrf.mxu0
    %v8653 = vadd.f32 %v8604, %v8652
    %8654 = vmatmul.bf16.gmra.mxu0 %v7752
    %v8655 = vpop.f32.mrf.mxu0
    %v8656 = vadd.f32 %v8607, %v8655
    %v8657 = vpop.f32.mrf.mxu0
    %v8658 = vadd.f32 %v8609, %v8657
    %8659 = vmatmul.bf16.gmra.mxu0 %v7754
    %v8660 = vpop.f32.mrf.mxu0
    %v8661 = vadd.f32 %v8612, %v8660
    %v8662 = vpop.f32.mrf.mxu0
    %v8663 = vadd.f32 %v8614, %v8662
    %8664 = vmatmul.bf16.gmra.mxu0 %v7756
    %v8665 = vpop.f32.mrf.mxu0
    %v8666 = vadd.f32 %v8617, %v8665
    %v8667 = vpop.f32.mrf.mxu0
    %v8668 = vadd.f32 %v8619, %v8667
    %8669 = vmatmul.bf16.gmra.mxu0 %v7758
    %v8670 = vpop.f32.mrf.mxu0
    %v8671 = vadd.f32 %v8622, %v8670
    %v8672 = vpop.f32.mrf.mxu0
    %v8673 = vadd.f32 %v8624, %v8672
    %8674 = vmatmul.bf16.gmra.mxu0 %v7760
    %v8675 = vpop.f32.mrf.mxu0
    %v8676 = vadd.f32 %v8627, %v8675
    %v8677 = vpop.f32.mrf.mxu0
    %v8678 = vadd.f32 %v8629, %v8677
    %8679 = vmatmul.bf16.gmra.mxu0 %v7762
    %v8680 = vpop.f32.mrf.mxu0
    %v8681 = vadd.f32 %v8632, %v8680
    %v8682 = vpop.f32.mrf.mxu0
    %v8683 = vadd.f32 %v8634, %v8682
    %8684 = vdwg.mxu0
    %v8685 = vadd.f32 %v7506, %v8254
    %v8686 = vadd.f32 %v7507, %v8352
    %v8687 = vadd.f32 %v7508, %v8450
    %v8688 = vadd.f32 %v7509, %v8548
    %v8689 = vadd.f32 %v7510, %v8646
    %v8690 = vadd.f32 %v7511, %v8256
    %v8691 = vadd.f32 %v7512, %v8354
    %v8692 = vadd.f32 %v7513, %v8452
    %v8693 = vadd.f32 %v7514, %v8550
    %v8694 = vadd.f32 %v7515, %v8648
    %v8695 = vadd.f32 %v7516, %v8259
    %v8696 = vadd.f32 %v7517, %v8357
    %v8697 = vadd.f32 %v7518, %v8455
    %v8698 = vadd.f32 %v7519, %v8553
    %v8699 = vadd.f32 %v7520, %v8651
    %v8700 = vadd.f32 %v7521, %v8261
    %v8701 = vadd.f32 %v7522, %v8359
    %v8702 = vadd.f32 %v7523, %v8457
    %v8703 = vadd.f32 %v7524, %v8555
    %v8704 = vadd.f32 %v7525, %v8653
    %v8705 = vadd.f32 %v7526, %v8264
    %v8706 = vadd.f32 %v7527, %v8362
    %v8707 = vadd.f32 %v7528, %v8460
    %v8708 = vadd.f32 %v7529, %v8558
    %v8709 = vadd.f32 %v7530, %v8656
    %v8710 = vadd.f32 %v7531, %v8266
    %v8711 = vadd.f32 %v7532, %v8364
    %v8712 = vadd.f32 %v7533, %v8462
    %v8713 = vadd.f32 %v7534, %v8560
    %v8714 = vadd.f32 %v7535, %v8658
    %v8715 = vadd.f32 %v7536, %v8269
    %v8716 = vadd.f32 %v7537, %v8367
    %v8717 = vadd.f32 %v7538, %v8465
    %v8718 = vadd.f32 %v7539, %v8563
    %v8719 = vadd.f32 %v7540, %v8661
    %v8720 = vadd.f32 %v7541, %v8271
    %v8721 = vadd.f32 %v7542, %v8369
    %v8722 = vadd.f32 %v7543, %v8467
    %v8723 = vadd.f32 %v7544, %v8565
    %v8724 = vadd.f32 %v7545, %v8663
    %v8725 = vadd.f32 %v7546, %v8274
    %v8726 = vadd.f32 %v7547, %v8372
    %v8727 = vadd.f32 %v7548, %v8470
    %v8728 = vadd.f32 %v7549, %v8568
    %v8729 = vadd.f32 %v7550, %v8666
    %v8730 = vadd.f32 %v7551, %v8276
    %v8731 = vadd.f32 %v7552, %v8374
    %v8732 = vadd.f32 %v7553, %v8472
    %v8733 = vadd.f32 %v7554, %v8570
    %v8734 = vadd.f32 %v7555, %v8668
    %v8735 = vadd.f32 %v7556, %v8279
    %v8736 = vadd.f32 %v7557, %v8377
    %v8737 = vadd.f32 %v7558, %v8475
    %v8738 = vadd.f32 %v7559, %v8573
    %v8739 = vadd.f32 %v7560, %v8671
    %v8740 = vadd.f32 %v7561, %v8281
    %v8741 = vadd.f32 %v7562, %v8379
    %v8742 = vadd.f32 %v7563, %v8477
    %v8743 = vadd.f32 %v7564, %v8575
    %v8744 = vadd.f32 %v7565, %v8673
    %v8745 = vadd.f32 %v7566, %v8284
    %v8746 = vadd.f32 %v7567, %v8382
    %v8747 = vadd.f32 %v7568, %v8480
    %v8748 = vadd.f32 %v7569, %v8578
    %v8749 = vadd.f32 %v7570, %v8676
    %v8750 = vadd.f32 %v7571, %v8286
    %v8751 = vadd.f32 %v7572, %v8384
    %v8752 = vadd.f32 %v7573, %v8482
    %v8753 = vadd.f32 %v7574, %v8580
    %v8754 = vadd.f32 %v7575, %v8678
    %v8755 = vadd.f32 %v7576, %v8289
    %v8756 = vadd.f32 %v7577, %v8387
    %v8757 = vadd.f32 %v7578, %v8485
    %v8758 = vadd.f32 %v7579, %v8583
    %v8759 = vadd.f32 %v7580, %v8681
    %v8760 = vadd.f32 %v7581, %v8291
    %v8761 = vadd.f32 %v7582, %v8389
    %v8762 = vadd.f32 %v7583, %v8487
    %v8763 = vadd.f32 %v7584, %v8585
    %v8764 = vadd.f32 %v7585, %v8683
    %v8765 = vld [vmem:[%s7586] sm:$0xff]
    %v8766 = vld [vmem:[%s7586 + $0x8] sm:$0x11]
    %v8767 = vld [vmem:[%s7586 + $0x10] sm:$0xff]
    %v8768 = vld [vmem:[%s7586 + $0x18] sm:$0x11]
    %v8769 = vld [vmem:[%s7586 + $0x20] sm:$0xff]
    %v8770 = vld [vmem:[%s7586 + $0x28] sm:$0x11]
    %v8771 = vld [vmem:[%s7586 + $0x30] sm:$0xff]
    %v8772 = vld [vmem:[%s7586 + $0x38] sm:$0x11]
    %v8773 = vld [vmem:[%s7586 + $0x40] sm:$0xff]
    %v8774 = vld [vmem:[%s7586 + $0x48] sm:$0x11]
    %v8775 = vld [vmem:[%s7586 + $0x50] sm:$0xff]
    %v8776 = vld [vmem:[%s7586 + $0x58] sm:$0x11]
    %v8777 = vld [vmem:[%s7586 + $0x60] sm:$0xff]
    %v8778 = vld [vmem:[%s7586 + $0x68] sm:$0x11]
    %v8779 = vld [vmem:[%s7586 + $0x70] sm:$0xff]
    %v8780 = vld [vmem:[%s7586 + $0x78] sm:$0x11]
    %v8781 = vld [vmem:[%s7586 + $0xa0] sm:$0xff]
    %v8782 = vld [vmem:[%s7586 + $0xa8] sm:$0x11]
    %v8783 = vld [vmem:[%s7586 + $0xb0] sm:$0xff]
    %v8784 = vld [vmem:[%s7586 + $0xb8] sm:$0x11]
    %v8785 = vld [vmem:[%s7586 + $0xc0] sm:$0xff]
    %v8786 = vld [vmem:[%s7586 + $0xc8] sm:$0x11]
    %v8787 = vld [vmem:[%s7586 + $0xd0] sm:$0xff]
    %v8788 = vld [vmem:[%s7586 + $0xd8] sm:$0x11]
    %v8789 = vld [vmem:[%s7586 + $0xe0] sm:$0xff]
    %v8790 = vld [vmem:[%s7586 + $0xe8] sm:$0x11]
    %v8791 = vld [vmem:[%s7586 + $0xf0] sm:$0xff]
    %v8792 = vld [vmem:[%s7586 + $0xf8] sm:$0x11]
    %v8793 = vld [vmem:[%s7586 + $0x100] sm:$0xff]
    %v8794 = vld [vmem:[%s7586 + $0x108] sm:$0x11]
    %v8795 = vld [vmem:[%s7586 + $0x110] sm:$0xff]
    %v8796 = vld [vmem:[%s7586 + $0x118] sm:$0x11]
    %v8798 = vshrl.u32 %v8765, 16
    %v8800 = vrot.slane %v8798, 4
    %v8801 = vshll.u32 %v8765, 16
    %v8803 = vrot.slane %v8801, 5
    %v8804 = vor.u32 %v8800, %v8803
    %v8805 = vrot.slane %v8804, 4
    %v8807 = vshll.u32 %v8766, 16
    %v8809 = vrot.slane %v8807, 5
    %v8810 = vsel %vm209, %v8805, %v8809
    %v8812 = vshrl.u32 %v8767, 16
    %v8814 = vrot.slane %v8812, 4
    %v8815 = vshll.u32 %v8767, 16
    %v8817 = vrot.slane %v8815, 5
    %v8818 = vor.u32 %v8814, %v8817
    %v8819 = vrot.slane %v8818, 4
    %v8821 = vshll.u32 %v8768, 16
    %v8823 = vrot.slane %v8821, 5
    %v8824 = vsel %vm209, %v8819, %v8823
    %v8826 = vshrl.u32 %v8769, 16
    %v8828 = vrot.slane %v8826, 4
    %v8829 = vshll.u32 %v8769, 16
    %v8831 = vrot.slane %v8829, 5
    %v8832 = vor.u32 %v8828, %v8831
    %v8833 = vrot.slane %v8832, 4
    %v8835 = vshll.u32 %v8770, 16
    %v8837 = vrot.slane %v8835, 5
    %v8838 = vsel %vm209, %v8833, %v8837
    %v8840 = vshrl.u32 %v8771, 16
    %v8842 = vrot.slane %v8840, 4
    %v8843 = vshll.u32 %v8771, 16
    %v8845 = vrot.slane %v8843, 5
    %v8846 = vor.u32 %v8842, %v8845
    %v8847 = vrot.slane %v8846, 4
    %v8849 = vshll.u32 %v8772, 16
    %v8851 = vrot.slane %v8849, 5
    %v8852 = vsel %vm209, %v8847, %v8851
    %v8854 = vshrl.u32 %v8773, 16
    %v8856 = vrot.slane %v8854, 4
    %v8857 = vshll.u32 %v8773, 16
    %v8859 = vrot.slane %v8857, 5
    %v8860 = vor.u32 %v8856, %v8859
    %v8861 = vrot.slane %v8860, 4
    %v8863 = vshll.u32 %v8774, 16
    %v8865 = vrot.slane %v8863, 5
    %v8866 = vsel %vm209, %v8861, %v8865
    %v8868 = vshrl.u32 %v8775, 16
    %v8870 = vrot.slane %v8868, 4
    %v8871 = vshll.u32 %v8775, 16
    %v8873 = vrot.slane %v8871, 5
    %v8874 = vor.u32 %v8870, %v8873
    %v8875 = vrot.slane %v8874, 4
    %v8877 = vshll.u32 %v8776, 16
    %v8879 = vrot.slane %v8877, 5
    %v8880 = vsel %vm209, %v8875, %v8879
    %v8882 = vshrl.u32 %v8777, 16
    %v8884 = vrot.slane %v8882, 4
    %v8885 = vshll.u32 %v8777, 16
    %v8887 = vrot.slane %v8885, 5
    %v8888 = vor.u32 %v8884, %v8887
    %v8889 = vrot.slane %v8888, 4
    %v8891 = vshll.u32 %v8778, 16
    %v8893 = vrot.slane %v8891, 5
    %v8894 = vsel %vm209, %v8889, %v8893
    %v8896 = vshrl.u32 %v8779, 16
    %v8898 = vrot.slane %v8896, 4
    %v8899 = vshll.u32 %v8779, 16
    %v8901 = vrot.slane %v8899, 5
    %v8902 = vor.u32 %v8898, %v8901
    %v8903 = vrot.slane %v8902, 4
    %v8905 = vshll.u32 %v8780, 16
    %v8907 = vrot.slane %v8905, 5
    %v8908 = vsel %vm209, %v8903, %v8907
    %v8910 = vshrl.u32 %v8781, 16
    %v8912 = vrot.slane %v8910, 4
    %v8913 = vshll.u32 %v8781, 16
    %v8915 = vrot.slane %v8913, 5
    %v8916 = vor.u32 %v8912, %v8915
    %v8917 = vrot.slane %v8916, 4
    %v8919 = vshll.u32 %v8782, 16
    %v8921 = vrot.slane %v8919, 5
    %v8922 = vsel %vm209, %v8917, %v8921
    %v8924 = vshrl.u32 %v8783, 16
    %v8926 = vrot.slane %v8924, 4
    %v8927 = vshll.u32 %v8783, 16
    %v8929 = vrot.slane %v8927, 5
    %v8930 = vor.u32 %v8926, %v8929
    %v8931 = vrot.slane %v8930, 4
    %v8933 = vshll.u32 %v8784, 16
    %v8935 = vrot.slane %v8933, 5
    %v8936 = vsel %vm209, %v8931, %v8935
    %v8938 = vshrl.u32 %v8785, 16
    %v8940 = vrot.slane %v8938, 4
    %v8941 = vshll.u32 %v8785, 16
    %v8943 = vrot.slane %v8941, 5
    %v8944 = vor.u32 %v8940, %v8943
    %v8945 = vrot.slane %v8944, 4
    %v8947 = vshll.u32 %v8786, 16
    %v8949 = vrot.slane %v8947, 5
    %v8950 = vsel %vm209, %v8945, %v8949
    %v8952 = vshrl.u32 %v8787, 16
    %v8954 = vrot.slane %v8952, 4
    %v8955 = vshll.u32 %v8787, 16
    %v8957 = vrot.slane %v8955, 5
    %v8958 = vor.u32 %v8954, %v8957
    %v8959 = vrot.slane %v8958, 4
    %v8961 = vshll.u32 %v8788, 16
    %v8963 = vrot.slane %v8961, 5
    %v8964 = vsel %vm209, %v8959, %v8963
    %v8966 = vshrl.u32 %v8789, 16
    %v8968 = vrot.slane %v8966, 4
    %v8969 = vshll.u32 %v8789, 16
    %v8971 = vrot.slane %v8969, 5
    %v8972 = vor.u32 %v8968, %v8971
    %v8973 = vrot.slane %v8972, 4
    %v8975 = vshll.u32 %v8790, 16
    %v8977 = vrot.slane %v8975, 5
    %v8978 = vsel %vm209, %v8973, %v8977
    %v8980 = vshrl.u32 %v8791, 16
    %v8982 = vrot.slane %v8980, 4
    %v8983 = vshll.u32 %v8791, 16
    %v8985 = vrot.slane %v8983, 5
    %v8986 = vor.u32 %v8982, %v8985
    %v8987 = vrot.slane %v8986, 4
    %v8989 = vshll.u32 %v8792, 16
    %v8991 = vrot.slane %v8989, 5
    %v8992 = vsel %vm209, %v8987, %v8991
    %v8994 = vshrl.u32 %v8793, 16
    %v8996 = vrot.slane %v8994, 4
    %v8997 = vshll.u32 %v8793, 16
    %v8999 = vrot.slane %v8997, 5
    %v9000 = vor.u32 %v8996, %v8999
    %v9001 = vrot.slane %v9000, 4
    %v9003 = vshll.u32 %v8794, 16
    %v9005 = vrot.slane %v9003, 5
    %v9006 = vsel %vm209, %v9001, %v9005
    %v9008 = vshrl.u32 %v8795, 16
    %v9010 = vrot.slane %v9008, 4
    %v9011 = vshll.u32 %v8795, 16
    %v9013 = vrot.slane %v9011, 5
    %v9014 = vor.u32 %v9010, %v9013
    %v9015 = vrot.slane %v9014, 4
    %v9017 = vshll.u32 %v8796, 16
    %v9019 = vrot.slane %v9017, 5
    %v9020 = vsel %vm209, %v9015, %v9019
    %v9021 = vld [vmem:[#allocation2 + $0x1180] sm:$0xff]
    %v9022 = vld [vmem:[#allocation2 + $0x1188] sm:$0xff]
    %v9023 = vld [vmem:[#allocation2 + $0x1190] sm:$0xf]
    %v9024 = vld [vmem:[#allocation2 + $0x1194] sm:$0xff]
    %v9025 = vld [vmem:[#allocation2 + $0x119c] sm:$0xff]
    %v9026 = vld [vmem:[#allocation2 + $0x11a4] sm:$0xf]
    %v9027 = vld [vmem:[#allocation2 + $0x11a8] sm:$0xff]
    %v9028 = vld [vmem:[#allocation2 + $0x11b0] sm:$0xff]
    %v9029 = vld [vmem:[#allocation2 + $0x11b8] sm:$0xf]
    %v9030 = vld [vmem:[#allocation2 + $0x11bc] sm:$0xff]
    %v9031 = vld [vmem:[#allocation2 + $0x11c4] sm:$0xff]
    %v9032 = vld [vmem:[#allocation2 + $0x11cc] sm:$0xf]
    %v9033 = vld [vmem:[#allocation2 + $0x11d0] sm:$0xff]
    %v9034 = vld [vmem:[#allocation2 + $0x11d8] sm:$0xff]
    %v9035 = vld [vmem:[#allocation2 + $0x11e0] sm:$0xf]
    %v9036 = vld [vmem:[#allocation2 + $0x11e4] sm:$0xff]
    %v9037 = vld [vmem:[#allocation2 + $0x11ec] sm:$0xff]
    %v9038 = vld [vmem:[#allocation2 + $0x11f4] sm:$0xf]
    %v9039 = vld [vmem:[#allocation2 + $0x11f8] sm:$0xff]
    %v9040 = vld [vmem:[#allocation2 + $0x1200] sm:$0xff]
    %v9041 = vld [vmem:[#allocation2 + $0x1208] sm:$0xf]
    %v9042 = vld [vmem:[#allocation2 + $0x120c] sm:$0xff]
    %v9043 = vld [vmem:[#allocation2 + $0x1214] sm:$0xff]
    %v9044 = vld [vmem:[#allocation2 + $0x121c] sm:$0xf]
    %v9045 = vld [vmem:[#allocation2 + $0x1220] sm:$0xff]
    %v9046 = vld [vmem:[#allocation2 + $0x1228] sm:$0xff]
    %v9047 = vld [vmem:[#allocation2 + $0x1230] sm:$0xf]
    %v9048 = vld [vmem:[#allocation2 + $0x1234] sm:$0xff]
    %v9049 = vld [vmem:[#allocation2 + $0x123c] sm:$0xff]
    %v9050 = vld [vmem:[#allocation2 + $0x1244] sm:$0xf]
    %v9051 = vld [vmem:[#allocation2 + $0x1248] sm:$0xff]
    %v9052 = vld [vmem:[#allocation2 + $0x1250] sm:$0xff]
    %v9053 = vld [vmem:[#allocation2 + $0x1258] sm:$0xf]
    %v9054 = vld [vmem:[#allocation2 + $0x125c] sm:$0xff]
    %v9055 = vld [vmem:[#allocation2 + $0x1264] sm:$0xff]
    %v9056 = vld [vmem:[#allocation2 + $0x126c] sm:$0xf]
    %v9057 = vld [vmem:[#allocation2 + $0x1270] sm:$0xff]
    %v9058 = vld [vmem:[#allocation2 + $0x1278] sm:$0xff]
    %v9059 = vld [vmem:[#allocation2 + $0x1280] sm:$0xf]
    %v9060 = vld [vmem:[#allocation2 + $0x1284] sm:$0xff]
    %v9061 = vld [vmem:[#allocation2 + $0x128c] sm:$0xff]
    %v9062 = vld [vmem:[#allocation2 + $0x1294] sm:$0xf]
    %v9063 = vld [vmem:[#allocation2 + $0x1298] sm:$0xff]
    %v9064 = vld [vmem:[#allocation2 + $0x12a0] sm:$0xff]
    %v9065 = vld [vmem:[#allocation2 + $0x12a8] sm:$0xf]
    %v9066 = vld [vmem:[#allocation2 + $0x12ac] sm:$0xff]
    %v9067 = vld [vmem:[#allocation2 + $0x12b4] sm:$0xff]
    %v9068 = vld [vmem:[#allocation2 + $0x12bc] sm:$0xf]
    %v9069 = vld [vmem:[#allocation2 + $0x12c0] sm:$0xff]
    %v9070 = vld [vmem:[#allocation2 + $0x12c8] sm:$0xff]
    %v9071 = vld [vmem:[#allocation2 + $0x12d0] sm:$0xf]
    %v9072 = vld [vmem:[#allocation2 + $0x12d4] sm:$0xff]
    %v9073 = vld [vmem:[#allocation2 + $0x12dc] sm:$0xff]
    %v9074 = vld [vmem:[#allocation2 + $0x12e4] sm:$0xf]
    %v9075 = vld [vmem:[#allocation2 + $0x12e8] sm:$0xff]
    %v9076 = vld [vmem:[#allocation2 + $0x12f0] sm:$0xff]
    %v9077 = vld [vmem:[#allocation2 + $0x12f8] sm:$0xf]
    %v9078 = vld [vmem:[#allocation2 + $0x12fc] sm:$0xff]
    %v9079 = vld [vmem:[#allocation2 + $0x1304] sm:$0xff]
    %v9080 = vld [vmem:[#allocation2 + $0x130c] sm:$0xf]
    %v9081 = vld [vmem:[#allocation2 + $0x1310] sm:$0xff]
    %v9082 = vld [vmem:[#allocation2 + $0x1318] sm:$0xff]
    %v9083 = vld [vmem:[#allocation2 + $0x1320] sm:$0xf]
    %v9084 = vld [vmem:[#allocation2 + $0x1324] sm:$0xff]
    %v9085 = vld [vmem:[#allocation2 + $0x132c] sm:$0xff]
    %v9086 = vld [vmem:[#allocation2 + $0x1334] sm:$0xf]
    %v9087 = vld [vmem:[#allocation2 + $0x1338] sm:$0xff]
    %v9088 = vld [vmem:[#allocation2 + $0x1340] sm:$0xff]
    %v9089 = vld [vmem:[#allocation2 + $0x1348] sm:$0xf]
    %v9090 = vld [vmem:[#allocation2 + $0x134c] sm:$0xff]
    %v9091 = vld [vmem:[#allocation2 + $0x1354] sm:$0xff]
    %v9092 = vld [vmem:[#allocation2 + $0x135c] sm:$0xf]
    %v9093 = vld [vmem:[#allocation2 + $0x1360] sm:$0xff]
    %v9094 = vld [vmem:[#allocation2 + $0x1368] sm:$0xff]
    %v9095 = vld [vmem:[#allocation2 + $0x1370] sm:$0xf]
    %v9096 = vld [vmem:[#allocation2 + $0x1374] sm:$0xff]
    %v9097 = vld [vmem:[#allocation2 + $0x137c] sm:$0xff]
    %v9098 = vld [vmem:[#allocation2 + $0x1384] sm:$0xf]
    %v9099 = vld [vmem:[#allocation2 + $0x1388] sm:$0xff]
    %v9100 = vld [vmem:[#allocation2 + $0x1390] sm:$0xff]
    %v9101 = vld [vmem:[#allocation2 + $0x1398] sm:$0xf]
    %v9102 = vld [vmem:[#allocation2 + $0x139c] sm:$0xff]
    %v9103 = vld [vmem:[#allocation2 + $0x13a4] sm:$0xff]
    %v9104 = vld [vmem:[#allocation2 + $0x13ac] sm:$0xf]
    %v9105 = vld [vmem:[#allocation2 + $0x13b0] sm:$0xff]
    %v9106 = vld [vmem:[#allocation2 + $0x13b8] sm:$0xff]
    %v9107 = vld [vmem:[#allocation2 + $0x13c0] sm:$0xf]
    %v9108 = vld [vmem:[#allocation2 + $0x13c4] sm:$0xff]
    %v9109 = vld [vmem:[#allocation2 + $0x13cc] sm:$0xff]
    %v9110 = vld [vmem:[#allocation2 + $0x13d4] sm:$0xf]
    %v9111 = vld [vmem:[#allocation2 + $0x13d8] sm:$0xff]
    %v9112 = vld [vmem:[#allocation2 + $0x13e0] sm:$0xff]
    %v9113 = vld [vmem:[#allocation2 + $0x13e8] sm:$0xf]
    %v9114 = vld [vmem:[#allocation2 + $0x13ec] sm:$0xff]
    %v9115 = vld [vmem:[#allocation2 + $0x13f4] sm:$0xff]
    %v9116 = vld [vmem:[#allocation2 + $0x13fc] sm:$0xf]
    %v9117 = vunpack.c.l.b16 %v8810
    %v9118 = vunpack.c.h.b16 %v8810
    %v9119 = vunpack.c.l.b16 %v8824
    %v9120 = vunpack.c.h.b16 %v8824
    %v9121 = vunpack.c.l.b16 %v8838
    %v9122 = vunpack.c.h.b16 %v8838
    %v9123 = vunpack.c.l.b16 %v8852
    %v9124 = vunpack.c.h.b16 %v8852
    %v9125 = vunpack.c.l.b16 %v8866
    %v9126 = vunpack.c.h.b16 %v8866
    %v9127 = vunpack.c.l.b16 %v8880
    %v9128 = vunpack.c.h.b16 %v8880
    %v9129 = vunpack.c.l.b16 %v8894
    %v9130 = vunpack.c.h.b16 %v8894
    %v9131 = vunpack.c.l.b16 %v8908
    %v9132 = vunpack.c.h.b16 %v8908
    %v9133 = vunpack.c.l.b16 %v8922
    %v9134 = vunpack.c.h.b16 %v8922
    %v9135 = vunpack.c.l.b16 %v8936
    %v9136 = vunpack.c.h.b16 %v8936
    %v9137 = vunpack.c.l.b16 %v8950
    %v9138 = vunpack.c.h.b16 %v8950
    %v9139 = vunpack.c.l.b16 %v8964
    %v9140 = vunpack.c.h.b16 %v8964
    %v9141 = vunpack.c.l.b16 %v8978
    %v9142 = vunpack.c.h.b16 %v8978
    %v9143 = vunpack.c.l.b16 %v8992
    %v9144 = vunpack.c.h.b16 %v8992
    %v9145 = vunpack.c.l.b16 %v9006
    %v9146 = vunpack.c.h.b16 %v9006
    %v9147 = vunpack.c.l.b16 %v9020
    %v9148 = vunpack.c.h.b16 %v9020
    %v9149 = vpack.c.b16 %v9119, %v9117
    %v9150 = vpack.c.b16 %v9120, %v9118
    %v9151 = vpack.c.b16 %v9123, %v9121
    %v9152 = vpack.c.b16 %v9124, %v9122
    %v9153 = vpack.c.b16 %v9127, %v9125
    %v9154 = vpack.c.b16 %v9128, %v9126
    %v9155 = vpack.c.b16 %v9131, %v9129
    %v9156 = vpack.c.b16 %v9132, %v9130
    %v9157 = vpack.c.b16 %v9135, %v9133
    %v9158 = vpack.c.b16 %v9136, %v9134
    %v9159 = vpack.c.b16 %v9139, %v9137
    %v9160 = vpack.c.b16 %v9140, %v9138
    %v9161 = vpack.c.b16 %v9143, %v9141
    %v9162 = vpack.c.b16 %v9144, %v9142
    %v9163 = vpack.c.b16 %v9147, %v9145
    %v9164 = vpack.c.b16 %v9148, %v9146
    %v9277 = vunpack.c.l.b16 %v9021
    %v9278 = vunpack.c.h.b16 %v9021
    %v9279 = vunpack.c.l.b16 %v9022
    %v9280 = vunpack.c.h.b16 %v9022
    %v9281 = vunpack.c.l.b16 %v9023
    %v9282 = vunpack.c.l.b16 %v9024
    %v9283 = vunpack.c.h.b16 %v9024
    %v9284 = vunpack.c.l.b16 %v9025
    %v9285 = vunpack.c.h.b16 %v9025
    %v9286 = vunpack.c.l.b16 %v9026
    %v9287 = vunpack.c.l.b16 %v9027
    %v9288 = vunpack.c.h.b16 %v9027
    %v9289 = vunpack.c.l.b16 %v9028
    %v9290 = vunpack.c.h.b16 %v9028
    %v9291 = vunpack.c.l.b16 %v9029
    %v9292 = vunpack.c.l.b16 %v9030
    %v9293 = vunpack.c.h.b16 %v9030
    %v9294 = vunpack.c.l.b16 %v9031
    %v9295 = vunpack.c.h.b16 %v9031
    %v9296 = vunpack.c.l.b16 %v9032
    %v9297 = vunpack.c.l.b16 %v9033
    %v9298 = vunpack.c.h.b16 %v9033
    %v9299 = vunpack.c.l.b16 %v9034
    %v9300 = vunpack.c.h.b16 %v9034
    %v9301 = vunpack.c.l.b16 %v9035
    %v9302 = vunpack.c.l.b16 %v9036
    %v9303 = vunpack.c.h.b16 %v9036
    %v9304 = vunpack.c.l.b16 %v9037
    %v9305 = vunpack.c.h.b16 %v9037
    %v9306 = vunpack.c.l.b16 %v9038
    %v9307 = vunpack.c.l.b16 %v9039
    %v9308 = vunpack.c.h.b16 %v9039
    %v9309 = vunpack.c.l.b16 %v9040
    %v9310 = vunpack.c.h.b16 %v9040
    %v9311 = vunpack.c.l.b16 %v9041
    %v9312 = vunpack.c.l.b16 %v9042
    %v9313 = vunpack.c.h.b16 %v9042
    %v9314 = vunpack.c.l.b16 %v9043
    %v9315 = vunpack.c.h.b16 %v9043
    %v9316 = vunpack.c.l.b16 %v9044
    %v9317 = vunpack.c.l.b16 %v9045
    %v9318 = vunpack.c.h.b16 %v9045
    %v9319 = vunpack.c.l.b16 %v9046
    %v9320 = vunpack.c.h.b16 %v9046
    %v9321 = vunpack.c.l.b16 %v9047
    %v9322 = vunpack.c.l.b16 %v9048
    %v9323 = vunpack.c.h.b16 %v9048
    %v9324 = vunpack.c.l.b16 %v9049
    %v9325 = vunpack.c.h.b16 %v9049
    %v9326 = vunpack.c.l.b16 %v9050
    %v9327 = vunpack.c.l.b16 %v9051
    %v9328 = vunpack.c.h.b16 %v9051
    %v9329 = vunpack.c.l.b16 %v9052
    %v9330 = vunpack.c.h.b16 %v9052
    %v9331 = vunpack.c.l.b16 %v9053
    %v9332 = vunpack.c.l.b16 %v9054
    %v9333 = vunpack.c.h.b16 %v9054
    %v9334 = vunpack.c.l.b16 %v9055
    %v9335 = vunpack.c.h.b16 %v9055
    %v9336 = vunpack.c.l.b16 %v9056
    %v9337 = vunpack.c.l.b16 %v9057
    %v9338 = vunpack.c.h.b16 %v9057
    %v9339 = vunpack.c.l.b16 %v9058
    %v9340 = vunpack.c.h.b16 %v9058
    %v9341 = vunpack.c.l.b16 %v9059
    %v9342 = vunpack.c.l.b16 %v9060
    %v9343 = vunpack.c.h.b16 %v9060
    %v9344 = vunpack.c.l.b16 %v9061
    %v9345 = vunpack.c.h.b16 %v9061
    %v9346 = vunpack.c.l.b16 %v9062
    %v9347 = vunpack.c.l.b16 %v9063
    %v9348 = vunpack.c.h.b16 %v9063
    %v9349 = vunpack.c.l.b16 %v9064
    %v9350 = vunpack.c.h.b16 %v9064
    %v9351 = vunpack.c.l.b16 %v9065
    %v9352 = vunpack.c.l.b16 %v9066
    %v9353 = vunpack.c.h.b16 %v9066
    %v9354 = vunpack.c.l.b16 %v9067
    %v9355 = vunpack.c.h.b16 %v9067
    %v9356 = vunpack.c.l.b16 %v9068
    %v9357 = vunpack.c.l.b16 %v9069
    %v9358 = vunpack.c.h.b16 %v9069
    %v9359 = vunpack.c.l.b16 %v9070
    %v9360 = vunpack.c.h.b16 %v9070
    %v9361 = vunpack.c.l.b16 %v9071
    %v9362 = vunpack.c.l.b16 %v9072
    %v9363 = vunpack.c.h.b16 %v9072
    %v9364 = vunpack.c.l.b16 %v9073
    %v9365 = vunpack.c.h.b16 %v9073
    %v9366 = vunpack.c.l.b16 %v9074
    %v9367 = vunpack.c.l.b16 %v9075
    %v9368 = vunpack.c.h.b16 %v9075
    %v9369 = vunpack.c.l.b16 %v9076
    %v9370 = vunpack.c.h.b16 %v9076
    %v9371 = vunpack.c.l.b16 %v9077
    %v9372 = vunpack.c.l.b16 %v9078
    %v9373 = vunpack.c.h.b16 %v9078
    %v9374 = vunpack.c.l.b16 %v9079
    %v9375 = vunpack.c.h.b16 %v9079
    %v9376 = vunpack.c.l.b16 %v9080
    %v9377 = vunpack.c.l.b16 %v9081
    %v9378 = vunpack.c.h.b16 %v9081
    %v9379 = vunpack.c.l.b16 %v9082
    %v9380 = vunpack.c.h.b16 %v9082
    %v9381 = vunpack.c.l.b16 %v9083
    %v9382 = vunpack.c.l.b16 %v9084
    %v9383 = vunpack.c.h.b16 %v9084
    %v9384 = vunpack.c.l.b16 %v9085
    %v9385 = vunpack.c.h.b16 %v9085
    %v9386 = vunpack.c.l.b16 %v9086
    %v9387 = vunpack.c.l.b16 %v9087
    %v9388 = vunpack.c.h.b16 %v9087
    %v9389 = vunpack.c.l.b16 %v9088
    %v9390 = vunpack.c.h.b16 %v9088
    %v9391 = vunpack.c.l.b16 %v9089
    %v9392 = vunpack.c.l.b16 %v9090
    %v9393 = vunpack.c.h.b16 %v9090
    %v9394 = vunpack.c.l.b16 %v9091
    %v9395 = vunpack.c.h.b16 %v9091
    %v9396 = vunpack.c.l.b16 %v9092
    %v9397 = vunpack.c.l.b16 %v9093
    %v9398 = vunpack.c.h.b16 %v9093
    %v9399 = vunpack.c.l.b16 %v9094
    %v9400 = vunpack.c.h.b16 %v9094
    %v9401 = vunpack.c.l.b16 %v9095
    %v9402 = vunpack.c.l.b16 %v9096
    %v9403 = vunpack.c.h.b16 %v9096
    %v9404 = vunpack.c.l.b16 %v9097
    %v9405 = vunpack.c.h.b16 %v9097
    %v9406 = vunpack.c.l.b16 %v9098
    %v9407 = vunpack.c.l.b16 %v9099
    %v9408 = vunpack.c.h.b16 %v9099
    %v9409 = vunpack.c.l.b16 %v9100
    %v9410 = vunpack.c.h.b16 %v9100
    %v9411 = vunpack.c.l.b16 %v9101
    %v9412 = vunpack.c.l.b16 %v9102
    %v9413 = vunpack.c.h.b16 %v9102
    %v9414 = vunpack.c.l.b16 %v9103
    %v9415 = vunpack.c.h.b16 %v9103
    %v9416 = vunpack.c.l.b16 %v9104
    %v9417 = vunpack.c.l.b16 %v9105
    %v9418 = vunpack.c.h.b16 %v9105
    %v9419 = vunpack.c.l.b16 %v9106
    %v9420 = vunpack.c.h.b16 %v9106
    %v9421 = vunpack.c.l.b16 %v9107
    %v9422 = vunpack.c.l.b16 %v9108
    %v9423 = vunpack.c.h.b16 %v9108
    %v9424 = vunpack.c.l.b16 %v9109
    %v9425 = vunpack.c.h.b16 %v9109
    %v9426 = vunpack.c.l.b16 %v9110
    %v9427 = vunpack.c.l.b16 %v9111
    %v9428 = vunpack.c.h.b16 %v9111
    %v9429 = vunpack.c.l.b16 %v9112
    %v9430 = vunpack.c.h.b16 %v9112
    %v9431 = vunpack.c.l.b16 %v9113
    %v9432 = vunpack.c.l.b16 %v9114
    %v9433 = vunpack.c.h.b16 %v9114
    %v9434 = vunpack.c.l.b16 %v9115
    %v9435 = vunpack.c.h.b16 %v9115
    %v9436 = vunpack.c.l.b16 %v9116
    %v9437 = vpack.c.b16 %v9282, %v9277
    %v9438 = vpack.c.b16 %v9283, %v9278
    %v9439 = vpack.c.b16 %v9284, %v9279
    %v9440 = vpack.c.b16 %v9285, %v9280
    %v9441 = vpack.c.b16 %v9286, %v9281
    %v9442 = vpack.c.b16 %v9292, %v9287
    %v9443 = vpack.c.b16 %v9293, %v9288
    %v9444 = vpack.c.b16 %v9294, %v9289
    %v9445 = vpack.c.b16 %v9295, %v9290
    %v9446 = vpack.c.b16 %v9296, %v9291
    %v9447 = vpack.c.b16 %v9302, %v9297
    %v9448 = vpack.c.b16 %v9303, %v9298
    %v9449 = vpack.c.b16 %v9304, %v9299
    %v9450 = vpack.c.b16 %v9305, %v9300
    %v9451 = vpack.c.b16 %v9306, %v9301
    %v9452 = vpack.c.b16 %v9312, %v9307
    %v9453 = vpack.c.b16 %v9313, %v9308
    %v9454 = vpack.c.b16 %v9314, %v9309
    %v9455 = vpack.c.b16 %v9315, %v9310
    %v9456 = vpack.c.b16 %v9316, %v9311
    %v9457 = vpack.c.b16 %v9322, %v9317
    %v9458 = vpack.c.b16 %v9323, %v9318
    %v9459 = vpack.c.b16 %v9324, %v9319
    %v9460 = vpack.c.b16 %v9325, %v9320
    %v9461 = vpack.c.b16 %v9326, %v9321
    %v9462 = vpack.c.b16 %v9332, %v9327
    %v9463 = vpack.c.b16 %v9333, %v9328
    %v9464 = vpack.c.b16 %v9334, %v9329
    %v9465 = vpack.c.b16 %v9335, %v9330
    %v9466 = vpack.c.b16 %v9336, %v9331
    %v9467 = vpack.c.b16 %v9342, %v9337
    %v9468 = vpack.c.b16 %v9343, %v9338
    %v9469 = vpack.c.b16 %v9344, %v9339
    %v9470 = vpack.c.b16 %v9345, %v9340
    %v9471 = vpack.c.b16 %v9346, %v9341
    %v9472 = vpack.c.b16 %v9352, %v9347
    %v9473 = vpack.c.b16 %v9353, %v9348
    %v9474 = vpack.c.b16 %v9354, %v9349
    %v9475 = vpack.c.b16 %v9355, %v9350
    %v9476 = vpack.c.b16 %v9356, %v9351
    %v9477 = vpack.c.b16 %v9362, %v9357
    %v9478 = vpack.c.b16 %v9363, %v9358
    %v9479 = vpack.c.b16 %v9364, %v9359
    %v9480 = vpack.c.b16 %v9365, %v9360
    %v9481 = vpack.c.b16 %v9366, %v9361
    %v9482 = vpack.c.b16 %v9372, %v9367
    %v9483 = vpack.c.b16 %v9373, %v9368
    %v9484 = vpack.c.b16 %v9374, %v9369
    %v9485 = vpack.c.b16 %v9375, %v9370
    %v9486 = vpack.c.b16 %v9376, %v9371
    %v9487 = vpack.c.b16 %v9382, %v9377
    %v9488 = vpack.c.b16 %v9383, %v9378
    %v9489 = vpack.c.b16 %v9384, %v9379
    %v9490 = vpack.c.b16 %v9385, %v9380
    %v9491 = vpack.c.b16 %v9386, %v9381
    %v9492 = vpack.c.b16 %v9392, %v9387
    %v9493 = vpack.c.b16 %v9393, %v9388
    %v9494 = vpack.c.b16 %v9394, %v9389
    %v9495 = vpack.c.b16 %v9395, %v9390
    %v9496 = vpack.c.b16 %v9396, %v9391
    %v9497 = vpack.c.b16 %v9402, %v9397
    %v9498 = vpack.c.b16 %v9403, %v9398
    %v9499 = vpack.c.b16 %v9404, %v9399
    %v9500 = vpack.c.b16 %v9405, %v9400
    %v9501 = vpack.c.b16 %v9406, %v9401
    %v9502 = vpack.c.b16 %v9412, %v9407
    %v9503 = vpack.c.b16 %v9413, %v9408
    %v9504 = vpack.c.b16 %v9414, %v9409
    %v9505 = vpack.c.b16 %v9415, %v9410
    %v9506 = vpack.c.b16 %v9416, %v9411
    %v9507 = vpack.c.b16 %v9422, %v9417
    %v9508 = vpack.c.b16 %v9423, %v9418
    %v9509 = vpack.c.b16 %v9424, %v9419
    %v9510 = vpack.c.b16 %v9425, %v9420
    %v9511 = vpack.c.b16 %v9426, %v9421
    %v9512 = vpack.c.b16 %v9432, %v9427
    %v9513 = vpack.c.b16 %v9433, %v9428
    %v9514 = vpack.c.b16 %v9434, %v9429
    %v9515 = vpack.c.b16 %v9435, %v9430
    %v9516 = vpack.c.b16 %v9436, %v9431
    %9597 = vmatpush.bf16.msra.mxu0 %v9472
    %9598 = vmatpush.bf16.msra.mxu0 %v9467
    %9599 = vmatpush.bf16.msra.mxu0 %v9462
    %9600 = vmatpush.bf16.msra.mxu0 %v9457
    %9601 = vmatpush.bf16.msra.mxu0 %v9452
    %9602 = vmatpush.bf16.msra.mxu0 %v9447
    %9603 = vmatpush.bf16.msra.mxu0 %v9442
    %9604 = vmatpush.bf16.msra.mxu0 %v9437
    %9605 = vmatmul.bf16.gmra.mxu0 %v9149
    %v9606 = vpop.f32.mrf.mxu0
    %v9607 = vadd.f32 0.0, %v9606
    %v9608 = vpop.f32.mrf.mxu0
    %v9609 = vadd.f32 0.0, %v9608
    %9610 = vmatmul.bf16.gmra.mxu0 %v9151
    %v9611 = vpop.f32.mrf.mxu0
    %v9612 = vadd.f32 0.0, %v9611
    %v9613 = vpop.f32.mrf.mxu0
    %v9614 = vadd.f32 0.0, %v9613
    %9615 = vmatmul.bf16.gmra.mxu0 %v9153
    %v9616 = vpop.f32.mrf.mxu0
    %v9617 = vadd.f32 0.0, %v9616
    %v9618 = vpop.f32.mrf.mxu0
    %v9619 = vadd.f32 0.0, %v9618
    %9620 = vmatmul.bf16.gmra.mxu0 %v9155
    %v9621 = vpop.f32.mrf.mxu0
    %v9622 = vadd.f32 0.0, %v9621
    %v9623 = vpop.f32.mrf.mxu0
    %v9624 = vadd.f32 0.0, %v9623
    %9625 = vmatmul.bf16.gmra.mxu0 %v9157
    %v9626 = vpop.f32.mrf.mxu0
    %v9627 = vadd.f32 0.0, %v9626
    %v9628 = vpop.f32.mrf.mxu0
    %v9629 = vadd.f32 0.0, %v9628
    %9630 = vmatmul.bf16.gmra.mxu0 %v9159
    %v9631 = vpop.f32.mrf.mxu0
    %v9632 = vadd.f32 0.0, %v9631
    %v9633 = vpop.f32.mrf.mxu0
    %v9634 = vadd.f32 0.0, %v9633
    %9635 = vmatmul.bf16.gmra.mxu0 %v9161
    %v9636 = vpop.f32.mrf.mxu0
    %v9637 = vadd.f32 0.0, %v9636
    %v9638 = vpop.f32.mrf.mxu0
    %v9639 = vadd.f32 0.0, %v9638
    %9640 = vmatmul.bf16.gmra.mxu0 %v9163
    %v9641 = vpop.f32.mrf.mxu0
    %v9642 = vadd.f32 0.0, %v9641
    %v9643 = vpop.f32.mrf.mxu0
    %v9644 = vadd.f32 0.0, %v9643
    %9645 = vdwg.mxu0
    %9646 = vmatpush.bf16.msra.mxu0 %v9512
    %9647 = vmatpush.bf16.msra.mxu0 %v9507
    %9648 = vmatpush.bf16.msra.mxu0 %v9502
    %9649 = vmatpush.bf16.msra.mxu0 %v9497
    %9650 = vmatpush.bf16.msra.mxu0 %v9492
    %9651 = vmatpush.bf16.msra.mxu0 %v9487
    %9652 = vmatpush.bf16.msra.mxu0 %v9482
    %9653 = vmatpush.bf16.msra.mxu0 %v9477
    %9654 = vmatmul.bf16.gmra.mxu0 %v9150
    %v9655 = vpop.f32.mrf.mxu0
    %v9656 = vadd.f32 %v9607, %v9655
    %v9657 = vpop.f32.mrf.mxu0
    %v9658 = vadd.f32 %v9609, %v9657
    %9659 = vmatmul.bf16.gmra.mxu0 %v9152
    %v9660 = vpop.f32.mrf.mxu0
    %v9661 = vadd.f32 %v9612, %v9660
    %v9662 = vpop.f32.mrf.mxu0
    %v9663 = vadd.f32 %v9614, %v9662
    %9664 = vmatmul.bf16.gmra.mxu0 %v9154
    %v9665 = vpop.f32.mrf.mxu0
    %v9666 = vadd.f32 %v9617, %v9665
    %v9667 = vpop.f32.mrf.mxu0
    %v9668 = vadd.f32 %v9619, %v9667
    %9669 = vmatmul.bf16.gmra.mxu0 %v9156
    %v9670 = vpop.f32.mrf.mxu0
    %v9671 = vadd.f32 %v9622, %v9670
    %v9672 = vpop.f32.mrf.mxu0
    %v9673 = vadd.f32 %v9624, %v9672
    %9674 = vmatmul.bf16.gmra.mxu0 %v9158
    %v9675 = vpop.f32.mrf.mxu0
    %v9676 = vadd.f32 %v9627, %v9675
    %v9677 = vpop.f32.mrf.mxu0
    %v9678 = vadd.f32 %v9629, %v9677
    %9679 = vmatmul.bf16.gmra.mxu0 %v9160
    %v9680 = vpop.f32.mrf.mxu0
    %v9681 = vadd.f32 %v9632, %v9680
    %v9682 = vpop.f32.mrf.mxu0
    %v9683 = vadd.f32 %v9634, %v9682
    %9684 = vmatmul.bf16.gmra.mxu0 %v9162
    %v9685 = vpop.f32.mrf.mxu0
    %v9686 = vadd.f32 %v9637, %v9685
    %v9687 = vpop.f32.mrf.mxu0
    %v9688 = vadd.f32 %v9639, %v9687
    %9689 = vmatmul.bf16.gmra.mxu0 %v9164
    %v9690 = vpop.f32.mrf.mxu0
    %v9691 = vadd.f32 %v9642, %v9690
    %v9692 = vpop.f32.mrf.mxu0
    %v9693 = vadd.f32 %v9644, %v9692
    %9694 = vdwg.mxu0
    %9695 = vmatpush.bf16.msra.mxu0 %v9473
    %9696 = vmatpush.bf16.msra.mxu0 %v9468
    %9697 = vmatpush.bf16.msra.mxu0 %v9463
    %9698 = vmatpush.bf16.msra.mxu0 %v9458
    %9699 = vmatpush.bf16.msra.mxu0 %v9453
    %9700 = vmatpush.bf16.msra.mxu0 %v9448
    %9701 = vmatpush.bf16.msra.mxu0 %v9443
    %9702 = vmatpush.bf16.msra.mxu0 %v9438
    %9703 = vmatmul.bf16.gmra.mxu0 %v9149
    %v9704 = vpop.f32.mrf.mxu0
    %v9705 = vadd.f32 0.0, %v9704
    %v9706 = vpop.f32.mrf.mxu0
    %v9707 = vadd.f32 0.0, %v9706
    %9708 = vmatmul.bf16.gmra.mxu0 %v9151
    %v9709 = vpop.f32.mrf.mxu0
    %v9710 = vadd.f32 0.0, %v9709
    %v9711 = vpop.f32.mrf.mxu0
    %v9712 = vadd.f32 0.0, %v9711
    %9713 = vmatmul.bf16.gmra.mxu0 %v9153
    %v9714 = vpop.f32.mrf.mxu0
    %v9715 = vadd.f32 0.0, %v9714
    %v9716 = vpop.f32.mrf.mxu0
    %v9717 = vadd.f32 0.0, %v9716
    %9718 = vmatmul.bf16.gmra.mxu0 %v9155
    %v9719 = vpop.f32.mrf.mxu0
    %v9720 = vadd.f32 0.0, %v9719
    %v9721 = vpop.f32.mrf.mxu0
    %v9722 = vadd.f32 0.0, %v9721
    %9723 = vmatmul.bf16.gmra.mxu0 %v9157
    %v9724 = vpop.f32.mrf.mxu0
    %v9725 = vadd.f32 0.0, %v9724
    %v9726 = vpop.f32.mrf.mxu0
    %v9727 = vadd.f32 0.0, %v9726
    %9728 = vmatmul.bf16.gmra.mxu0 %v9159
    %v9729 = vpop.f32.mrf.mxu0
    %v9730 = vadd.f32 0.0, %v9729
    %v9731 = vpop.f32.mrf.mxu0
    %v9732 = vadd.f32 0.0, %v9731
    %9733 = vmatmul.bf16.gmra.mxu0 %v9161
    %v9734 = vpop.f32.mrf.mxu0
    %v9735 = vadd.f32 0.0, %v9734
    %v9736 = vpop.f32.mrf.mxu0
    %v9737 = vadd.f32 0.0, %v9736
    %9738 = vmatmul.bf16.gmra.mxu0 %v9163
    %v9739 = vpop.f32.mrf.mxu0
    %v9740 = vadd.f32 0.0, %v9739
    %v9741 = vpop.f32.mrf.mxu0
    %v9742 = vadd.f32 0.0, %v9741
    %9743 = vdwg.mxu0
    %9744 = vmatpush.bf16.msra.mxu0 %v9513
    %9745 = vmatpush.bf16.msra.mxu0 %v9508
    %9746 = vmatpush.bf16.msra.mxu0 %v9503
    %9747 = vmatpush.bf16.msra.mxu0 %v9498
    %9748 = vmatpush.bf16.msra.mxu0 %v9493
    %9749 = vmatpush.bf16.msra.mxu0 %v9488
    %9750 = vmatpush.bf16.msra.mxu0 %v9483
    %9751 = vmatpush.bf16.msra.mxu0 %v9478
    %9752 = vmatmul.bf16.gmra.mxu0 %v9150
    %v9753 = vpop.f32.mrf.mxu0
    %v9754 = vadd.f32 %v9705, %v9753
    %v9755 = vpop.f32.mrf.mxu0
    %v9756 = vadd.f32 %v9707, %v9755
    %9757 = vmatmul.bf16.gmra.mxu0 %v9152
    %v9758 = vpop.f32.mrf.mxu0
    %v9759 = vadd.f32 %v9710, %v9758
    %v9760 = vpop.f32.mrf.mxu0
    %v9761 = vadd.f32 %v9712, %v9760
    %9762 = vmatmul.bf16.gmra.mxu0 %v9154
    %v9763 = vpop.f32.mrf.mxu0
    %v9764 = vadd.f32 %v9715, %v9763
    %v9765 = vpop.f32.mrf.mxu0
    %v9766 = vadd.f32 %v9717, %v9765
    %9767 = vmatmul.bf16.gmra.mxu0 %v9156
    %v9768 = vpop.f32.mrf.mxu0
    %v9769 = vadd.f32 %v9720, %v9768
    %v9770 = vpop.f32.mrf.mxu0
    %v9771 = vadd.f32 %v9722, %v9770
    %9772 = vmatmul.bf16.gmra.mxu0 %v9158
    %v9773 = vpop.f32.mrf.mxu0
    %v9774 = vadd.f32 %v9725, %v9773
    %v9775 = vpop.f32.mrf.mxu0
    %v9776 = vadd.f32 %v9727, %v9775
    %9777 = vmatmul.bf16.gmra.mxu0 %v9160
    %v9778 = vpop.f32.mrf.mxu0
    %v9779 = vadd.f32 %v9730, %v9778
    %v9780 = vpop.f32.mrf.mxu0
    %v9781 = vadd.f32 %v9732, %v9780
    %9782 = vmatmul.bf16.gmra.mxu0 %v9162
    %v9783 = vpop.f32.mrf.mxu0
    %v9784 = vadd.f32 %v9735, %v9783
    %v9785 = vpop.f32.mrf.mxu0
    %v9786 = vadd.f32 %v9737, %v9785
    %9787 = vmatmul.bf16.gmra.mxu0 %v9164
    %v9788 = vpop.f32.mrf.mxu0
    %v9789 = vadd.f32 %v9740, %v9788
    %v9790 = vpop.f32.mrf.mxu0
    %v9791 = vadd.f32 %v9742, %v9790
    %9792 = vdwg.mxu0
    %9793 = vmatpush.bf16.msra.mxu0 %v9474
    %9794 = vmatpush.bf16.msra.mxu0 %v9469
    %9795 = vmatpush.bf16.msra.mxu0 %v9464
    %9796 = vmatpush.bf16.msra.mxu0 %v9459
    %9797 = vmatpush.bf16.msra.mxu0 %v9454
    %9798 = vmatpush.bf16.msra.mxu0 %v9449
    %9799 = vmatpush.bf16.msra.mxu0 %v9444
    %9800 = vmatpush.bf16.msra.mxu0 %v9439
    %9801 = vmatmul.bf16.gmra.mxu0 %v9149
    %v9802 = vpop.f32.mrf.mxu0
    %v9803 = vadd.f32 0.0, %v9802
    %v9804 = vpop.f32.mrf.mxu0
    %v9805 = vadd.f32 0.0, %v9804
    %9806 = vmatmul.bf16.gmra.mxu0 %v9151
    %v9807 = vpop.f32.mrf.mxu0
    %v9808 = vadd.f32 0.0, %v9807
    %v9809 = vpop.f32.mrf.mxu0
    %v9810 = vadd.f32 0.0, %v9809
    %9811 = vmatmul.bf16.gmra.mxu0 %v9153
    %v9812 = vpop.f32.mrf.mxu0
    %v9813 = vadd.f32 0.0, %v9812
    %v9814 = vpop.f32.mrf.mxu0
    %v9815 = vadd.f32 0.0, %v9814
    %9816 = vmatmul.bf16.gmra.mxu0 %v9155
    %v9817 = vpop.f32.mrf.mxu0
    %v9818 = vadd.f32 0.0, %v9817
    %v9819 = vpop.f32.mrf.mxu0
    %v9820 = vadd.f32 0.0, %v9819
    %9821 = vmatmul.bf16.gmra.mxu0 %v9157
    %v9822 = vpop.f32.mrf.mxu0
    %v9823 = vadd.f32 0.0, %v9822
    %v9824 = vpop.f32.mrf.mxu0
    %v9825 = vadd.f32 0.0, %v9824
    %9826 = vmatmul.bf16.gmra.mxu0 %v9159
    %v9827 = vpop.f32.mrf.mxu0
    %v9828 = vadd.f32 0.0, %v9827
    %v9829 = vpop.f32.mrf.mxu0
    %v9830 = vadd.f32 0.0, %v9829
    %9831 = vmatmul.bf16.gmra.mxu0 %v9161
    %v9832 = vpop.f32.mrf.mxu0
    %v9833 = vadd.f32 0.0, %v9832
    %v9834 = vpop.f32.mrf.mxu0
    %v9835 = vadd.f32 0.0, %v9834
    %9836 = vmatmul.bf16.gmra.mxu0 %v9163
    %v9837 = vpop.f32.mrf.mxu0
    %v9838 = vadd.f32 0.0, %v9837
    %v9839 = vpop.f32.mrf.mxu0
    %v9840 = vadd.f32 0.0, %v9839
    %9841 = vdwg.mxu0
    %9842 = vmatpush.bf16.msra.mxu0 %v9514
    %9843 = vmatpush.bf16.msra.mxu0 %v9509
    %9844 = vmatpush.bf16.msra.mxu0 %v9504
    %9845 = vmatpush.bf16.msra.mxu0 %v9499
    %9846 = vmatpush.bf16.msra.mxu0 %v9494
    %9847 = vmatpush.bf16.msra.mxu0 %v9489
    %9848 = vmatpush.bf16.msra.mxu0 %v9484
    %9849 = vmatpush.bf16.msra.mxu0 %v9479
    %9850 = vmatmul.bf16.gmra.mxu0 %v9150
    %v9851 = vpop.f32.mrf.mxu0
    %v9852 = vadd.f32 %v9803, %v9851
    %v9853 = vpop.f32.mrf.mxu0
    %v9854 = vadd.f32 %v9805, %v9853
    %9855 = vmatmul.bf16.gmra.mxu0 %v9152
    %v9856 = vpop.f32.mrf.mxu0
    %v9857 = vadd.f32 %v9808, %v9856
    %v9858 = vpop.f32.mrf.mxu0
    %v9859 = vadd.f32 %v9810, %v9858
    %9860 = vmatmul.bf16.gmra.mxu0 %v9154
    %v9861 = vpop.f32.mrf.mxu0
    %v9862 = vadd.f32 %v9813, %v9861
    %v9863 = vpop.f32.mrf.mxu0
    %v9864 = vadd.f32 %v9815, %v9863
    %9865 = vmatmul.bf16.gmra.mxu0 %v9156
    %v9866 = vpop.f32.mrf.mxu0
    %v9867 = vadd.f32 %v9818, %v9866
    %v9868 = vpop.f32.mrf.mxu0
    %v9869 = vadd.f32 %v9820, %v9868
    %9870 = vmatmul.bf16.gmra.mxu0 %v9158
    %v9871 = vpop.f32.mrf.mxu0
    %v9872 = vadd.f32 %v9823, %v9871
    %v9873 = vpop.f32.mrf.mxu0
    %v9874 = vadd.f32 %v9825, %v9873
    %9875 = vmatmul.bf16.gmra.mxu0 %v9160
    %v9876 = vpop.f32.mrf.mxu0
    %v9877 = vadd.f32 %v9828, %v9876
    %v9878 = vpop.f32.mrf.mxu0
    %v9879 = vadd.f32 %v9830, %v9878
    %9880 = vmatmul.bf16.gmra.mxu0 %v9162
    %v9881 = vpop.f32.mrf.mxu0
    %v9882 = vadd.f32 %v9833, %v9881
    %v9883 = vpop.f32.mrf.mxu0
    %v9884 = vadd.f32 %v9835, %v9883
    %9885 = vmatmul.bf16.gmra.mxu0 %v9164
    %v9886 = vpop.f32.mrf.mxu0
    %v9887 = vadd.f32 %v9838, %v9886
    %v9888 = vpop.f32.mrf.mxu0
    %v9889 = vadd.f32 %v9840, %v9888
    %9890 = vdwg.mxu0
    %9891 = vmatpush.bf16.msra.mxu0 %v9475
    %9892 = vmatpush.bf16.msra.mxu0 %v9470
    %9893 = vmatpush.bf16.msra.mxu0 %v9465
    %9894 = vmatpush.bf16.msra.mxu0 %v9460
    %9895 = vmatpush.bf16.msra.mxu0 %v9455
    %9896 = vmatpush.bf16.msra.mxu0 %v9450
    %9897 = vmatpush.bf16.msra.mxu0 %v9445
    %9898 = vmatpush.bf16.msra.mxu0 %v9440
    %9899 = vmatmul.bf16.gmra.mxu0 %v9149
    %v9900 = vpop.f32.mrf.mxu0
    %v9901 = vadd.f32 0.0, %v9900
    %v9902 = vpop.f32.mrf.mxu0
    %v9903 = vadd.f32 0.0, %v9902
    %9904 = vmatmul.bf16.gmra.mxu0 %v9151
    %v9905 = vpop.f32.mrf.mxu0
    %v9906 = vadd.f32 0.0, %v9905
    %v9907 = vpop.f32.mrf.mxu0
    %v9908 = vadd.f32 0.0, %v9907
    %9909 = vmatmul.bf16.gmra.mxu0 %v9153
    %v9910 = vpop.f32.mrf.mxu0
    %v9911 = vadd.f32 0.0, %v9910
    %v9912 = vpop.f32.mrf.mxu0
    %v9913 = vadd.f32 0.0, %v9912
    %9914 = vmatmul.bf16.gmra.mxu0 %v9155
    %v9915 = vpop.f32.mrf.mxu0
    %v9916 = vadd.f32 0.0, %v9915
    %v9917 = vpop.f32.mrf.mxu0
    %v9918 = vadd.f32 0.0, %v9917
    %9919 = vmatmul.bf16.gmra.mxu0 %v9157
    %v9920 = vpop.f32.mrf.mxu0
    %v9921 = vadd.f32 0.0, %v9920
    %v9922 = vpop.f32.mrf.mxu0
    %v9923 = vadd.f32 0.0, %v9922
    %9924 = vmatmul.bf16.gmra.mxu0 %v9159
    %v9925 = vpop.f32.mrf.mxu0
    %v9926 = vadd.f32 0.0, %v9925
    %v9927 = vpop.f32.mrf.mxu0
    %v9928 = vadd.f32 0.0, %v9927
    %9929 = vmatmul.bf16.gmra.mxu0 %v9161
    %v9930 = vpop.f32.mrf.mxu0
    %v9931 = vadd.f32 0.0, %v9930
    %v9932 = vpop.f32.mrf.mxu0
    %v9933 = vadd.f32 0.0, %v9932
    %9934 = vmatmul.bf16.gmra.mxu0 %v9163
    %v9935 = vpop.f32.mrf.mxu0
    %v9936 = vadd.f32 0.0, %v9935
    %v9937 = vpop.f32.mrf.mxu0
    %v9938 = vadd.f32 0.0, %v9937
    %9939 = vdwg.mxu0
    %9940 = vmatpush.bf16.msra.mxu0 %v9515
    %9941 = vmatpush.bf16.msra.mxu0 %v9510
    %9942 = vmatpush.bf16.msra.mxu0 %v9505
    %9943 = vmatpush.bf16.msra.mxu0 %v9500
    %9944 = vmatpush.bf16.msra.mxu0 %v9495
    %9945 = vmatpush.bf16.msra.mxu0 %v9490
    %9946 = vmatpush.bf16.msra.mxu0 %v9485
    %9947 = vmatpush.bf16.msra.mxu0 %v9480
    %9948 = vmatmul.bf16.gmra.mxu0 %v9150
    %v9949 = vpop.f32.mrf.mxu0
    %v9950 = vadd.f32 %v9901, %v9949
    %v9951 = vpop.f32.mrf.mxu0
    %v9952 = vadd.f32 %v9903, %v9951
    %9953 = vmatmul.bf16.gmra.mxu0 %v9152
    %v9954 = vpop.f32.mrf.mxu0
    %v9955 = vadd.f32 %v9906, %v9954
    %v9956 = vpop.f32.mrf.mxu0
    %v9957 = vadd.f32 %v9908, %v9956
    %9958 = vmatmul.bf16.gmra.mxu0 %v9154
    %v9959 = vpop.f32.mrf.mxu0
    %v9960 = vadd.f32 %v9911, %v9959
    %v9961 = vpop.f32.mrf.mxu0
    %v9962 = vadd.f32 %v9913, %v9961
    %9963 = vmatmul.bf16.gmra.mxu0 %v9156
    %v9964 = vpop.f32.mrf.mxu0
    %v9965 = vadd.f32 %v9916, %v9964
    %v9966 = vpop.f32.mrf.mxu0
    %v9967 = vadd.f32 %v9918, %v9966
    %9968 = vmatmul.bf16.gmra.mxu0 %v9158
    %v9969 = vpop.f32.mrf.mxu0
    %v9970 = vadd.f32 %v9921, %v9969
    %v9971 = vpop.f32.mrf.mxu0
    %v9972 = vadd.f32 %v9923, %v9971
    %9973 = vmatmul.bf16.gmra.mxu0 %v9160
    %v9974 = vpop.f32.mrf.mxu0
    %v9975 = vadd.f32 %v9926, %v9974
    %v9976 = vpop.f32.mrf.mxu0
    %v9977 = vadd.f32 %v9928, %v9976
    %9978 = vmatmul.bf16.gmra.mxu0 %v9162
    %v9979 = vpop.f32.mrf.mxu0
    %v9980 = vadd.f32 %v9931, %v9979
    %v9981 = vpop.f32.mrf.mxu0
    %v9982 = vadd.f32 %v9933, %v9981
    %9983 = vmatmul.bf16.gmra.mxu0 %v9164
    %v9984 = vpop.f32.mrf.mxu0
    %v9985 = vadd.f32 %v9936, %v9984
    %v9986 = vpop.f32.mrf.mxu0
    %v9987 = vadd.f32 %v9938, %v9986
    %9988 = vdwg.mxu0
    %9989 = vmatpush.bf16.msra.mxu0 %v9476
    %9990 = vmatpush.bf16.msra.mxu0 %v9471
    %9991 = vmatpush.bf16.msra.mxu0 %v9466
    %9992 = vmatpush.bf16.msra.mxu0 %v9461
    %9993 = vmatpush.bf16.msra.mxu0 %v9456
    %9994 = vmatpush.bf16.msra.mxu0 %v9451
    %9995 = vmatpush.bf16.msra.mxu0 %v9446
    %9996 = vmatpush.bf16.msra.mxu0 %v9441
    %9997 = vmatmul.bf16.gmra.mxu0 %v9149
    %v9998 = vpop.f32.mrf.mxu0
    %v9999 = vadd.f32 0.0, %v9998
    %v10000 = vpop.f32.mrf.mxu0
    %v10001 = vadd.f32 0.0, %v10000
    %10002 = vmatmul.bf16.gmra.mxu0 %v9151
    %v10003 = vpop.f32.mrf.mxu0
    %v10004 = vadd.f32 0.0, %v10003
    %v10005 = vpop.f32.mrf.mxu0
    %v10006 = vadd.f32 0.0, %v10005
    %10007 = vmatmul.bf16.gmra.mxu0 %v9153
    %v10008 = vpop.f32.mrf.mxu0
    %v10009 = vadd.f32 0.0, %v10008
    %v10010 = vpop.f32.mrf.mxu0
    %v10011 = vadd.f32 0.0, %v10010
    %10012 = vmatmul.bf16.gmra.mxu0 %v9155
    %v10013 = vpop.f32.mrf.mxu0
    %v10014 = vadd.f32 0.0, %v10013
    %v10015 = vpop.f32.mrf.mxu0
    %v10016 = vadd.f32 0.0, %v10015
    %10017 = vmatmul.bf16.gmra.mxu0 %v9157
    %v10018 = vpop.f32.mrf.mxu0
    %v10019 = vadd.f32 0.0, %v10018
    %v10020 = vpop.f32.mrf.mxu0
    %v10021 = vadd.f32 0.0, %v10020
    %10022 = vmatmul.bf16.gmra.mxu0 %v9159
    %v10023 = vpop.f32.mrf.mxu0
    %v10024 = vadd.f32 0.0, %v10023
    %v10025 = vpop.f32.mrf.mxu0
    %v10026 = vadd.f32 0.0, %v10025
    %10027 = vmatmul.bf16.gmra.mxu0 %v9161
    %v10028 = vpop.f32.mrf.mxu0
    %v10029 = vadd.f32 0.0, %v10028
    %v10030 = vpop.f32.mrf.mxu0
    %v10031 = vadd.f32 0.0, %v10030
    %10032 = vmatmul.bf16.gmra.mxu0 %v9163
    %v10033 = vpop.f32.mrf.mxu0
    %v10034 = vadd.f32 0.0, %v10033
    %v10035 = vpop.f32.mrf.mxu0
    %v10036 = vadd.f32 0.0, %v10035
    %10037 = vdwg.mxu0
    %10038 = vmatpush.bf16.msra.mxu0 %v9516
    %10039 = vmatpush.bf16.msra.mxu0 %v9511
    %10040 = vmatpush.bf16.msra.mxu0 %v9506
    %10041 = vmatpush.bf16.msra.mxu0 %v9501
    %10042 = vmatpush.bf16.msra.mxu0 %v9496
    %10043 = vmatpush.bf16.msra.mxu0 %v9491
    %10044 = vmatpush.bf16.msra.mxu0 %v9486
    %10045 = vmatpush.bf16.msra.mxu0 %v9481
    %10046 = vmatmul.bf16.gmra.mxu0 %v9150
    %v10047 = vpop.f32.mrf.mxu0
    %v10048 = vadd.f32 %v9999, %v10047
    %v10049 = vpop.f32.mrf.mxu0
    %v10050 = vadd.f32 %v10001, %v10049
    %10051 = vmatmul.bf16.gmra.mxu0 %v9152
    %v10052 = vpop.f32.mrf.mxu0
    %v10053 = vadd.f32 %v10004, %v10052
    %v10054 = vpop.f32.mrf.mxu0
    %v10055 = vadd.f32 %v10006, %v10054
    %10056 = vmatmul.bf16.gmra.mxu0 %v9154
    %v10057 = vpop.f32.mrf.mxu0
    %v10058 = vadd.f32 %v10009, %v10057
    %v10059 = vpop.f32.mrf.mxu0
    %v10060 = vadd.f32 %v10011, %v10059
    %10061 = vmatmul.bf16.gmra.mxu0 %v9156
    %v10062 = vpop.f32.mrf.mxu0
    %v10063 = vadd.f32 %v10014, %v10062
    %v10064 = vpop.f32.mrf.mxu0
    %v10065 = vadd.f32 %v10016, %v10064
    %10066 = vmatmul.bf16.gmra.mxu0 %v9158
    %v10067 = vpop.f32.mrf.mxu0
    %v10068 = vadd.f32 %v10019, %v10067
    %v10069 = vpop.f32.mrf.mxu0
    %v10070 = vadd.f32 %v10021, %v10069
    %10071 = vmatmul.bf16.gmra.mxu0 %v9160
    %v10072 = vpop.f32.mrf.mxu0
    %v10073 = vadd.f32 %v10024, %v10072
    %v10074 = vpop.f32.mrf.mxu0
    %v10075 = vadd.f32 %v10026, %v10074
    %10076 = vmatmul.bf16.gmra.mxu0 %v9162
    %v10077 = vpop.f32.mrf.mxu0
    %v10078 = vadd.f32 %v10029, %v10077
    %v10079 = vpop.f32.mrf.mxu0
    %v10080 = vadd.f32 %v10031, %v10079
    %10081 = vmatmul.bf16.gmra.mxu0 %v9164
    %v10082 = vpop.f32.mrf.mxu0
    %v10083 = vadd.f32 %v10034, %v10082
    %v10084 = vpop.f32.mrf.mxu0
    %v10085 = vadd.f32 %v10036, %v10084
    %10086 = vdwg.mxu0
    %v10087 = vadd.f32 %v8685, %v9656
    %v10088 = vadd.f32 %v8686, %v9754
    %v10089 = vadd.f32 %v8687, %v9852
    %v10090 = vadd.f32 %v8688, %v9950
    %v10091 = vadd.f32 %v8689, %v10048
    %v10092 = vadd.f32 %v8690, %v9658
    %v10093 = vadd.f32 %v8691, %v9756
    %v10094 = vadd.f32 %v8692, %v9854
    %v10095 = vadd.f32 %v8693, %v9952
    %v10096 = vadd.f32 %v8694, %v10050
    %v10097 = vadd.f32 %v8695, %v9661
    %v10098 = vadd.f32 %v8696, %v9759
    %v10099 = vadd.f32 %v8697, %v9857
    %v10100 = vadd.f32 %v8698, %v9955
    %v10101 = vadd.f32 %v8699, %v10053
    %v10102 = vadd.f32 %v8700, %v9663
    %v10103 = vadd.f32 %v8701, %v9761
    %v10104 = vadd.f32 %v8702, %v9859
    %v10105 = vadd.f32 %v8703, %v9957
    %v10106 = vadd.f32 %v8704, %v10055
    %v10107 = vadd.f32 %v8705, %v9666
    %v10108 = vadd.f32 %v8706, %v9764
    %v10109 = vadd.f32 %v8707, %v9862
    %v10110 = vadd.f32 %v8708, %v9960
    %v10111 = vadd.f32 %v8709, %v10058
    %v10112 = vadd.f32 %v8710, %v9668
    %v10113 = vadd.f32 %v8711, %v9766
    %v10114 = vadd.f32 %v8712, %v9864
    %v10115 = vadd.f32 %v8713, %v9962
    %v10116 = vadd.f32 %v8714, %v10060
    %v10117 = vadd.f32 %v8715, %v9671
    %v10118 = vadd.f32 %v8716, %v9769
    %v10119 = vadd.f32 %v8717, %v9867
    %v10120 = vadd.f32 %v8718, %v9965
    %v10121 = vadd.f32 %v8719, %v10063
    %v10122 = vadd.f32 %v8720, %v9673
    %v10123 = vadd.f32 %v8721, %v9771
    %v10124 = vadd.f32 %v8722, %v9869
    %v10125 = vadd.f32 %v8723, %v9967
    %v10126 = vadd.f32 %v8724, %v10065
    %v10127 = vadd.f32 %v8725, %v9676
    %v10128 = vadd.f32 %v8726, %v9774
    %v10129 = vadd.f32 %v8727, %v9872
    %v10130 = vadd.f32 %v8728, %v9970
    %v10131 = vadd.f32 %v8729, %v10068
    %v10132 = vadd.f32 %v8730, %v9678
    %v10133 = vadd.f32 %v8731, %v9776
    %v10134 = vadd.f32 %v8732, %v9874
    %v10135 = vadd.f32 %v8733, %v9972
    %v10136 = vadd.f32 %v8734, %v10070
    %v10137 = vadd.f32 %v8735, %v9681
    %v10138 = vadd.f32 %v8736, %v9779
    %v10139 = vadd.f32 %v8737, %v9877
    %v10140 = vadd.f32 %v8738, %v9975
    %v10141 = vadd.f32 %v8739, %v10073
    %v10142 = vadd.f32 %v8740, %v9683
    %v10143 = vadd.f32 %v8741, %v9781
    %v10144 = vadd.f32 %v8742, %v9879
    %v10145 = vadd.f32 %v8743, %v9977
    %v10146 = vadd.f32 %v8744, %v10075
    %v10147 = vadd.f32 %v8745, %v9686
    %v10148 = vadd.f32 %v8746, %v9784
    %v10149 = vadd.f32 %v8747, %v9882
    %v10150 = vadd.f32 %v8748, %v9980
    %v10151 = vadd.f32 %v8749, %v10078
    %v10152 = vadd.f32 %v8750, %v9688
    %v10153 = vadd.f32 %v8751, %v9786
    %v10154 = vadd.f32 %v8752, %v9884
    %v10155 = vadd.f32 %v8753, %v9982
    %v10156 = vadd.f32 %v8754, %v10080
    %v10157 = vadd.f32 %v8755, %v9691
    %v10158 = vadd.f32 %v8756, %v9789
    %v10159 = vadd.f32 %v8757, %v9887
    %v10160 = vadd.f32 %v8758, %v9985
    %v10161 = vadd.f32 %v8759, %v10083
    %v10162 = vadd.f32 %v8760, %v9693
    %v10163 = vadd.f32 %v8761, %v9791
    %v10164 = vadd.f32 %v8762, %v9889
    %v10165 = vadd.f32 %v8763, %v9987
    %v10166 = vadd.f32 %v8764, %v10085
    %v10167 = vld [vmem:[%s7586] sm:$0xee]
    %v10168 = vld [vmem:[%s7586 + $0x10] sm:$0xee]
    %v10169 = vld [vmem:[%s7586 + $0x20] sm:$0xee]
    %v10170 = vld [vmem:[%s7586 + $0x30] sm:$0xee]
    %v10171 = vld [vmem:[%s7586 + $0x40] sm:$0xee]
    %v10172 = vld [vmem:[%s7586 + $0x50] sm:$0xee]
    %v10173 = vld [vmem:[%s7586 + $0x60] sm:$0xee]
    %v10174 = vld [vmem:[%s7586 + $0x70] sm:$0xee]
    %v10175 = vld [vmem:[%s7586 + $0xa0] sm:$0xee]
    %v10176 = vld [vmem:[%s7586 + $0xb0] sm:$0xee]
    %v10177 = vld [vmem:[%s7586 + $0xc0] sm:$0xee]
    %v10178 = vld [vmem:[%s7586 + $0xd0] sm:$0xee]
    %v10179 = vld [vmem:[%s7586 + $0xe0] sm:$0xee]
    %v10180 = vld [vmem:[%s7586 + $0xf0] sm:$0xee]
    %v10181 = vld [vmem:[%s7586 + $0x100] sm:$0xee]
    %v10182 = vld [vmem:[%s7586 + $0x110] sm:$0xee]
    %v10215 = vrot.slane %v10167, 5
    %v10216 = vrot.slane %v10215, 4
    %v10217 = vrot.slane %v8766, 5
    %v10218 = vsel %vm2536, %v10216, %v10217
    %v10219 = vrot.slane %v10168, 5
    %v10220 = vrot.slane %v10219, 4
    %v10221 = vrot.slane %v8768, 5
    %v10222 = vsel %vm2536, %v10220, %v10221
    %v10223 = vrot.slane %v10169, 5
    %v10224 = vrot.slane %v10223, 4
    %v10225 = vrot.slane %v8770, 5
    %v10226 = vsel %vm2536, %v10224, %v10225
    %v10227 = vrot.slane %v10170, 5
    %v10228 = vrot.slane %v10227, 4
    %v10229 = vrot.slane %v8772, 5
    %v10230 = vsel %vm2536, %v10228, %v10229
    %v10231 = vrot.slane %v10171, 5
    %v10232 = vrot.slane %v10231, 4
    %v10233 = vrot.slane %v8774, 5
    %v10234 = vsel %vm2536, %v10232, %v10233
    %v10235 = vrot.slane %v10172, 5
    %v10236 = vrot.slane %v10235, 4
    %v10237 = vrot.slane %v8776, 5
    %v10238 = vsel %vm2536, %v10236, %v10237
    %v10239 = vrot.slane %v10173, 5
    %v10240 = vrot.slane %v10239, 4
    %v10241 = vrot.slane %v8778, 5
    %v10242 = vsel %vm2536, %v10240, %v10241
    %v10243 = vrot.slane %v10174, 5
    %v10244 = vrot.slane %v10243, 4
    %v10245 = vrot.slane %v8780, 5
    %v10246 = vsel %vm2536, %v10244, %v10245
    %v10247 = vrot.slane %v10175, 5
    %v10248 = vrot.slane %v10247, 4
    %v10249 = vrot.slane %v8782, 5
    %v10250 = vsel %vm2536, %v10248, %v10249
    %v10251 = vrot.slane %v10176, 5
    %v10252 = vrot.slane %v10251, 4
    %v10253 = vrot.slane %v8784, 5
    %v10254 = vsel %vm2536, %v10252, %v10253
    %v10255 = vrot.slane %v10177, 5
    %v10256 = vrot.slane %v10255, 4
    %v10257 = vrot.slane %v8786, 5
    %v10258 = vsel %vm2536, %v10256, %v10257
    %v10259 = vrot.slane %v10178, 5
    %v10260 = vrot.slane %v10259, 4
    %v10261 = vrot.slane %v8788, 5
    %v10262 = vsel %vm2536, %v10260, %v10261
    %v10263 = vrot.slane %v10179, 5
    %v10264 = vrot.slane %v10263, 4
    %v10265 = vrot.slane %v8790, 5
    %v10266 = vsel %vm2536, %v10264, %v10265
    %v10267 = vrot.slane %v10180, 5
    %v10268 = vrot.slane %v10267, 4
    %v10269 = vrot.slane %v8792, 5
    %v10270 = vsel %vm2536, %v10268, %v10269
    %v10271 = vrot.slane %v10181, 5
    %v10272 = vrot.slane %v10271, 4
    %v10273 = vrot.slane %v8794, 5
    %v10274 = vsel %vm2536, %v10272, %v10273
    %v10275 = vrot.slane %v10182, 5
    %v10276 = vrot.slane %v10275, 4
    %v10277 = vrot.slane %v8796, 5
    %v10278 = vsel %vm2536, %v10276, %v10277
    %v10279 = vld [vmem:[#allocation2 + $0x1400] sm:$0xff]
    %v10280 = vld [vmem:[#allocation2 + $0x1408] sm:$0xff]
    %v10281 = vld [vmem:[#allocation2 + $0x1410] sm:$0xf]
    %v10282 = vld [vmem:[#allocation2 + $0x1414] sm:$0xff]
    %v10283 = vld [vmem:[#allocation2 + $0x141c] sm:$0xff]
    %v10284 = vld [vmem:[#allocation2 + $0x1424] sm:$0xf]
    %v10285 = vld [vmem:[#allocation2 + $0x1428] sm:$0xff]
    %v10286 = vld [vmem:[#allocation2 + $0x1430] sm:$0xff]
    %v10287 = vld [vmem:[#allocation2 + $0x1438] sm:$0xf]
    %v10288 = vld [vmem:[#allocation2 + $0x143c] sm:$0xff]
    %v10289 = vld [vmem:[#allocation2 + $0x1444] sm:$0xff]
    %v10290 = vld [vmem:[#allocation2 + $0x144c] sm:$0xf]
    %v10291 = vld [vmem:[#allocation2 + $0x1450] sm:$0xff]
    %v10292 = vld [vmem:[#allocation2 + $0x1458] sm:$0xff]
    %v10293 = vld [vmem:[#allocation2 + $0x1460] sm:$0xf]
    %v10294 = vld [vmem:[#allocation2 + $0x1464] sm:$0xff]
    %v10295 = vld [vmem:[#allocation2 + $0x146c] sm:$0xff]
    %v10296 = vld [vmem:[#allocation2 + $0x1474] sm:$0xf]
    %v10297 = vld [vmem:[#allocation2 + $0x1478] sm:$0xff]
    %v10298 = vld [vmem:[#allocation2 + $0x1480] sm:$0xff]
    %v10299 = vld [vmem:[#allocation2 + $0x1488] sm:$0xf]
    %v10300 = vld [vmem:[#allocation2 + $0x148c] sm:$0xff]
    %v10301 = vld [vmem:[#allocation2 + $0x1494] sm:$0xff]
    %v10302 = vld [vmem:[#allocation2 + $0x149c] sm:$0xf]
    %v10303 = vld [vmem:[#allocation2 + $0x14a0] sm:$0xff]
    %v10304 = vld [vmem:[#allocation2 + $0x14a8] sm:$0xff]
    %v10305 = vld [vmem:[#allocation2 + $0x14b0] sm:$0xf]
    %v10306 = vld [vmem:[#allocation2 + $0x14b4] sm:$0xff]
    %v10307 = vld [vmem:[#allocation2 + $0x14bc] sm:$0xff]
    %v10308 = vld [vmem:[#allocation2 + $0x14c4] sm:$0xf]
    %v10309 = vld [vmem:[#allocation2 + $0x14c8] sm:$0xff]
    %v10310 = vld [vmem:[#allocation2 + $0x14d0] sm:$0xff]
    %v10311 = vld [vmem:[#allocation2 + $0x14d8] sm:$0xf]
    %v10312 = vld [vmem:[#allocation2 + $0x14dc] sm:$0xff]
    %v10313 = vld [vmem:[#allocation2 + $0x14e4] sm:$0xff]
    %v10314 = vld [vmem:[#allocation2 + $0x14ec] sm:$0xf]
    %v10315 = vld [vmem:[#allocation2 + $0x14f0] sm:$0xff]
    %v10316 = vld [vmem:[#allocation2 + $0x14f8] sm:$0xff]
    %v10317 = vld [vmem:[#allocation2 + $0x1500] sm:$0xf]
    %v10318 = vld [vmem:[#allocation2 + $0x1504] sm:$0xff]
    %v10319 = vld [vmem:[#allocation2 + $0x150c] sm:$0xff]
    %v10320 = vld [vmem:[#allocation2 + $0x1514] sm:$0xf]
    %v10321 = vld [vmem:[#allocation2 + $0x1518] sm:$0xff]
    %v10322 = vld [vmem:[#allocation2 + $0x1520] sm:$0xff]
    %v10323 = vld [vmem:[#allocation2 + $0x1528] sm:$0xf]
    %v10324 = vld [vmem:[#allocation2 + $0x152c] sm:$0xff]
    %v10325 = vld [vmem:[#allocation2 + $0x1534] sm:$0xff]
    %v10326 = vld [vmem:[#allocation2 + $0x153c] sm:$0xf]
    %v10327 = vld [vmem:[#allocation2 + $0x1540] sm:$0xff]
    %v10328 = vld [vmem:[#allocation2 + $0x1548] sm:$0xff]
    %v10329 = vld [vmem:[#allocation2 + $0x1550] sm:$0xf]
    %v10330 = vld [vmem:[#allocation2 + $0x1554] sm:$0xff]
    %v10331 = vld [vmem:[#allocation2 + $0x155c] sm:$0xff]
    %v10332 = vld [vmem:[#allocation2 + $0x1564] sm:$0xf]
    %v10333 = vld [vmem:[#allocation2 + $0x1568] sm:$0xff]
    %v10334 = vld [vmem:[#allocation2 + $0x1570] sm:$0xff]
    %v10335 = vld [vmem:[#allocation2 + $0x1578] sm:$0xf]
    %v10336 = vld [vmem:[#allocation2 + $0x157c] sm:$0xff]
    %v10337 = vld [vmem:[#allocation2 + $0x1584] sm:$0xff]
    %v10338 = vld [vmem:[#allocation2 + $0x158c] sm:$0xf]
    %v10339 = vld [vmem:[#allocation2 + $0x1590] sm:$0xff]
    %v10340 = vld [vmem:[#allocation2 + $0x1598] sm:$0xff]
    %v10341 = vld [vmem:[#allocation2 + $0x15a0] sm:$0xf]
    %v10342 = vld [vmem:[#allocation2 + $0x15a4] sm:$0xff]
    %v10343 = vld [vmem:[#allocation2 + $0x15ac] sm:$0xff]
    %v10344 = vld [vmem:[#allocation2 + $0x15b4] sm:$0xf]
    %v10345 = vld [vmem:[#allocation2 + $0x15b8] sm:$0xff]
    %v10346 = vld [vmem:[#allocation2 + $0x15c0] sm:$0xff]
    %v10347 = vld [vmem:[#allocation2 + $0x15c8] sm:$0xf]
    %v10348 = vld [vmem:[#allocation2 + $0x15cc] sm:$0xff]
    %v10349 = vld [vmem:[#allocation2 + $0x15d4] sm:$0xff]
    %v10350 = vld [vmem:[#allocation2 + $0x15dc] sm:$0xf]
    %v10351 = vld [vmem:[#allocation2 + $0x15e0] sm:$0xff]
    %v10352 = vld [vmem:[#allocation2 + $0x15e8] sm:$0xff]
    %v10353 = vld [vmem:[#allocation2 + $0x15f0] sm:$0xf]
    %v10354 = vld [vmem:[#allocation2 + $0x15f4] sm:$0xff]
    %v10355 = vld [vmem:[#allocation2 + $0x15fc] sm:$0xff]
    %v10356 = vld [vmem:[#allocation2 + $0x1604] sm:$0xf]
    %v10357 = vld [vmem:[#allocation2 + $0x1608] sm:$0xff]
    %v10358 = vld [vmem:[#allocation2 + $0x1610] sm:$0xff]
    %v10359 = vld [vmem:[#allocation2 + $0x1618] sm:$0xf]
    %v10360 = vld [vmem:[#allocation2 + $0x161c] sm:$0xff]
    %v10361 = vld [vmem:[#allocation2 + $0x1624] sm:$0xff]
    %v10362 = vld [vmem:[#allocation2 + $0x162c] sm:$0xf]
    %v10363 = vld [vmem:[#allocation2 + $0x1630] sm:$0xff]
    %v10364 = vld [vmem:[#allocation2 + $0x1638] sm:$0xff]
    %v10365 = vld [vmem:[#allocation2 + $0x1640] sm:$0xf]
    %v10366 = vld [vmem:[#allocation2 + $0x1644] sm:$0xff]
    %v10367 = vld [vmem:[#allocation2 + $0x164c] sm:$0xff]
    %v10368 = vld [vmem:[#allocation2 + $0x1654] sm:$0xf]
    %v10369 = vld [vmem:[#allocation2 + $0x1658] sm:$0xff]
    %v10370 = vld [vmem:[#allocation2 + $0x1660] sm:$0xff]
    %v10371 = vld [vmem:[#allocation2 + $0x1668] sm:$0xf]
    %v10372 = vld [vmem:[#allocation2 + $0x166c] sm:$0xff]
    %v10373 = vld [vmem:[#allocation2 + $0x1674] sm:$0xff]
    %v10374 = vld [vmem:[#allocation2 + $0x167c] sm:$0xf]
    %v10375 = vunpack.c.l.b16 %v10218
    %v10376 = vunpack.c.h.b16 %v10218
    %v10377 = vunpack.c.l.b16 %v10222
    %v10378 = vunpack.c.h.b16 %v10222
    %v10379 = vunpack.c.l.b16 %v10226
    %v10380 = vunpack.c.h.b16 %v10226
    %v10381 = vunpack.c.l.b16 %v10230
    %v10382 = vunpack.c.h.b16 %v10230
    %v10383 = vunpack.c.l.b16 %v10234
    %v10384 = vunpack.c.h.b16 %v10234
    %v10385 = vunpack.c.l.b16 %v10238
    %v10386 = vunpack.c.h.b16 %v10238
    %v10387 = vunpack.c.l.b16 %v10242
    %v10388 = vunpack.c.h.b16 %v10242
    %v10389 = vunpack.c.l.b16 %v10246
    %v10390 = vunpack.c.h.b16 %v10246
    %v10391 = vunpack.c.l.b16 %v10250
    %v10392 = vunpack.c.h.b16 %v10250
    %v10393 = vunpack.c.l.b16 %v10254
    %v10394 = vunpack.c.h.b16 %v10254
    %v10395 = vunpack.c.l.b16 %v10258
    %v10396 = vunpack.c.h.b16 %v10258
    %v10397 = vunpack.c.l.b16 %v10262
    %v10398 = vunpack.c.h.b16 %v10262
    %v10399 = vunpack.c.l.b16 %v10266
    %v10400 = vunpack.c.h.b16 %v10266
    %v10401 = vunpack.c.l.b16 %v10270
    %v10402 = vunpack.c.h.b16 %v10270
    %v10403 = vunpack.c.l.b16 %v10274
    %v10404 = vunpack.c.h.b16 %v10274
    %v10405 = vunpack.c.l.b16 %v10278
    %v10406 = vunpack.c.h.b16 %v10278
    %v10407 = vpack.c.b16 %v10377, %v10375
    %v10408 = vpack.c.b16 %v10378, %v10376
    %v10409 = vpack.c.b16 %v10381, %v10379
    %v10410 = vpack.c.b16 %v10382, %v10380
    %v10411 = vpack.c.b16 %v10385, %v10383
    %v10412 = vpack.c.b16 %v10386, %v10384
    %v10413 = vpack.c.b16 %v10389, %v10387
    %v10414 = vpack.c.b16 %v10390, %v10388
    %v10415 = vpack.c.b16 %v10393, %v10391
    %v10416 = vpack.c.b16 %v10394, %v10392
    %v10417 = vpack.c.b16 %v10397, %v10395
    %v10418 = vpack.c.b16 %v10398, %v10396
    %v10419 = vpack.c.b16 %v10401, %v10399
    %v10420 = vpack.c.b16 %v10402, %v10400
    %v10421 = vpack.c.b16 %v10405, %v10403
    %v10422 = vpack.c.b16 %v10406, %v10404
    %v10535 = vunpack.c.l.b16 %v10279
    %v10536 = vunpack.c.h.b16 %v10279
    %v10537 = vunpack.c.l.b16 %v10280
    %v10538 = vunpack.c.h.b16 %v10280
    %v10539 = vunpack.c.l.b16 %v10281
    %v10540 = vunpack.c.l.b16 %v10282
    %v10541 = vunpack.c.h.b16 %v10282
    %v10542 = vunpack.c.l.b16 %v10283
    %v10543 = vunpack.c.h.b16 %v10283
    %v10544 = vunpack.c.l.b16 %v10284
    %v10545 = vunpack.c.l.b16 %v10285
    %v10546 = vunpack.c.h.b16 %v10285
    %v10547 = vunpack.c.l.b16 %v10286
    %v10548 = vunpack.c.h.b16 %v10286
    %v10549 = vunpack.c.l.b16 %v10287
    %v10550 = vunpack.c.l.b16 %v10288
    %v10551 = vunpack.c.h.b16 %v10288
    %v10552 = vunpack.c.l.b16 %v10289
    %v10553 = vunpack.c.h.b16 %v10289
    %v10554 = vunpack.c.l.b16 %v10290
    %v10555 = vunpack.c.l.b16 %v10291
    %v10556 = vunpack.c.h.b16 %v10291
    %v10557 = vunpack.c.l.b16 %v10292
    %v10558 = vunpack.c.h.b16 %v10292
    %v10559 = vunpack.c.l.b16 %v10293
    %v10560 = vunpack.c.l.b16 %v10294
    %v10561 = vunpack.c.h.b16 %v10294
    %v10562 = vunpack.c.l.b16 %v10295
    %v10563 = vunpack.c.h.b16 %v10295
    %v10564 = vunpack.c.l.b16 %v10296
    %v10565 = vunpack.c.l.b16 %v10297
    %v10566 = vunpack.c.h.b16 %v10297
    %v10567 = vunpack.c.l.b16 %v10298
    %v10568 = vunpack.c.h.b16 %v10298
    %v10569 = vunpack.c.l.b16 %v10299
    %v10570 = vunpack.c.l.b16 %v10300
    %v10571 = vunpack.c.h.b16 %v10300
    %v10572 = vunpack.c.l.b16 %v10301
    %v10573 = vunpack.c.h.b16 %v10301
    %v10574 = vunpack.c.l.b16 %v10302
    %v10575 = vunpack.c.l.b16 %v10303
    %v10576 = vunpack.c.h.b16 %v10303
    %v10577 = vunpack.c.l.b16 %v10304
    %v10578 = vunpack.c.h.b16 %v10304
    %v10579 = vunpack.c.l.b16 %v10305
    %v10580 = vunpack.c.l.b16 %v10306
    %v10581 = vunpack.c.h.b16 %v10306
    %v10582 = vunpack.c.l.b16 %v10307
    %v10583 = vunpack.c.h.b16 %v10307
    %v10584 = vunpack.c.l.b16 %v10308
    %v10585 = vunpack.c.l.b16 %v10309
    %v10586 = vunpack.c.h.b16 %v10309
    %v10587 = vunpack.c.l.b16 %v10310
    %v10588 = vunpack.c.h.b16 %v10310
    %v10589 = vunpack.c.l.b16 %v10311
    %v10590 = vunpack.c.l.b16 %v10312
    %v10591 = vunpack.c.h.b16 %v10312
    %v10592 = vunpack.c.l.b16 %v10313
    %v10593 = vunpack.c.h.b16 %v10313
    %v10594 = vunpack.c.l.b16 %v10314
    %v10595 = vunpack.c.l.b16 %v10315
    %v10596 = vunpack.c.h.b16 %v10315
    %v10597 = vunpack.c.l.b16 %v10316
    %v10598 = vunpack.c.h.b16 %v10316
    %v10599 = vunpack.c.l.b16 %v10317
    %v10600 = vunpack.c.l.b16 %v10318
    %v10601 = vunpack.c.h.b16 %v10318
    %v10602 = vunpack.c.l.b16 %v10319
    %v10603 = vunpack.c.h.b16 %v10319
    %v10604 = vunpack.c.l.b16 %v10320
    %v10605 = vunpack.c.l.b16 %v10321
    %v10606 = vunpack.c.h.b16 %v10321
    %v10607 = vunpack.c.l.b16 %v10322
    %v10608 = vunpack.c.h.b16 %v10322
    %v10609 = vunpack.c.l.b16 %v10323
    %v10610 = vunpack.c.l.b16 %v10324
    %v10611 = vunpack.c.h.b16 %v10324
    %v10612 = vunpack.c.l.b16 %v10325
    %v10613 = vunpack.c.h.b16 %v10325
    %v10614 = vunpack.c.l.b16 %v10326
    %v10615 = vunpack.c.l.b16 %v10327
    %v10616 = vunpack.c.h.b16 %v10327
    %v10617 = vunpack.c.l.b16 %v10328
    %v10618 = vunpack.c.h.b16 %v10328
    %v10619 = vunpack.c.l.b16 %v10329
    %v10620 = vunpack.c.l.b16 %v10330
    %v10621 = vunpack.c.h.b16 %v10330
    %v10622 = vunpack.c.l.b16 %v10331
    %v10623 = vunpack.c.h.b16 %v10331
    %v10624 = vunpack.c.l.b16 %v10332
    %v10625 = vunpack.c.l.b16 %v10333
    %v10626 = vunpack.c.h.b16 %v10333
    %v10627 = vunpack.c.l.b16 %v10334
    %v10628 = vunpack.c.h.b16 %v10334
    %v10629 = vunpack.c.l.b16 %v10335
    %v10630 = vunpack.c.l.b16 %v10336
    %v10631 = vunpack.c.h.b16 %v10336
    %v10632 = vunpack.c.l.b16 %v10337
    %v10633 = vunpack.c.h.b16 %v10337
    %v10634 = vunpack.c.l.b16 %v10338
    %v10635 = vunpack.c.l.b16 %v10339
    %v10636 = vunpack.c.h.b16 %v10339
    %v10637 = vunpack.c.l.b16 %v10340
    %v10638 = vunpack.c.h.b16 %v10340
    %v10639 = vunpack.c.l.b16 %v10341
    %v10640 = vunpack.c.l.b16 %v10342
    %v10641 = vunpack.c.h.b16 %v10342
    %v10642 = vunpack.c.l.b16 %v10343
    %v10643 = vunpack.c.h.b16 %v10343
    %v10644 = vunpack.c.l.b16 %v10344
    %v10645 = vunpack.c.l.b16 %v10345
    %v10646 = vunpack.c.h.b16 %v10345
    %v10647 = vunpack.c.l.b16 %v10346
    %v10648 = vunpack.c.h.b16 %v10346
    %v10649 = vunpack.c.l.b16 %v10347
    %v10650 = vunpack.c.l.b16 %v10348
    %v10651 = vunpack.c.h.b16 %v10348
    %v10652 = vunpack.c.l.b16 %v10349
    %v10653 = vunpack.c.h.b16 %v10349
    %v10654 = vunpack.c.l.b16 %v10350
    %v10655 = vunpack.c.l.b16 %v10351
    %v10656 = vunpack.c.h.b16 %v10351
    %v10657 = vunpack.c.l.b16 %v10352
    %v10658 = vunpack.c.h.b16 %v10352
    %v10659 = vunpack.c.l.b16 %v10353
    %v10660 = vunpack.c.l.b16 %v10354
    %v10661 = vunpack.c.h.b16 %v10354
    %v10662 = vunpack.c.l.b16 %v10355
    %v10663 = vunpack.c.h.b16 %v10355
    %v10664 = vunpack.c.l.b16 %v10356
    %v10665 = vunpack.c.l.b16 %v10357
    %v10666 = vunpack.c.h.b16 %v10357
    %v10667 = vunpack.c.l.b16 %v10358
    %v10668 = vunpack.c.h.b16 %v10358
    %v10669 = vunpack.c.l.b16 %v10359
    %v10670 = vunpack.c.l.b16 %v10360
    %v10671 = vunpack.c.h.b16 %v10360
    %v10672 = vunpack.c.l.b16 %v10361
    %v10673 = vunpack.c.h.b16 %v10361
    %v10674 = vunpack.c.l.b16 %v10362
    %v10675 = vunpack.c.l.b16 %v10363
    %v10676 = vunpack.c.h.b16 %v10363
    %v10677 = vunpack.c.l.b16 %v10364
    %v10678 = vunpack.c.h.b16 %v10364
    %v10679 = vunpack.c.l.b16 %v10365
    %v10680 = vunpack.c.l.b16 %v10366
    %v10681 = vunpack.c.h.b16 %v10366
    %v10682 = vunpack.c.l.b16 %v10367
    %v10683 = vunpack.c.h.b16 %v10367
    %v10684 = vunpack.c.l.b16 %v10368
    %v10685 = vunpack.c.l.b16 %v10369
    %v10686 = vunpack.c.h.b16 %v10369
    %v10687 = vunpack.c.l.b16 %v10370
    %v10688 = vunpack.c.h.b16 %v10370
    %v10689 = vunpack.c.l.b16 %v10371
    %v10690 = vunpack.c.l.b16 %v10372
    %v10691 = vunpack.c.h.b16 %v10372
    %v10692 = vunpack.c.l.b16 %v10373
    %v10693 = vunpack.c.h.b16 %v10373
    %v10694 = vunpack.c.l.b16 %v10374
    %v10695 = vpack.c.b16 %v10540, %v10535
    %v10696 = vpack.c.b16 %v10541, %v10536
    %v10697 = vpack.c.b16 %v10542, %v10537
    %v10698 = vpack.c.b16 %v10543, %v10538
    %v10699 = vpack.c.b16 %v10544, %v10539
    %v10700 = vpack.c.b16 %v10550, %v10545
    %v10701 = vpack.c.b16 %v10551, %v10546
    %v10702 = vpack.c.b16 %v10552, %v10547
    %v10703 = vpack.c.b16 %v10553, %v10548
    %v10704 = vpack.c.b16 %v10554, %v10549
    %v10705 = vpack.c.b16 %v10560, %v10555
    %v10706 = vpack.c.b16 %v10561, %v10556
    %v10707 = vpack.c.b16 %v10562, %v10557
    %v10708 = vpack.c.b16 %v10563, %v10558
    %v10709 = vpack.c.b16 %v10564, %v10559
    %v10710 = vpack.c.b16 %v10570, %v10565
    %v10711 = vpack.c.b16 %v10571, %v10566
    %v10712 = vpack.c.b16 %v10572, %v10567
    %v10713 = vpack.c.b16 %v10573, %v10568
    %v10714 = vpack.c.b16 %v10574, %v10569
    %v10715 = vpack.c.b16 %v10580, %v10575
    %v10716 = vpack.c.b16 %v10581, %v10576
    %v10717 = vpack.c.b16 %v10582, %v10577
    %v10718 = vpack.c.b16 %v10583, %v10578
    %v10719 = vpack.c.b16 %v10584, %v10579
    %v10720 = vpack.c.b16 %v10590, %v10585
    %v10721 = vpack.c.b16 %v10591, %v10586
    %v10722 = vpack.c.b16 %v10592, %v10587
    %v10723 = vpack.c.b16 %v10593, %v10588
    %v10724 = vpack.c.b16 %v10594, %v10589
    %v10725 = vpack.c.b16 %v10600, %v10595
    %v10726 = vpack.c.b16 %v10601, %v10596
    %v10727 = vpack.c.b16 %v10602, %v10597
    %v10728 = vpack.c.b16 %v10603, %v10598
    %v10729 = vpack.c.b16 %v10604, %v10599
    %v10730 = vpack.c.b16 %v10610, %v10605
    %v10731 = vpack.c.b16 %v10611, %v10606
    %v10732 = vpack.c.b16 %v10612, %v10607
    %v10733 = vpack.c.b16 %v10613, %v10608
    %v10734 = vpack.c.b16 %v10614, %v10609
    %v10735 = vpack.c.b16 %v10620, %v10615
    %v10736 = vpack.c.b16 %v10621, %v10616
    %v10737 = vpack.c.b16 %v10622, %v10617
    %v10738 = vpack.c.b16 %v10623, %v10618
    %v10739 = vpack.c.b16 %v10624, %v10619
    %v10740 = vpack.c.b16 %v10630, %v10625
    %v10741 = vpack.c.b16 %v10631, %v10626
    %v10742 = vpack.c.b16 %v10632, %v10627
    %v10743 = vpack.c.b16 %v10633, %v10628
    %v10744 = vpack.c.b16 %v10634, %v10629
    %v10745 = vpack.c.b16 %v10640, %v10635
    %v10746 = vpack.c.b16 %v10641, %v10636
    %v10747 = vpack.c.b16 %v10642, %v10637
    %v10748 = vpack.c.b16 %v10643, %v10638
    %v10749 = vpack.c.b16 %v10644, %v10639
    %v10750 = vpack.c.b16 %v10650, %v10645
    %v10751 = vpack.c.b16 %v10651, %v10646
    %v10752 = vpack.c.b16 %v10652, %v10647
    %v10753 = vpack.c.b16 %v10653, %v10648
    %v10754 = vpack.c.b16 %v10654, %v10649
    %v10755 = vpack.c.b16 %v10660, %v10655
    %v10756 = vpack.c.b16 %v10661, %v10656
    %v10757 = vpack.c.b16 %v10662, %v10657
    %v10758 = vpack.c.b16 %v10663, %v10658
    %v10759 = vpack.c.b16 %v10664, %v10659
    %v10760 = vpack.c.b16 %v10670, %v10665
    %v10761 = vpack.c.b16 %v10671, %v10666
    %v10762 = vpack.c.b16 %v10672, %v10667
    %v10763 = vpack.c.b16 %v10673, %v10668
    %v10764 = vpack.c.b16 %v10674, %v10669
    %v10765 = vpack.c.b16 %v10680, %v10675
    %v10766 = vpack.c.b16 %v10681, %v10676
    %v10767 = vpack.c.b16 %v10682, %v10677
    %v10768 = vpack.c.b16 %v10683, %v10678
    %v10769 = vpack.c.b16 %v10684, %v10679
    %v10770 = vpack.c.b16 %v10690, %v10685
    %v10771 = vpack.c.b16 %v10691, %v10686
    %v10772 = vpack.c.b16 %v10692, %v10687
    %v10773 = vpack.c.b16 %v10693, %v10688
    %v10774 = vpack.c.b16 %v10694, %v10689
    %10855 = vmatpush.bf16.msra.mxu0 %v10730
    %10856 = vmatpush.bf16.msra.mxu0 %v10725
    %10857 = vmatpush.bf16.msra.mxu0 %v10720
    %10858 = vmatpush.bf16.msra.mxu0 %v10715
    %10859 = vmatpush.bf16.msra.mxu0 %v10710
    %10860 = vmatpush.bf16.msra.mxu0 %v10705
    %10861 = vmatpush.bf16.msra.mxu0 %v10700
    %10862 = vmatpush.bf16.msra.mxu0 %v10695
    %10863 = vmatmul.bf16.gmra.mxu0 %v10407
    %v10864 = vpop.f32.mrf.mxu0
    %v10865 = vadd.f32 0.0, %v10864
    %v10866 = vpop.f32.mrf.mxu0
    %v10867 = vadd.f32 0.0, %v10866
    %10868 = vmatmul.bf16.gmra.mxu0 %v10409
    %v10869 = vpop.f32.mrf.mxu0
    %v10870 = vadd.f32 0.0, %v10869
    %v10871 = vpop.f32.mrf.mxu0
    %v10872 = vadd.f32 0.0, %v10871
    %10873 = vmatmul.bf16.gmra.mxu0 %v10411
    %v10874 = vpop.f32.mrf.mxu0
    %v10875 = vadd.f32 0.0, %v10874
    %v10876 = vpop.f32.mrf.mxu0
    %v10877 = vadd.f32 0.0, %v10876
    %10878 = vmatmul.bf16.gmra.mxu0 %v10413
    %v10879 = vpop.f32.mrf.mxu0
    %v10880 = vadd.f32 0.0, %v10879
    %v10881 = vpop.f32.mrf.mxu0
    %v10882 = vadd.f32 0.0, %v10881
    %10883 = vmatmul.bf16.gmra.mxu0 %v10415
    %v10884 = vpop.f32.mrf.mxu0
    %v10885 = vadd.f32 0.0, %v10884
    %v10886 = vpop.f32.mrf.mxu0
    %v10887 = vadd.f32 0.0, %v10886
    %10888 = vmatmul.bf16.gmra.mxu0 %v10417
    %v10889 = vpop.f32.mrf.mxu0
    %v10890 = vadd.f32 0.0, %v10889
    %v10891 = vpop.f32.mrf.mxu0
    %v10892 = vadd.f32 0.0, %v10891
    %10893 = vmatmul.bf16.gmra.mxu0 %v10419
    %v10894 = vpop.f32.mrf.mxu0
    %v10895 = vadd.f32 0.0, %v10894
    %v10896 = vpop.f32.mrf.mxu0
    %v10897 = vadd.f32 0.0, %v10896
    %10898 = vmatmul.bf16.gmra.mxu0 %v10421
    %v10899 = vpop.f32.mrf.mxu0
    %v10900 = vadd.f32 0.0, %v10899
    %v10901 = vpop.f32.mrf.mxu0
    %v10902 = vadd.f32 0.0, %v10901
    %10903 = vdwg.mxu0
    %10904 = vmatpush.bf16.msra.mxu0 %v10770
    %10905 = vmatpush.bf16.msra.mxu0 %v10765
    %10906 = vmatpush.bf16.msra.mxu0 %v10760
    %10907 = vmatpush.bf16.msra.mxu0 %v10755
    %10908 = vmatpush.bf16.msra.mxu0 %v10750
    %10909 = vmatpush.bf16.msra.mxu0 %v10745
    %10910 = vmatpush.bf16.msra.mxu0 %v10740
    %10911 = vmatpush.bf16.msra.mxu0 %v10735
    %10912 = vmatmul.bf16.gmra.mxu0 %v10408
    %v10913 = vpop.f32.mrf.mxu0
    %v10914 = vadd.f32 %v10865, %v10913
    %v10915 = vpop.f32.mrf.mxu0
    %v10916 = vadd.f32 %v10867, %v10915
    %10917 = vmatmul.bf16.gmra.mxu0 %v10410
    %v10918 = vpop.f32.mrf.mxu0
    %v10919 = vadd.f32 %v10870, %v10918
    %v10920 = vpop.f32.mrf.mxu0
    %v10921 = vadd.f32 %v10872, %v10920
    %10922 = vmatmul.bf16.gmra.mxu0 %v10412
    %v10923 = vpop.f32.mrf.mxu0
    %v10924 = vadd.f32 %v10875, %v10923
    %v10925 = vpop.f32.mrf.mxu0
    %v10926 = vadd.f32 %v10877, %v10925
    %10927 = vmatmul.bf16.gmra.mxu0 %v10414
    %v10928 = vpop.f32.mrf.mxu0
    %v10929 = vadd.f32 %v10880, %v10928
    %v10930 = vpop.f32.mrf.mxu0
    %v10931 = vadd.f32 %v10882, %v10930
    %10932 = vmatmul.bf16.gmra.mxu0 %v10416
    %v10933 = vpop.f32.mrf.mxu0
    %v10934 = vadd.f32 %v10885, %v10933
    %v10935 = vpop.f32.mrf.mxu0
    %v10936 = vadd.f32 %v10887, %v10935
    %10937 = vmatmul.bf16.gmra.mxu0 %v10418
    %v10938 = vpop.f32.mrf.mxu0
    %v10939 = vadd.f32 %v10890, %v10938
    %v10940 = vpop.f32.mrf.mxu0
    %v10941 = vadd.f32 %v10892, %v10940
    %10942 = vmatmul.bf16.gmra.mxu0 %v10420
    %v10943 = vpop.f32.mrf.mxu0
    %v10944 = vadd.f32 %v10895, %v10943
    %v10945 = vpop.f32.mrf.mxu0
    %v10946 = vadd.f32 %v10897, %v10945
    %10947 = vmatmul.bf16.gmra.mxu0 %v10422
    %v10948 = vpop.f32.mrf.mxu0
    %v10949 = vadd.f32 %v10900, %v10948
    %v10950 = vpop.f32.mrf.mxu0
    %v10951 = vadd.f32 %v10902, %v10950
    %10952 = vdwg.mxu0
    %10953 = vmatpush.bf16.msra.mxu0 %v10731
    %10954 = vmatpush.bf16.msra.mxu0 %v10726
    %10955 = vmatpush.bf16.msra.mxu0 %v10721
    %10956 = vmatpush.bf16.msra.mxu0 %v10716
    %10957 = vmatpush.bf16.msra.mxu0 %v10711
    %10958 = vmatpush.bf16.msra.mxu0 %v10706
    %10959 = vmatpush.bf16.msra.mxu0 %v10701
    %10960 = vmatpush.bf16.msra.mxu0 %v10696
    %10961 = vmatmul.bf16.gmra.mxu0 %v10407
    %v10962 = vpop.f32.mrf.mxu0
    %v10963 = vadd.f32 0.0, %v10962
    %v10964 = vpop.f32.mrf.mxu0
    %v10965 = vadd.f32 0.0, %v10964
    %10966 = vmatmul.bf16.gmra.mxu0 %v10409
    %v10967 = vpop.f32.mrf.mxu0
    %v10968 = vadd.f32 0.0, %v10967
    %v10969 = vpop.f32.mrf.mxu0
    %v10970 = vadd.f32 0.0, %v10969
    %10971 = vmatmul.bf16.gmra.mxu0 %v10411
    %v10972 = vpop.f32.mrf.mxu0
    %v10973 = vadd.f32 0.0, %v10972
    %v10974 = vpop.f32.mrf.mxu0
    %v10975 = vadd.f32 0.0, %v10974
    %10976 = vmatmul.bf16.gmra.mxu0 %v10413
    %v10977 = vpop.f32.mrf.mxu0
    %v10978 = vadd.f32 0.0, %v10977
    %v10979 = vpop.f32.mrf.mxu0
    %v10980 = vadd.f32 0.0, %v10979
    %10981 = vmatmul.bf16.gmra.mxu0 %v10415
    %v10982 = vpop.f32.mrf.mxu0
    %v10983 = vadd.f32 0.0, %v10982
    %v10984 = vpop.f32.mrf.mxu0
    %v10985 = vadd.f32 0.0, %v10984
    %10986 = vmatmul.bf16.gmra.mxu0 %v10417
    %v10987 = vpop.f32.mrf.mxu0
    %v10988 = vadd.f32 0.0, %v10987
    %v10989 = vpop.f32.mrf.mxu0
    %v10990 = vadd.f32 0.0, %v10989
    %10991 = vmatmul.bf16.gmra.mxu0 %v10419
    %v10992 = vpop.f32.mrf.mxu0
    %v10993 = vadd.f32 0.0, %v10992
    %v10994 = vpop.f32.mrf.mxu0
    %v10995 = vadd.f32 0.0, %v10994
    %10996 = vmatmul.bf16.gmra.mxu0 %v10421
    %v10997 = vpop.f32.mrf.mxu0
    %v10998 = vadd.f32 0.0, %v10997
    %v10999 = vpop.f32.mrf.mxu0
    %v11000 = vadd.f32 0.0, %v10999
    %11001 = vdwg.mxu0
    %11002 = vmatpush.bf16.msra.mxu0 %v10771
    %11003 = vmatpush.bf16.msra.mxu0 %v10766
    %11004 = vmatpush.bf16.msra.mxu0 %v10761
    %11005 = vmatpush.bf16.msra.mxu0 %v10756
    %11006 = vmatpush.bf16.msra.mxu0 %v10751
    %11007 = vmatpush.bf16.msra.mxu0 %v10746
    %11008 = vmatpush.bf16.msra.mxu0 %v10741
    %11009 = vmatpush.bf16.msra.mxu0 %v10736
    %11010 = vmatmul.bf16.gmra.mxu0 %v10408
    %v11011 = vpop.f32.mrf.mxu0
    %v11012 = vadd.f32 %v10963, %v11011
    %v11013 = vpop.f32.mrf.mxu0
    %v11014 = vadd.f32 %v10965, %v11013
    %11015 = vmatmul.bf16.gmra.mxu0 %v10410
    %v11016 = vpop.f32.mrf.mxu0
    %v11017 = vadd.f32 %v10968, %v11016
    %v11018 = vpop.f32.mrf.mxu0
    %v11019 = vadd.f32 %v10970, %v11018
    %11020 = vmatmul.bf16.gmra.mxu0 %v10412
    %v11021 = vpop.f32.mrf.mxu0
    %v11022 = vadd.f32 %v10973, %v11021
    %v11023 = vpop.f32.mrf.mxu0
    %v11024 = vadd.f32 %v10975, %v11023
    %11025 = vmatmul.bf16.gmra.mxu0 %v10414
    %v11026 = vpop.f32.mrf.mxu0
    %v11027 = vadd.f32 %v10978, %v11026
    %v11028 = vpop.f32.mrf.mxu0
    %v11029 = vadd.f32 %v10980, %v11028
    %11030 = vmatmul.bf16.gmra.mxu0 %v10416
    %v11031 = vpop.f32.mrf.mxu0
    %v11032 = vadd.f32 %v10983, %v11031
    %v11033 = vpop.f32.mrf.mxu0
    %v11034 = vadd.f32 %v10985, %v11033
    %11035 = vmatmul.bf16.gmra.mxu0 %v10418
    %v11036 = vpop.f32.mrf.mxu0
    %v11037 = vadd.f32 %v10988, %v11036
    %v11038 = vpop.f32.mrf.mxu0
    %v11039 = vadd.f32 %v10990, %v11038
    %11040 = vmatmul.bf16.gmra.mxu0 %v10420
    %v11041 = vpop.f32.mrf.mxu0
    %v11042 = vadd.f32 %v10993, %v11041
    %v11043 = vpop.f32.mrf.mxu0
    %v11044 = vadd.f32 %v10995, %v11043
    %11045 = vmatmul.bf16.gmra.mxu0 %v10422
    %v11046 = vpop.f32.mrf.mxu0
    %v11047 = vadd.f32 %v10998, %v11046
    %v11048 = vpop.f32.mrf.mxu0
    %v11049 = vadd.f32 %v11000, %v11048
    %11050 = vdwg.mxu0
    %11051 = vmatpush.bf16.msra.mxu0 %v10732
    %11052 = vmatpush.bf16.msra.mxu0 %v10727
    %11053 = vmatpush.bf16.msra.mxu0 %v10722
    %11054 = vmatpush.bf16.msra.mxu0 %v10717
    %11055 = vmatpush.bf16.msra.mxu0 %v10712
    %11056 = vmatpush.bf16.msra.mxu0 %v10707
    %11057 = vmatpush.bf16.msra.mxu0 %v10702
    %11058 = vmatpush.bf16.msra.mxu0 %v10697
    %11059 = vmatmul.bf16.gmra.mxu0 %v10407
    %v11060 = vpop.f32.mrf.mxu0
    %v11061 = vadd.f32 0.0, %v11060
    %v11062 = vpop.f32.mrf.mxu0
    %v11063 = vadd.f32 0.0, %v11062
    %11064 = vmatmul.bf16.gmra.mxu0 %v10409
    %v11065 = vpop.f32.mrf.mxu0
    %v11066 = vadd.f32 0.0, %v11065
    %v11067 = vpop.f32.mrf.mxu0
    %v11068 = vadd.f32 0.0, %v11067
    %11069 = vmatmul.bf16.gmra.mxu0 %v10411
    %v11070 = vpop.f32.mrf.mxu0
    %v11071 = vadd.f32 0.0, %v11070
    %v11072 = vpop.f32.mrf.mxu0
    %v11073 = vadd.f32 0.0, %v11072
    %11074 = vmatmul.bf16.gmra.mxu0 %v10413
    %v11075 = vpop.f32.mrf.mxu0
    %v11076 = vadd.f32 0.0, %v11075
    %v11077 = vpop.f32.mrf.mxu0
    %v11078 = vadd.f32 0.0, %v11077
    %11079 = vmatmul.bf16.gmra.mxu0 %v10415
    %v11080 = vpop.f32.mrf.mxu0
    %v11081 = vadd.f32 0.0, %v11080
    %v11082 = vpop.f32.mrf.mxu0
    %v11083 = vadd.f32 0.0, %v11082
    %11084 = vmatmul.bf16.gmra.mxu0 %v10417
    %v11085 = vpop.f32.mrf.mxu0
    %v11086 = vadd.f32 0.0, %v11085
    %v11087 = vpop.f32.mrf.mxu0
    %v11088 = vadd.f32 0.0, %v11087
    %11089 = vmatmul.bf16.gmra.mxu0 %v10419
    %v11090 = vpop.f32.mrf.mxu0
    %v11091 = vadd.f32 0.0, %v11090
    %v11092 = vpop.f32.mrf.mxu0
    %v11093 = vadd.f32 0.0, %v11092
    %11094 = vmatmul.bf16.gmra.mxu0 %v10421
    %v11095 = vpop.f32.mrf.mxu0
    %v11096 = vadd.f32 0.0, %v11095
    %v11097 = vpop.f32.mrf.mxu0
    %v11098 = vadd.f32 0.0, %v11097
    %11099 = vdwg.mxu0
    %11100 = vmatpush.bf16.msra.mxu0 %v10772
    %11101 = vmatpush.bf16.msra.mxu0 %v10767
    %11102 = vmatpush.bf16.msra.mxu0 %v10762
    %11103 = vmatpush.bf16.msra.mxu0 %v10757
    %11104 = vmatpush.bf16.msra.mxu0 %v10752
    %11105 = vmatpush.bf16.msra.mxu0 %v10747
    %11106 = vmatpush.bf16.msra.mxu0 %v10742
    %11107 = vmatpush.bf16.msra.mxu0 %v10737
    %11108 = vmatmul.bf16.gmra.mxu0 %v10408
    %v11109 = vpop.f32.mrf.mxu0
    %v11110 = vadd.f32 %v11061, %v11109
    %v11111 = vpop.f32.mrf.mxu0
    %v11112 = vadd.f32 %v11063, %v11111
    %11113 = vmatmul.bf16.gmra.mxu0 %v10410
    %v11114 = vpop.f32.mrf.mxu0
    %v11115 = vadd.f32 %v11066, %v11114
    %v11116 = vpop.f32.mrf.mxu0
    %v11117 = vadd.f32 %v11068, %v11116
    %11118 = vmatmul.bf16.gmra.mxu0 %v10412
    %v11119 = vpop.f32.mrf.mxu0
    %v11120 = vadd.f32 %v11071, %v11119
    %v11121 = vpop.f32.mrf.mxu0
    %v11122 = vadd.f32 %v11073, %v11121
    %11123 = vmatmul.bf16.gmra.mxu0 %v10414
    %v11124 = vpop.f32.mrf.mxu0
    %v11125 = vadd.f32 %v11076, %v11124
    %v11126 = vpop.f32.mrf.mxu0
    %v11127 = vadd.f32 %v11078, %v11126
    %11128 = vmatmul.bf16.gmra.mxu0 %v10416
    %v11129 = vpop.f32.mrf.mxu0
    %v11130 = vadd.f32 %v11081, %v11129
    %v11131 = vpop.f32.mrf.mxu0
    %v11132 = vadd.f32 %v11083, %v11131
    %11133 = vmatmul.bf16.gmra.mxu0 %v10418
    %v11134 = vpop.f32.mrf.mxu0
    %v11135 = vadd.f32 %v11086, %v11134
    %v11136 = vpop.f32.mrf.mxu0
    %v11137 = vadd.f32 %v11088, %v11136
    %11138 = vmatmul.bf16.gmra.mxu0 %v10420
    %v11139 = vpop.f32.mrf.mxu0
    %v11140 = vadd.f32 %v11091, %v11139
    %v11141 = vpop.f32.mrf.mxu0
    %v11142 = vadd.f32 %v11093, %v11141
    %11143 = vmatmul.bf16.gmra.mxu0 %v10422
    %v11144 = vpop.f32.mrf.mxu0
    %v11145 = vadd.f32 %v11096, %v11144
    %v11146 = vpop.f32.mrf.mxu0
    %v11147 = vadd.f32 %v11098, %v11146
    %11148 = vdwg.mxu0
    %11149 = vmatpush.bf16.msra.mxu0 %v10733
    %11150 = vmatpush.bf16.msra.mxu0 %v10728
    %11151 = vmatpush.bf16.msra.mxu0 %v10723
    %11152 = vmatpush.bf16.msra.mxu0 %v10718
    %11153 = vmatpush.bf16.msra.mxu0 %v10713
    %11154 = vmatpush.bf16.msra.mxu0 %v10708
    %11155 = vmatpush.bf16.msra.mxu0 %v10703
    %11156 = vmatpush.bf16.msra.mxu0 %v10698
    %11157 = vmatmul.bf16.gmra.mxu0 %v10407
    %v11158 = vpop.f32.mrf.mxu0
    %v11159 = vadd.f32 0.0, %v11158
    %v11160 = vpop.f32.mrf.mxu0
    %v11161 = vadd.f32 0.0, %v11160
    %11162 = vmatmul.bf16.gmra.mxu0 %v10409
    %v11163 = vpop.f32.mrf.mxu0
    %v11164 = vadd.f32 0.0, %v11163
    %v11165 = vpop.f32.mrf.mxu0
    %v11166 = vadd.f32 0.0, %v11165
    %11167 = vmatmul.bf16.gmra.mxu0 %v10411
    %v11168 = vpop.f32.mrf.mxu0
    %v11169 = vadd.f32 0.0, %v11168
    %v11170 = vpop.f32.mrf.mxu0
    %v11171 = vadd.f32 0.0, %v11170
    %11172 = vmatmul.bf16.gmra.mxu0 %v10413
    %v11173 = vpop.f32.mrf.mxu0
    %v11174 = vadd.f32 0.0, %v11173
    %v11175 = vpop.f32.mrf.mxu0
    %v11176 = vadd.f32 0.0, %v11175
    %11177 = vmatmul.bf16.gmra.mxu0 %v10415
    %v11178 = vpop.f32.mrf.mxu0
    %v11179 = vadd.f32 0.0, %v11178
    %v11180 = vpop.f32.mrf.mxu0
    %v11181 = vadd.f32 0.0, %v11180
    %11182 = vmatmul.bf16.gmra.mxu0 %v10417
    %v11183 = vpop.f32.mrf.mxu0
    %v11184 = vadd.f32 0.0, %v11183
    %v11185 = vpop.f32.mrf.mxu0
    %v11186 = vadd.f32 0.0, %v11185
    %11187 = vmatmul.bf16.gmra.mxu0 %v10419
    %v11188 = vpop.f32.mrf.mxu0
    %v11189 = vadd.f32 0.0, %v11188
    %v11190 = vpop.f32.mrf.mxu0
    %v11191 = vadd.f32 0.0, %v11190
    %11192 = vmatmul.bf16.gmra.mxu0 %v10421
    %v11193 = vpop.f32.mrf.mxu0
    %v11194 = vadd.f32 0.0, %v11193
    %v11195 = vpop.f32.mrf.mxu0
    %v11196 = vadd.f32 0.0, %v11195
    %11197 = vdwg.mxu0
    %11198 = vmatpush.bf16.msra.mxu0 %v10773
    %11199 = vmatpush.bf16.msra.mxu0 %v10768
    %11200 = vmatpush.bf16.msra.mxu0 %v10763
    %11201 = vmatpush.bf16.msra.mxu0 %v10758
    %11202 = vmatpush.bf16.msra.mxu0 %v10753
    %11203 = vmatpush.bf16.msra.mxu0 %v10748
    %11204 = vmatpush.bf16.msra.mxu0 %v10743
    %11205 = vmatpush.bf16.msra.mxu0 %v10738
    %11206 = vmatmul.bf16.gmra.mxu0 %v10408
    %v11207 = vpop.f32.mrf.mxu0
    %v11208 = vadd.f32 %v11159, %v11207
    %v11209 = vpop.f32.mrf.mxu0
    %v11210 = vadd.f32 %v11161, %v11209
    %11211 = vmatmul.bf16.gmra.mxu0 %v10410
    %v11212 = vpop.f32.mrf.mxu0
    %v11213 = vadd.f32 %v11164, %v11212
    %v11214 = vpop.f32.mrf.mxu0
    %v11215 = vadd.f32 %v11166, %v11214
    %11216 = vmatmul.bf16.gmra.mxu0 %v10412
    %v11217 = vpop.f32.mrf.mxu0
    %v11218 = vadd.f32 %v11169, %v11217
    %v11219 = vpop.f32.mrf.mxu0
    %v11220 = vadd.f32 %v11171, %v11219
    %11221 = vmatmul.bf16.gmra.mxu0 %v10414
    %v11222 = vpop.f32.mrf.mxu0
    %v11223 = vadd.f32 %v11174, %v11222
    %v11224 = vpop.f32.mrf.mxu0
    %v11225 = vadd.f32 %v11176, %v11224
    %11226 = vmatmul.bf16.gmra.mxu0 %v10416
    %v11227 = vpop.f32.mrf.mxu0
    %v11228 = vadd.f32 %v11179, %v11227
    %v11229 = vpop.f32.mrf.mxu0
    %v11230 = vadd.f32 %v11181, %v11229
    %11231 = vmatmul.bf16.gmra.mxu0 %v10418
    %v11232 = vpop.f32.mrf.mxu0
    %v11233 = vadd.f32 %v11184, %v11232
    %v11234 = vpop.f32.mrf.mxu0
    %v11235 = vadd.f32 %v11186, %v11234
    %11236 = vmatmul.bf16.gmra.mxu0 %v10420
    %v11237 = vpop.f32.mrf.mxu0
    %v11238 = vadd.f32 %v11189, %v11237
    %v11239 = vpop.f32.mrf.mxu0
    %v11240 = vadd.f32 %v11191, %v11239
    %11241 = vmatmul.bf16.gmra.mxu0 %v10422
    %v11242 = vpop.f32.mrf.mxu0
    %v11243 = vadd.f32 %v11194, %v11242
    %v11244 = vpop.f32.mrf.mxu0
    %v11245 = vadd.f32 %v11196, %v11244
    %11246 = vdwg.mxu0
    %11247 = vmatpush.bf16.msra.mxu0 %v10734
    %11248 = vmatpush.bf16.msra.mxu0 %v10729
    %11249 = vmatpush.bf16.msra.mxu0 %v10724
    %11250 = vmatpush.bf16.msra.mxu0 %v10719
    %11251 = vmatpush.bf16.msra.mxu0 %v10714
    %11252 = vmatpush.bf16.msra.mxu0 %v10709
    %11253 = vmatpush.bf16.msra.mxu0 %v10704
    %11254 = vmatpush.bf16.msra.mxu0 %v10699
    %11255 = vmatmul.bf16.gmra.mxu0 %v10407
    %v11256 = vpop.f32.mrf.mxu0
    %v11257 = vadd.f32 0.0, %v11256
    %v11258 = vpop.f32.mrf.mxu0
    %v11259 = vadd.f32 0.0, %v11258
    %11260 = vmatmul.bf16.gmra.mxu0 %v10409
    %v11261 = vpop.f32.mrf.mxu0
    %v11262 = vadd.f32 0.0, %v11261
    %v11263 = vpop.f32.mrf.mxu0
    %v11264 = vadd.f32 0.0, %v11263
    %11265 = vmatmul.bf16.gmra.mxu0 %v10411
    %v11266 = vpop.f32.mrf.mxu0
    %v11267 = vadd.f32 0.0, %v11266
    %v11268 = vpop.f32.mrf.mxu0
    %v11269 = vadd.f32 0.0, %v11268
    %11270 = vmatmul.bf16.gmra.mxu0 %v10413
    %v11271 = vpop.f32.mrf.mxu0
    %v11272 = vadd.f32 0.0, %v11271
    %v11273 = vpop.f32.mrf.mxu0
    %v11274 = vadd.f32 0.0, %v11273
    %11275 = vmatmul.bf16.gmra.mxu0 %v10415
    %v11276 = vpop.f32.mrf.mxu0
    %v11277 = vadd.f32 0.0, %v11276
    %v11278 = vpop.f32.mrf.mxu0
    %v11279 = vadd.f32 0.0, %v11278
    %11280 = vmatmul.bf16.gmra.mxu0 %v10417
    %v11281 = vpop.f32.mrf.mxu0
    %v11282 = vadd.f32 0.0, %v11281
    %v11283 = vpop.f32.mrf.mxu0
    %v11284 = vadd.f32 0.0, %v11283
    %11285 = vmatmul.bf16.gmra.mxu0 %v10419
    %v11286 = vpop.f32.mrf.mxu0
    %v11287 = vadd.f32 0.0, %v11286
    %v11288 = vpop.f32.mrf.mxu0
    %v11289 = vadd.f32 0.0, %v11288
    %11290 = vmatmul.bf16.gmra.mxu0 %v10421
    %v11291 = vpop.f32.mrf.mxu0
    %v11292 = vadd.f32 0.0, %v11291
    %v11293 = vpop.f32.mrf.mxu0
    %v11294 = vadd.f32 0.0, %v11293
    %11295 = vdwg.mxu0
    %11296 = vmatpush.bf16.msra.mxu0 %v10774
    %11297 = vmatpush.bf16.msra.mxu0 %v10769
    %11298 = vmatpush.bf16.msra.mxu0 %v10764
    %11299 = vmatpush.bf16.msra.mxu0 %v10759
    %11300 = vmatpush.bf16.msra.mxu0 %v10754
    %11301 = vmatpush.bf16.msra.mxu0 %v10749
    %11302 = vmatpush.bf16.msra.mxu0 %v10744
    %11303 = vmatpush.bf16.msra.mxu0 %v10739
    %11304 = vmatmul.bf16.gmra.mxu0 %v10408
    %v11305 = vpop.f32.mrf.mxu0
    %v11306 = vadd.f32 %v11257, %v11305
    %v11307 = vpop.f32.mrf.mxu0
    %v11308 = vadd.f32 %v11259, %v11307
    %11309 = vmatmul.bf16.gmra.mxu0 %v10410
    %v11310 = vpop.f32.mrf.mxu0
    %v11311 = vadd.f32 %v11262, %v11310
    %v11312 = vpop.f32.mrf.mxu0
    %v11313 = vadd.f32 %v11264, %v11312
    %11314 = vmatmul.bf16.gmra.mxu0 %v10412
    %v11315 = vpop.f32.mrf.mxu0
    %v11316 = vadd.f32 %v11267, %v11315
    %v11317 = vpop.f32.mrf.mxu0
    %v11318 = vadd.f32 %v11269, %v11317
    %11319 = vmatmul.bf16.gmra.mxu0 %v10414
    %v11320 = vpop.f32.mrf.mxu0
    %v11321 = vadd.f32 %v11272, %v11320
    %v11322 = vpop.f32.mrf.mxu0
    %v11323 = vadd.f32 %v11274, %v11322
    %11324 = vmatmul.bf16.gmra.mxu0 %v10416
    %v11325 = vpop.f32.mrf.mxu0
    %v11326 = vadd.f32 %v11277, %v11325
    %v11327 = vpop.f32.mrf.mxu0
    %v11328 = vadd.f32 %v11279, %v11327
    %11329 = vmatmul.bf16.gmra.mxu0 %v10418
    %v11330 = vpop.f32.mrf.mxu0
    %v11331 = vadd.f32 %v11282, %v11330
    %v11332 = vpop.f32.mrf.mxu0
    %v11333 = vadd.f32 %v11284, %v11332
    %11334 = vmatmul.bf16.gmra.mxu0 %v10420
    %v11335 = vpop.f32.mrf.mxu0
    %v11336 = vadd.f32 %v11287, %v11335
    %v11337 = vpop.f32.mrf.mxu0
    %v11338 = vadd.f32 %v11289, %v11337
    %11339 = vmatmul.bf16.gmra.mxu0 %v10422
    %v11340 = vpop.f32.mrf.mxu0
    %v11341 = vadd.f32 %v11292, %v11340
    %v11342 = vpop.f32.mrf.mxu0
    %v11343 = vadd.f32 %v11294, %v11342
    %11344 = vdwg.mxu0
    %v11345 = vadd.f32 %v10087, %v10914
    %v11346 = vadd.f32 %v10088, %v11012
    %v11347 = vadd.f32 %v10089, %v11110
    %v11348 = vadd.f32 %v10090, %v11208
    %v11349 = vadd.f32 %v10091, %v11306
    %v11350 = vadd.f32 %v10092, %v10916
    %v11351 = vadd.f32 %v10093, %v11014
    %v11352 = vadd.f32 %v10094, %v11112
    %v11353 = vadd.f32 %v10095, %v11210
    %v11354 = vadd.f32 %v10096, %v11308
    %v11355 = vadd.f32 %v10097, %v10919
    %v11356 = vadd.f32 %v10098, %v11017
    %v11357 = vadd.f32 %v10099, %v11115
    %v11358 = vadd.f32 %v10100, %v11213
    %v11359 = vadd.f32 %v10101, %v11311
    %v11360 = vadd.f32 %v10102, %v10921
    %v11361 = vadd.f32 %v10103, %v11019
    %v11362 = vadd.f32 %v10104, %v11117
    %v11363 = vadd.f32 %v10105, %v11215
    %v11364 = vadd.f32 %v10106, %v11313
    %v11365 = vadd.f32 %v10107, %v10924
    %v11366 = vadd.f32 %v10108, %v11022
    %v11367 = vadd.f32 %v10109, %v11120
    %v11368 = vadd.f32 %v10110, %v11218
    %v11369 = vadd.f32 %v10111, %v11316
    %v11370 = vadd.f32 %v10112, %v10926
    %v11371 = vadd.f32 %v10113, %v11024
    %v11372 = vadd.f32 %v10114, %v11122
    %v11373 = vadd.f32 %v10115, %v11220
    %v11374 = vadd.f32 %v10116, %v11318
    %v11375 = vadd.f32 %v10117, %v10929
    %v11376 = vadd.f32 %v10118, %v11027
    %v11377 = vadd.f32 %v10119, %v11125
    %v11378 = vadd.f32 %v10120, %v11223
    %v11379 = vadd.f32 %v10121, %v11321
    %v11380 = vadd.f32 %v10122, %v10931
    %v11381 = vadd.f32 %v10123, %v11029
    %v11382 = vadd.f32 %v10124, %v11127
    %v11383 = vadd.f32 %v10125, %v11225
    %v11384 = vadd.f32 %v10126, %v11323
    %v11385 = vadd.f32 %v10127, %v10934
    %v11386 = vadd.f32 %v10128, %v11032
    %v11387 = vadd.f32 %v10129, %v11130
    %v11388 = vadd.f32 %v10130, %v11228
    %v11389 = vadd.f32 %v10131, %v11326
    %v11390 = vadd.f32 %v10132, %v10936
    %v11391 = vadd.f32 %v10133, %v11034
    %v11392 = vadd.f32 %v10134, %v11132
    %v11393 = vadd.f32 %v10135, %v11230
    %v11394 = vadd.f32 %v10136, %v11328
    %v11395 = vadd.f32 %v10137, %v10939
    %v11396 = vadd.f32 %v10138, %v11037
    %v11397 = vadd.f32 %v10139, %v11135
    %v11398 = vadd.f32 %v10140, %v11233
    %v11399 = vadd.f32 %v10141, %v11331
    %v11400 = vadd.f32 %v10142, %v10941
    %v11401 = vadd.f32 %v10143, %v11039
    %v11402 = vadd.f32 %v10144, %v11137
    %v11403 = vadd.f32 %v10145, %v11235
    %v11404 = vadd.f32 %v10146, %v11333
    %v11405 = vadd.f32 %v10147, %v10944
    %v11406 = vadd.f32 %v10148, %v11042
    %v11407 = vadd.f32 %v10149, %v11140
    %v11408 = vadd.f32 %v10150, %v11238
    %v11409 = vadd.f32 %v10151, %v11336
    %v11410 = vadd.f32 %v10152, %v10946
    %v11411 = vadd.f32 %v10153, %v11044
    %v11412 = vadd.f32 %v10154, %v11142
    %v11413 = vadd.f32 %v10155, %v11240
    %v11414 = vadd.f32 %v10156, %v11338
    %v11415 = vadd.f32 %v10157, %v10949
    %v11416 = vadd.f32 %v10158, %v11047
    %v11417 = vadd.f32 %v10159, %v11145
    %v11418 = vadd.f32 %v10160, %v11243
    %v11419 = vadd.f32 %v10161, %v11341
    %v11420 = vadd.f32 %v10162, %v10951
    %v11421 = vadd.f32 %v10163, %v11049
    %v11422 = vadd.f32 %v10164, %v11147
    %v11423 = vadd.f32 %v10165, %v11245
    %v11424 = vadd.f32 %v10166, %v11343
    %v11425 = vld [vmem:[#allocation4] sm:$0x1f]
    %v11427 = vperm.slane %v11425, 0
    %v11428 = vperm.slane %v11425, 1
    %v11429 = vperm.slane %v11425, 2
    %v11430 = vperm.slane %v11425, 3
    %v11431 = vperm.slane %v11425, 4
    %v11437 = vadd.f32 %v11345, %v11427
    %v11438 = vadd.f32 %v11346, %v11428
    %v11439 = vadd.f32 %v11347, %v11429
    %v11440 = vadd.f32 %v11348, %v11430
    %v11441 = vadd.f32 %v11349, %v11431
    %v11442 = vadd.f32 %v11350, %v11427
    %v11443 = vadd.f32 %v11351, %v11428
    %v11444 = vadd.f32 %v11352, %v11429
    %v11445 = vadd.f32 %v11353, %v11430
    %v11446 = vadd.f32 %v11354, %v11431
    %v11447 = vadd.f32 %v11355, %v11427
    %v11448 = vadd.f32 %v11356, %v11428
    %v11449 = vadd.f32 %v11357, %v11429
    %v11450 = vadd.f32 %v11358, %v11430
    %v11451 = vadd.f32 %v11359, %v11431
    %v11452 = vadd.f32 %v11360, %v11427
    %v11453 = vadd.f32 %v11361, %v11428
    %v11454 = vadd.f32 %v11362, %v11429
    %v11455 = vadd.f32 %v11363, %v11430
    %v11456 = vadd.f32 %v11364, %v11431
    %v11457 = vadd.f32 %v11365, %v11427
    %v11458 = vadd.f32 %v11366, %v11428
    %v11459 = vadd.f32 %v11367, %v11429
    %v11460 = vadd.f32 %v11368, %v11430
    %v11461 = vadd.f32 %v11369, %v11431
    %v11462 = vadd.f32 %v11370, %v11427
    %v11463 = vadd.f32 %v11371, %v11428
    %v11464 = vadd.f32 %v11372, %v11429
    %v11465 = vadd.f32 %v11373, %v11430
    %v11466 = vadd.f32 %v11374, %v11431
    %v11467 = vadd.f32 %v11375, %v11427
    %v11468 = vadd.f32 %v11376, %v11428
    %v11469 = vadd.f32 %v11377, %v11429
    %v11470 = vadd.f32 %v11378, %v11430
    %v11471 = vadd.f32 %v11379, %v11431
    %v11472 = vadd.f32 %v11380, %v11427
    %v11473 = vadd.f32 %v11381, %v11428
    %v11474 = vadd.f32 %v11382, %v11429
    %v11475 = vadd.f32 %v11383, %v11430
    %v11476 = vadd.f32 %v11384, %v11431
    %v11477 = vadd.f32 %v11385, %v11427
    %v11478 = vadd.f32 %v11386, %v11428
    %v11479 = vadd.f32 %v11387, %v11429
    %v11480 = vadd.f32 %v11388, %v11430
    %v11481 = vadd.f32 %v11389, %v11431
    %v11482 = vadd.f32 %v11390, %v11427
    %v11483 = vadd.f32 %v11391, %v11428
    %v11484 = vadd.f32 %v11392, %v11429
    %v11485 = vadd.f32 %v11393, %v11430
    %v11486 = vadd.f32 %v11394, %v11431
    %v11487 = vadd.f32 %v11395, %v11427
    %v11488 = vadd.f32 %v11396, %v11428
    %v11489 = vadd.f32 %v11397, %v11429
    %v11490 = vadd.f32 %v11398, %v11430
    %v11491 = vadd.f32 %v11399, %v11431
    %v11492 = vadd.f32 %v11400, %v11427
    %v11493 = vadd.f32 %v11401, %v11428
    %v11494 = vadd.f32 %v11402, %v11429
    %v11495 = vadd.f32 %v11403, %v11430
    %v11496 = vadd.f32 %v11404, %v11431
    %v11497 = vadd.f32 %v11405, %v11427
    %v11498 = vadd.f32 %v11406, %v11428
    %v11499 = vadd.f32 %v11407, %v11429
    %v11500 = vadd.f32 %v11408, %v11430
    %v11501 = vadd.f32 %v11409, %v11431
    %v11502 = vadd.f32 %v11410, %v11427
    %v11503 = vadd.f32 %v11411, %v11428
    %v11504 = vadd.f32 %v11412, %v11429
    %v11505 = vadd.f32 %v11413, %v11430
    %v11506 = vadd.f32 %v11414, %v11431
    %v11507 = vadd.f32 %v11415, %v11427
    %v11508 = vadd.f32 %v11416, %v11428
    %v11509 = vadd.f32 %v11417, %v11429
    %v11510 = vadd.f32 %v11418, %v11430
    %v11511 = vadd.f32 %v11419, %v11431
    %v11512 = vadd.f32 %v11420, %v11427
    %v11513 = vadd.f32 %v11421, %v11428
    %v11514 = vadd.f32 %v11422, %v11429
    %v11515 = vadd.f32 %v11423, %v11430
    %v11516 = vadd.f32 %v11424, %v11431
    %v11517 = vmax.f32 %v11437, 0.0
    %v11518 = vmax.f32 %v11438, 0.0
    %v11519 = vmax.f32 %v11439, 0.0
    %v11520 = vmax.f32 %v11440, 0.0
    %v11521 = vmax.f32 %v11441, 0.0
    %v11522 = vmax.f32 %v11442, 0.0
    %v11523 = vmax.f32 %v11443, 0.0
    %v11524 = vmax.f32 %v11444, 0.0
    %v11525 = vmax.f32 %v11445, 0.0
    %v11526 = vmax.f32 %v11446, 0.0
    %v11527 = vmax.f32 %v11447, 0.0
    %v11528 = vmax.f32 %v11448, 0.0
    %v11529 = vmax.f32 %v11449, 0.0
    %v11530 = vmax.f32 %v11450, 0.0
    %v11531 = vmax.f32 %v11451, 0.0
    %v11532 = vmax.f32 %v11452, 0.0
    %v11533 = vmax.f32 %v11453, 0.0
    %v11534 = vmax.f32 %v11454, 0.0
    %v11535 = vmax.f32 %v11455, 0.0
    %v11536 = vmax.f32 %v11456, 0.0
    %v11537 = vmax.f32 %v11457, 0.0
    %v11538 = vmax.f32 %v11458, 0.0
    %v11539 = vmax.f32 %v11459, 0.0
    %v11540 = vmax.f32 %v11460, 0.0
    %v11541 = vmax.f32 %v11461, 0.0
    %v11542 = vmax.f32 %v11462, 0.0
    %v11543 = vmax.f32 %v11463, 0.0
    %v11544 = vmax.f32 %v11464, 0.0
    %v11545 = vmax.f32 %v11465, 0.0
    %v11546 = vmax.f32 %v11466, 0.0
    %v11547 = vmax.f32 %v11467, 0.0
    %v11548 = vmax.f32 %v11468, 0.0
    %v11549 = vmax.f32 %v11469, 0.0
    %v11550 = vmax.f32 %v11470, 0.0
    %v11551 = vmax.f32 %v11471, 0.0
    %v11552 = vmax.f32 %v11472, 0.0
    %v11553 = vmax.f32 %v11473, 0.0
    %v11554 = vmax.f32 %v11474, 0.0
    %v11555 = vmax.f32 %v11475, 0.0
    %v11556 = vmax.f32 %v11476, 0.0
    %v11557 = vmax.f32 %v11477, 0.0
    %v11558 = vmax.f32 %v11478, 0.0
    %v11559 = vmax.f32 %v11479, 0.0
    %v11560 = vmax.f32 %v11480, 0.0
    %v11561 = vmax.f32 %v11481, 0.0
    %v11562 = vmax.f32 %v11482, 0.0
    %v11563 = vmax.f32 %v11483, 0.0
    %v11564 = vmax.f32 %v11484, 0.0
    %v11565 = vmax.f32 %v11485, 0.0
    %v11566 = vmax.f32 %v11486, 0.0
    %v11567 = vmax.f32 %v11487, 0.0
    %v11568 = vmax.f32 %v11488, 0.0
    %v11569 = vmax.f32 %v11489, 0.0
    %v11570 = vmax.f32 %v11490, 0.0
    %v11571 = vmax.f32 %v11491, 0.0
    %v11572 = vmax.f32 %v11492, 0.0
    %v11573 = vmax.f32 %v11493, 0.0
    %v11574 = vmax.f32 %v11494, 0.0
    %v11575 = vmax.f32 %v11495, 0.0
    %v11576 = vmax.f32 %v11496, 0.0
    %v11577 = vmax.f32 %v11497, 0.0
    %v11578 = vmax.f32 %v11498, 0.0
    %v11579 = vmax.f32 %v11499, 0.0
    %v11580 = vmax.f32 %v11500, 0.0
    %v11581 = vmax.f32 %v11501, 0.0
    %v11582 = vmax.f32 %v11502, 0.0
    %v11583 = vmax.f32 %v11503, 0.0
    %v11584 = vmax.f32 %v11504, 0.0
    %v11585 = vmax.f32 %v11505, 0.0
    %v11586 = vmax.f32 %v11506, 0.0
    %v11587 = vmax.f32 %v11507, 0.0
    %v11588 = vmax.f32 %v11508, 0.0
    %v11589 = vmax.f32 %v11509, 0.0
    %v11590 = vmax.f32 %v11510, 0.0
    %v11591 = vmax.f32 %v11511, 0.0
    %v11592 = vmax.f32 %v11512, 0.0
    %v11593 = vmax.f32 %v11513, 0.0
    %v11594 = vmax.f32 %v11514, 0.0
    %v11595 = vmax.f32 %v11515, 0.0
    %v11596 = vmax.f32 %v11516, 0.0
    %v11597 = vpack.c.bf16 %v11522, %v11517
    %v11598 = vpack.c.bf16 %v11523, %v11518
    %v11599 = vpack.c.bf16 %v11524, %v11519
    %v11600 = vpack.c.bf16 %v11525, %v11520
    %v11601 = vpack.c.bf16 %v11526, %v11521
    %v11602 = vpack.c.bf16 %v11532, %v11527
    %v11603 = vpack.c.bf16 %v11533, %v11528
    %v11604 = vpack.c.bf16 %v11534, %v11529
    %v11605 = vpack.c.bf16 %v11535, %v11530
    %v11606 = vpack.c.bf16 %v11536, %v11531
    %v11607 = vpack.c.bf16 %v11542, %v11537
    %v11608 = vpack.c.bf16 %v11543, %v11538
    %v11609 = vpack.c.bf16 %v11544, %v11539
    %v11610 = vpack.c.bf16 %v11545, %v11540
    %v11611 = vpack.c.bf16 %v11546, %v11541
    %v11612 = vpack.c.bf16 %v11552, %v11547
    %v11613 = vpack.c.bf16 %v11553, %v11548
    %v11614 = vpack.c.bf16 %v11554, %v11549
    %v11615 = vpack.c.bf16 %v11555, %v11550
    %v11616 = vpack.c.bf16 %v11556, %v11551
    %v11617 = vpack.c.bf16 %v11562, %v11557
    %v11618 = vpack.c.bf16 %v11563, %v11558
    %v11619 = vpack.c.bf16 %v11564, %v11559
    %v11620 = vpack.c.bf16 %v11565, %v11560
    %v11621 = vpack.c.bf16 %v11566, %v11561
    %v11622 = vpack.c.bf16 %v11572, %v11567
    %v11623 = vpack.c.bf16 %v11573, %v11568
    %v11624 = vpack.c.bf16 %v11574, %v11569
    %v11625 = vpack.c.bf16 %v11575, %v11570
    %v11626 = vpack.c.bf16 %v11576, %v11571
    %v11627 = vpack.c.bf16 %v11582, %v11577
    %v11628 = vpack.c.bf16 %v11583, %v11578
    %v11629 = vpack.c.bf16 %v11584, %v11579
    %v11630 = vpack.c.bf16 %v11585, %v11580
    %v11631 = vpack.c.bf16 %v11586, %v11581
    %v11632 = vpack.c.bf16 %v11592, %v11587
    %v11633 = vpack.c.bf16 %v11593, %v11588
    %v11634 = vpack.c.bf16 %v11594, %v11589
    %v11635 = vpack.c.bf16 %v11595, %v11590
    %v11636 = vpack.c.bf16 %v11596, %v11591
    %v11637 = vld [vmem:[#allocation6] sm:$0xf]
    %v11638 = vld [vmem:[#allocation6 + $0x4] sm:$0xf]
    %v11639 = vld [vmem:[#allocation6 + $0x8] sm:$0xf]
    %v11640 = vld [vmem:[#allocation6 + $0xc] sm:$0xf]
    %v11641 = vld [vmem:[#allocation6 + $0x10] sm:$0xf]
    %v11642 = vld [vmem:[#allocation6 + $0x14] sm:$0xf]
    %v11643 = vld [vmem:[#allocation6 + $0x18] sm:$0xf]
    %v11644 = vld [vmem:[#allocation6 + $0x1c] sm:$0xf]
    %v11645 = vld [vmem:[#allocation6 + $0x20] sm:$0xf]
    %v11646 = vld [vmem:[#allocation6 + $0x24] sm:$0xf]
    %v11647 = vld [vmem:[#allocation6 + $0x28] sm:$0xf]
    %v11648 = vld [vmem:[#allocation6 + $0x2c] sm:$0xf]
    %v11649 = vld [vmem:[#allocation6 + $0x30] sm:$0xf]
    %v11650 = vld [vmem:[#allocation6 + $0x34] sm:$0xf]
    %v11651 = vld [vmem:[#allocation6 + $0x38] sm:$0xf]
    %v11652 = vld [vmem:[#allocation6 + $0x3c] sm:$0xf]
    %v11653 = vld [vmem:[#allocation6 + $0x40] sm:$0xf]
    %v11654 = vld [vmem:[#allocation6 + $0x44] sm:$0xf]
    %v11655 = vld [vmem:[#allocation6 + $0x48] sm:$0xf]
    %v11656 = vld [vmem:[#allocation6 + $0x4c] sm:$0xf]
    %v11657 = vld [vmem:[#allocation6 + $0x50] sm:$0xf]
    %v11658 = vld [vmem:[#allocation6 + $0x54] sm:$0xf]
    %v11659 = vld [vmem:[#allocation6 + $0x58] sm:$0xf]
    %v11660 = vld [vmem:[#allocation6 + $0x5c] sm:$0xf]
    %v11661 = vld [vmem:[#allocation6 + $0x60] sm:$0xf]
    %v11662 = vld [vmem:[#allocation6 + $0x64] sm:$0xf]
    %v11663 = vld [vmem:[#allocation6 + $0x68] sm:$0xf]
    %v11664 = vld [vmem:[#allocation6 + $0x6c] sm:$0xf]
    %v11665 = vld [vmem:[#allocation6 + $0x70] sm:$0xf]
    %v11666 = vld [vmem:[#allocation6 + $0x74] sm:$0xf]
    %v11667 = vld [vmem:[#allocation6 + $0x78] sm:$0xf]
    %v11668 = vld [vmem:[#allocation6 + $0x7c] sm:$0xf]
    %v11669 = vld [vmem:[#allocation6 + $0x80] sm:$0xf]
    %v11670 = vld [vmem:[#allocation6 + $0x84] sm:$0xf]
    %v11671 = vld [vmem:[#allocation6 + $0x88] sm:$0xf]
    %v11672 = vld [vmem:[#allocation6 + $0x8c] sm:$0xf]
    %v11673 = vld [vmem:[#allocation6 + $0x90] sm:$0xf]
    %v11674 = vld [vmem:[#allocation6 + $0x94] sm:$0xf]
    %v11675 = vld [vmem:[#allocation6 + $0x98] sm:$0xf]
    %v11676 = vld [vmem:[#allocation6 + $0x9c] sm:$0xf]
    %v11677 = vld [vmem:[#allocation6 + $0xa0] sm:$0xf]
    %v11678 = vld [vmem:[#allocation6 + $0xa4] sm:$0xf]
    %v11679 = vld [vmem:[#allocation6 + $0xa8] sm:$0xf]
    %v11680 = vld [vmem:[#allocation6 + $0xac] sm:$0xf]
    %v11681 = vld [vmem:[#allocation6 + $0xb0] sm:$0xf]
    %v11682 = vld [vmem:[#allocation6 + $0xb4] sm:$0xf]
    %v11683 = vld [vmem:[#allocation6 + $0xb8] sm:$0xf]
    %v11684 = vld [vmem:[#allocation6 + $0xbc] sm:$0xf]
    %v11685 = vld [vmem:[#allocation6 + $0xc0] sm:$0xf]
    %v11686 = vld [vmem:[#allocation6 + $0xc4] sm:$0xf]
    %v11687 = vld [vmem:[#allocation6 + $0xc8] sm:$0xf]
    %v11688 = vld [vmem:[#allocation6 + $0xcc] sm:$0xf]
    %v11689 = vld [vmem:[#allocation6 + $0xd0] sm:$0xf]
    %v11690 = vld [vmem:[#allocation6 + $0xd4] sm:$0xf]
    %v11691 = vld [vmem:[#allocation6 + $0xd8] sm:$0xf]
    %v11692 = vld [vmem:[#allocation6 + $0xdc] sm:$0xf]
    %v11693 = vld [vmem:[#allocation6 + $0xe0] sm:$0xf]
    %v11694 = vld [vmem:[#allocation6 + $0xe4] sm:$0xf]
    %v11695 = vld [vmem:[#allocation6 + $0xe8] sm:$0xf]
    %v11696 = vld [vmem:[#allocation6 + $0xec] sm:$0xf]
    %v11697 = vld [vmem:[#allocation6 + $0xf0] sm:$0xf]
    %v11698 = vld [vmem:[#allocation6 + $0xf4] sm:$0xf]
    %v11699 = vld [vmem:[#allocation6 + $0xf8] sm:$0xf]
    %v11700 = vld [vmem:[#allocation6 + $0xfc] sm:$0xf]
    %v11701 = vld [vmem:[#allocation6 + $0x100] sm:$0xf]
    %v11702 = vld [vmem:[#allocation6 + $0x104] sm:$0xf]
    %v11703 = vld [vmem:[#allocation6 + $0x108] sm:$0xf]
    %v11704 = vld [vmem:[#allocation6 + $0x10c] sm:$0xf]
    %v11705 = vld [vmem:[#allocation6 + $0x110] sm:$0xf]
    %v11706 = vld [vmem:[#allocation6 + $0x114] sm:$0xf]
    %v11707 = vld [vmem:[#allocation6 + $0x118] sm:$0xf]
    %v11708 = vld [vmem:[#allocation6 + $0x11c] sm:$0xf]
    %v11709 = vld [vmem:[#allocation6 + $0x120] sm:$0xf]
    %v11710 = vld [vmem:[#allocation6 + $0x124] sm:$0xf]
    %v11711 = vld [vmem:[#allocation6 + $0x128] sm:$0xf]
    %v11712 = vld [vmem:[#allocation6 + $0x12c] sm:$0xf]
    %v11713 = vld [vmem:[#allocation6 + $0x130] sm:$0xf]
    %v11714 = vld [vmem:[#allocation6 + $0x134] sm:$0xf]
    %v11715 = vld [vmem:[#allocation6 + $0x138] sm:$0xf]
    %v11716 = vld [vmem:[#allocation6 + $0x13c] sm:$0xf]
    %v11717 = vld [vmem:[#allocation7] sm:$0x1]
    %v11719 = vperm.slane %v11717, 0
    %v11801 = vunpack.c.l.b16 %v11637
    %v11802 = vunpack.c.l.b16 %v11638
    %v11803 = vunpack.c.l.b16 %v11639
    %v11804 = vunpack.c.l.b16 %v11640
    %v11805 = vunpack.c.l.b16 %v11641
    %v11806 = vunpack.c.l.b16 %v11642
    %v11807 = vunpack.c.l.b16 %v11643
    %v11808 = vunpack.c.l.b16 %v11644
    %v11809 = vunpack.c.l.b16 %v11645
    %v11810 = vunpack.c.l.b16 %v11646
    %v11811 = vunpack.c.l.b16 %v11647
    %v11812 = vunpack.c.l.b16 %v11648
    %v11813 = vunpack.c.l.b16 %v11649
    %v11814 = vunpack.c.l.b16 %v11650
    %v11815 = vunpack.c.l.b16 %v11651
    %v11816 = vunpack.c.l.b16 %v11652
    %v11817 = vunpack.c.l.b16 %v11653
    %v11818 = vunpack.c.l.b16 %v11654
    %v11819 = vunpack.c.l.b16 %v11655
    %v11820 = vunpack.c.l.b16 %v11656
    %v11821 = vunpack.c.l.b16 %v11657
    %v11822 = vunpack.c.l.b16 %v11658
    %v11823 = vunpack.c.l.b16 %v11659
    %v11824 = vunpack.c.l.b16 %v11660
    %v11825 = vunpack.c.l.b16 %v11661
    %v11826 = vunpack.c.l.b16 %v11662
    %v11827 = vunpack.c.l.b16 %v11663
    %v11828 = vunpack.c.l.b16 %v11664
    %v11829 = vunpack.c.l.b16 %v11665
    %v11830 = vunpack.c.l.b16 %v11666
    %v11831 = vunpack.c.l.b16 %v11667
    %v11832 = vunpack.c.l.b16 %v11668
    %v11833 = vunpack.c.l.b16 %v11669
    %v11834 = vunpack.c.l.b16 %v11670
    %v11835 = vunpack.c.l.b16 %v11671
    %v11836 = vunpack.c.l.b16 %v11672
    %v11837 = vunpack.c.l.b16 %v11673
    %v11838 = vunpack.c.l.b16 %v11674
    %v11839 = vunpack.c.l.b16 %v11675
    %v11840 = vunpack.c.l.b16 %v11676
    %v11841 = vunpack.c.l.b16 %v11677
    %v11842 = vunpack.c.l.b16 %v11678
    %v11843 = vunpack.c.l.b16 %v11679
    %v11844 = vunpack.c.l.b16 %v11680
    %v11845 = vunpack.c.l.b16 %v11681
    %v11846 = vunpack.c.l.b16 %v11682
    %v11847 = vunpack.c.l.b16 %v11683
    %v11848 = vunpack.c.l.b16 %v11684
    %v11849 = vunpack.c.l.b16 %v11685
    %v11850 = vunpack.c.l.b16 %v11686
    %v11851 = vunpack.c.l.b16 %v11687
    %v11852 = vunpack.c.l.b16 %v11688
    %v11853 = vunpack.c.l.b16 %v11689
    %v11854 = vunpack.c.l.b16 %v11690
    %v11855 = vunpack.c.l.b16 %v11691
    %v11856 = vunpack.c.l.b16 %v11692
    %v11857 = vunpack.c.l.b16 %v11693
    %v11858 = vunpack.c.l.b16 %v11694
    %v11859 = vunpack.c.l.b16 %v11695
    %v11860 = vunpack.c.l.b16 %v11696
    %v11861 = vunpack.c.l.b16 %v11697
    %v11862 = vunpack.c.l.b16 %v11698
    %v11863 = vunpack.c.l.b16 %v11699
    %v11864 = vunpack.c.l.b16 %v11700
    %v11865 = vunpack.c.l.b16 %v11701
    %v11866 = vunpack.c.l.b16 %v11702
    %v11867 = vunpack.c.l.b16 %v11703
    %v11868 = vunpack.c.l.b16 %v11704
    %v11869 = vunpack.c.l.b16 %v11705
    %v11870 = vunpack.c.l.b16 %v11706
    %v11871 = vunpack.c.l.b16 %v11707
    %v11872 = vunpack.c.l.b16 %v11708
    %v11873 = vunpack.c.l.b16 %v11709
    %v11874 = vunpack.c.l.b16 %v11710
    %v11875 = vunpack.c.l.b16 %v11711
    %v11876 = vunpack.c.l.b16 %v11712
    %v11877 = vunpack.c.l.b16 %v11713
    %v11878 = vunpack.c.l.b16 %v11714
    %v11879 = vunpack.c.l.b16 %v11715
    %v11880 = vunpack.c.l.b16 %v11716
    %v11881 = vpack.c.b16 %v11802, %v11801
    %v11882 = vpack.c.b16 %v11804, %v11803
    %v11883 = vpack.c.b16 %v11806, %v11805
    %v11884 = vpack.c.b16 %v11808, %v11807
    %v11885 = vpack.c.b16 %v11810, %v11809
    %v11886 = vpack.c.b16 %v11812, %v11811
    %v11887 = vpack.c.b16 %v11814, %v11813
    %v11888 = vpack.c.b16 %v11816, %v11815
    %v11889 = vpack.c.b16 %v11818, %v11817
    %v11890 = vpack.c.b16 %v11820, %v11819
    %v11891 = vpack.c.b16 %v11822, %v11821
    %v11892 = vpack.c.b16 %v11824, %v11823
    %v11893 = vpack.c.b16 %v11826, %v11825
    %v11894 = vpack.c.b16 %v11828, %v11827
    %v11895 = vpack.c.b16 %v11830, %v11829
    %v11896 = vpack.c.b16 %v11832, %v11831
    %v11897 = vpack.c.b16 %v11834, %v11833
    %v11898 = vpack.c.b16 %v11836, %v11835
    %v11899 = vpack.c.b16 %v11838, %v11837
    %v11900 = vpack.c.b16 %v11840, %v11839
    %v11901 = vpack.c.b16 %v11842, %v11841
    %v11902 = vpack.c.b16 %v11844, %v11843
    %v11903 = vpack.c.b16 %v11846, %v11845
    %v11904 = vpack.c.b16 %v11848, %v11847
    %v11905 = vpack.c.b16 %v11850, %v11849
    %v11906 = vpack.c.b16 %v11852, %v11851
    %v11907 = vpack.c.b16 %v11854, %v11853
    %v11908 = vpack.c.b16 %v11856, %v11855
    %v11909 = vpack.c.b16 %v11858, %v11857
    %v11910 = vpack.c.b16 %v11860, %v11859
    %v11911 = vpack.c.b16 %v11862, %v11861
    %v11912 = vpack.c.b16 %v11864, %v11863
    %v11913 = vpack.c.b16 %v11866, %v11865
    %v11914 = vpack.c.b16 %v11868, %v11867
    %v11915 = vpack.c.b16 %v11870, %v11869
    %v11916 = vpack.c.b16 %v11872, %v11871
    %v11917 = vpack.c.b16 %v11874, %v11873
    %v11918 = vpack.c.b16 %v11876, %v11875
    %v11919 = vpack.c.b16 %v11878, %v11877
    %v11920 = vpack.c.b16 %v11880, %v11879
    %11961 = vmatpush.bf16.msra.mxu0 %v11888
    %11962 = vmatpush.bf16.msra.mxu0 %v11887
    %11963 = vmatpush.bf16.msra.mxu0 %v11886
    %11964 = vmatpush.bf16.msra.mxu0 %v11885
    %11965 = vmatpush.bf16.msra.mxu0 %v11884
    %11966 = vmatpush.bf16.msra.mxu0 %v11883
    %11967 = vmatpush.bf16.msra.mxu0 %v11882
    %11968 = vmatpush.bf16.msra.mxu0 %v11881
    %11969 = vmatmul.bf16.gmra.mxu0 %v11597
    %v11970 = vpop.f32.mrf.mxu0
    %v11971 = vadd.f32 %v11719, %v11970
    %v11972 = vpop.f32.mrf.mxu0
    %v11973 = vadd.f32 %v11719, %v11972
    %11974 = vmatmul.bf16.gmra.mxu0 %v11602
    %v11975 = vpop.f32.mrf.mxu0
    %v11976 = vadd.f32 %v11719, %v11975
    %v11977 = vpop.f32.mrf.mxu0
    %v11978 = vadd.f32 %v11719, %v11977
    %11979 = vmatmul.bf16.gmra.mxu0 %v11607
    %v11980 = vpop.f32.mrf.mxu0
    %v11981 = vadd.f32 %v11719, %v11980
    %v11982 = vpop.f32.mrf.mxu0
    %v11983 = vadd.f32 %v11719, %v11982
    %11984 = vmatmul.bf16.gmra.mxu0 %v11612
    %v11985 = vpop.f32.mrf.mxu0
    %v11986 = vadd.f32 %v11719, %v11985
    %v11987 = vpop.f32.mrf.mxu0
    %v11988 = vadd.f32 %v11719, %v11987
    %11989 = vmatmul.bf16.gmra.mxu0 %v11617
    %v11990 = vpop.f32.mrf.mxu0
    %v11991 = vadd.f32 %v11719, %v11990
    %v11992 = vpop.f32.mrf.mxu0
    %v11993 = vadd.f32 %v11719, %v11992
    %11994 = vmatmul.bf16.gmra.mxu0 %v11622
    %v11995 = vpop.f32.mrf.mxu0
    %v11996 = vadd.f32 %v11719, %v11995
    %v11997 = vpop.f32.mrf.mxu0
    %v11998 = vadd.f32 %v11719, %v11997
    %11999 = vmatmul.bf16.gmra.mxu0 %v11627
    %v12000 = vpop.f32.mrf.mxu0
    %v12001 = vadd.f32 %v11719, %v12000
    %v12002 = vpop.f32.mrf.mxu0
    %v12003 = vadd.f32 %v11719, %v12002
    %12004 = vmatmul.bf16.gmra.mxu0 %v11632
    %v12005 = vpop.f32.mrf.mxu0
    %v12006 = vadd.f32 %v11719, %v12005
    %v12007 = vpop.f32.mrf.mxu0
    %v12008 = vadd.f32 %v11719, %v12007
    %12009 = vdwg.mxu0
    %12010 = vmatpush.bf16.msra.mxu0 %v11896
    %12011 = vmatpush.bf16.msra.mxu0 %v11895
    %12012 = vmatpush.bf16.msra.mxu0 %v11894
    %12013 = vmatpush.bf16.msra.mxu0 %v11893
    %12014 = vmatpush.bf16.msra.mxu0 %v11892
    %12015 = vmatpush.bf16.msra.mxu0 %v11891
    %12016 = vmatpush.bf16.msra.mxu0 %v11890
    %12017 = vmatpush.bf16.msra.mxu0 %v11889
    %12018 = vmatmul.bf16.gmra.mxu0 %v11598
    %v12019 = vpop.f32.mrf.mxu0
    %v12020 = vadd.f32 %v11971, %v12019
    %v12021 = vpop.f32.mrf.mxu0
    %v12022 = vadd.f32 %v11973, %v12021
    %12023 = vmatmul.bf16.gmra.mxu0 %v11603
    %v12024 = vpop.f32.mrf.mxu0
    %v12025 = vadd.f32 %v11976, %v12024
    %v12026 = vpop.f32.mrf.mxu0
    %v12027 = vadd.f32 %v11978, %v12026
    %12028 = vmatmul.bf16.gmra.mxu0 %v11608
    %v12029 = vpop.f32.mrf.mxu0
    %v12030 = vadd.f32 %v11981, %v12029
    %v12031 = vpop.f32.mrf.mxu0
    %v12032 = vadd.f32 %v11983, %v12031
    %12033 = vmatmul.bf16.gmra.mxu0 %v11613
    %v12034 = vpop.f32.mrf.mxu0
    %v12035 = vadd.f32 %v11986, %v12034
    %v12036 = vpop.f32.mrf.mxu0
    %v12037 = vadd.f32 %v11988, %v12036
    %12038 = vmatmul.bf16.gmra.mxu0 %v11618
    %v12039 = vpop.f32.mrf.mxu0
    %v12040 = vadd.f32 %v11991, %v12039
    %v12041 = vpop.f32.mrf.mxu0
    %v12042 = vadd.f32 %v11993, %v12041
    %12043 = vmatmul.bf16.gmra.mxu0 %v11623
    %v12044 = vpop.f32.mrf.mxu0
    %v12045 = vadd.f32 %v11996, %v12044
    %v12046 = vpop.f32.mrf.mxu0
    %v12047 = vadd.f32 %v11998, %v12046
    %12048 = vmatmul.bf16.gmra.mxu0 %v11628
    %v12049 = vpop.f32.mrf.mxu0
    %v12050 = vadd.f32 %v12001, %v12049
    %v12051 = vpop.f32.mrf.mxu0
    %v12052 = vadd.f32 %v12003, %v12051
    %12053 = vmatmul.bf16.gmra.mxu0 %v11633
    %v12054 = vpop.f32.mrf.mxu0
    %v12055 = vadd.f32 %v12006, %v12054
    %v12056 = vpop.f32.mrf.mxu0
    %v12057 = vadd.f32 %v12008, %v12056
    %12058 = vdwg.mxu0
    %12059 = vmatpush.bf16.msra.mxu0 %v11904
    %12060 = vmatpush.bf16.msra.mxu0 %v11903
    %12061 = vmatpush.bf16.msra.mxu0 %v11902
    %12062 = vmatpush.bf16.msra.mxu0 %v11901
    %12063 = vmatpush.bf16.msra.mxu0 %v11900
    %12064 = vmatpush.bf16.msra.mxu0 %v11899
    %12065 = vmatpush.bf16.msra.mxu0 %v11898
    %12066 = vmatpush.bf16.msra.mxu0 %v11897
    %12067 = vmatmul.bf16.gmra.mxu0 %v11599
    %v12068 = vpop.f32.mrf.mxu0
    %v12069 = vadd.f32 %v12020, %v12068
    %v12070 = vpop.f32.mrf.mxu0
    %v12071 = vadd.f32 %v12022, %v12070
    %12072 = vmatmul.bf16.gmra.mxu0 %v11604
    %v12073 = vpop.f32.mrf.mxu0
    %v12074 = vadd.f32 %v12025, %v12073
    %v12075 = vpop.f32.mrf.mxu0
    %v12076 = vadd.f32 %v12027, %v12075
    %12077 = vmatmul.bf16.gmra.mxu0 %v11609
    %v12078 = vpop.f32.mrf.mxu0
    %v12079 = vadd.f32 %v12030, %v12078
    %v12080 = vpop.f32.mrf.mxu0
    %v12081 = vadd.f32 %v12032, %v12080
    %12082 = vmatmul.bf16.gmra.mxu0 %v11614
    %v12083 = vpop.f32.mrf.mxu0
    %v12084 = vadd.f32 %v12035, %v12083
    %v12085 = vpop.f32.mrf.mxu0
    %v12086 = vadd.f32 %v12037, %v12085
    %12087 = vmatmul.bf16.gmra.mxu0 %v11619
    %v12088 = vpop.f32.mrf.mxu0
    %v12089 = vadd.f32 %v12040, %v12088
    %v12090 = vpop.f32.mrf.mxu0
    %v12091 = vadd.f32 %v12042, %v12090
    %12092 = vmatmul.bf16.gmra.mxu0 %v11624
    %v12093 = vpop.f32.mrf.mxu0
    %v12094 = vadd.f32 %v12045, %v12093
    %v12095 = vpop.f32.mrf.mxu0
    %v12096 = vadd.f32 %v12047, %v12095
    %12097 = vmatmul.bf16.gmra.mxu0 %v11629
    %v12098 = vpop.f32.mrf.mxu0
    %v12099 = vadd.f32 %v12050, %v12098
    %v12100 = vpop.f32.mrf.mxu0
    %v12101 = vadd.f32 %v12052, %v12100
    %12102 = vmatmul.bf16.gmra.mxu0 %v11634
    %v12103 = vpop.f32.mrf.mxu0
    %v12104 = vadd.f32 %v12055, %v12103
    %v12105 = vpop.f32.mrf.mxu0
    %v12106 = vadd.f32 %v12057, %v12105
    %12107 = vdwg.mxu0
    %12108 = vmatpush.bf16.msra.mxu0 %v11912
    %12109 = vmatpush.bf16.msra.mxu0 %v11911
    %12110 = vmatpush.bf16.msra.mxu0 %v11910
    %12111 = vmatpush.bf16.msra.mxu0 %v11909
    %12112 = vmatpush.bf16.msra.mxu0 %v11908
    %12113 = vmatpush.bf16.msra.mxu0 %v11907
    %12114 = vmatpush.bf16.msra.mxu0 %v11906
    %12115 = vmatpush.bf16.msra.mxu0 %v11905
    %12116 = vmatmul.bf16.gmra.mxu0 %v11600
    %v12117 = vpop.f32.mrf.mxu0
    %v12118 = vadd.f32 %v12069, %v12117
    %v12119 = vpop.f32.mrf.mxu0
    %v12120 = vadd.f32 %v12071, %v12119
    %12121 = vmatmul.bf16.gmra.mxu0 %v11605
    %v12122 = vpop.f32.mrf.mxu0
    %v12123 = vadd.f32 %v12074, %v12122
    %v12124 = vpop.f32.mrf.mxu0
    %v12125 = vadd.f32 %v12076, %v12124
    %12126 = vmatmul.bf16.gmra.mxu0 %v11610
    %v12127 = vpop.f32.mrf.mxu0
    %v12128 = vadd.f32 %v12079, %v12127
    %v12129 = vpop.f32.mrf.mxu0
    %v12130 = vadd.f32 %v12081, %v12129
    %12131 = vmatmul.bf16.gmra.mxu0 %v11615
    %v12132 = vpop.f32.mrf.mxu0
    %v12133 = vadd.f32 %v12084, %v12132
    %v12134 = vpop.f32.mrf.mxu0
    %v12135 = vadd.f32 %v12086, %v12134
    %12136 = vmatmul.bf16.gmra.mxu0 %v11620
    %v12137 = vpop.f32.mrf.mxu0
    %v12138 = vadd.f32 %v12089, %v12137
    %v12139 = vpop.f32.mrf.mxu0
    %v12140 = vadd.f32 %v12091, %v12139
    %12141 = vmatmul.bf16.gmra.mxu0 %v11625
    %v12142 = vpop.f32.mrf.mxu0
    %v12143 = vadd.f32 %v12094, %v12142
    %v12144 = vpop.f32.mrf.mxu0
    %v12145 = vadd.f32 %v12096, %v12144
    %12146 = vmatmul.bf16.gmra.mxu0 %v11630
    %v12147 = vpop.f32.mrf.mxu0
    %v12148 = vadd.f32 %v12099, %v12147
    %v12149 = vpop.f32.mrf.mxu0
    %v12150 = vadd.f32 %v12101, %v12149
    %12151 = vmatmul.bf16.gmra.mxu0 %v11635
    %v12152 = vpop.f32.mrf.mxu0
    %v12153 = vadd.f32 %v12104, %v12152
    %v12154 = vpop.f32.mrf.mxu0
    %v12155 = vadd.f32 %v12106, %v12154
    %12156 = vdwg.mxu0
    %12157 = vmatpush.bf16.msra.mxu0 %v11920
    %12158 = vmatpush.bf16.msra.mxu0 %v11919
    %12159 = vmatpush.bf16.msra.mxu0 %v11918
    %12160 = vmatpush.bf16.msra.mxu0 %v11917
    %12161 = vmatpush.bf16.msra.mxu0 %v11916
    %12162 = vmatpush.bf16.msra.mxu0 %v11915
    %12163 = vmatpush.bf16.msra.mxu0 %v11914
    %12164 = vmatpush.bf16.msra.mxu0 %v11913
    %12165 = vmatmul.bf16.gmra.mxu0 %v11601
    %v12166 = vpop.f32.mrf.mxu0
    %v12167 = vadd.f32 %v12118, %v12166
    %v12168 = vpop.f32.mrf.mxu0
    %v12169 = vadd.f32 %v12120, %v12168
    %12170 = vmatmul.bf16.gmra.mxu0 %v11606
    %v12171 = vpop.f32.mrf.mxu0
    %v12172 = vadd.f32 %v12123, %v12171
    %v12173 = vpop.f32.mrf.mxu0
    %v12174 = vadd.f32 %v12125, %v12173
    %12175 = vmatmul.bf16.gmra.mxu0 %v11611
    %v12176 = vpop.f32.mrf.mxu0
    %v12177 = vadd.f32 %v12128, %v12176
    %v12178 = vpop.f32.mrf.mxu0
    %v12179 = vadd.f32 %v12130, %v12178
    %12180 = vmatmul.bf16.gmra.mxu0 %v11616
    %v12181 = vpop.f32.mrf.mxu0
    %v12182 = vadd.f32 %v12133, %v12181
    %v12183 = vpop.f32.mrf.mxu0
    %v12184 = vadd.f32 %v12135, %v12183
    %12185 = vmatmul.bf16.gmra.mxu0 %v11621
    %v12186 = vpop.f32.mrf.mxu0
    %v12187 = vadd.f32 %v12138, %v12186
    %v12188 = vpop.f32.mrf.mxu0
    %v12189 = vadd.f32 %v12140, %v12188
    %12190 = vmatmul.bf16.gmra.mxu0 %v11626
    %v12191 = vpop.f32.mrf.mxu0
    %v12192 = vadd.f32 %v12143, %v12191
    %v12193 = vpop.f32.mrf.mxu0
    %v12194 = vadd.f32 %v12145, %v12193
    %12195 = vmatmul.bf16.gmra.mxu0 %v11631
    %v12196 = vpop.f32.mrf.mxu0
    %v12197 = vadd.f32 %v12148, %v12196
    %v12198 = vpop.f32.mrf.mxu0
    %v12199 = vadd.f32 %v12150, %v12198
    %12200 = vmatmul.bf16.gmra.mxu0 %v11636
    %v12201 = vpop.f32.mrf.mxu0
    %v12202 = vadd.f32 %v12153, %v12201
    %v12203 = vpop.f32.mrf.mxu0
    %v12204 = vadd.f32 %v12155, %v12203
    %12205 = vdwg.mxu0
    %v12206 = vlaneseq
    %v12207 = vand.u32 %v12206, 127
    %vm12208 = vcmp.lt.s32.totalorder %v12207, 80
    %v12209 = vxor.u32 %v12167, 2147483648
    %v12210 = vxor.u32 %v12169, 2147483648
    %v12211 = vxor.u32 %v12172, 2147483648
    %v12212 = vxor.u32 %v12174, 2147483648
    %v12213 = vxor.u32 %v12177, 2147483648
    %v12214 = vxor.u32 %v12179, 2147483648
    %v12215 = vxor.u32 %v12182, 2147483648
    %v12216 = vxor.u32 %v12184, 2147483648
    %v12217 = vxor.u32 %v12187, 2147483648
    %v12218 = vxor.u32 %v12189, 2147483648
    %v12219 = vxor.u32 %v12192, 2147483648
    %v12220 = vxor.u32 %v12194, 2147483648
    %v12221 = vxor.u32 %v12197, 2147483648
    %v12222 = vxor.u32 %v12199, 2147483648
    %v12223 = vxor.u32 %v12202, 2147483648
    %v12224 = vxor.u32 %v12204, 2147483648
    %v12225 = vmul.f32 %v12209, 1.442695
    %v12226 = vpow.pop %v12225
    %v12227 = vmul.f32 %v12210, 1.442695
    %v12228 = vpow.pop %v12227
    %v12229 = vmul.f32 %v12211, 1.442695
    %v12230 = vpow.pop %v12229
    %v12231 = vmul.f32 %v12212, 1.442695
    %v12232 = vpow.pop %v12231
    %v12233 = vmul.f32 %v12213, 1.442695
    %v12234 = vpow.pop %v12233
    %v12235 = vmul.f32 %v12214, 1.442695
    %v12236 = vpow.pop %v12235
    %v12237 = vmul.f32 %v12215, 1.442695
    %v12238 = vpow.pop %v12237
    %v12239 = vmul.f32 %v12216, 1.442695
    %v12240 = vpow.pop %v12239
    %v12241 = vmul.f32 %v12217, 1.442695
    %v12242 = vpow.pop %v12241
    %v12243 = vmul.f32 %v12218, 1.442695
    %v12244 = vpow.pop %v12243
    %v12245 = vmul.f32 %v12219, 1.442695
    %v12246 = vpow.pop %v12245
    %v12247 = vmul.f32 %v12220, 1.442695
    %v12248 = vpow.pop %v12247
    %v12249 = vmul.f32 %v12221, 1.442695
    %v12250 = vpow.pop %v12249
    %v12251 = vmul.f32 %v12222, 1.442695
    %v12252 = vpow.pop %v12251
    %v12253 = vmul.f32 %v12223, 1.442695
    %v12254 = vpow.pop %v12253
    %v12255 = vmul.f32 %v12224, 1.442695
    %v12256 = vpow.pop %v12255
    %v12257 = vadd.f32 %v12226, 1.0
    %v12258 = vadd.f32 %v12228, 1.0
    %v12259 = vadd.f32 %v12230, 1.0
    %v12260 = vadd.f32 %v12232, 1.0
    %v12261 = vadd.f32 %v12234, 1.0
    %v12262 = vadd.f32 %v12236, 1.0
    %v12263 = vadd.f32 %v12238, 1.0
    %v12264 = vadd.f32 %v12240, 1.0
    %v12265 = vadd.f32 %v12242, 1.0
    %v12266 = vadd.f32 %v12244, 1.0
    %v12267 = vadd.f32 %v12246, 1.0
    %v12268 = vadd.f32 %v12248, 1.0
    %v12269 = vadd.f32 %v12250, 1.0
    %v12270 = vadd.f32 %v12252, 1.0
    %v12271 = vadd.f32 %v12254, 1.0
    %v12272 = vadd.f32 %v12256, 1.0
    %v12273 = vrcp.pop %v12257
    %v12274 = vmul.f32 %v12257, %v12273
    %v12275 = vsub.f32 1.0, %v12274
    %v12276 = vmul.f32 %v12273, %v12275
    %v12277 = vadd.f32 %v12273, %v12276
    %vm12278 = vweird.f32 %v12257
    %vm12279 = vweird.f32 %v12273
    %vm12280 = vmor %vm12278, %vm12279
    %v12281 = vsel %vm12280, %v12273, %v12277
    %v12282 = vand.u32 2147483647, %v12257
    %vm12283 = vcmp.eq.f32.partialorder %v12282, 8.507059e+37
    %v12284 = vand.u32 %v12257, 2147483648
    %v12285 = vor.u32 1.1754944e-38, %v12284
    %v12286 = vsel %vm12283, %v12285, %v12281
    %v12287 = vmul.f32 1.0, %v12286
    %v12288 = vrcp.pop %v12258
    %v12289 = vmul.f32 %v12258, %v12288
    %v12290 = vsub.f32 1.0, %v12289
    %v12291 = vmul.f32 %v12288, %v12290
    %v12292 = vadd.f32 %v12288, %v12291
    %vm12293 = vweird.f32 %v12258
    %vm12294 = vweird.f32 %v12288
    %vm12295 = vmor %vm12293, %vm12294
    %v12296 = vsel %vm12295, %v12288, %v12292
    %v12297 = vand.u32 2147483647, %v12258
    %vm12298 = vcmp.eq.f32.partialorder %v12297, 8.507059e+37
    %v12299 = vand.u32 %v12258, 2147483648
    %v12300 = vor.u32 1.1754944e-38, %v12299
    %v12301 = vsel %vm12298, %v12300, %v12296
    %v12302 = vmul.f32 1.0, %v12301
    %v12303 = vrcp.pop %v12259
    %v12304 = vmul.f32 %v12259, %v12303
    %v12305 = vsub.f32 1.0, %v12304
    %v12306 = vmul.f32 %v12303, %v12305
    %v12307 = vadd.f32 %v12303, %v12306
    %vm12308 = vweird.f32 %v12259
    %vm12309 = vweird.f32 %v12303
    %vm12310 = vmor %vm12308, %vm12309
    %v12311 = vsel %vm12310, %v12303, %v12307
    %v12312 = vand.u32 2147483647, %v12259
    %vm12313 = vcmp.eq.f32.partialorder %v12312, 8.507059e+37
    %v12314 = vand.u32 %v12259, 2147483648
    %v12315 = vor.u32 1.1754944e-38, %v12314
    %v12316 = vsel %vm12313, %v12315, %v12311
    %v12317 = vmul.f32 1.0, %v12316
    %v12318 = vrcp.pop %v12260
    %v12319 = vmul.f32 %v12260, %v12318
    %v12320 = vsub.f32 1.0, %v12319
    %v12321 = vmul.f32 %v12318, %v12320
    %v12322 = vadd.f32 %v12318, %v12321
    %vm12323 = vweird.f32 %v12260
    %vm12324 = vweird.f32 %v12318
    %vm12325 = vmor %vm12323, %vm12324
    %v12326 = vsel %vm12325, %v12318, %v12322
    %v12327 = vand.u32 2147483647, %v12260
    %vm12328 = vcmp.eq.f32.partialorder %v12327, 8.507059e+37
    %v12329 = vand.u32 %v12260, 2147483648
    %v12330 = vor.u32 1.1754944e-38, %v12329
    %v12331 = vsel %vm12328, %v12330, %v12326
    %v12332 = vmul.f32 1.0, %v12331
    %v12333 = vrcp.pop %v12261
    %v12334 = vmul.f32 %v12261, %v12333
    %v12335 = vsub.f32 1.0, %v12334
    %v12336 = vmul.f32 %v12333, %v12335
    %v12337 = vadd.f32 %v12333, %v12336
    %vm12338 = vweird.f32 %v12261
    %vm12339 = vweird.f32 %v12333
    %vm12340 = vmor %vm12338, %vm12339
    %v12341 = vsel %vm12340, %v12333, %v12337
    %v12342 = vand.u32 2147483647, %v12261
    %vm12343 = vcmp.eq.f32.partialorder %v12342, 8.507059e+37
    %v12344 = vand.u32 %v12261, 2147483648
    %v12345 = vor.u32 1.1754944e-38, %v12344
    %v12346 = vsel %vm12343, %v12345, %v12341
    %v12347 = vmul.f32 1.0, %v12346
    %v12348 = vrcp.pop %v12262
    %v12349 = vmul.f32 %v12262, %v12348
    %v12350 = vsub.f32 1.0, %v12349
    %v12351 = vmul.f32 %v12348, %v12350
    %v12352 = vadd.f32 %v12348, %v12351
    %vm12353 = vweird.f32 %v12262
    %vm12354 = vweird.f32 %v12348
    %vm12355 = vmor %vm12353, %vm12354
    %v12356 = vsel %vm12355, %v12348, %v12352
    %v12357 = vand.u32 2147483647, %v12262
    %vm12358 = vcmp.eq.f32.partialorder %v12357, 8.507059e+37
    %v12359 = vand.u32 %v12262, 2147483648
    %v12360 = vor.u32 1.1754944e-38, %v12359
    %v12361 = vsel %vm12358, %v12360, %v12356
    %v12362 = vmul.f32 1.0, %v12361
    %v12363 = vrcp.pop %v12263
    %v12364 = vmul.f32 %v12263, %v12363
    %v12365 = vsub.f32 1.0, %v12364
    %v12366 = vmul.f32 %v12363, %v12365
    %v12367 = vadd.f32 %v12363, %v12366
    %vm12368 = vweird.f32 %v12263
    %vm12369 = vweird.f32 %v12363
    %vm12370 = vmor %vm12368, %vm12369
    %v12371 = vsel %vm12370, %v12363, %v12367
    %v12372 = vand.u32 2147483647, %v12263
    %vm12373 = vcmp.eq.f32.partialorder %v12372, 8.507059e+37
    %v12374 = vand.u32 %v12263, 2147483648
    %v12375 = vor.u32 1.1754944e-38, %v12374
    %v12376 = vsel %vm12373, %v12375, %v12371
    %v12377 = vmul.f32 1.0, %v12376
    %v12378 = vrcp.pop %v12264
    %v12379 = vmul.f32 %v12264, %v12378
    %v12380 = vsub.f32 1.0, %v12379
    %v12381 = vmul.f32 %v12378, %v12380
    %v12382 = vadd.f32 %v12378, %v12381
    %vm12383 = vweird.f32 %v12264
    %vm12384 = vweird.f32 %v12378
    %vm12385 = vmor %vm12383, %vm12384
    %v12386 = vsel %vm12385, %v12378, %v12382
    %v12387 = vand.u32 2147483647, %v12264
    %vm12388 = vcmp.eq.f32.partialorder %v12387, 8.507059e+37
    %v12389 = vand.u32 %v12264, 2147483648
    %v12390 = vor.u32 1.1754944e-38, %v12389
    %v12391 = vsel %vm12388, %v12390, %v12386
    %v12392 = vmul.f32 1.0, %v12391
    %v12393 = vrcp.pop %v12265
    %v12394 = vmul.f32 %v12265, %v12393
    %v12395 = vsub.f32 1.0, %v12394
    %v12396 = vmul.f32 %v12393, %v12395
    %v12397 = vadd.f32 %v12393, %v12396
    %vm12398 = vweird.f32 %v12265
    %vm12399 = vweird.f32 %v12393
    %vm12400 = vmor %vm12398, %vm12399
    %v12401 = vsel %vm12400, %v12393, %v12397
    %v12402 = vand.u32 2147483647, %v12265
    %vm12403 = vcmp.eq.f32.partialorder %v12402, 8.507059e+37
    %v12404 = vand.u32 %v12265, 2147483648
    %v12405 = vor.u32 1.1754944e-38, %v12404
    %v12406 = vsel %vm12403, %v12405, %v12401
    %v12407 = vmul.f32 1.0, %v12406
    %v12408 = vrcp.pop %v12266
    %v12409 = vmul.f32 %v12266, %v12408
    %v12410 = vsub.f32 1.0, %v12409
    %v12411 = vmul.f32 %v12408, %v12410
    %v12412 = vadd.f32 %v12408, %v12411
    %vm12413 = vweird.f32 %v12266
    %vm12414 = vweird.f32 %v12408
    %vm12415 = vmor %vm12413, %vm12414
    %v12416 = vsel %vm12415, %v12408, %v12412
    %v12417 = vand.u32 2147483647, %v12266
    %vm12418 = vcmp.eq.f32.partialorder %v12417, 8.507059e+37
    %v12419 = vand.u32 %v12266, 2147483648
    %v12420 = vor.u32 1.1754944e-38, %v12419
    %v12421 = vsel %vm12418, %v12420, %v12416
    %v12422 = vmul.f32 1.0, %v12421
    %v12423 = vrcp.pop %v12267
    %v12424 = vmul.f32 %v12267, %v12423
    %v12425 = vsub.f32 1.0, %v12424
    %v12426 = vmul.f32 %v12423, %v12425
    %v12427 = vadd.f32 %v12423, %v12426
    %vm12428 = vweird.f32 %v12267
    %vm12429 = vweird.f32 %v12423
    %vm12430 = vmor %vm12428, %vm12429
    %v12431 = vsel %vm12430, %v12423, %v12427
    %v12432 = vand.u32 2147483647, %v12267
    %vm12433 = vcmp.eq.f32.partialorder %v12432, 8.507059e+37
    %v12434 = vand.u32 %v12267, 2147483648
    %v12435 = vor.u32 1.1754944e-38, %v12434
    %v12436 = vsel %vm12433, %v12435, %v12431
    %v12437 = vmul.f32 1.0, %v12436
    %v12438 = vrcp.pop %v12268
    %v12439 = vmul.f32 %v12268, %v12438
    %v12440 = vsub.f32 1.0, %v12439
    %v12441 = vmul.f32 %v12438, %v12440
    %v12442 = vadd.f32 %v12438, %v12441
    %vm12443 = vweird.f32 %v12268
    %vm12444 = vweird.f32 %v12438
    %vm12445 = vmor %vm12443, %vm12444
    %v12446 = vsel %vm12445, %v12438, %v12442
    %v12447 = vand.u32 2147483647, %v12268
    %vm12448 = vcmp.eq.f32.partialorder %v12447, 8.507059e+37
    %v12449 = vand.u32 %v12268, 2147483648
    %v12450 = vor.u32 1.1754944e-38, %v12449
    %v12451 = vsel %vm12448, %v12450, %v12446
    %v12452 = vmul.f32 1.0, %v12451
    %v12453 = vrcp.pop %v12269
    %v12454 = vmul.f32 %v12269, %v12453
    %v12455 = vsub.f32 1.0, %v12454
    %v12456 = vmul.f32 %v12453, %v12455
    %v12457 = vadd.f32 %v12453, %v12456
    %vm12458 = vweird.f32 %v12269
    %vm12459 = vweird.f32 %v12453
    %vm12460 = vmor %vm12458, %vm12459
    %v12461 = vsel %vm12460, %v12453, %v12457
    %v12462 = vand.u32 2147483647, %v12269
    %vm12463 = vcmp.eq.f32.partialorder %v12462, 8.507059e+37
    %v12464 = vand.u32 %v12269, 2147483648
    %v12465 = vor.u32 1.1754944e-38, %v12464
    %v12466 = vsel %vm12463, %v12465, %v12461
    %v12467 = vmul.f32 1.0, %v12466
    %v12468 = vrcp.pop %v12270
    %v12469 = vmul.f32 %v12270, %v12468
    %v12470 = vsub.f32 1.0, %v12469
    %v12471 = vmul.f32 %v12468, %v12470
    %v12472 = vadd.f32 %v12468, %v12471
    %vm12473 = vweird.f32 %v12270
    %vm12474 = vweird.f32 %v12468
    %vm12475 = vmor %vm12473, %vm12474
    %v12476 = vsel %vm12475, %v12468, %v12472
    %v12477 = vand.u32 2147483647, %v12270
    %vm12478 = vcmp.eq.f32.partialorder %v12477, 8.507059e+37
    %v12479 = vand.u32 %v12270, 2147483648
    %v12480 = vor.u32 1.1754944e-38, %v12479
    %v12481 = vsel %vm12478, %v12480, %v12476
    %v12482 = vmul.f32 1.0, %v12481
    %v12483 = vrcp.pop %v12271
    %v12484 = vmul.f32 %v12271, %v12483
    %v12485 = vsub.f32 1.0, %v12484
    %v12486 = vmul.f32 %v12483, %v12485
    %v12487 = vadd.f32 %v12483, %v12486
    %vm12488 = vweird.f32 %v12271
    %vm12489 = vweird.f32 %v12483
    %vm12490 = vmor %vm12488, %vm12489
    %v12491 = vsel %vm12490, %v12483, %v12487
    %v12492 = vand.u32 2147483647, %v12271
    %vm12493 = vcmp.eq.f32.partialorder %v12492, 8.507059e+37
    %v12494 = vand.u32 %v12271, 2147483648
    %v12495 = vor.u32 1.1754944e-38, %v12494
    %v12496 = vsel %vm12493, %v12495, %v12491
    %v12497 = vmul.f32 1.0, %v12496
    %v12498 = vrcp.pop %v12272
    %v12499 = vmul.f32 %v12272, %v12498
    %v12500 = vsub.f32 1.0, %v12499
    %v12501 = vmul.f32 %v12498, %v12500
    %v12502 = vadd.f32 %v12498, %v12501
    %vm12503 = vweird.f32 %v12272
    %vm12504 = vweird.f32 %v12498
    %vm12505 = vmor %vm12503, %vm12504
    %v12506 = vsel %vm12505, %v12498, %v12502
    %v12507 = vand.u32 2147483647, %v12272
    %vm12508 = vcmp.eq.f32.partialorder %v12507, 8.507059e+37
    %v12509 = vand.u32 %v12272, 2147483648
    %v12510 = vor.u32 1.1754944e-38, %v12509
    %v12511 = vsel %vm12508, %v12510, %v12506
    %v12512 = vmul.f32 1.0, %v12511
    %vm12513 = vcmp.lt.s32.totalorder %v12207, 88
    %v12514 = vmax.f32 %v12167, 0.0
    %v12515 = vmax.f32 %v12169, 0.0
    %v12516 = vmax.f32 %v12172, 0.0
    %v12517 = vmax.f32 %v12174, 0.0
    %v12518 = vmax.f32 %v12177, 0.0
    %v12519 = vmax.f32 %v12179, 0.0
    %v12520 = vmax.f32 %v12182, 0.0
    %v12521 = vmax.f32 %v12184, 0.0
    %v12522 = vmax.f32 %v12187, 0.0
    %v12523 = vmax.f32 %v12189, 0.0
    %v12524 = vmax.f32 %v12192, 0.0
    %v12525 = vmax.f32 %v12194, 0.0
    %v12526 = vmax.f32 %v12197, 0.0
    %v12527 = vmax.f32 %v12199, 0.0
    %v12528 = vmax.f32 %v12202, 0.0
    %v12529 = vmax.f32 %v12204, 0.0
    %v12530 = vsel %vm12513, %v12514, %v12167
    %v12531 = vsel %vm12513, %v12515, %v12169
    %v12532 = vsel %vm12513, %v12516, %v12172
    %v12533 = vsel %vm12513, %v12517, %v12174
    %v12534 = vsel %vm12513, %v12518, %v12177
    %v12535 = vsel %vm12513, %v12519, %v12179
    %v12536 = vsel %vm12513, %v12520, %v12182
    %v12537 = vsel %vm12513, %v12521, %v12184
    %v12538 = vsel %vm12513, %v12522, %v12187
    %v12539 = vsel %vm12513, %v12523, %v12189
    %v12540 = vsel %vm12513, %v12524, %v12192
    %v12541 = vsel %vm12513, %v12525, %v12194
    %v12542 = vsel %vm12513, %v12526, %v12197
    %v12543 = vsel %vm12513, %v12527, %v12199
    %v12544 = vsel %vm12513, %v12528, %v12202
    %v12545 = vsel %vm12513, %v12529, %v12204
    %v12546 = vsel %vm12208, %v12287, %v12530
    %v12547 = vsel %vm12208, %v12302, %v12531
    %v12548 = vsel %vm12208, %v12317, %v12532
    %v12549 = vsel %vm12208, %v12332, %v12533
    %v12550 = vsel %vm12208, %v12347, %v12534
    %v12551 = vsel %vm12208, %v12362, %v12535
    %v12552 = vsel %vm12208, %v12377, %v12536
    %v12553 = vsel %vm12208, %v12392, %v12537
    %v12554 = vsel %vm12208, %v12407, %v12538
    %v12555 = vsel %vm12208, %v12422, %v12539
    %v12556 = vsel %vm12208, %v12437, %v12540
    %v12557 = vsel %vm12208, %v12452, %v12541
    %v12558 = vsel %vm12208, %v12467, %v12542
    %v12559 = vsel %vm12208, %v12482, %v12543
    %v12560 = vsel %vm12208, %v12497, %v12544
    %v12561 = vsel %vm12208, %v12512, %v12545
    %12562 = vst [vmem:[%s5] sm:$0xff] %v12546
    %12563 = vst [vmem:[%s5 + $0x8] sm:$0xff] %v12547
    %12564 = vst [vmem:[%s5 + $0x10] sm:$0xff] %v12548
    %12565 = vst [vmem:[%s5 + $0x18] sm:$0xff] %v12549
    %12566 = vst [vmem:[%s5 + $0x20] sm:$0xff] %v12550
    %12567 = vst [vmem:[%s5 + $0x28] sm:$0xff] %v12551
    %12568 = vst [vmem:[%s5 + $0x30] sm:$0xff] %v12552
    %12569 = vst [vmem:[%s5 + $0x38] sm:$0xff] %v12553
    %12570 = vst [vmem:[%s5 + $0x40] sm:$0xff] %v12554
    %12571 = vst [vmem:[%s5 + $0x48] sm:$0xff] %v12555
    %12572 = vst [vmem:[%s5 + $0x50] sm:$0xff] %v12556
    %12573 = vst [vmem:[%s5 + $0x58] sm:$0xff] %v12557
    %12574 = vst [vmem:[%s5 + $0x60] sm:$0xff] %v12558
    %12575 = vst [vmem:[%s5 + $0x68] sm:$0xff] %v12559
    %12576 = vst [vmem:[%s5 + $0x70] sm:$0xff] %v12560
    %12577 = vst [vmem:[%s5 + $0x78] sm:$0xff] %v12561
    // Predicated region
    $region38: #{_lambda_.1} parent=1 // pred_check
      _
    $region39: #{_lambda_.1} parent=1 // pred_check_branch
      %12579 = sbr.rel (0) target = $region41
    $region40: #{_lambda_.1} parent=1 // pred_region
      _
    $region41: #{_lambda_.1} parent=1 // pred_fallthru
      _
    // Predicated region
    $region42: #{_lambda_.1} parent=1 // pred_check
      _
    $region43: #{_lambda_.1} parent=1 // pred_check_branch
      %12581 = sbr.rel (0) target = $region45
    $region44: #{_lambda_.1} parent=1 // pred_region
      _
    $region45: #{_lambda_.1} parent=1 // pred_fallthru
      _
    %12582 = vsyncpa [#allocation3], 1
    %12583 = vsyncpa [#allocation5], 1
    %12584 = vsyncpa [#allocation8], 1

</llo_original>
